<compile_context>
chip_gen: v7x
topology: tpu7x:2x2x1
jax: 0.10.0
libtpu: 0.0.40
codegen_flags: <defaults>
</compile_context>

<pallas_src>
import math
import functools

import jax
import jax.numpy as jnp
from jax.experimental import pallas as pl
from jax.experimental.pallas import tpu as pltpu


def _attn_core_kernel(q_ref, k_ref, v_ref, o_ref, *, sk, sk_pad, h_blk):
    # q_ref: (h_blk, tq, D) bf16
    # k_ref: (h_blk, D, Sk_pad) bf16   (pre-transposed K)
    # v_ref: (h_blk, Sk_pad, D) bf16
    # o_ref: (tq, h_blk*D)
    if sk_pad > sk:
        kmask = jax.lax.broadcasted_iota(jnp.int32, (1, sk_pad), 1) < sk

    outs = []
    for h in range(h_blk):
        q = q_ref[h]                                   # (tq, D)
        kt = k_ref[h]                                  # (D, Sk_pad)
        # scores, f32 accumulation on the MXU; scale already folded into Q.
        s = jnp.dot(q, kt, preferred_element_type=jnp.float32)   # (tq, Sk_pad)
        if sk_pad > sk:
            s = jnp.where(kmask, s, -jnp.inf)

        # Numerically stable softmax along the lane-dense key axis.
        m = jnp.max(s, axis=-1, keepdims=True)
        p = jnp.exp(s - m)
        l = jnp.sum(p, axis=-1, keepdims=True)

        o = jnp.dot(p.astype(v_ref.dtype), v_ref[h],
                    preferred_element_type=jnp.float32)           # (tq, D)
        outs.append(o * pl.reciprocal(l, approx=True))

    # One lane-dense store per grid step.
    o_ref[...] = jnp.concatenate(outs, axis=-1).astype(o_ref.dtype)


def _pick_tq(sq):
    """Largest divisor of sq that is a multiple of 8 and <= 512 (else whole sq)."""
    best = None
    for d in range(8, min(sq, 512) + 1, 8):
        if sq % d == 0:
            best = d
    return best if best is not None else sq


def _pick_heads_per_block(nhead, d):
    """Largest divisor of nhead whose combined lane width h*D stays <= 128."""
    cap = max(1, 128 // d)
    h = 1
    for cand in range(1, nhead + 1):
        if nhead % cand == 0 and cand <= cap:
            h = cand
    return h


def attention2d_forward(x, kv, params, nhead, self_attn=False):
    """x: (B, C, H, W); kv: (B, S_kv, C); params mirror nn.MultiheadAttention."""
    in_w = params["in_proj_weight"]    # (3C, C)  (PyTorch layout: out x in)
    in_b = params["in_proj_bias"]      # (3C,)
    out_w = params["out_proj_weight"]  # (C, C)
    out_b = params["out_proj_bias"]    # (C,)

    B, C, H, W = x.shape
    assert C % nhead == 0
    D = C // nhead
    Sq = H * W

    # NCHW -> (B, Sq, C) sequence layout.
    xs = x.reshape(B, C, Sq).transpose(0, 2, 1)
    kvf = jnp.concatenate([xs, kv], axis=1) if self_attn else kv
    Sk = kvf.shape[1]

    # Input projections (hoisted to XLA). The softmax scale 1/sqrt(D) is folded into
    # the Q projection so the kernel never scales the (tq, Sk) score matrix.
    wq, wk, wv = jnp.split(in_w, 3, axis=0)
    bq, bk, bv = jnp.split(in_b, 3, axis=0)
    scale = 1.0 / math.sqrt(D)
    q = xs @ (wq.T * scale) + bq * scale          # (B, Sq, C)
    k = kvf @ wk.T + bk                           # (B, Sk, C)
    v = kvf @ wv.T + bv                           # (B, Sk, C)

    # Pad keys/values up to a lane-dense multiple of 128 (masked to -inf in-kernel).
    Sk_pad = ((Sk + 127) // 128) * 128
    if Sk_pad != Sk:
        pad = ((0, 0), (0, Sk_pad - Sk), (0, 0))
        k = jnp.pad(k, pad)
        v = jnp.pad(v, pad)

    # Head grouping: each grid step handles h_blk heads -> lane-dense output block.
    h_blk = _pick_heads_per_block(nhead, D)
    n_groups = nhead // h_blk
    Gd = h_blk * D
    BG = B * n_groups

    # bf16 operands for the MXU (halves HBM traffic / VMEM residency); the kernel
    # accumulates in f32 via preferred_element_type.
    cdt = jnp.bfloat16
    qh = (q.reshape(B, Sq, n_groups, h_blk, D)
            .transpose(0, 2, 3, 1, 4).reshape(BG, h_blk, Sq, D).astype(cdt))
    kh = (k.reshape(B, Sk_pad, n_groups, h_blk, D)
            .transpose(0, 2, 3, 4, 1).reshape(BG, h_blk, D, Sk_pad).astype(cdt))   # K^T
    vh = (v.reshape(B, Sk_pad, n_groups, h_blk, D)
            .transpose(0, 2, 3, 1, 4).reshape(BG, h_blk, Sk_pad, D).astype(cdt))

    tq = _pick_tq(Sq)
    n_q_tiles = Sq // tq
    BH = B * nhead

    cost = pl.CostEstimate(
        flops=int(4 * BH * Sq * Sk_pad * D),                 # QK^T + PV
        transcendentals=int(BH * Sq * Sk_pad),               # exp
        bytes_accessed=int(2 * BH * Sq * D                   # Q (bf16)
                           + 2 * 2 * BH * Sk_pad * D         # K + V (bf16), once/head
                           + 4 * BH * Sq * D),               # O (f32)
    )

    oh = pl.pallas_call(
        functools.partial(_attn_core_kernel, sk=Sk, sk_pad=Sk_pad, h_blk=h_blk),
        out_shape=jax.ShapeDtypeStruct((BG, Sq, Gd), x.dtype),
        grid=(BG, n_q_tiles),
        in_specs=[
            pl.BlockSpec((None, h_blk, tq, D), lambda i, qi: (i, 0, qi, 0)),
            pl.BlockSpec((None, h_blk, D, Sk_pad), lambda i, qi: (i, 0, 0, 0)),
            pl.BlockSpec((None, h_blk, Sk_pad, D), lambda i, qi: (i, 0, 0, 0)),
        ],
        out_specs=pl.BlockSpec((None, tq, Gd), lambda i, qi: (i, qi, 0)),
        compiler_params=pltpu.CompilerParams(
            # Head-group axis parallel (megacore shards whole heads, K/V fetched once
            # per core); query-tile axis arbitrary so KV is never re-fetched per tile.
            dimension_semantics=("parallel", "arbitrary")),
        cost_estimate=cost,
    )(qh, kh, vh)

    # Merge head groups, output projection, back to NCHW.
    o = oh.reshape(B, n_groups, Sq, Gd).transpose(0, 2, 1, 3).reshape(B, Sq, C)
    o = o @ out_w.T + out_b
    return o.transpose(0, 2, 1).reshape(B, C, H, W)


def ref_forward(x, kv, params, nhead, self_attn=False):
    """Pure-JAX f32 reference mirroring the PyTorch Attention2D forward."""
    B, C, H, W = x.shape
    D = C // nhead
    xs = x.reshape(B, C, H * W).transpose(0, 2, 1)
    kvf = jnp.concatenate([xs, kv], axis=1) if self_attn else kv

    wq, wk, wv = jnp.split(params["in_proj_weight"], 3, axis=0)
    bq, bk, bv = jnp.split(params["in_proj_bias"], 3, axis=0)
    q = xs @ wq.T + bq
    k = kvf @ wk.T + bk
    v = kvf @ wv.T + bv

    def heads(t):
        b, s, _ = t.shape
        return t.reshape(b, s, nhead, D).transpose(0, 2, 1, 3)

    qh, kh, vh = heads(q), heads(k), heads(v)
    s = jnp.einsum("bhqd,bhkd->bhqk", qh, kh) / math.sqrt(D)
    p = jax.nn.softmax(s, axis=-1)
    o = jnp.einsum("bhqk,bhkd->bhqd", p, vh)
    o = o.transpose(0, 2, 1, 3).reshape(B, H * W, C)
    o = o @ params["out_proj_weight"].T + params["out_proj_bias"]
    return o.transpose(0, 2, 1).reshape(B, C, H, W)


if __name__ == "__main__":
    # Small config consistent with the module: c=32, nhead=4 (head_dim=8), 16x16 spatial,
    # external kv sequence of length 8.
    B, C, H, W = 2, 32, 16, 16
    nhead = 4
    S_kv = 8

    key = jax.random.PRNGKey(0)
    kx, kkv, k1, k2, k3, k4 = jax.random.split(key, 6)

    x = jax.random.normal(kx, (B, C, H, W), dtype=jnp.float32)
    kv = jax.random.normal(kkv, (B, S_kv, C), dtype=jnp.float32)

    params = {
        "in_proj_weight": 0.1 * jax.random.normal(k1, (3 * C, C), dtype=jnp.float32),
        "in_proj_bias": 0.05 * jax.random.normal(k2, (3 * C,), dtype=jnp.float32),
        "out_proj_weight": 0.1 * jax.random.normal(k3, (C, C), dtype=jnp.float32),
        "out_proj_bias": 0.05 * jax.random.normal(k4, (C,), dtype=jnp.float32),
    }

    for self_attn in (True, False):
        out = attention2d_forward(x, kv, params, nhead, self_attn=self_attn)
        out = jax.block_until_ready(out)
        ref = ref_forward(x, kv, params, nhead, self_attn=self_attn)
        assert out.shape == (B, C, H, W)
        # bf16 operands + approx reciprocal -> slightly looser tolerance than pure f32.
        assert jnp.allclose(out, ref, atol=2e-2, rtol=2e-2), \
            f"mismatch vs reference (self_attn={self_attn})"

    print("KERNEL_OK")
</pallas_src>

<mosaic_0001>
module attributes {stable_mosaic.version = 11 : i64} {
  func.func @_attn_core_kernel(%arg0: i32, %arg1: i32, %arg2: memref<1x4x256x8xbf16, #tpu.memory_space<vmem>>, %arg3: memref<1x4x8x384xbf16, #tpu.memory_space<vmem>>, %arg4: memref<1x4x384x8xbf16, #tpu.memory_space<vmem>>, %arg5: memref<1x256x32xf32, #tpu.memory_space<vmem>>) attributes {dimension_semantics = [#tpu.dimension_semantics<parallel>, #tpu.dimension_semantics<arbitrary>], iteration_bounds = array<i64: 2, 1>, scalar_prefetch = 0 : i64, scratch_operands = 0 : i64, tpu.core_type = #tpu.core_type<tc>, window_params = [{transform_indices = @transform_0, window_bounds = array<i64: 1, 4, 256, 8>}, {transform_indices = @transform_1, window_bounds = array<i64: 1, 4, 8, 384>}, {transform_indices = @transform_2, window_bounds = array<i64: 1, 4, 384, 8>}, {transform_indices = @transform_3, window_bounds = array<i64: 1, 256, 32>}]} {
    %0 = tpu.iota {dimensions = array<i32: 1>} : vector<1x384xi32>
    %c264_i32 = arith.constant 264 : i32
    %1 = vector.broadcast %c264_i32 : i32 to vector<1x384xi32>
    %2 = arith.cmpi slt, %0, %1 : vector<1x384xi32>
    %c0 = arith.constant 0 : index
    %c0_0 = arith.constant 0 : index
    %c0_1 = arith.constant 0 : index
    %c0_2 = arith.constant 0 : index
    %3 = vector.load %arg2[%c0, %c0_0, %c0_1, %c0_2] : memref<1x4x256x8xbf16, #tpu.memory_space<vmem>>, vector<1x1x256x8xbf16>
    %4 = vector.shape_cast %3 : vector<1x1x256x8xbf16> to vector<256x8xbf16>
    %c0_3 = arith.constant 0 : index
    %c0_4 = arith.constant 0 : index
    %c0_5 = arith.constant 0 : index
    %c0_6 = arith.constant 0 : index
    %5 = vector.load %arg3[%c0_3, %c0_4, %c0_5, %c0_6] : memref<1x4x8x384xbf16, #tpu.memory_space<vmem>>, vector<1x1x8x384xbf16>
    %6 = vector.shape_cast %5 : vector<1x1x8x384xbf16> to vector<8x384xbf16>
    %cst = arith.constant dense<0.000000e+00> : vector<256x384xf32>
    %7 = tpu.matmul %4, %6, %cst {dimension_numbers = #tpu.dot_dimension_numbers<[1], [0], [0], [1], [0, 0, 1, 1], [], []>} : vector<256x8xbf16>, vector<8x384xbf16>, vector<256x384xf32> -> vector<256x384xf32>
    %cst_7 = arith.constant 0xFF800000 : f32
    %8 = vector.shape_cast %2 : vector<1x384xi1> to vector<1x384xi1>
    %9 = vector.broadcast %8 : vector<1x384xi1> to vector<256x384xi1>
    %10 = vector.broadcast %cst_7 : f32 to vector<256x384xf32>
    %11 = arith.select %9, %7, %10 : vector<256x384xi1>, vector<256x384xf32>
    %cst_8 = arith.constant dense<0xFF800000> : vector<256xf32>
    %12 = vector.multi_reduction <maximumf>, %11, %cst_8 [1] : vector<256x384xf32> to vector<256xf32>
    %13 = vector.shape_cast %12 : vector<256xf32> to vector<256x1xf32>
    %14 = vector.broadcast %13 : vector<256x1xf32> to vector<256x384xf32>
    %15 = arith.subf %11, %14 : vector<256x384xf32>
    %16 = math.exp %15 : vector<256x384xf32>
    %cst_9 = arith.constant dense<0.000000e+00> : vector<256xf32>
    %17 = vector.multi_reduction <add>, %16, %cst_9 [1] : vector<256x384xf32> to vector<256xf32>
    %18 = vector.shape_cast %17 : vector<256xf32> to vector<256x1xf32>
    %19 = arith.truncf %16 : vector<256x384xf32> to vector<256x384xbf16>
    %c0_10 = arith.constant 0 : index
    %c0_11 = arith.constant 0 : index
    %c0_12 = arith.constant 0 : index
    %c0_13 = arith.constant 0 : index
    %20 = vector.load %arg4[%c0_10, %c0_11, %c0_12, %c0_13] : memref<1x4x384x8xbf16, #tpu.memory_space<vmem>>, vector<1x1x384x8xbf16>
    %21 = vector.shape_cast %20 : vector<1x1x384x8xbf16> to vector<384x8xbf16>
    %cst_14 = arith.constant dense<0.000000e+00> : vector<256x8xf32>
    %22 = tpu.matmul %19, %21, %cst_14 {dimension_numbers = #tpu.dot_dimension_numbers<[1], [0], [0], [1], [0, 0, 1, 1], [], []>} : vector<256x384xbf16>, vector<384x8xbf16>, vector<256x8xf32> -> vector<256x8xf32>
    %23 = tpu.reciprocal %18 {approx = true} : vector<256x1xf32> -> vector<256x1xf32>
    %24 = vector.broadcast %23 : vector<256x1xf32> to vector<256x8xf32>
    %25 = arith.mulf %22, %24 : vector<256x8xf32>
    %c0_15 = arith.constant 0 : index
    %c1 = arith.constant 1 : index
    %c0_16 = arith.constant 0 : index
    %c0_17 = arith.constant 0 : index
    %26 = vector.load %arg2[%c0_15, %c1, %c0_16, %c0_17] : memref<1x4x256x8xbf16, #tpu.memory_space<vmem>>, vector<1x1x256x8xbf16>
    %27 = vector.shape_cast %26 : vector<1x1x256x8xbf16> to vector<256x8xbf16>
    %c0_18 = arith.constant 0 : index
    %c1_19 = arith.constant 1 : index
    %c0_20 = arith.constant 0 : index
    %c0_21 = arith.constant 0 : index
    %28 = vector.load %arg3[%c0_18, %c1_19, %c0_20, %c0_21] : memref<1x4x8x384xbf16, #tpu.memory_space<vmem>>, vector<1x1x8x384xbf16>
    %29 = vector.shape_cast %28 : vector<1x1x8x384xbf16> to vector<8x384xbf16>
    %cst_22 = arith.constant dense<0.000000e+00> : vector<256x384xf32>
    %30 = tpu.matmul %27, %29, %cst_22 {dimension_numbers = #tpu.dot_dimension_numbers<[1], [0], [0], [1], [0, 0, 1, 1], [], []>} : vector<256x8xbf16>, vector<8x384xbf16>, vector<256x384xf32> -> vector<256x384xf32>
    %cst_23 = arith.constant 0xFF800000 : f32
    %31 = vector.shape_cast %2 : vector<1x384xi1> to vector<1x384xi1>
    %32 = vector.broadcast %31 : vector<1x384xi1> to vector<256x384xi1>
    %33 = vector.broadcast %cst_23 : f32 to vector<256x384xf32>
    %34 = arith.select %32, %30, %33 : vector<256x384xi1>, vector<256x384xf32>
    %cst_24 = arith.constant dense<0xFF800000> : vector<256xf32>
    %35 = vector.multi_reduction <maximumf>, %34, %cst_24 [1] : vector<256x384xf32> to vector<256xf32>
    %36 = vector.shape_cast %35 : vector<256xf32> to vector<256x1xf32>
    %37 = vector.broadcast %36 : vector<256x1xf32> to vector<256x384xf32>
    %38 = arith.subf %34, %37 : vector<256x384xf32>
    %39 = math.exp %38 : vector<256x384xf32>
    %cst_25 = arith.constant dense<0.000000e+00> : vector<256xf32>
    %40 = vector.multi_reduction <add>, %39, %cst_25 [1] : vector<256x384xf32> to vector<256xf32>
    %41 = vector.shape_cast %40 : vector<256xf32> to vector<256x1xf32>
    %42 = arith.truncf %39 : vector<256x384xf32> to vector<256x384xbf16>
    %c0_26 = arith.constant 0 : index
    %c1_27 = arith.constant 1 : index
    %c0_28 = arith.constant 0 : index
    %c0_29 = arith.constant 0 : index
    %43 = vector.load %arg4[%c0_26, %c1_27, %c0_28, %c0_29] : memref<1x4x384x8xbf16, #tpu.memory_space<vmem>>, vector<1x1x384x8xbf16>
    %44 = vector.shape_cast %43 : vector<1x1x384x8xbf16> to vector<384x8xbf16>
    %cst_30 = arith.constant dense<0.000000e+00> : vector<256x8xf32>
    %45 = tpu.matmul %42, %44, %cst_30 {dimension_numbers = #tpu.dot_dimension_numbers<[1], [0], [0], [1], [0, 0, 1, 1], [], []>} : vector<256x384xbf16>, vector<384x8xbf16>, vector<256x8xf32> -> vector<256x8xf32>
    %46 = tpu.reciprocal %41 {approx = true} : vector<256x1xf32> -> vector<256x1xf32>
    %47 = vector.broadcast %46 : vector<256x1xf32> to vector<256x8xf32>
    %48 = arith.mulf %45, %47 : vector<256x8xf32>
    %c0_31 = arith.constant 0 : index
    %c2 = arith.constant 2 : index
    %c0_32 = arith.constant 0 : index
    %c0_33 = arith.constant 0 : index
    %49 = vector.load %arg2[%c0_31, %c2, %c0_32, %c0_33] : memref<1x4x256x8xbf16, #tpu.memory_space<vmem>>, vector<1x1x256x8xbf16>
    %50 = vector.shape_cast %49 : vector<1x1x256x8xbf16> to vector<256x8xbf16>
    %c0_34 = arith.constant 0 : index
    %c2_35 = arith.constant 2 : index
    %c0_36 = arith.constant 0 : index
    %c0_37 = arith.constant 0 : index
    %51 = vector.load %arg3[%c0_34, %c2_35, %c0_36, %c0_37] : memref<1x4x8x384xbf16, #tpu.memory_space<vmem>>, vector<1x1x8x384xbf16>
    %52 = vector.shape_cast %51 : vector<1x1x8x384xbf16> to vector<8x384xbf16>
    %cst_38 = arith.constant dense<0.000000e+00> : vector<256x384xf32>
    %53 = tpu.matmul %50, %52, %cst_38 {dimension_numbers = #tpu.dot_dimension_numbers<[1], [0], [0], [1], [0, 0, 1, 1], [], []>} : vector<256x8xbf16>, vector<8x384xbf16>, vector<256x384xf32> -> vector<256x384xf32>
    %cst_39 = arith.constant 0xFF800000 : f32
    %54 = vector.shape_cast %2 : vector<1x384xi1> to vector<1x384xi1>
    %55 = vector.broadcast %54 : vector<1x384xi1> to vector<256x384xi1>
    %56 = vector.broadcast %cst_39 : f32 to vector<256x384xf32>
    %57 = arith.select %55, %53, %56 : vector<256x384xi1>, vector<256x384xf32>
    %cst_40 = arith.constant dense<0xFF800000> : vector<256xf32>
    %58 = vector.multi_reduction <maximumf>, %57, %cst_40 [1] : vector<256x384xf32> to vector<256xf32>
    %59 = vector.shape_cast %58 : vector<256xf32> to vector<256x1xf32>
    %60 = vector.broadcast %59 : vector<256x1xf32> to vector<256x384xf32>
    %61 = arith.subf %57, %60 : vector<256x384xf32>
    %62 = math.exp %61 : vector<256x384xf32>
    %cst_41 = arith.constant dense<0.000000e+00> : vector<256xf32>
    %63 = vector.multi_reduction <add>, %62, %cst_41 [1] : vector<256x384xf32> to vector<256xf32>
    %64 = vector.shape_cast %63 : vector<256xf32> to vector<256x1xf32>
    %65 = arith.truncf %62 : vector<256x384xf32> to vector<256x384xbf16>
    %c0_42 = arith.constant 0 : index
    %c2_43 = arith.constant 2 : index
    %c0_44 = arith.constant 0 : index
    %c0_45 = arith.constant 0 : index
    %66 = vector.load %arg4[%c0_42, %c2_43, %c0_44, %c0_45] : memref<1x4x384x8xbf16, #tpu.memory_space<vmem>>, vector<1x1x384x8xbf16>
    %67 = vector.shape_cast %66 : vector<1x1x384x8xbf16> to vector<384x8xbf16>
    %cst_46 = arith.constant dense<0.000000e+00> : vector<256x8xf32>
    %68 = tpu.matmul %65, %67, %cst_46 {dimension_numbers = #tpu.dot_dimension_numbers<[1], [0], [0], [1], [0, 0, 1, 1], [], []>} : vector<256x384xbf16>, vector<384x8xbf16>, vector<256x8xf32> -> vector<256x8xf32>
    %69 = tpu.reciprocal %64 {approx = true} : vector<256x1xf32> -> vector<256x1xf32>
    %70 = vector.broadcast %69 : vector<256x1xf32> to vector<256x8xf32>
    %71 = arith.mulf %68, %70 : vector<256x8xf32>
    %c0_47 = arith.constant 0 : index
    %c3 = arith.constant 3 : index
    %c0_48 = arith.constant 0 : index
    %c0_49 = arith.constant 0 : index
    %72 = vector.load %arg2[%c0_47, %c3, %c0_48, %c0_49] : memref<1x4x256x8xbf16, #tpu.memory_space<vmem>>, vector<1x1x256x8xbf16>
    %73 = vector.shape_cast %72 : vector<1x1x256x8xbf16> to vector<256x8xbf16>
    %c0_50 = arith.constant 0 : index
    %c3_51 = arith.constant 3 : index
    %c0_52 = arith.constant 0 : index
    %c0_53 = arith.constant 0 : index
    %74 = vector.load %arg3[%c0_50, %c3_51, %c0_52, %c0_53] : memref<1x4x8x384xbf16, #tpu.memory_space<vmem>>, vector<1x1x8x384xbf16>
    %75 = vector.shape_cast %74 : vector<1x1x8x384xbf16> to vector<8x384xbf16>
    %cst_54 = arith.constant dense<0.000000e+00> : vector<256x384xf32>
    %76 = tpu.matmul %73, %75, %cst_54 {dimension_numbers = #tpu.dot_dimension_numbers<[1], [0], [0], [1], [0, 0, 1, 1], [], []>} : vector<256x8xbf16>, vector<8x384xbf16>, vector<256x384xf32> -> vector<256x384xf32>
    %cst_55 = arith.constant 0xFF800000 : f32
    %77 = vector.shape_cast %2 : vector<1x384xi1> to vector<1x384xi1>
    %78 = vector.broadcast %77 : vector<1x384xi1> to vector<256x384xi1>
    %79 = vector.broadcast %cst_55 : f32 to vector<256x384xf32>
    %80 = arith.select %78, %76, %79 : vector<256x384xi1>, vector<256x384xf32>
    %cst_56 = arith.constant dense<0xFF800000> : vector<256xf32>
    %81 = vector.multi_reduction <maximumf>, %80, %cst_56 [1] : vector<256x384xf32> to vector<256xf32>
    %82 = vector.shape_cast %81 : vector<256xf32> to vector<256x1xf32>
    %83 = vector.broadcast %82 : vector<256x1xf32> to vector<256x384xf32>
    %84 = arith.subf %80, %83 : vector<256x384xf32>
    %85 = math.exp %84 : vector<256x384xf32>
    %cst_57 = arith.constant dense<0.000000e+00> : vector<256xf32>
    %86 = vector.multi_reduction <add>, %85, %cst_57 [1] : vector<256x384xf32> to vector<256xf32>
    %87 = vector.shape_cast %86 : vector<256xf32> to vector<256x1xf32>
    %88 = arith.truncf %85 : vector<256x384xf32> to vector<256x384xbf16>
    %c0_58 = arith.constant 0 : index
    %c3_59 = arith.constant 3 : index
    %c0_60 = arith.constant 0 : index
    %c0_61 = arith.constant 0 : index
    %89 = vector.load %arg4[%c0_58, %c3_59, %c0_60, %c0_61] : memref<1x4x384x8xbf16, #tpu.memory_space<vmem>>, vector<1x1x384x8xbf16>
    %90 = vector.shape_cast %89 : vector<1x1x384x8xbf16> to vector<384x8xbf16>
    %cst_62 = arith.constant dense<0.000000e+00> : vector<256x8xf32>
    %91 = tpu.matmul %88, %90, %cst_62 {dimension_numbers = #tpu.dot_dimension_numbers<[1], [0], [0], [1], [0, 0, 1, 1], [], []>} : vector<256x384xbf16>, vector<384x8xbf16>, vector<256x8xf32> -> vector<256x8xf32>
    %92 = tpu.reciprocal %87 {approx = true} : vector<256x1xf32> -> vector<256x1xf32>
    %93 = vector.broadcast %92 : vector<256x1xf32> to vector<256x8xf32>
    %94 = arith.mulf %91, %93 : vector<256x8xf32>
    %95 = tpu.concatenate %25, %48, %71, %94 in 1 : vector<256x8xf32>, vector<256x8xf32>, vector<256x8xf32>, vector<256x8xf32> -> vector<256x32xf32>
    %c0_63 = arith.constant 0 : index
    %c0_64 = arith.constant 0 : index
    %c0_65 = arith.constant 0 : index
    %96 = vector.load %arg5[%c0_63, %c0_64, %c0_65] : memref<1x256x32xf32, #tpu.memory_space<vmem>>, vector<1x256x32xf32>
    %97 = vector.shape_cast %96 : vector<1x256x32xf32> to vector<256x32xf32>
    %98 = vector.shape_cast %95 : vector<256x32xf32> to vector<1x256x32xf32>
    tpu.vector_store %arg5[%c0_63, %c0_64, %c0_65], %98 {strides = array<i32>} : memref<1x256x32xf32, #tpu.memory_space<vmem>>, vector<1x256x32xf32>,
    return
  }
  func.func @transform_0(%arg0: i32, %arg1: i32) -> (i32, i32, i32, i32) {
    %c0_i32 = arith.constant 0 : i32
    %c0_i32_0 = arith.constant 0 : i32
    %c0_i32_1 = arith.constant 0 : i32
    return %arg0, %c0_i32, %arg1, %c0_i32_0 : i32, i32, i32, i32
  }
  func.func @transform_1(%arg0: i32, %arg1: i32) -> (i32, i32, i32, i32) {
    %c0_i32 = arith.constant 0 : i32
    %c0_i32_0 = arith.constant 0 : i32
    %c0_i32_1 = arith.constant 0 : i32
    %c0_i32_2 = arith.constant 0 : i32
    return %arg0, %c0_i32, %c0_i32_0, %c0_i32_1 : i32, i32, i32, i32
  }
  func.func @transform_2(%arg0: i32, %arg1: i32) -> (i32, i32, i32, i32) {
    %c0_i32 = arith.constant 0 : i32
    %c0_i32_0 = arith.constant 0 : i32
    %c0_i32_1 = arith.constant 0 : i32
    %c0_i32_2 = arith.constant 0 : i32
    return %arg0, %c0_i32, %c0_i32_0, %c0_i32_1 : i32, i32, i32, i32
  }
  func.func @transform_3(%arg0: i32, %arg1: i32) -> (i32, i32, i32) {
    %c0_i32 = arith.constant 0 : i32
    %c0_i32_0 = arith.constant 0 : i32
    return %arg0, %arg1, %c0_i32 : i32, i32, i32
  }
}

</mosaic_0001>

<llo_original>
// kernel: tpu_custom_call.1
$region0: #{tpu_custom_call.1}
  #allocation0 [shape = 'u32[]', space=smem, size = 0x4, offset = 0x4, fixed_abs, tag = 'smem constant byte address 0x4 - core index']
  #allocation1 [shape = 'u32[144,128]{1,0:T(1,128)}', space=vmem, size = 0x12000, scoped, tag = 'internal scratch']
  %s0 = inlined_call_operand.vmem [shape: bf16[2,4,256,8], index: 0, kind: input, shape index: {}]
  %s1 = inlined_call_operand.vmem [shape: bf16[2,4,8,384], index: 1, kind: input, shape index: {}]
  %s2 = inlined_call_operand.vmem [shape: bf16[2,4,384,8], index: 2, kind: input, shape index: {}]
  %s3 = inlined_call_operand.vmem [shape: f32[2,256,32], index: 3, kind: output, shape index: {}]
  %s4 = sld [smem:[#allocation0]]
  $region45: #{tpu_custom_call.1} parent=0
    _
  %s6 = ssub.s32 1, %s4
  %s7 = scalar_select 0, %s6, %s4
  loop: start=0, step=1, limit=4
  $region2: #{tpu_custom_call.1} parent=0 // loop_pre_header
    _
  $region3: #{tpu_custom_call.1} parent=0 // loop_header
    %s9 = sphi 0, %s13
    %p10 = scmp.ge.s32.totalorder %s9, 4
    %s16 = sphi 0, %s28
    %s17 = sphi 0, %s24
    %s18 = sphi 0, %s16
    %s19 = sphi 0, %s17
    %s20 = sphi 0, %s18
    %s21 = sphi 0, %s19
    %s33 = sphi 0, %s35
    %s36 = sphi 0, %s33
    %s37 = sphi 0, %s36
    %s53 = sphi 0, %s37
    %s59 = sphi 0, %s61
    %s62 = sphi 0, %s59
    %s63 = sphi 0, %s62
    %s79 = sphi 0, %s63
    %s85 = sphi 0, %s87
    %s88 = sphi 0, %s85
    %s89 = sphi 0, %s88
    %s105 = sphi 0, %s89
    %s113 = sphi 0, %s115
    %s116 = sphi 0, %s113
    %s117 = sphi 0, %s116
    %s133 = sphi 0, %s117
  $region4: #{tpu_custom_call.1} parent=0 // loop_header_branch
    %12 = sbr.rel (%p10) target = $region8
  $region5: #{tpu_custom_call.1} parent=0 // loop_body
    %s14 = ssub.s32 %s9, 1
    %s15 = ssub.s32 %s9, 2
    %s22 = sadd.s32 1, %s17
    %p23 = scmp.ge.s32.totalorder %s22, 1
    %s24 = scalar_select %p23, 0, %s22
    %s25 = sadd.s32 1, %s16
    %s26 = scalar_select %p23, %s25, %s16
    %p27 = scmp.ge.s32.totalorder %s26, 2
    %s28 = scalar_select %p27, 0, %s26
    %s29 = ssub.s32 %s16, %s28
    %s30 = ssub.s32 %s17, %s24
    %s31 = sor.u32 %s29, %s30
    %p32 = scmp.eq.s32.totalorder %s31, 0
    %s34 = sadd.s32 %s33, 1
    %s35 = scalar_select %p32, %s33, %s34
    %p38 = pneg %p32
    %p39 = scmp.eq.s32.totalorder %s9, 1
    %p40 = por %p38, %p39
    %p41 = scmp.ne.s32.totalorder %s33, %s36
    %p42 = scmp.eq.s32.totalorder %s9, 0
    %p43 = por %p41, %p42
    %p44 = scmp.ne.s32.totalorder %s33, %s36
    %p45 = scmp.eq.s32.totalorder %s14, 1
    %p46 = por %p44, %p45
    %p47 = scmp.ne.s32.totalorder %s36, %s37
    %p48 = scmp.eq.s32.totalorder %s14, 0
    %p49 = por %p47, %p48
    %p50 = scmp.ne.s32.totalorder %s36, %s37
    %p51 = scmp.eq.s32.totalorder %s15, 1
    %p52 = por %p50, %p51
    %p54 = scmp.ne.s32.totalorder %s37, %s53
    %p55 = scmp.eq.s32.totalorder %s15, 0
    %p56 = por %p54, %p55
    %s57 = ssub.s32 %s16, %s28
    %p58 = scmp.eq.s32.totalorder %s57, 0
    %s60 = sadd.s32 %s59, 1
    %s61 = scalar_select %p58, %s59, %s60
    %p64 = pneg %p58
    %p65 = scmp.eq.s32.totalorder %s9, 1
    %p66 = por %p64, %p65
    %p67 = scmp.ne.s32.totalorder %s59, %s62
    %p68 = scmp.eq.s32.totalorder %s9, 0
    %p69 = por %p67, %p68
    %p70 = scmp.ne.s32.totalorder %s59, %s62
    %p71 = scmp.eq.s32.totalorder %s14, 1
    %p72 = por %p70, %p71
    %p73 = scmp.ne.s32.totalorder %s62, %s63
    %p74 = scmp.eq.s32.totalorder %s14, 0
    %p75 = por %p73, %p74
    %p76 = scmp.ne.s32.totalorder %s62, %s63
    %p77 = scmp.eq.s32.totalorder %s15, 1
    %p78 = por %p76, %p77
    %p80 = scmp.ne.s32.totalorder %s63, %s79
    %p81 = scmp.eq.s32.totalorder %s15, 0
    %p82 = por %p80, %p81
    %s83 = ssub.s32 %s16, %s28
    %p84 = scmp.eq.s32.totalorder %s83, 0
    %s86 = sadd.s32 %s85, 1
    %s87 = scalar_select %p84, %s85, %s86
    %p90 = pneg %p84
    %p91 = scmp.eq.s32.totalorder %s9, 1
    %p92 = por %p90, %p91
    %p93 = scmp.ne.s32.totalorder %s85, %s88
    %p94 = scmp.eq.s32.totalorder %s9, 0
    %p95 = por %p93, %p94
    %p96 = scmp.ne.s32.totalorder %s85, %s88
    %p97 = scmp.eq.s32.totalorder %s14, 1
    %p98 = por %p96, %p97
    %p99 = scmp.ne.s32.totalorder %s88, %s89
    %p100 = scmp.eq.s32.totalorder %s14, 0
    %p101 = por %p99, %p100
    %p102 = scmp.ne.s32.totalorder %s88, %s89
    %p103 = scmp.eq.s32.totalorder %s15, 1
    %p104 = por %p102, %p103
    %p106 = scmp.ne.s32.totalorder %s89, %s105
    %p107 = scmp.eq.s32.totalorder %s15, 0
    %p108 = por %p106, %p107
    %s109 = ssub.s32 %s16, %s28
    %s110 = ssub.s32 %s17, %s24
    %s111 = sor.u32 %s109, %s110
    %p112 = scmp.eq.s32.totalorder %s111, 0
    %s114 = sadd.s32 %s113, 1
    %s115 = scalar_select %p112, %s113, %s114
    %p118 = pneg %p112
    %p119 = scmp.eq.s32.totalorder %s9, 1
    %p120 = por %p118, %p119
    %p121 = scmp.ne.s32.totalorder %s113, %s116
    %p122 = scmp.eq.s32.totalorder %s9, 0
    %p123 = por %p121, %p122
    %p124 = scmp.ne.s32.totalorder %s113, %s116
    %p125 = scmp.eq.s32.totalorder %s14, 1
    %p126 = por %p124, %p125
    %p127 = scmp.ne.s32.totalorder %s116, %s117
    %p128 = scmp.eq.s32.totalorder %s14, 0
    %p129 = por %p127, %p128
    %p130 = scmp.ne.s32.totalorder %s116, %s117
    %p131 = scmp.eq.s32.totalorder %s15, 1
    %p132 = por %p130, %p131
    %p134 = scmp.ne.s32.totalorder %s117, %s133
    %p135 = scmp.eq.s32.totalorder %s15, 0
    %p136 = por %p134, %p135
    %p137 = scmp.le.s32.totalorder 1, %s9
    %p138 = scmp.lt.s32.totalorder %s9, 3
    %p139 = pnand %p137, %p138
    %p140 = pneg %p139
    // Predicated region
    $region9: #{tpu_custom_call.1} parent=5 // pred_check
      _
    $region10: #{tpu_custom_call.1} parent=5 // pred_check_branch
      %142 = sbr.rel (%p139) target = $region12
    $region11: #{tpu_custom_call.1} parent=5 // pred_region
      %s143 = ssub.s32 %s9, 1
    $region12: #{tpu_custom_call.1} parent=5 // pred_fallthru
      _
    %p144 = scmp.lt.s32.totalorder %s9, 2
    // Predicated region
    $region13: #{tpu_custom_call.1} parent=5 // pred_check
      %p145 = pneg %p144
    $region14: #{tpu_custom_call.1} parent=5 // pred_check_branch
      %147 = sbr.rel (%p145) target = $region16
    $region15: #{tpu_custom_call.1} parent=5 // pred_region
      // Predicated region
      $region17: #{tpu_custom_call.1} parent=15 // pred_check
        %p148 = pneg %p43
      $region18: #{tpu_custom_call.1} parent=15 // pred_check_branch
        %150 = sbr.rel (%p148) target = $region20
      $region19: #{tpu_custom_call.1} parent=15 // pred_region
        %s151 = smul.u32 32, %s17
        %p152 = scmp.lt.s32.totalorder %s16, 1
        %s153 = scalar_select %p152, %s16, 1
        %p154 = scmp.lt.s32.totalorder %s151, 31
        %s155 = scalar_select %p154, %s151, 31
        %s156 = smul.addr %s153, 128
        %s157 = sadd.s32 %s155, %s156
        %s158 = smul.addr %s157, 4
        %s159 = scalar_lea.vmem %s0, %s158
        %s160 = smul.u32 32, %s17
      $region20: #{tpu_custom_call.1} parent=15 // pred_fallthru
        _
      // Predicated region
      $region21: #{tpu_custom_call.1} parent=15 // pred_check
        %p161 = pneg %p69
      $region22: #{tpu_custom_call.1} parent=15 // pred_check_branch
        %163 = sbr.rel (%p161) target = $region24
      $region23: #{tpu_custom_call.1} parent=15 // pred_region
        %p164 = scmp.lt.s32.totalorder %s16, 1
        %s165 = scalar_select %p164, %s16, 1
        %s166 = smul.addr %s165, 12
        %s167 = smul.addr %s166, 4
        %s168 = scalar_lea.vmem %s1, %s167
      $region24: #{tpu_custom_call.1} parent=15 // pred_fallthru
        _
      // Predicated region
      $region25: #{tpu_custom_call.1} parent=15 // pred_check
        %p169 = pneg %p95
      $region26: #{tpu_custom_call.1} parent=15 // pred_check_branch
        %171 = sbr.rel (%p169) target = $region28
      $region27: #{tpu_custom_call.1} parent=15 // pred_region
        %p172 = scmp.lt.s32.totalorder %s16, 1
        %s173 = scalar_select %p172, %s16, 1
        %s174 = smul.addr %s173, 192
        %s175 = smul.addr %s174, 4
        %s176 = scalar_lea.vmem %s2, %s175
      $region28: #{tpu_custom_call.1} parent=15 // pred_fallthru
        _
    $region16: #{tpu_custom_call.1} parent=5 // pred_fallthru
      _
    %p177 = scmp.le.s32.totalorder 1, %s9
    %p178 = scmp.lt.s32.totalorder %s9, 3
    %p179 = pnand %p177, %p178
    %p180 = pneg %p179
    // Predicated region
    $region29: #{tpu_custom_call.1} parent=5 // pred_check
      _
    $region30: #{tpu_custom_call.1} parent=5 // pred_check_branch
      %182 = sbr.rel (%p179) target = $region32
    $region31: #{tpu_custom_call.1} parent=5 // pred_region
      %s183 = ssub.s32 %s9, 1
      %s184 = smul.u32 32, %s19
      %p185 = scmp.lt.s32.totalorder %s18, 1
      %s186 = scalar_select %p185, %s18, 1
      %p187 = scmp.lt.s32.totalorder %s184, 31
      %s188 = scalar_select %p187, %s184, 31
      %s189 = smul.addr %s186, 128
      %s190 = sadd.s32 %s188, %s189
      %s191 = smul.addr %s190, 4
      %s192 = scalar_lea.vmem %s0, %s191
      %p193 = pneg %p49
      %p194 = pneg %p46
      %p195 = scmp.lt.s32.totalorder %s18, 1
      %s196 = scalar_select %p195, %s18, 1
      %s197 = smul.addr %s196, 12
      %s198 = smul.addr %s197, 4
      %s199 = scalar_lea.vmem %s1, %s198
      %p200 = pneg %p75
      %p201 = pneg %p72
      %p202 = scmp.lt.s32.totalorder %s18, 1
      %s203 = scalar_select %p202, %s18, 1
      %s204 = smul.addr %s203, 192
      %s205 = smul.addr %s204, 4
      %s206 = scalar_lea.vmem %s2, %s205
      %p207 = pneg %p101
      %p208 = pneg %p98
      %p209 = pneg %p129
      %p210 = pneg %p126
      %s211 = smul.u32 32, %s19
      %p212 = scmp.lt.s32.totalorder %s18, 1
      %s213 = scalar_select %p212, %s18, 1
      %p214 = scmp.lt.s32.totalorder %s211, 31
      %s215 = scalar_select %p214, %s211, 31
      %s216 = smul.addr %s213, 32
      %s217 = sadd.s32 %s215, %s216
      %s218 = smul.addr %s217, 8
      %s219 = scalar_lea.vmem %s3, %s218
      %s220 = smul.u32 32, %s19
      %p221 = scmp.lt.s32.totalorder %s18, 1
      %s222 = scalar_select %p221, %s18, 1
      %p223 = scmp.lt.s32.totalorder %s220, 31
      %s224 = scalar_select %p223, %s220, 31
      %s225 = smul.addr %s222, 128
      %s226 = sadd.s32 %s224, %s225
      %s227 = smul.addr %s226, 4
      %s228 = scalar_lea.vmem %s0, %s227
      %s229 = smul.u32 32, %s19
      %p230 = scmp.lt.s32.totalorder %s18, 1
      %s231 = scalar_select %p230, %s18, 1
      %s232 = smul.addr %s231, 12
      %s233 = smul.addr %s232, 4
      %s234 = scalar_lea.vmem %s1, %s233
      %p235 = scmp.lt.s32.totalorder %s18, 1
      %s236 = scalar_select %p235, %s18, 1
      %s237 = smul.addr %s236, 192
      %s238 = smul.addr %s237, 4
      %s239 = scalar_lea.vmem %s2, %s238
      %s240 = smul.u32 32, %s19
      %p241 = scmp.lt.s32.totalorder %s18, 1
      %s242 = scalar_select %p241, %s18, 1
      %p243 = scmp.lt.s32.totalorder %s240, 31
      %s244 = scalar_select %p243, %s240, 31
      %s245 = smul.addr %s242, 32
      %s246 = sadd.s32 %s244, %s245
      %s247 = smul.addr %s246, 8
      %s248 = scalar_lea.vmem %s3, %s247
      %s249 = smul.u32 32, %s19
      %v251 = vlaneseq
      %v252 = vand.u32 %v251, 127
      %v253 = vadd.s32 %v252, 128
      %v254 = vadd.s32 %v252, 256
      %vm255 = vcmp.lt.s32.totalorder %v252, 264
      %vm256 = vcmp.lt.s32.totalorder %v253, 264
      %vm257 = vcmp.lt.s32.totalorder %v254, 264
      %v258 = vld [vmem:[%s228] sm:$0xf]
      %v259 = vld [vmem:[%s228 + $0x4] sm:$0xf]
      %v260 = vld [vmem:[%s228 + $0x8] sm:$0xf]
      %v261 = vld [vmem:[%s228 + $0xc] sm:$0xf]
      %v262 = vld [vmem:[%s228 + $0x10] sm:$0xf]
      %v263 = vld [vmem:[%s228 + $0x14] sm:$0xf]
      %v264 = vld [vmem:[%s228 + $0x18] sm:$0xf]
      %v265 = vld [vmem:[%s228 + $0x1c] sm:$0xf]
      %v266 = vld [vmem:[%s228 + $0x20] sm:$0xf]
      %v267 = vld [vmem:[%s228 + $0x24] sm:$0xf]
      %v268 = vld [vmem:[%s228 + $0x28] sm:$0xf]
      %v269 = vld [vmem:[%s228 + $0x2c] sm:$0xf]
      %v270 = vld [vmem:[%s228 + $0x30] sm:$0xf]
      %v271 = vld [vmem:[%s228 + $0x34] sm:$0xf]
      %v272 = vld [vmem:[%s228 + $0x38] sm:$0xf]
      %v273 = vld [vmem:[%s228 + $0x3c] sm:$0xf]
      %v274 = vld [vmem:[%s228 + $0x40] sm:$0xf]
      %v275 = vld [vmem:[%s228 + $0x44] sm:$0xf]
      %v276 = vld [vmem:[%s228 + $0x48] sm:$0xf]
      %v277 = vld [vmem:[%s228 + $0x4c] sm:$0xf]
      %v278 = vld [vmem:[%s228 + $0x50] sm:$0xf]
      %v279 = vld [vmem:[%s228 + $0x54] sm:$0xf]
      %v280 = vld [vmem:[%s228 + $0x58] sm:$0xf]
      %v281 = vld [vmem:[%s228 + $0x5c] sm:$0xf]
      %v282 = vld [vmem:[%s228 + $0x60] sm:$0xf]
      %v283 = vld [vmem:[%s228 + $0x64] sm:$0xf]
      %v284 = vld [vmem:[%s228 + $0x68] sm:$0xf]
      %v285 = vld [vmem:[%s228 + $0x6c] sm:$0xf]
      %v286 = vld [vmem:[%s228 + $0x70] sm:$0xf]
      %v287 = vld [vmem:[%s228 + $0x74] sm:$0xf]
      %v288 = vld [vmem:[%s228 + $0x78] sm:$0xf]
      %v289 = vld [vmem:[%s228 + $0x7c] sm:$0xf]
      %v290 = vld [vmem:[%s234] sm:$0xff]
      %v291 = vld [vmem:[%s234 + $0x8] sm:$0xf]
      %v324 = vunpack.c.l.b16 %v258
      %v325 = vunpack.c.l.b16 %v259
      %v326 = vunpack.c.l.b16 %v260
      %v327 = vunpack.c.l.b16 %v261
      %v328 = vunpack.c.l.b16 %v262
      %v329 = vunpack.c.l.b16 %v263
      %v330 = vunpack.c.l.b16 %v264
      %v331 = vunpack.c.l.b16 %v265
      %v332 = vunpack.c.l.b16 %v266
      %v333 = vunpack.c.l.b16 %v267
      %v334 = vunpack.c.l.b16 %v268
      %v335 = vunpack.c.l.b16 %v269
      %v336 = vunpack.c.l.b16 %v270
      %v337 = vunpack.c.l.b16 %v271
      %v338 = vunpack.c.l.b16 %v272
      %v339 = vunpack.c.l.b16 %v273
      %v340 = vunpack.c.l.b16 %v274
      %v341 = vunpack.c.l.b16 %v275
      %v342 = vunpack.c.l.b16 %v276
      %v343 = vunpack.c.l.b16 %v277
      %v344 = vunpack.c.l.b16 %v278
      %v345 = vunpack.c.l.b16 %v279
      %v346 = vunpack.c.l.b16 %v280
      %v347 = vunpack.c.l.b16 %v281
      %v348 = vunpack.c.l.b16 %v282
      %v349 = vunpack.c.l.b16 %v283
      %v350 = vunpack.c.l.b16 %v284
      %v351 = vunpack.c.l.b16 %v285
      %v352 = vunpack.c.l.b16 %v286
      %v353 = vunpack.c.l.b16 %v287
      %v354 = vunpack.c.l.b16 %v288
      %v355 = vunpack.c.l.b16 %v289
      %v356 = vpack.c.b16 %v325, %v324
      %v357 = vpack.c.b16 %v327, %v326
      %v358 = vpack.c.b16 %v329, %v328
      %v359 = vpack.c.b16 %v331, %v330
      %v360 = vpack.c.b16 %v333, %v332
      %v361 = vpack.c.b16 %v335, %v334
      %v362 = vpack.c.b16 %v337, %v336
      %v363 = vpack.c.b16 %v339, %v338
      %v364 = vpack.c.b16 %v341, %v340
      %v365 = vpack.c.b16 %v343, %v342
      %v366 = vpack.c.b16 %v345, %v344
      %v367 = vpack.c.b16 %v347, %v346
      %v368 = vpack.c.b16 %v349, %v348
      %v369 = vpack.c.b16 %v351, %v350
      %v370 = vpack.c.b16 %v353, %v352
      %v371 = vpack.c.b16 %v355, %v354
      %v374 = vunpack.c.l.b16 %v290
      %v375 = vunpack.c.h.b16 %v290
      %v376 = vunpack.c.l.b16 %v291
      %v377 = vpack.c.b16 %v374, %v374
      %v378 = vpack.c.b16 %v375, %v375
      %v379 = vpack.c.b16 %v376, %v376
      %vm380 = vcmask 64512
      %v382 = vsel %vm380, %v356, 0
      %v385 = vsel %vm380, %v357, 0
      %v388 = vsel %vm380, %v358, 0
      %v391 = vsel %vm380, %v359, 0
      %v394 = vsel %vm380, %v360, 0
      %v397 = vsel %vm380, %v361, 0
      %v400 = vsel %vm380, %v362, 0
      %v403 = vsel %vm380, %v363, 0
      %v406 = vsel %vm380, %v364, 0
      %v409 = vsel %vm380, %v365, 0
      %v412 = vsel %vm380, %v366, 0
      %v415 = vsel %vm380, %v367, 0
      %v418 = vsel %vm380, %v368, 0
      %v421 = vsel %vm380, %v369, 0
      %v424 = vsel %vm380, %v370, 0
      %v427 = vsel %vm380, %v371, 0
      %vm429 = vcmask 1043456
      %v431 = vsel %vm429, %v377, 0
      %v434 = vsel %vm429, %v378, 0
      %v437 = vsel %vm429, %v379, 0
      %439 = vmatprep.subr.bf16.mxu0 %v434
      %440 = vmatpush1.bf16.msra.mxu0 %v431
      %441 = vmatprep.subr.bf16.mxu0 0
      %442 = vmatpush1.bf16.msra.mxu0 0
      %443 = vmatprep.subr.bf16.mxu0 0
      %444 = vmatpush1.bf16.msra.mxu0 0
      %445 = vmatprep.subr.bf16.mxu0 0
      %446 = vmatpush1.bf16.msra.mxu0 0
      %447 = vmatprep.subr.bf16.mxu0 0
      %448 = vmatpush1.bf16.msra.mxu0 0
      %449 = vmatprep.subr.bf16.mxu0 0
      %450 = vmatpush1.bf16.msra.mxu0 0
      %451 = vmatprep.subr.bf16.mxu0 0
      %452 = vmatpush1.bf16.msra.mxu0 0
      %453 = vmatprep.subr.bf16.mxu0 0
      %454 = vmatpush1.bf16.msra.mxu0 0
      %455 = vmatprep.subr.bf16.mxu0 0
      %456 = vmatpush1.bf16.msra.mxu0 0
      %457 = vmatprep.subr.bf16.mxu0 0
      %458 = vmatpush1.bf16.msra.mxu0 0
      %459 = vmatprep.subr.bf16.mxu0 0
      %460 = vmatpush1.bf16.msra.mxu0 0
      %461 = vmatprep.subr.bf16.mxu0 0
      %462 = vmatpush1.bf16.msra.mxu0 0
      %463 = vmatprep.subr.bf16.mxu0 0
      %464 = vmatpush1.bf16.msra.mxu0 0
      %465 = vmatprep.subr.bf16.mxu0 0
      %466 = vmatpush1.bf16.msra.mxu0 0
      %467 = vmatprep.subr.bf16.mxu0 0
      %468 = vmatpush1.bf16.msra.mxu0 0
      %469 = vmatprep.subr.bf16.mxu0 0
      %470 = vmatpush1.bf16.msra.mxu0 0
      %471 = vmatprep.mubr.bf16.mxu0 0
      %472 = vmatmul.mubr.bf16.gmra.mrb[0].mxu0 %v382
      %v473 = vpop.f32.mrb[0].mxu0
      %v474 = vadd.f32 0.0, %v473
      %v475 = vpop.f32.mrb[0].mxu0
      %v476 = vadd.f32 0.0, %v475
      %v477 = vpop.f32.mrb[0].mxu0
      %v478 = vadd.f32 0.0, %v477
      %v479 = vpop.f32.mrb[0].mxu0
      %v480 = vadd.f32 0.0, %v479
      %481 = vmatprep.mubr.bf16.mxu0 0
      %482 = vmatmul.mubr.bf16.gmra.mrb[0].mxu0 %v385
      %v483 = vpop.f32.mrb[0].mxu0
      %v484 = vadd.f32 0.0, %v483
      %v485 = vpop.f32.mrb[0].mxu0
      %v486 = vadd.f32 0.0, %v485
      %v487 = vpop.f32.mrb[0].mxu0
      %v488 = vadd.f32 0.0, %v487
      %v489 = vpop.f32.mrb[0].mxu0
      %v490 = vadd.f32 0.0, %v489
      %491 = vmatprep.mubr.bf16.mxu0 0
      %492 = vmatmul.mubr.bf16.gmra.mrb[0].mxu0 %v388
      %v493 = vpop.f32.mrb[0].mxu0
      %v494 = vadd.f32 0.0, %v493
      %v495 = vpop.f32.mrb[0].mxu0
      %v496 = vadd.f32 0.0, %v495
      %v497 = vpop.f32.mrb[0].mxu0
      %v498 = vadd.f32 0.0, %v497
      %v499 = vpop.f32.mrb[0].mxu0
      %v500 = vadd.f32 0.0, %v499
      %501 = vmatprep.mubr.bf16.mxu0 0
      %502 = vmatmul.mubr.bf16.gmra.mrb[0].mxu0 %v391
      %v503 = vpop.f32.mrb[0].mxu0
      %v504 = vadd.f32 0.0, %v503
      %v505 = vpop.f32.mrb[0].mxu0
      %v506 = vadd.f32 0.0, %v505
      %v507 = vpop.f32.mrb[0].mxu0
      %v508 = vadd.f32 0.0, %v507
      %v509 = vpop.f32.mrb[0].mxu0
      %v510 = vadd.f32 0.0, %v509
      %511 = vmatprep.mubr.bf16.mxu0 0
      %512 = vmatmul.mubr.bf16.gmra.mrb[0].mxu0 %v394
      %v513 = vpop.f32.mrb[0].mxu0
      %v514 = vadd.f32 0.0, %v513
      %v515 = vpop.f32.mrb[0].mxu0
      %v516 = vadd.f32 0.0, %v515
      %v517 = vpop.f32.mrb[0].mxu0
      %v518 = vadd.f32 0.0, %v517
      %v519 = vpop.f32.mrb[0].mxu0
      %v520 = vadd.f32 0.0, %v519
      %521 = vmatprep.mubr.bf16.mxu0 0
      %522 = vmatmul.mubr.bf16.gmra.mrb[0].mxu0 %v397
      %v523 = vpop.f32.mrb[0].mxu0
      %v524 = vadd.f32 0.0, %v523
      %v525 = vpop.f32.mrb[0].mxu0
      %v526 = vadd.f32 0.0, %v525
      %v527 = vpop.f32.mrb[0].mxu0
      %v528 = vadd.f32 0.0, %v527
      %v529 = vpop.f32.mrb[0].mxu0
      %v530 = vadd.f32 0.0, %v529
      %531 = vmatprep.mubr.bf16.mxu0 0
      %532 = vmatmul.mubr.bf16.gmra.mrb[0].mxu0 %v400
      %v533 = vpop.f32.mrb[0].mxu0
      %v534 = vadd.f32 0.0, %v533
      %v535 = vpop.f32.mrb[0].mxu0
      %v536 = vadd.f32 0.0, %v535
      %v537 = vpop.f32.mrb[0].mxu0
      %v538 = vadd.f32 0.0, %v537
      %v539 = vpop.f32.mrb[0].mxu0
      %v540 = vadd.f32 0.0, %v539
      %541 = vmatprep.mubr.bf16.mxu0 0
      %542 = vmatmul.mubr.bf16.gmra.mrb[0].mxu0 %v403
      %v543 = vpop.f32.mrb[0].mxu0
      %v544 = vadd.f32 0.0, %v543
      %v545 = vpop.f32.mrb[0].mxu0
      %v546 = vadd.f32 0.0, %v545
      %v547 = vpop.f32.mrb[0].mxu0
      %v548 = vadd.f32 0.0, %v547
      %v549 = vpop.f32.mrb[0].mxu0
      %v550 = vadd.f32 0.0, %v549
      %551 = vmatprep.mubr.bf16.mxu0 0
      %552 = vmatmul.mubr.bf16.gmra.mrb[0].mxu0 %v406
      %v553 = vpop.f32.mrb[0].mxu0
      %v554 = vadd.f32 0.0, %v553
      %v555 = vpop.f32.mrb[0].mxu0
      %v556 = vadd.f32 0.0, %v555
      %v557 = vpop.f32.mrb[0].mxu0
      %v558 = vadd.f32 0.0, %v557
      %v559 = vpop.f32.mrb[0].mxu0
      %v560 = vadd.f32 0.0, %v559
      %561 = vmatprep.mubr.bf16.mxu0 0
      %562 = vmatmul.mubr.bf16.gmra.mrb[0].mxu0 %v409
      %v563 = vpop.f32.mrb[0].mxu0
      %v564 = vadd.f32 0.0, %v563
      %v565 = vpop.f32.mrb[0].mxu0
      %v566 = vadd.f32 0.0, %v565
      %v567 = vpop.f32.mrb[0].mxu0
      %v568 = vadd.f32 0.0, %v567
      %v569 = vpop.f32.mrb[0].mxu0
      %v570 = vadd.f32 0.0, %v569
      %571 = vmatprep.mubr.bf16.mxu0 0
      %572 = vmatmul.mubr.bf16.gmra.mrb[0].mxu0 %v412
      %v573 = vpop.f32.mrb[0].mxu0
      %v574 = vadd.f32 0.0, %v573
      %v575 = vpop.f32.mrb[0].mxu0
      %v576 = vadd.f32 0.0, %v575
      %v577 = vpop.f32.mrb[0].mxu0
      %v578 = vadd.f32 0.0, %v577
      %v579 = vpop.f32.mrb[0].mxu0
      %v580 = vadd.f32 0.0, %v579
      %581 = vmatprep.mubr.bf16.mxu0 0
      %582 = vmatmul.mubr.bf16.gmra.mrb[0].mxu0 %v415
      %v583 = vpop.f32.mrb[0].mxu0
      %v584 = vadd.f32 0.0, %v583
      %v585 = vpop.f32.mrb[0].mxu0
      %v586 = vadd.f32 0.0, %v585
      %v587 = vpop.f32.mrb[0].mxu0
      %v588 = vadd.f32 0.0, %v587
      %v589 = vpop.f32.mrb[0].mxu0
      %v590 = vadd.f32 0.0, %v589
      %591 = vmatprep.mubr.bf16.mxu0 0
      %592 = vmatmul.mubr.bf16.gmra.mrb[0].mxu0 %v418
      %v593 = vpop.f32.mrb[0].mxu0
      %v594 = vadd.f32 0.0, %v593
      %v595 = vpop.f32.mrb[0].mxu0
      %v596 = vadd.f32 0.0, %v595
      %v597 = vpop.f32.mrb[0].mxu0
      %v598 = vadd.f32 0.0, %v597
      %v599 = vpop.f32.mrb[0].mxu0
      %v600 = vadd.f32 0.0, %v599
      %601 = vmatprep.mubr.bf16.mxu0 0
      %602 = vmatmul.mubr.bf16.gmra.mrb[0].mxu0 %v421
      %v603 = vpop.f32.mrb[0].mxu0
      %v604 = vadd.f32 0.0, %v603
      %v605 = vpop.f32.mrb[0].mxu0
      %v606 = vadd.f32 0.0, %v605
      %v607 = vpop.f32.mrb[0].mxu0
      %v608 = vadd.f32 0.0, %v607
      %v609 = vpop.f32.mrb[0].mxu0
      %v610 = vadd.f32 0.0, %v609
      %611 = vmatprep.mubr.bf16.mxu0 0
      %612 = vmatmul.mubr.bf16.gmra.mrb[0].mxu0 %v424
      %v613 = vpop.f32.mrb[0].mxu0
      %v614 = vadd.f32 0.0, %v613
      %v615 = vpop.f32.mrb[0].mxu0
      %v616 = vadd.f32 0.0, %v615
      %v617 = vpop.f32.mrb[0].mxu0
      %v618 = vadd.f32 0.0, %v617
      %v619 = vpop.f32.mrb[0].mxu0
      %v620 = vadd.f32 0.0, %v619
      %621 = vmatprep.mubr.bf16.mxu0 0
      %622 = vmatmul.mubr.bf16.gmra.mrb[0].mxu0 %v427
      %v623 = vpop.f32.mrb[0].mxu0
      %v624 = vadd.f32 0.0, %v623
      %v625 = vpop.f32.mrb[0].mxu0
      %v626 = vadd.f32 0.0, %v625
      %v627 = vpop.f32.mrb[0].mxu0
      %v628 = vadd.f32 0.0, %v627
      %v629 = vpop.f32.mrb[0].mxu0
      %v630 = vadd.f32 0.0, %v629
      %631 = vdwg.mxu0
      %632 = vmatprep.subr.bf16.mxu0 0
      %633 = vmatpush1.bf16.msra.mxu0 %v437
      %634 = vmatprep.subr.bf16.mxu0 0
      %635 = vmatpush1.bf16.msra.mxu0 0
      %636 = vmatprep.subr.bf16.mxu0 0
      %637 = vmatpush1.bf16.msra.mxu0 0
      %638 = vmatprep.subr.bf16.mxu0 0
      %639 = vmatpush1.bf16.msra.mxu0 0
      %640 = vmatprep.subr.bf16.mxu0 0
      %641 = vmatpush1.bf16.msra.mxu0 0
      %642 = vmatprep.subr.bf16.mxu0 0
      %643 = vmatpush1.bf16.msra.mxu0 0
      %644 = vmatprep.subr.bf16.mxu0 0
      %645 = vmatpush1.bf16.msra.mxu0 0
      %646 = vmatprep.subr.bf16.mxu0 0
      %647 = vmatpush1.bf16.msra.mxu0 0
      %648 = vmatprep.subr.bf16.mxu0 0
      %649 = vmatpush1.bf16.msra.mxu0 0
      %650 = vmatprep.subr.bf16.mxu0 0
      %651 = vmatpush1.bf16.msra.mxu0 0
      %652 = vmatprep.subr.bf16.mxu0 0
      %653 = vmatpush1.bf16.msra.mxu0 0
      %654 = vmatprep.subr.bf16.mxu0 0
      %655 = vmatpush1.bf16.msra.mxu0 0
      %656 = vmatprep.subr.bf16.mxu0 0
      %657 = vmatpush1.bf16.msra.mxu0 0
      %658 = vmatprep.subr.bf16.mxu0 0
      %659 = vmatpush1.bf16.msra.mxu0 0
      %660 = vmatprep.subr.bf16.mxu0 0
      %661 = vmatpush1.bf16.msra.mxu0 0
      %662 = vmatprep.subr.bf16.mxu0 0
      %663 = vmatpush1.bf16.msra.mxu0 0
      %664 = vmatprep.mubr.bf16.mxu0 0
      %665 = vmatmul.mubr.bf16.gmra.mrb[0].mxu0 %v382
      %v666 = vpop.f32.mrb[0].mxu0
      %v667 = vadd.f32 0.0, %v666
      %v668 = vpop.f32.mrb[0].mxu0
      %v669 = vpop.f32.mrb[0].mxu0
      %v670 = vadd.f32 0.0, %v669
      %v671 = vpop.f32.mrb[0].mxu0
      %672 = vmatprep.mubr.bf16.mxu0 0
      %673 = vmatmul.mubr.bf16.gmra.mrb[0].mxu0 %v385
      %v674 = vpop.f32.mrb[0].mxu0
      %v675 = vadd.f32 0.0, %v674
      %v676 = vpop.f32.mrb[0].mxu0
      %v677 = vpop.f32.mrb[0].mxu0
      %v678 = vadd.f32 0.0, %v677
      %v679 = vpop.f32.mrb[0].mxu0
      %680 = vmatprep.mubr.bf16.mxu0 0
      %681 = vmatmul.mubr.bf16.gmra.mrb[0].mxu0 %v388
      %v682 = vpop.f32.mrb[0].mxu0
      %v683 = vadd.f32 0.0, %v682
      %v684 = vpop.f32.mrb[0].mxu0
      %v685 = vpop.f32.mrb[0].mxu0
      %v686 = vadd.f32 0.0, %v685
      %v687 = vpop.f32.mrb[0].mxu0
      %688 = vmatprep.mubr.bf16.mxu0 0
      %689 = vmatmul.mubr.bf16.gmra.mrb[0].mxu0 %v391
      %v690 = vpop.f32.mrb[0].mxu0
      %v691 = vadd.f32 0.0, %v690
      %v692 = vpop.f32.mrb[0].mxu0
      %v693 = vpop.f32.mrb[0].mxu0
      %v694 = vadd.f32 0.0, %v693
      %v695 = vpop.f32.mrb[0].mxu0
      %696 = vmatprep.mubr.bf16.mxu0 0
      %697 = vmatmul.mubr.bf16.gmra.mrb[0].mxu0 %v394
      %v698 = vpop.f32.mrb[0].mxu0
      %v699 = vadd.f32 0.0, %v698
      %v700 = vpop.f32.mrb[0].mxu0
      %v701 = vpop.f32.mrb[0].mxu0
      %v702 = vadd.f32 0.0, %v701
      %v703 = vpop.f32.mrb[0].mxu0
      %704 = vmatprep.mubr.bf16.mxu0 0
      %705 = vmatmul.mubr.bf16.gmra.mrb[0].mxu0 %v397
      %v706 = vpop.f32.mrb[0].mxu0
      %v707 = vadd.f32 0.0, %v706
      %v708 = vpop.f32.mrb[0].mxu0
      %v709 = vpop.f32.mrb[0].mxu0
      %v710 = vadd.f32 0.0, %v709
      %v711 = vpop.f32.mrb[0].mxu0
      %712 = vmatprep.mubr.bf16.mxu0 0
      %713 = vmatmul.mubr.bf16.gmra.mrb[0].mxu0 %v400
      %v714 = vpop.f32.mrb[0].mxu0
      %v715 = vadd.f32 0.0, %v714
      %v716 = vpop.f32.mrb[0].mxu0
      %v717 = vpop.f32.mrb[0].mxu0
      %v718 = vadd.f32 0.0, %v717
      %v719 = vpop.f32.mrb[0].mxu0
      %720 = vmatprep.mubr.bf16.mxu0 0
      %721 = vmatmul.mubr.bf16.gmra.mrb[0].mxu0 %v403
      %v722 = vpop.f32.mrb[0].mxu0
      %v723 = vadd.f32 0.0, %v722
      %v724 = vpop.f32.mrb[0].mxu0
      %v725 = vpop.f32.mrb[0].mxu0
      %v726 = vadd.f32 0.0, %v725
      %v727 = vpop.f32.mrb[0].mxu0
      %728 = vmatprep.mubr.bf16.mxu0 0
      %729 = vmatmul.mubr.bf16.gmra.mrb[0].mxu0 %v406
      %v730 = vpop.f32.mrb[0].mxu0
      %v731 = vadd.f32 0.0, %v730
      %v732 = vpop.f32.mrb[0].mxu0
      %v733 = vpop.f32.mrb[0].mxu0
      %v734 = vadd.f32 0.0, %v733
      %v735 = vpop.f32.mrb[0].mxu0
      %736 = vmatprep.mubr.bf16.mxu0 0
      %737 = vmatmul.mubr.bf16.gmra.mrb[0].mxu0 %v409
      %v738 = vpop.f32.mrb[0].mxu0
      %v739 = vadd.f32 0.0, %v738
      %v740 = vpop.f32.mrb[0].mxu0
      %v741 = vpop.f32.mrb[0].mxu0
      %v742 = vadd.f32 0.0, %v741
      %v743 = vpop.f32.mrb[0].mxu0
      %744 = vmatprep.mubr.bf16.mxu0 0
      %745 = vmatmul.mubr.bf16.gmra.mrb[0].mxu0 %v412
      %v746 = vpop.f32.mrb[0].mxu0
      %v747 = vadd.f32 0.0, %v746
      %v748 = vpop.f32.mrb[0].mxu0
      %v749 = vpop.f32.mrb[0].mxu0
      %v750 = vadd.f32 0.0, %v749
      %v751 = vpop.f32.mrb[0].mxu0
      %752 = vmatprep.mubr.bf16.mxu0 0
      %753 = vmatmul.mubr.bf16.gmra.mrb[0].mxu0 %v415
      %v754 = vpop.f32.mrb[0].mxu0
      %v755 = vadd.f32 0.0, %v754
      %v756 = vpop.f32.mrb[0].mxu0
      %v757 = vpop.f32.mrb[0].mxu0
      %v758 = vadd.f32 0.0, %v757
      %v759 = vpop.f32.mrb[0].mxu0
      %760 = vmatprep.mubr.bf16.mxu0 0
      %761 = vmatmul.mubr.bf16.gmra.mrb[0].mxu0 %v418
      %v762 = vpop.f32.mrb[0].mxu0
      %v763 = vadd.f32 0.0, %v762
      %v764 = vpop.f32.mrb[0].mxu0
      %v765 = vpop.f32.mrb[0].mxu0
      %v766 = vadd.f32 0.0, %v765
      %v767 = vpop.f32.mrb[0].mxu0
      %768 = vmatprep.mubr.bf16.mxu0 0
      %769 = vmatmul.mubr.bf16.gmra.mrb[0].mxu0 %v421
      %v770 = vpop.f32.mrb[0].mxu0
      %v771 = vadd.f32 0.0, %v770
      %v772 = vpop.f32.mrb[0].mxu0
      %v773 = vpop.f32.mrb[0].mxu0
      %v774 = vadd.f32 0.0, %v773
      %v775 = vpop.f32.mrb[0].mxu0
      %776 = vmatprep.mubr.bf16.mxu0 0
      %777 = vmatmul.mubr.bf16.gmra.mrb[0].mxu0 %v424
      %v778 = vpop.f32.mrb[0].mxu0
      %v779 = vadd.f32 0.0, %v778
      %v780 = vpop.f32.mrb[0].mxu0
      %v781 = vpop.f32.mrb[0].mxu0
      %v782 = vadd.f32 0.0, %v781
      %v783 = vpop.f32.mrb[0].mxu0
      %784 = vmatprep.mubr.bf16.mxu0 0
      %785 = vmatmul.mubr.bf16.gmra.mrb[0].mxu0 %v427
      %v786 = vpop.f32.mrb[0].mxu0
      %v787 = vadd.f32 0.0, %v786
      %v788 = vpop.f32.mrb[0].mxu0
      %v789 = vpop.f32.mrb[0].mxu0
      %v790 = vadd.f32 0.0, %v789
      %v791 = vpop.f32.mrb[0].mxu0
      %792 = vdwg.mxu0
      %v793 = vsel %vm255, 1, 0
      %v794 = vsel %vm256, 1, 0
      %v795 = vsel %vm257, 1, 0
      %vm796 = vcmp.eq.s32.totalorder %v793, 1
      %vm797 = vcmp.eq.s32.totalorder %v794, 1
      %vm798 = vcmp.eq.s32.totalorder %v795, 1
      %v799 = vsel %vm796, %v474, -inf
      %v800 = vsel %vm797, %v476, -inf
      %v801 = vsel %vm798, %v667, -inf
      %v802 = vsel %vm796, %v478, -inf
      %v803 = vsel %vm797, %v480, -inf
      %v804 = vsel %vm798, %v670, -inf
      %v805 = vsel %vm796, %v484, -inf
      %v806 = vsel %vm797, %v486, -inf
      %v807 = vsel %vm798, %v675, -inf
      %v808 = vsel %vm796, %v488, -inf
      %v809 = vsel %vm797, %v490, -inf
      %v810 = vsel %vm798, %v678, -inf
      %v811 = vsel %vm796, %v494, -inf
      %v812 = vsel %vm797, %v496, -inf
      %v813 = vsel %vm798, %v683, -inf
      %v814 = vsel %vm796, %v498, -inf
      %v815 = vsel %vm797, %v500, -inf
      %v816 = vsel %vm798, %v686, -inf
      %v817 = vsel %vm796, %v504, -inf
      %v818 = vsel %vm797, %v506, -inf
      %v819 = vsel %vm798, %v691, -inf
      %v820 = vsel %vm796, %v508, -inf
      %v821 = vsel %vm797, %v510, -inf
      %v822 = vsel %vm798, %v694, -inf
      %v823 = vsel %vm796, %v514, -inf
      %v824 = vsel %vm797, %v516, -inf
      %v825 = vsel %vm798, %v699, -inf
      %v826 = vsel %vm796, %v518, -inf
      %v827 = vsel %vm797, %v520, -inf
      %v828 = vsel %vm798, %v702, -inf
      %v829 = vsel %vm796, %v524, -inf
      %v830 = vsel %vm797, %v526, -inf
      %v831 = vsel %vm798, %v707, -inf
      %v832 = vsel %vm796, %v528, -inf
      %v833 = vsel %vm797, %v530, -inf
      %v834 = vsel %vm798, %v710, -inf
      %v835 = vsel %vm796, %v534, -inf
      %v836 = vsel %vm797, %v536, -inf
      %v837 = vsel %vm798, %v715, -inf
      %v838 = vsel %vm796, %v538, -inf
      %v839 = vsel %vm797, %v540, -inf
      %v840 = vsel %vm798, %v718, -inf
      %v841 = vsel %vm796, %v544, -inf
      %v842 = vsel %vm797, %v546, -inf
      %v843 = vsel %vm798, %v723, -inf
      %v844 = vsel %vm796, %v548, -inf
      %v845 = vsel %vm797, %v550, -inf
      %v846 = vsel %vm798, %v726, -inf
      %v847 = vsel %vm796, %v554, -inf
      %v848 = vsel %vm797, %v556, -inf
      %v849 = vsel %vm798, %v731, -inf
      %v850 = vsel %vm796, %v558, -inf
      %v851 = vsel %vm797, %v560, -inf
      %v852 = vsel %vm798, %v734, -inf
      %v853 = vsel %vm796, %v564, -inf
      %v854 = vsel %vm797, %v566, -inf
      %v855 = vsel %vm798, %v739, -inf
      %v856 = vsel %vm796, %v568, -inf
      %v857 = vsel %vm797, %v570, -inf
      %v858 = vsel %vm798, %v742, -inf
      %v859 = vsel %vm796, %v574, -inf
      %v860 = vsel %vm797, %v576, -inf
      %v861 = vsel %vm798, %v747, -inf
      %v862 = vsel %vm796, %v578, -inf
      %v863 = vsel %vm797, %v580, -inf
      %v864 = vsel %vm798, %v750, -inf
      %v865 = vsel %vm796, %v584, -inf
      %v866 = vsel %vm797, %v586, -inf
      %v867 = vsel %vm798, %v755, -inf
      %v868 = vsel %vm796, %v588, -inf
      %v869 = vsel %vm797, %v590, -inf
      %v870 = vsel %vm798, %v758, -inf
      %v871 = vsel %vm796, %v594, -inf
      %v872 = vsel %vm797, %v596, -inf
      %v873 = vsel %vm798, %v763, -inf
      %v874 = vsel %vm796, %v598, -inf
      %v875 = vsel %vm797, %v600, -inf
      %v876 = vsel %vm798, %v766, -inf
      %v877 = vsel %vm796, %v604, -inf
      %v878 = vsel %vm797, %v606, -inf
      %v879 = vsel %vm798, %v771, -inf
      %v880 = vsel %vm796, %v608, -inf
      %v881 = vsel %vm797, %v610, -inf
      %v882 = vsel %vm798, %v774, -inf
      %v883 = vsel %vm796, %v614, -inf
      %v884 = vsel %vm797, %v616, -inf
      %v885 = vsel %vm798, %v779, -inf
      %v886 = vsel %vm796, %v618, -inf
      %v887 = vsel %vm797, %v620, -inf
      %v888 = vsel %vm798, %v782, -inf
      %v889 = vsel %vm796, %v624, -inf
      %v890 = vsel %vm797, %v626, -inf
      %v891 = vsel %vm798, %v787, -inf
      %v892 = vsel %vm796, %v628, -inf
      %v893 = vsel %vm797, %v630, -inf
      %v894 = vsel %vm798, %v790, -inf
      %v895 = vmax.f32 %v799, %v800
      %v896 = vmax.f32 %v895, %v801
      %897 = vmax.xlane.f32.xlu0 %v896
      %v898 = vpop.xlane.xlu0 %897
      %v899 = vmax.f32 %v802, %v803
      %v900 = vmax.f32 %v899, %v804
      %901 = vmax.xlane.f32.xlu0 %v900
      %v902 = vpop.xlane.xlu0 %901
      %v903 = vmax.f32 %v805, %v806
      %v904 = vmax.f32 %v903, %v807
      %905 = vmax.xlane.f32.xlu0 %v904
      %v906 = vpop.xlane.xlu0 %905
      %v907 = vmax.f32 %v808, %v809
      %v908 = vmax.f32 %v907, %v810
      %909 = vmax.xlane.f32.xlu0 %v908
      %v910 = vpop.xlane.xlu0 %909
      %v911 = vmax.f32 %v811, %v812
      %v912 = vmax.f32 %v911, %v813
      %913 = vmax.xlane.f32.xlu0 %v912
      %v914 = vpop.xlane.xlu0 %913
      %v915 = vmax.f32 %v814, %v815
      %v916 = vmax.f32 %v915, %v816
      %917 = vmax.xlane.f32.xlu0 %v916
      %v918 = vpop.xlane.xlu0 %917
      %v919 = vmax.f32 %v817, %v818
      %v920 = vmax.f32 %v919, %v819
      %921 = vmax.xlane.f32.xlu0 %v920
      %v922 = vpop.xlane.xlu0 %921
      %v923 = vmax.f32 %v820, %v821
      %v924 = vmax.f32 %v923, %v822
      %925 = vmax.xlane.f32.xlu0 %v924
      %v926 = vpop.xlane.xlu0 %925
      %v927 = vmax.f32 %v823, %v824
      %v928 = vmax.f32 %v927, %v825
      %929 = vmax.xlane.f32.xlu0 %v928
      %v930 = vpop.xlane.xlu0 %929
      %v931 = vmax.f32 %v826, %v827
      %v932 = vmax.f32 %v931, %v828
      %933 = vmax.xlane.f32.xlu0 %v932
      %v934 = vpop.xlane.xlu0 %933
      %v935 = vmax.f32 %v829, %v830
      %v936 = vmax.f32 %v935, %v831
      %937 = vmax.xlane.f32.xlu0 %v936
      %v938 = vpop.xlane.xlu0 %937
      %v939 = vmax.f32 %v832, %v833
      %v940 = vmax.f32 %v939, %v834
      %941 = vmax.xlane.f32.xlu0 %v940
      %v942 = vpop.xlane.xlu0 %941
      %v943 = vmax.f32 %v835, %v836
      %v944 = vmax.f32 %v943, %v837
      %945 = vmax.xlane.f32.xlu0 %v944
      %v946 = vpop.xlane.xlu0 %945
      %v947 = vmax.f32 %v838, %v839
      %v948 = vmax.f32 %v947, %v840
      %949 = vmax.xlane.f32.xlu0 %v948
      %v950 = vpop.xlane.xlu0 %949
      %v951 = vmax.f32 %v841, %v842
      %v952 = vmax.f32 %v951, %v843
      %953 = vmax.xlane.f32.xlu0 %v952
      %v954 = vpop.xlane.xlu0 %953
      %v955 = vmax.f32 %v844, %v845
      %v956 = vmax.f32 %v955, %v846
      %957 = vmax.xlane.f32.xlu0 %v956
      %v958 = vpop.xlane.xlu0 %957
      %v959 = vmax.f32 %v847, %v848
      %v960 = vmax.f32 %v959, %v849
      %961 = vmax.xlane.f32.xlu0 %v960
      %v962 = vpop.xlane.xlu0 %961
      %v963 = vmax.f32 %v850, %v851
      %v964 = vmax.f32 %v963, %v852
      %965 = vmax.xlane.f32.xlu0 %v964
      %v966 = vpop.xlane.xlu0 %965
      %v967 = vmax.f32 %v853, %v854
      %v968 = vmax.f32 %v967, %v855
      %969 = vmax.xlane.f32.xlu0 %v968
      %v970 = vpop.xlane.xlu0 %969
      %v971 = vmax.f32 %v856, %v857
      %v972 = vmax.f32 %v971, %v858
      %973 = vmax.xlane.f32.xlu0 %v972
      %v974 = vpop.xlane.xlu0 %973
      %v975 = vmax.f32 %v859, %v860
      %v976 = vmax.f32 %v975, %v861
      %977 = vmax.xlane.f32.xlu0 %v976
      %v978 = vpop.xlane.xlu0 %977
      %v979 = vmax.f32 %v862, %v863
      %v980 = vmax.f32 %v979, %v864
      %981 = vmax.xlane.f32.xlu0 %v980
      %v982 = vpop.xlane.xlu0 %981
      %v983 = vmax.f32 %v865, %v866
      %v984 = vmax.f32 %v983, %v867
      %985 = vmax.xlane.f32.xlu0 %v984
      %v986 = vpop.xlane.xlu0 %985
      %v987 = vmax.f32 %v868, %v869
      %v988 = vmax.f32 %v987, %v870
      %989 = vmax.xlane.f32.xlu0 %v988
      %v990 = vpop.xlane.xlu0 %989
      %v991 = vmax.f32 %v871, %v872
      %v992 = vmax.f32 %v991, %v873
      %993 = vmax.xlane.f32.xlu0 %v992
      %v994 = vpop.xlane.xlu0 %993
      %v995 = vmax.f32 %v874, %v875
      %v996 = vmax.f32 %v995, %v876
      %997 = vmax.xlane.f32.xlu0 %v996
      %v998 = vpop.xlane.xlu0 %997
      %v999 = vmax.f32 %v877, %v878
      %v1000 = vmax.f32 %v999, %v879
      %1001 = vmax.xlane.f32.xlu0 %v1000
      %v1002 = vpop.xlane.xlu0 %1001
      %v1003 = vmax.f32 %v880, %v881
      %v1004 = vmax.f32 %v1003, %v882
      %1005 = vmax.xlane.f32.xlu0 %v1004
      %v1006 = vpop.xlane.xlu0 %1005
      %v1007 = vmax.f32 %v883, %v884
      %v1008 = vmax.f32 %v1007, %v885
      %1009 = vmax.xlane.f32.xlu0 %v1008
      %v1010 = vpop.xlane.xlu0 %1009
      %v1011 = vmax.f32 %v886, %v887
      %v1012 = vmax.f32 %v1011, %v888
      %1013 = vmax.xlane.f32.xlu0 %v1012
      %v1014 = vpop.xlane.xlu0 %1013
      %v1015 = vmax.f32 %v889, %v890
      %v1016 = vmax.f32 %v1015, %v891
      %1017 = vmax.xlane.f32.xlu0 %v1016
      %v1018 = vpop.xlane.xlu0 %1017
      %v1019 = vmax.f32 %v892, %v893
      %v1020 = vmax.f32 %v1019, %v894
      %1021 = vmax.xlane.f32.xlu0 %v1020
      %v1022 = vpop.xlane.xlu0 %1021
      %v1023 = vsub.f32 %v799, %v898
      %v1024 = vsub.f32 %v800, %v898
      %v1025 = vsub.f32 %v801, %v898
      %v1026 = vsub.f32 %v802, %v902
      %v1027 = vsub.f32 %v803, %v902
      %v1028 = vsub.f32 %v804, %v902
      %v1029 = vsub.f32 %v805, %v906
      %v1030 = vsub.f32 %v806, %v906
      %v1031 = vsub.f32 %v807, %v906
      %v1032 = vsub.f32 %v808, %v910
      %v1033 = vsub.f32 %v809, %v910
      %v1034 = vsub.f32 %v810, %v910
      %v1035 = vsub.f32 %v811, %v914
      %v1036 = vsub.f32 %v812, %v914
      %v1037 = vsub.f32 %v813, %v914
      %v1038 = vsub.f32 %v814, %v918
      %v1039 = vsub.f32 %v815, %v918
      %v1040 = vsub.f32 %v816, %v918
      %v1041 = vsub.f32 %v817, %v922
      %v1042 = vsub.f32 %v818, %v922
      %v1043 = vsub.f32 %v819, %v922
      %v1044 = vsub.f32 %v820, %v926
      %v1045 = vsub.f32 %v821, %v926
      %v1046 = vsub.f32 %v822, %v926
      %v1047 = vsub.f32 %v823, %v930
      %v1048 = vsub.f32 %v824, %v930
      %v1049 = vsub.f32 %v825, %v930
      %v1050 = vsub.f32 %v826, %v934
      %v1051 = vsub.f32 %v827, %v934
      %v1052 = vsub.f32 %v828, %v934
      %v1053 = vsub.f32 %v829, %v938
      %v1054 = vsub.f32 %v830, %v938
      %v1055 = vsub.f32 %v831, %v938
      %v1056 = vsub.f32 %v832, %v942
      %v1057 = vsub.f32 %v833, %v942
      %v1058 = vsub.f32 %v834, %v942
      %v1059 = vsub.f32 %v835, %v946
      %v1060 = vsub.f32 %v836, %v946
      %v1061 = vsub.f32 %v837, %v946
      %v1062 = vsub.f32 %v838, %v950
      %v1063 = vsub.f32 %v839, %v950
      %v1064 = vsub.f32 %v840, %v950
      %v1065 = vsub.f32 %v841, %v954
      %v1066 = vsub.f32 %v842, %v954
      %v1067 = vsub.f32 %v843, %v954
      %v1068 = vsub.f32 %v844, %v958
      %v1069 = vsub.f32 %v845, %v958
      %v1070 = vsub.f32 %v846, %v958
      %v1071 = vsub.f32 %v847, %v962
      %v1072 = vsub.f32 %v848, %v962
      %v1073 = vsub.f32 %v849, %v962
      %v1074 = vsub.f32 %v850, %v966
      %v1075 = vsub.f32 %v851, %v966
      %v1076 = vsub.f32 %v852, %v966
      %v1077 = vsub.f32 %v853, %v970
      %v1078 = vsub.f32 %v854, %v970
      %v1079 = vsub.f32 %v855, %v970
      %v1080 = vsub.f32 %v856, %v974
      %v1081 = vsub.f32 %v857, %v974
      %v1082 = vsub.f32 %v858, %v974
      %v1083 = vsub.f32 %v859, %v978
      %v1084 = vsub.f32 %v860, %v978
      %v1085 = vsub.f32 %v861, %v978
      %v1086 = vsub.f32 %v862, %v982
      %v1087 = vsub.f32 %v863, %v982
      %v1088 = vsub.f32 %v864, %v982
      %v1089 = vsub.f32 %v865, %v986
      %v1090 = vsub.f32 %v866, %v986
      %v1091 = vsub.f32 %v867, %v986
      %v1092 = vsub.f32 %v868, %v990
      %v1093 = vsub.f32 %v869, %v990
      %v1094 = vsub.f32 %v870, %v990
      %v1095 = vsub.f32 %v871, %v994
      %v1096 = vsub.f32 %v872, %v994
      %v1097 = vsub.f32 %v873, %v994
      %v1098 = vsub.f32 %v874, %v998
      %v1099 = vsub.f32 %v875, %v998
      %v1100 = vsub.f32 %v876, %v998
      %v1101 = vsub.f32 %v877, %v1002
      %v1102 = vsub.f32 %v878, %v1002
      %v1103 = vsub.f32 %v879, %v1002
      %v1104 = vsub.f32 %v880, %v1006
      %v1105 = vsub.f32 %v881, %v1006
      %v1106 = vsub.f32 %v882, %v1006
      %v1107 = vsub.f32 %v883, %v1010
      %v1108 = vsub.f32 %v884, %v1010
      %v1109 = vsub.f32 %v885, %v1010
      %v1110 = vsub.f32 %v886, %v1014
      %v1111 = vsub.f32 %v887, %v1014
      %v1112 = vsub.f32 %v888, %v1014
      %v1113 = vsub.f32 %v889, %v1018
      %v1114 = vsub.f32 %v890, %v1018
      %v1115 = vsub.f32 %v891, %v1018
      %v1116 = vsub.f32 %v892, %v1022
      %v1117 = vsub.f32 %v893, %v1022
      %v1118 = vsub.f32 %v894, %v1022
      %v1119 = vmul.f32 %v1023, 1.442695
      %v1120 = vpow.pop %v1119
      %v1121 = vmul.f32 %v1024, 1.442695
      %v1122 = vpow.pop %v1121
      %v1123 = vmul.f32 %v1025, 1.442695
      %v1124 = vpow.pop %v1123
      %v1125 = vmul.f32 %v1026, 1.442695
      %v1126 = vpow.pop %v1125
      %v1127 = vmul.f32 %v1027, 1.442695
      %v1128 = vpow.pop %v1127
      %v1129 = vmul.f32 %v1028, 1.442695
      %v1130 = vpow.pop %v1129
      %v1131 = vmul.f32 %v1029, 1.442695
      %v1132 = vpow.pop %v1131
      %v1133 = vmul.f32 %v1030, 1.442695
      %v1134 = vpow.pop %v1133
      %v1135 = vmul.f32 %v1031, 1.442695
      %v1136 = vpow.pop %v1135
      %v1137 = vmul.f32 %v1032, 1.442695
      %v1138 = vpow.pop %v1137
      %v1139 = vmul.f32 %v1033, 1.442695
      %v1140 = vpow.pop %v1139
      %v1141 = vmul.f32 %v1034, 1.442695
      %v1142 = vpow.pop %v1141
      %v1143 = vmul.f32 %v1035, 1.442695
      %v1144 = vpow.pop %v1143
      %v1145 = vmul.f32 %v1036, 1.442695
      %v1146 = vpow.pop %v1145
      %v1147 = vmul.f32 %v1037, 1.442695
      %v1148 = vpow.pop %v1147
      %v1149 = vmul.f32 %v1038, 1.442695
      %v1150 = vpow.pop %v1149
      %v1151 = vmul.f32 %v1039, 1.442695
      %v1152 = vpow.pop %v1151
      %v1153 = vmul.f32 %v1040, 1.442695
      %v1154 = vpow.pop %v1153
      %v1155 = vmul.f32 %v1041, 1.442695
      %v1156 = vpow.pop %v1155
      %v1157 = vmul.f32 %v1042, 1.442695
      %v1158 = vpow.pop %v1157
      %v1159 = vmul.f32 %v1043, 1.442695
      %v1160 = vpow.pop %v1159
      %v1161 = vmul.f32 %v1044, 1.442695
      %v1162 = vpow.pop %v1161
      %v1163 = vmul.f32 %v1045, 1.442695
      %v1164 = vpow.pop %v1163
      %v1165 = vmul.f32 %v1046, 1.442695
      %v1166 = vpow.pop %v1165
      %v1167 = vmul.f32 %v1047, 1.442695
      %v1168 = vpow.pop %v1167
      %v1169 = vmul.f32 %v1048, 1.442695
      %v1170 = vpow.pop %v1169
      %v1171 = vmul.f32 %v1049, 1.442695
      %v1172 = vpow.pop %v1171
      %v1173 = vmul.f32 %v1050, 1.442695
      %v1174 = vpow.pop %v1173
      %v1175 = vmul.f32 %v1051, 1.442695
      %v1176 = vpow.pop %v1175
      %v1177 = vmul.f32 %v1052, 1.442695
      %v1178 = vpow.pop %v1177
      %v1179 = vmul.f32 %v1053, 1.442695
      %v1180 = vpow.pop %v1179
      %v1181 = vmul.f32 %v1054, 1.442695
      %v1182 = vpow.pop %v1181
      %v1183 = vmul.f32 %v1055, 1.442695
      %v1184 = vpow.pop %v1183
      %v1185 = vmul.f32 %v1056, 1.442695
      %v1186 = vpow.pop %v1185
      %v1187 = vmul.f32 %v1057, 1.442695
      %v1188 = vpow.pop %v1187
      %v1189 = vmul.f32 %v1058, 1.442695
      %v1190 = vpow.pop %v1189
      %v1191 = vmul.f32 %v1059, 1.442695
      %v1192 = vpow.pop %v1191
      %v1193 = vmul.f32 %v1060, 1.442695
      %v1194 = vpow.pop %v1193
      %v1195 = vmul.f32 %v1061, 1.442695
      %v1196 = vpow.pop %v1195
      %v1197 = vmul.f32 %v1062, 1.442695
      %v1198 = vpow.pop %v1197
      %v1199 = vmul.f32 %v1063, 1.442695
      %v1200 = vpow.pop %v1199
      %v1201 = vmul.f32 %v1064, 1.442695
      %v1202 = vpow.pop %v1201
      %v1203 = vmul.f32 %v1065, 1.442695
      %v1204 = vpow.pop %v1203
      %v1205 = vmul.f32 %v1066, 1.442695
      %v1206 = vpow.pop %v1205
      %v1207 = vmul.f32 %v1067, 1.442695
      %v1208 = vpow.pop %v1207
      %v1209 = vmul.f32 %v1068, 1.442695
      %v1210 = vpow.pop %v1209
      %v1211 = vmul.f32 %v1069, 1.442695
      %v1212 = vpow.pop %v1211
      %v1213 = vmul.f32 %v1070, 1.442695
      %v1214 = vpow.pop %v1213
      %v1215 = vmul.f32 %v1071, 1.442695
      %v1216 = vpow.pop %v1215
      %v1217 = vmul.f32 %v1072, 1.442695
      %v1218 = vpow.pop %v1217
      %v1219 = vmul.f32 %v1073, 1.442695
      %v1220 = vpow.pop %v1219
      %v1221 = vmul.f32 %v1074, 1.442695
      %v1222 = vpow.pop %v1221
      %v1223 = vmul.f32 %v1075, 1.442695
      %v1224 = vpow.pop %v1223
      %v1225 = vmul.f32 %v1076, 1.442695
      %v1226 = vpow.pop %v1225
      %v1227 = vmul.f32 %v1077, 1.442695
      %v1228 = vpow.pop %v1227
      %v1229 = vmul.f32 %v1078, 1.442695
      %v1230 = vpow.pop %v1229
      %v1231 = vmul.f32 %v1079, 1.442695
      %v1232 = vpow.pop %v1231
      %v1233 = vmul.f32 %v1080, 1.442695
      %v1234 = vpow.pop %v1233
      %v1235 = vmul.f32 %v1081, 1.442695
      %v1236 = vpow.pop %v1235
      %v1237 = vmul.f32 %v1082, 1.442695
      %v1238 = vpow.pop %v1237
      %v1239 = vmul.f32 %v1083, 1.442695
      %v1240 = vpow.pop %v1239
      %v1241 = vmul.f32 %v1084, 1.442695
      %v1242 = vpow.pop %v1241
      %v1243 = vmul.f32 %v1085, 1.442695
      %v1244 = vpow.pop %v1243
      %v1245 = vmul.f32 %v1086, 1.442695
      %v1246 = vpow.pop %v1245
      %v1247 = vmul.f32 %v1087, 1.442695
      %v1248 = vpow.pop %v1247
      %v1249 = vmul.f32 %v1088, 1.442695
      %v1250 = vpow.pop %v1249
      %v1251 = vmul.f32 %v1089, 1.442695
      %v1252 = vpow.pop %v1251
      %v1253 = vmul.f32 %v1090, 1.442695
      %v1254 = vpow.pop %v1253
      %v1255 = vmul.f32 %v1091, 1.442695
      %v1256 = vpow.pop %v1255
      %v1257 = vmul.f32 %v1092, 1.442695
      %v1258 = vpow.pop %v1257
      %v1259 = vmul.f32 %v1093, 1.442695
      %v1260 = vpow.pop %v1259
      %v1261 = vmul.f32 %v1094, 1.442695
      %v1262 = vpow.pop %v1261
      %v1263 = vmul.f32 %v1095, 1.442695
      %v1264 = vpow.pop %v1263
      %v1265 = vmul.f32 %v1096, 1.442695
      %v1266 = vpow.pop %v1265
      %v1267 = vmul.f32 %v1097, 1.442695
      %v1268 = vpow.pop %v1267
      %v1269 = vmul.f32 %v1098, 1.442695
      %v1270 = vpow.pop %v1269
      %v1271 = vmul.f32 %v1099, 1.442695
      %v1272 = vpow.pop %v1271
      %v1273 = vmul.f32 %v1100, 1.442695
      %v1274 = vpow.pop %v1273
      %v1275 = vmul.f32 %v1101, 1.442695
      %v1276 = vpow.pop %v1275
      %v1277 = vmul.f32 %v1102, 1.442695
      %v1278 = vpow.pop %v1277
      %v1279 = vmul.f32 %v1103, 1.442695
      %v1280 = vpow.pop %v1279
      %v1281 = vmul.f32 %v1104, 1.442695
      %v1282 = vpow.pop %v1281
      %v1283 = vmul.f32 %v1105, 1.442695
      %v1284 = vpow.pop %v1283
      %v1285 = vmul.f32 %v1106, 1.442695
      %v1286 = vpow.pop %v1285
      %v1287 = vmul.f32 %v1107, 1.442695
      %v1288 = vpow.pop %v1287
      %v1289 = vmul.f32 %v1108, 1.442695
      %v1290 = vpow.pop %v1289
      %v1291 = vmul.f32 %v1109, 1.442695
      %v1292 = vpow.pop %v1291
      %v1293 = vmul.f32 %v1110, 1.442695
      %v1294 = vpow.pop %v1293
      %v1295 = vmul.f32 %v1111, 1.442695
      %v1296 = vpow.pop %v1295
      %v1297 = vmul.f32 %v1112, 1.442695
      %v1298 = vpow.pop %v1297
      %v1299 = vmul.f32 %v1113, 1.442695
      %v1300 = vpow.pop %v1299
      %v1301 = vmul.f32 %v1114, 1.442695
      %v1302 = vpow.pop %v1301
      %v1303 = vmul.f32 %v1115, 1.442695
      %v1304 = vpow.pop %v1303
      %v1305 = vmul.f32 %v1116, 1.442695
      %v1306 = vpow.pop %v1305
      %v1307 = vmul.f32 %v1117, 1.442695
      %v1308 = vpow.pop %v1307
      %v1309 = vmul.f32 %v1118, 1.442695
      %v1310 = vpow.pop %v1309
      %v1311 = vadd.f32 %v1120, %v1122
      %v1312 = vadd.f32 %v1311, %v1124
      %1313 = vadd.xlane.f32.xlu0 %v1312
      %v1314 = vpop.xlane.xlu0 %1313
      %v1315 = vadd.f32 %v1126, %v1128
      %v1316 = vadd.f32 %v1315, %v1130
      %1317 = vadd.xlane.f32.xlu0 %v1316
      %v1318 = vpop.xlane.xlu0 %1317
      %v1319 = vadd.f32 %v1132, %v1134
      %v1320 = vadd.f32 %v1319, %v1136
      %1321 = vadd.xlane.f32.xlu0 %v1320
      %v1322 = vpop.xlane.xlu0 %1321
      %v1323 = vadd.f32 %v1138, %v1140
      %v1324 = vadd.f32 %v1323, %v1142
      %1325 = vadd.xlane.f32.xlu0 %v1324
      %v1326 = vpop.xlane.xlu0 %1325
      %v1327 = vadd.f32 %v1144, %v1146
      %v1328 = vadd.f32 %v1327, %v1148
      %1329 = vadd.xlane.f32.xlu0 %v1328
      %v1330 = vpop.xlane.xlu0 %1329
      %v1331 = vadd.f32 %v1150, %v1152
      %v1332 = vadd.f32 %v1331, %v1154
      %1333 = vadd.xlane.f32.xlu0 %v1332
      %v1334 = vpop.xlane.xlu0 %1333
      %v1335 = vadd.f32 %v1156, %v1158
      %v1336 = vadd.f32 %v1335, %v1160
      %1337 = vadd.xlane.f32.xlu0 %v1336
      %v1338 = vpop.xlane.xlu0 %1337
      %v1339 = vadd.f32 %v1162, %v1164
      %v1340 = vadd.f32 %v1339, %v1166
      %1341 = vadd.xlane.f32.xlu0 %v1340
      %v1342 = vpop.xlane.xlu0 %1341
      %v1343 = vadd.f32 %v1168, %v1170
      %v1344 = vadd.f32 %v1343, %v1172
      %1345 = vadd.xlane.f32.xlu0 %v1344
      %v1346 = vpop.xlane.xlu0 %1345
      %v1347 = vadd.f32 %v1174, %v1176
      %v1348 = vadd.f32 %v1347, %v1178
      %1349 = vadd.xlane.f32.xlu0 %v1348
      %v1350 = vpop.xlane.xlu0 %1349
      %v1351 = vadd.f32 %v1180, %v1182
      %v1352 = vadd.f32 %v1351, %v1184
      %1353 = vadd.xlane.f32.xlu0 %v1352
      %v1354 = vpop.xlane.xlu0 %1353
      %v1355 = vadd.f32 %v1186, %v1188
      %v1356 = vadd.f32 %v1355, %v1190
      %1357 = vadd.xlane.f32.xlu0 %v1356
      %v1358 = vpop.xlane.xlu0 %1357
      %v1359 = vadd.f32 %v1192, %v1194
      %v1360 = vadd.f32 %v1359, %v1196
      %1361 = vadd.xlane.f32.xlu0 %v1360
      %v1362 = vpop.xlane.xlu0 %1361
      %v1363 = vadd.f32 %v1198, %v1200
      %v1364 = vadd.f32 %v1363, %v1202
      %1365 = vadd.xlane.f32.xlu0 %v1364
      %v1366 = vpop.xlane.xlu0 %1365
      %v1367 = vadd.f32 %v1204, %v1206
      %v1368 = vadd.f32 %v1367, %v1208
      %1369 = vadd.xlane.f32.xlu0 %v1368
      %v1370 = vpop.xlane.xlu0 %1369
      %v1371 = vadd.f32 %v1210, %v1212
      %v1372 = vadd.f32 %v1371, %v1214
      %1373 = vadd.xlane.f32.xlu0 %v1372
      %v1374 = vpop.xlane.xlu0 %1373
      %v1375 = vadd.f32 %v1216, %v1218
      %v1376 = vadd.f32 %v1375, %v1220
      %1377 = vadd.xlane.f32.xlu0 %v1376
      %v1378 = vpop.xlane.xlu0 %1377
      %v1379 = vadd.f32 %v1222, %v1224
      %v1380 = vadd.f32 %v1379, %v1226
      %1381 = vadd.xlane.f32.xlu0 %v1380
      %v1382 = vpop.xlane.xlu0 %1381
      %v1383 = vadd.f32 %v1228, %v1230
      %v1384 = vadd.f32 %v1383, %v1232
      %1385 = vadd.xlane.f32.xlu0 %v1384
      %v1386 = vpop.xlane.xlu0 %1385
      %v1387 = vadd.f32 %v1234, %v1236
      %v1388 = vadd.f32 %v1387, %v1238
      %1389 = vadd.xlane.f32.xlu0 %v1388
      %v1390 = vpop.xlane.xlu0 %1389
      %v1391 = vadd.f32 %v1240, %v1242
      %v1392 = vadd.f32 %v1391, %v1244
      %1393 = vadd.xlane.f32.xlu0 %v1392
      %v1394 = vpop.xlane.xlu0 %1393
      %v1395 = vadd.f32 %v1246, %v1248
      %v1396 = vadd.f32 %v1395, %v1250
      %1397 = vadd.xlane.f32.xlu0 %v1396
      %v1398 = vpop.xlane.xlu0 %1397
      %v1399 = vadd.f32 %v1252, %v1254
      %v1400 = vadd.f32 %v1399, %v1256
      %1401 = vadd.xlane.f32.xlu0 %v1400
      %v1402 = vpop.xlane.xlu0 %1401
      %v1403 = vadd.f32 %v1258, %v1260
      %v1404 = vadd.f32 %v1403, %v1262
      %1405 = vadd.xlane.f32.xlu0 %v1404
      %v1406 = vpop.xlane.xlu0 %1405
      %v1407 = vadd.f32 %v1264, %v1266
      %v1408 = vadd.f32 %v1407, %v1268
      %1409 = vadd.xlane.f32.xlu0 %v1408
      %v1410 = vpop.xlane.xlu0 %1409
      %v1411 = vadd.f32 %v1270, %v1272
      %v1412 = vadd.f32 %v1411, %v1274
      %1413 = vadd.xlane.f32.xlu0 %v1412
      %v1414 = vpop.xlane.xlu0 %1413
      %v1415 = vadd.f32 %v1276, %v1278
      %v1416 = vadd.f32 %v1415, %v1280
      %1417 = vadd.xlane.f32.xlu0 %v1416
      %v1418 = vpop.xlane.xlu0 %1417
      %v1419 = vadd.f32 %v1282, %v1284
      %v1420 = vadd.f32 %v1419, %v1286
      %1421 = vadd.xlane.f32.xlu0 %v1420
      %v1422 = vpop.xlane.xlu0 %1421
      %v1423 = vadd.f32 %v1288, %v1290
      %v1424 = vadd.f32 %v1423, %v1292
      %1425 = vadd.xlane.f32.xlu0 %v1424
      %v1426 = vpop.xlane.xlu0 %1425
      %v1427 = vadd.f32 %v1294, %v1296
      %v1428 = vadd.f32 %v1427, %v1298
      %1429 = vadd.xlane.f32.xlu0 %v1428
      %v1430 = vpop.xlane.xlu0 %1429
      %v1431 = vadd.f32 %v1300, %v1302
      %v1432 = vadd.f32 %v1431, %v1304
      %1433 = vadd.xlane.f32.xlu0 %v1432
      %v1434 = vpop.xlane.xlu0 %1433
      %v1435 = vadd.f32 %v1306, %v1308
      %v1436 = vadd.f32 %v1435, %v1310
      %1437 = vadd.xlane.f32.xlu0 %v1436
      %v1438 = vpop.xlane.xlu0 %1437
      %v1439 = vpack.c.bf16 %v1126, %v1120
      %v1440 = vpack.c.bf16 %v1128, %v1122
      %v1441 = vpack.c.bf16 %v1130, %v1124
      %v1442 = vpack.c.bf16 %v1138, %v1132
      %v1443 = vpack.c.bf16 %v1140, %v1134
      %v1444 = vpack.c.bf16 %v1142, %v1136
      %v1445 = vpack.c.bf16 %v1150, %v1144
      %v1446 = vpack.c.bf16 %v1152, %v1146
      %v1447 = vpack.c.bf16 %v1154, %v1148
      %v1448 = vpack.c.bf16 %v1162, %v1156
      %v1449 = vpack.c.bf16 %v1164, %v1158
      %v1450 = vpack.c.bf16 %v1166, %v1160
      %v1451 = vpack.c.bf16 %v1174, %v1168
      %v1452 = vpack.c.bf16 %v1176, %v1170
      %v1453 = vpack.c.bf16 %v1178, %v1172
      %v1454 = vpack.c.bf16 %v1186, %v1180
      %v1455 = vpack.c.bf16 %v1188, %v1182
      %v1456 = vpack.c.bf16 %v1190, %v1184
      %v1457 = vpack.c.bf16 %v1198, %v1192
      %v1458 = vpack.c.bf16 %v1200, %v1194
      %v1459 = vpack.c.bf16 %v1202, %v1196
      %v1460 = vpack.c.bf16 %v1210, %v1204
      %v1461 = vpack.c.bf16 %v1212, %v1206
      %v1462 = vpack.c.bf16 %v1214, %v1208
      %v1463 = vpack.c.bf16 %v1222, %v1216
      %v1464 = vpack.c.bf16 %v1224, %v1218
      %v1465 = vpack.c.bf16 %v1226, %v1220
      %v1466 = vpack.c.bf16 %v1234, %v1228
      %v1467 = vpack.c.bf16 %v1236, %v1230
      %v1468 = vpack.c.bf16 %v1238, %v1232
      %v1469 = vpack.c.bf16 %v1246, %v1240
      %v1470 = vpack.c.bf16 %v1248, %v1242
      %v1471 = vpack.c.bf16 %v1250, %v1244
      %v1472 = vpack.c.bf16 %v1258, %v1252
      %v1473 = vpack.c.bf16 %v1260, %v1254
      %v1474 = vpack.c.bf16 %v1262, %v1256
      %v1475 = vpack.c.bf16 %v1270, %v1264
      %v1476 = vpack.c.bf16 %v1272, %v1266
      %v1477 = vpack.c.bf16 %v1274, %v1268
      %v1478 = vpack.c.bf16 %v1282, %v1276
      %v1479 = vpack.c.bf16 %v1284, %v1278
      %v1480 = vpack.c.bf16 %v1286, %v1280
      %v1481 = vpack.c.bf16 %v1294, %v1288
      %v1482 = vpack.c.bf16 %v1296, %v1290
      %v1483 = vpack.c.bf16 %v1298, %v1292
      %v1484 = vpack.c.bf16 %v1306, %v1300
      %v1485 = vpack.c.bf16 %v1308, %v1302
      %v1486 = vpack.c.bf16 %v1310, %v1304
      %v1487 = vld [vmem:[%s239] sm:$0xf]
      %v1488 = vld [vmem:[%s239 + $0x4] sm:$0xf]
      %v1489 = vld [vmem:[%s239 + $0x8] sm:$0xf]
      %v1490 = vld [vmem:[%s239 + $0xc] sm:$0xf]
      %v1491 = vld [vmem:[%s239 + $0x10] sm:$0xf]
      %v1492 = vld [vmem:[%s239 + $0x14] sm:$0xf]
      %v1493 = vld [vmem:[%s239 + $0x18] sm:$0xf]
      %v1494 = vld [vmem:[%s239 + $0x1c] sm:$0xf]
      %v1495 = vld [vmem:[%s239 + $0x20] sm:$0xf]
      %v1496 = vld [vmem:[%s239 + $0x24] sm:$0xf]
      %v1497 = vld [vmem:[%s239 + $0x28] sm:$0xf]
      %v1498 = vld [vmem:[%s239 + $0x2c] sm:$0xf]
      %v1499 = vld [vmem:[%s239 + $0x30] sm:$0xf]
      %v1500 = vld [vmem:[%s239 + $0x34] sm:$0xf]
      %v1501 = vld [vmem:[%s239 + $0x38] sm:$0xf]
      %v1502 = vld [vmem:[%s239 + $0x3c] sm:$0xf]
      %v1503 = vld [vmem:[%s239 + $0x40] sm:$0xf]
      %v1504 = vld [vmem:[%s239 + $0x44] sm:$0xf]
      %v1505 = vld [vmem:[%s239 + $0x48] sm:$0xf]
      %v1506 = vld [vmem:[%s239 + $0x4c] sm:$0xf]
      %v1507 = vld [vmem:[%s239 + $0x50] sm:$0xf]
      %v1508 = vld [vmem:[%s239 + $0x54] sm:$0xf]
      %v1509 = vld [vmem:[%s239 + $0x58] sm:$0xf]
      %v1510 = vld [vmem:[%s239 + $0x5c] sm:$0xf]
      %v1511 = vld [vmem:[%s239 + $0x60] sm:$0xf]
      %v1512 = vld [vmem:[%s239 + $0x64] sm:$0xf]
      %v1513 = vld [vmem:[%s239 + $0x68] sm:$0xf]
      %v1514 = vld [vmem:[%s239 + $0x6c] sm:$0xf]
      %v1515 = vld [vmem:[%s239 + $0x70] sm:$0xf]
      %v1516 = vld [vmem:[%s239 + $0x74] sm:$0xf]
      %v1517 = vld [vmem:[%s239 + $0x78] sm:$0xf]
      %v1518 = vld [vmem:[%s239 + $0x7c] sm:$0xf]
      %v1519 = vld [vmem:[%s239 + $0x80] sm:$0xf]
      %v1520 = vld [vmem:[%s239 + $0x84] sm:$0xf]
      %v1521 = vld [vmem:[%s239 + $0x88] sm:$0xf]
      %v1522 = vld [vmem:[%s239 + $0x8c] sm:$0xf]
      %v1523 = vld [vmem:[%s239 + $0x90] sm:$0xf]
      %v1524 = vld [vmem:[%s239 + $0x94] sm:$0xf]
      %v1525 = vld [vmem:[%s239 + $0x98] sm:$0xf]
      %v1526 = vld [vmem:[%s239 + $0x9c] sm:$0xf]
      %v1527 = vld [vmem:[%s239 + $0xa0] sm:$0xf]
      %v1528 = vld [vmem:[%s239 + $0xa4] sm:$0xf]
      %v1529 = vld [vmem:[%s239 + $0xa8] sm:$0xf]
      %v1530 = vld [vmem:[%s239 + $0xac] sm:$0xf]
      %v1531 = vld [vmem:[%s239 + $0xb0] sm:$0xf]
      %v1532 = vld [vmem:[%s239 + $0xb4] sm:$0xf]
      %v1533 = vld [vmem:[%s239 + $0xb8] sm:$0xf]
      %v1534 = vld [vmem:[%s239 + $0xbc] sm:$0xf]
      %v1583 = vunpack.c.l.b16 %v1487
      %v1584 = vunpack.c.l.b16 %v1488
      %v1585 = vunpack.c.l.b16 %v1489
      %v1586 = vunpack.c.l.b16 %v1490
      %v1587 = vunpack.c.l.b16 %v1491
      %v1588 = vunpack.c.l.b16 %v1492
      %v1589 = vunpack.c.l.b16 %v1493
      %v1590 = vunpack.c.l.b16 %v1494
      %v1591 = vunpack.c.l.b16 %v1495
      %v1592 = vunpack.c.l.b16 %v1496
      %v1593 = vunpack.c.l.b16 %v1497
      %v1594 = vunpack.c.l.b16 %v1498
      %v1595 = vunpack.c.l.b16 %v1499
      %v1596 = vunpack.c.l.b16 %v1500
      %v1597 = vunpack.c.l.b16 %v1501
      %v1598 = vunpack.c.l.b16 %v1502
      %v1599 = vunpack.c.l.b16 %v1503
      %v1600 = vunpack.c.l.b16 %v1504
      %v1601 = vunpack.c.l.b16 %v1505
      %v1602 = vunpack.c.l.b16 %v1506
      %v1603 = vunpack.c.l.b16 %v1507
      %v1604 = vunpack.c.l.b16 %v1508
      %v1605 = vunpack.c.l.b16 %v1509
      %v1606 = vunpack.c.l.b16 %v1510
      %v1607 = vunpack.c.l.b16 %v1511
      %v1608 = vunpack.c.l.b16 %v1512
      %v1609 = vunpack.c.l.b16 %v1513
      %v1610 = vunpack.c.l.b16 %v1514
      %v1611 = vunpack.c.l.b16 %v1515
      %v1612 = vunpack.c.l.b16 %v1516
      %v1613 = vunpack.c.l.b16 %v1517
      %v1614 = vunpack.c.l.b16 %v1518
      %v1615 = vunpack.c.l.b16 %v1519
      %v1616 = vunpack.c.l.b16 %v1520
      %v1617 = vunpack.c.l.b16 %v1521
      %v1618 = vunpack.c.l.b16 %v1522
      %v1619 = vunpack.c.l.b16 %v1523
      %v1620 = vunpack.c.l.b16 %v1524
      %v1621 = vunpack.c.l.b16 %v1525
      %v1622 = vunpack.c.l.b16 %v1526
      %v1623 = vunpack.c.l.b16 %v1527
      %v1624 = vunpack.c.l.b16 %v1528
      %v1625 = vunpack.c.l.b16 %v1529
      %v1626 = vunpack.c.l.b16 %v1530
      %v1627 = vunpack.c.l.b16 %v1531
      %v1628 = vunpack.c.l.b16 %v1532
      %v1629 = vunpack.c.l.b16 %v1533
      %v1630 = vunpack.c.l.b16 %v1534
      %v1631 = vpack.c.b16 %v1584, %v1583
      %v1632 = vpack.c.b16 %v1586, %v1585
      %v1633 = vpack.c.b16 %v1588, %v1587
      %v1634 = vpack.c.b16 %v1590, %v1589
      %v1635 = vpack.c.b16 %v1592, %v1591
      %v1636 = vpack.c.b16 %v1594, %v1593
      %v1637 = vpack.c.b16 %v1596, %v1595
      %v1638 = vpack.c.b16 %v1598, %v1597
      %v1639 = vpack.c.b16 %v1600, %v1599
      %v1640 = vpack.c.b16 %v1602, %v1601
      %v1641 = vpack.c.b16 %v1604, %v1603
      %v1642 = vpack.c.b16 %v1606, %v1605
      %v1643 = vpack.c.b16 %v1608, %v1607
      %v1644 = vpack.c.b16 %v1610, %v1609
      %v1645 = vpack.c.b16 %v1612, %v1611
      %v1646 = vpack.c.b16 %v1614, %v1613
      %v1647 = vpack.c.b16 %v1616, %v1615
      %v1648 = vpack.c.b16 %v1618, %v1617
      %v1649 = vpack.c.b16 %v1620, %v1619
      %v1650 = vpack.c.b16 %v1622, %v1621
      %v1651 = vpack.c.b16 %v1624, %v1623
      %v1652 = vpack.c.b16 %v1626, %v1625
      %v1653 = vpack.c.b16 %v1628, %v1627
      %v1654 = vpack.c.b16 %v1630, %v1629
      %1679 = vmatprep.subr.bf16.mxu0 0
      %1680 = vmatpush1.bf16.msra.mxu0 %v1631
      %1681 = vmatprep.subr.bf16.mxu0 0
      %1682 = vmatpush1.bf16.msra.mxu0 %v1632
      %1683 = vmatprep.subr.bf16.mxu0 0
      %1684 = vmatpush1.bf16.msra.mxu0 %v1633
      %1685 = vmatprep.subr.bf16.mxu0 0
      %1686 = vmatpush1.bf16.msra.mxu0 %v1634
      %1687 = vmatprep.subr.bf16.mxu0 0
      %1688 = vmatpush1.bf16.msra.mxu0 %v1635
      %1689 = vmatprep.subr.bf16.mxu0 0
      %1690 = vmatpush1.bf16.msra.mxu0 %v1636
      %1691 = vmatprep.subr.bf16.mxu0 0
      %1692 = vmatpush1.bf16.msra.mxu0 %v1637
      %1693 = vmatprep.subr.bf16.mxu0 0
      %1694 = vmatpush1.bf16.msra.mxu0 %v1638
      %1695 = vmatprep.subr.bf16.mxu0 0
      %1696 = vmatpush1.bf16.msra.mxu0 %v1639
      %1697 = vmatprep.subr.bf16.mxu0 0
      %1698 = vmatpush1.bf16.msra.mxu0 %v1640
      %1699 = vmatprep.subr.bf16.mxu0 0
      %1700 = vmatpush1.bf16.msra.mxu0 %v1641
      %1701 = vmatprep.subr.bf16.mxu0 0
      %1702 = vmatpush1.bf16.msra.mxu0 %v1642
      %1703 = vmatprep.subr.bf16.mxu0 0
      %1704 = vmatpush1.bf16.msra.mxu0 %v1643
      %1705 = vmatprep.subr.bf16.mxu0 0
      %1706 = vmatpush1.bf16.msra.mxu0 %v1644
      %1707 = vmatprep.subr.bf16.mxu0 0
      %1708 = vmatpush1.bf16.msra.mxu0 %v1645
      %1709 = vmatprep.subr.bf16.mxu0 0
      %1710 = vmatpush1.bf16.msra.mxu0 %v1646
      %1711 = vmatprep.mubr.bf16.mxu0 %v1440
      %1712 = vmatmul.mubr.bf16.gmra.mrb[0].mxu0 %v1439
      %v1713 = vpop.f32.mrb[0].mxu0
      %v1714 = vadd.f32 0.0, %v1713
      %v1715 = vpop.f32.mrb[0].mxu0
      %v1716 = vpop.f32.mrb[0].mxu0
      %v1717 = vadd.f32 0.0, %v1716
      %v1718 = vpop.f32.mrb[0].mxu0
      %1719 = vmatprep.mubr.bf16.mxu0 %v1443
      %1720 = vmatmul.mubr.bf16.gmra.mrb[0].mxu0 %v1442
      %v1721 = vpop.f32.mrb[0].mxu0
      %v1722 = vadd.f32 0.0, %v1721
      %v1723 = vpop.f32.mrb[0].mxu0
      %v1724 = vpop.f32.mrb[0].mxu0
      %v1725 = vadd.f32 0.0, %v1724
      %v1726 = vpop.f32.mrb[0].mxu0
      %1727 = vmatprep.mubr.bf16.mxu0 %v1446
      %1728 = vmatmul.mubr.bf16.gmra.mrb[0].mxu0 %v1445
      %v1729 = vpop.f32.mrb[0].mxu0
      %v1730 = vadd.f32 0.0, %v1729
      %v1731 = vpop.f32.mrb[0].mxu0
      %v1732 = vpop.f32.mrb[0].mxu0
      %v1733 = vadd.f32 0.0, %v1732
      %v1734 = vpop.f32.mrb[0].mxu0
      %1735 = vmatprep.mubr.bf16.mxu0 %v1449
      %1736 = vmatmul.mubr.bf16.gmra.mrb[0].mxu0 %v1448
      %v1737 = vpop.f32.mrb[0].mxu0
      %v1738 = vadd.f32 0.0, %v1737
      %v1739 = vpop.f32.mrb[0].mxu0
      %v1740 = vpop.f32.mrb[0].mxu0
      %v1741 = vadd.f32 0.0, %v1740
      %v1742 = vpop.f32.mrb[0].mxu0
      %1743 = vmatprep.mubr.bf16.mxu0 %v1452
      %1744 = vmatmul.mubr.bf16.gmra.mrb[0].mxu0 %v1451
      %v1745 = vpop.f32.mrb[0].mxu0
      %v1746 = vadd.f32 0.0, %v1745
      %v1747 = vpop.f32.mrb[0].mxu0
      %v1748 = vpop.f32.mrb[0].mxu0
      %v1749 = vadd.f32 0.0, %v1748
      %v1750 = vpop.f32.mrb[0].mxu0
      %1751 = vmatprep.mubr.bf16.mxu0 %v1455
      %1752 = vmatmul.mubr.bf16.gmra.mrb[0].mxu0 %v1454
      %v1753 = vpop.f32.mrb[0].mxu0
      %v1754 = vadd.f32 0.0, %v1753
      %v1755 = vpop.f32.mrb[0].mxu0
      %v1756 = vpop.f32.mrb[0].mxu0
      %v1757 = vadd.f32 0.0, %v1756
      %v1758 = vpop.f32.mrb[0].mxu0
      %1759 = vmatprep.mubr.bf16.mxu0 %v1458
      %1760 = vmatmul.mubr.bf16.gmra.mrb[0].mxu0 %v1457
      %v1761 = vpop.f32.mrb[0].mxu0
      %v1762 = vadd.f32 0.0, %v1761
      %v1763 = vpop.f32.mrb[0].mxu0
      %v1764 = vpop.f32.mrb[0].mxu0
      %v1765 = vadd.f32 0.0, %v1764
      %v1766 = vpop.f32.mrb[0].mxu0
      %1767 = vmatprep.mubr.bf16.mxu0 %v1461
      %1768 = vmatmul.mubr.bf16.gmra.mrb[0].mxu0 %v1460
      %v1769 = vpop.f32.mrb[0].mxu0
      %v1770 = vadd.f32 0.0, %v1769
      %v1771 = vpop.f32.mrb[0].mxu0
      %v1772 = vpop.f32.mrb[0].mxu0
      %v1773 = vadd.f32 0.0, %v1772
      %v1774 = vpop.f32.mrb[0].mxu0
      %1775 = vmatprep.mubr.bf16.mxu0 %v1464
      %1776 = vmatmul.mubr.bf16.gmra.mrb[0].mxu0 %v1463
      %v1777 = vpop.f32.mrb[0].mxu0
      %v1778 = vadd.f32 0.0, %v1777
      %v1779 = vpop.f32.mrb[0].mxu0
      %v1780 = vpop.f32.mrb[0].mxu0
      %v1781 = vadd.f32 0.0, %v1780
      %v1782 = vpop.f32.mrb[0].mxu0
      %1783 = vmatprep.mubr.bf16.mxu0 %v1467
      %1784 = vmatmul.mubr.bf16.gmra.mrb[0].mxu0 %v1466
      %v1785 = vpop.f32.mrb[0].mxu0
      %v1786 = vadd.f32 0.0, %v1785
      %v1787 = vpop.f32.mrb[0].mxu0
      %v1788 = vpop.f32.mrb[0].mxu0
      %v1789 = vadd.f32 0.0, %v1788
      %v1790 = vpop.f32.mrb[0].mxu0
      %1791 = vmatprep.mubr.bf16.mxu0 %v1470
      %1792 = vmatmul.mubr.bf16.gmra.mrb[0].mxu0 %v1469
      %v1793 = vpop.f32.mrb[0].mxu0
      %v1794 = vadd.f32 0.0, %v1793
      %v1795 = vpop.f32.mrb[0].mxu0
      %v1796 = vpop.f32.mrb[0].mxu0
      %v1797 = vadd.f32 0.0, %v1796
      %v1798 = vpop.f32.mrb[0].mxu0
      %1799 = vmatprep.mubr.bf16.mxu0 %v1473
      %1800 = vmatmul.mubr.bf16.gmra.mrb[0].mxu0 %v1472
      %v1801 = vpop.f32.mrb[0].mxu0
      %v1802 = vadd.f32 0.0, %v1801
      %v1803 = vpop.f32.mrb[0].mxu0
      %v1804 = vpop.f32.mrb[0].mxu0
      %v1805 = vadd.f32 0.0, %v1804
      %v1806 = vpop.f32.mrb[0].mxu0
      %1807 = vmatprep.mubr.bf16.mxu0 %v1476
      %1808 = vmatmul.mubr.bf16.gmra.mrb[0].mxu0 %v1475
      %v1809 = vpop.f32.mrb[0].mxu0
      %v1810 = vadd.f32 0.0, %v1809
      %v1811 = vpop.f32.mrb[0].mxu0
      %v1812 = vpop.f32.mrb[0].mxu0
      %v1813 = vadd.f32 0.0, %v1812
      %v1814 = vpop.f32.mrb[0].mxu0
      %1815 = vmatprep.mubr.bf16.mxu0 %v1479
      %1816 = vmatmul.mubr.bf16.gmra.mrb[0].mxu0 %v1478
      %v1817 = vpop.f32.mrb[0].mxu0
      %v1818 = vadd.f32 0.0, %v1817
      %v1819 = vpop.f32.mrb[0].mxu0
      %v1820 = vpop.f32.mrb[0].mxu0
      %v1821 = vadd.f32 0.0, %v1820
      %v1822 = vpop.f32.mrb[0].mxu0
      %1823 = vmatprep.mubr.bf16.mxu0 %v1482
      %1824 = vmatmul.mubr.bf16.gmra.mrb[0].mxu0 %v1481
      %v1825 = vpop.f32.mrb[0].mxu0
      %v1826 = vadd.f32 0.0, %v1825
      %v1827 = vpop.f32.mrb[0].mxu0
      %v1828 = vpop.f32.mrb[0].mxu0
      %v1829 = vadd.f32 0.0, %v1828
      %v1830 = vpop.f32.mrb[0].mxu0
      %1831 = vmatprep.mubr.bf16.mxu0 %v1485
      %1832 = vmatmul.mubr.bf16.gmra.mrb[0].mxu0 %v1484
      %v1833 = vpop.f32.mrb[0].mxu0
      %v1834 = vadd.f32 0.0, %v1833
      %v1835 = vpop.f32.mrb[0].mxu0
      %v1836 = vpop.f32.mrb[0].mxu0
      %v1837 = vadd.f32 0.0, %v1836
      %v1838 = vpop.f32.mrb[0].mxu0
      %1839 = vdwg.mxu0
      %1840 = vmatprep.subr.bf16.mxu0 0
      %1841 = vmatpush1.bf16.msra.mxu0 %v1647
      %1842 = vmatprep.subr.bf16.mxu0 0
      %1843 = vmatpush1.bf16.msra.mxu0 %v1648
      %1844 = vmatprep.subr.bf16.mxu0 0
      %1845 = vmatpush1.bf16.msra.mxu0 %v1649
      %1846 = vmatprep.subr.bf16.mxu0 0
      %1847 = vmatpush1.bf16.msra.mxu0 %v1650
      %1848 = vmatprep.subr.bf16.mxu0 0
      %1849 = vmatpush1.bf16.msra.mxu0 %v1651
      %1850 = vmatprep.subr.bf16.mxu0 0
      %1851 = vmatpush1.bf16.msra.mxu0 %v1652
      %1852 = vmatprep.subr.bf16.mxu0 0
      %1853 = vmatpush1.bf16.msra.mxu0 %v1653
      %1854 = vmatprep.subr.bf16.mxu0 0
      %1855 = vmatpush1.bf16.msra.mxu0 %v1654
      %1856 = vmatprep.subr.bf16.mxu0 0
      %1857 = vmatpush1.bf16.msra.mxu0 0
      %1858 = vmatprep.subr.bf16.mxu0 0
      %1859 = vmatpush1.bf16.msra.mxu0 0
      %1860 = vmatprep.subr.bf16.mxu0 0
      %1861 = vmatpush1.bf16.msra.mxu0 0
      %1862 = vmatprep.subr.bf16.mxu0 0
      %1863 = vmatpush1.bf16.msra.mxu0 0
      %1864 = vmatprep.subr.bf16.mxu0 0
      %1865 = vmatpush1.bf16.msra.mxu0 0
      %1866 = vmatprep.subr.bf16.mxu0 0
      %1867 = vmatpush1.bf16.msra.mxu0 0
      %1868 = vmatprep.subr.bf16.mxu0 0
      %1869 = vmatpush1.bf16.msra.mxu0 0
      %1870 = vmatprep.subr.bf16.mxu0 0
      %1871 = vmatpush1.bf16.msra.mxu0 0
      %1872 = vmatprep.mubr.bf16.mxu0 0
      %1873 = vmatmul.mubr.bf16.gmra.mrb[0].mxu0 %v1441
      %v1874 = vpop.f32.mrb[0].mxu0
      %v1875 = vadd.f32 %v1714, %v1874
      %v1876 = vpop.f32.mrb[0].mxu0
      %v1877 = vpop.f32.mrb[0].mxu0
      %v1878 = vadd.f32 %v1717, %v1877
      %v1879 = vpop.f32.mrb[0].mxu0
      %1880 = vmatprep.mubr.bf16.mxu0 0
      %1881 = vmatmul.mubr.bf16.gmra.mrb[0].mxu0 %v1444
      %v1882 = vpop.f32.mrb[0].mxu0
      %v1883 = vadd.f32 %v1722, %v1882
      %v1884 = vpop.f32.mrb[0].mxu0
      %v1885 = vpop.f32.mrb[0].mxu0
      %v1886 = vadd.f32 %v1725, %v1885
      %v1887 = vpop.f32.mrb[0].mxu0
      %1888 = vmatprep.mubr.bf16.mxu0 0
      %1889 = vmatmul.mubr.bf16.gmra.mrb[0].mxu0 %v1447
      %v1890 = vpop.f32.mrb[0].mxu0
      %v1891 = vadd.f32 %v1730, %v1890
      %v1892 = vpop.f32.mrb[0].mxu0
      %v1893 = vpop.f32.mrb[0].mxu0
      %v1894 = vadd.f32 %v1733, %v1893
      %v1895 = vpop.f32.mrb[0].mxu0
      %1896 = vmatprep.mubr.bf16.mxu0 0
      %1897 = vmatmul.mubr.bf16.gmra.mrb[0].mxu0 %v1450
      %v1898 = vpop.f32.mrb[0].mxu0
      %v1899 = vadd.f32 %v1738, %v1898
      %v1900 = vpop.f32.mrb[0].mxu0
      %v1901 = vpop.f32.mrb[0].mxu0
      %v1902 = vadd.f32 %v1741, %v1901
      %v1903 = vpop.f32.mrb[0].mxu0
      %1904 = vmatprep.mubr.bf16.mxu0 0
      %1905 = vmatmul.mubr.bf16.gmra.mrb[0].mxu0 %v1453
      %v1906 = vpop.f32.mrb[0].mxu0
      %v1907 = vadd.f32 %v1746, %v1906
      %v1908 = vpop.f32.mrb[0].mxu0
      %v1909 = vpop.f32.mrb[0].mxu0
      %v1910 = vadd.f32 %v1749, %v1909
      %v1911 = vpop.f32.mrb[0].mxu0
      %1912 = vmatprep.mubr.bf16.mxu0 0
      %1913 = vmatmul.mubr.bf16.gmra.mrb[0].mxu0 %v1456
      %v1914 = vpop.f32.mrb[0].mxu0
      %v1915 = vadd.f32 %v1754, %v1914
      %v1916 = vpop.f32.mrb[0].mxu0
      %v1917 = vpop.f32.mrb[0].mxu0
      %v1918 = vadd.f32 %v1757, %v1917
      %v1919 = vpop.f32.mrb[0].mxu0
      %1920 = vmatprep.mubr.bf16.mxu0 0
      %1921 = vmatmul.mubr.bf16.gmra.mrb[0].mxu0 %v1459
      %v1922 = vpop.f32.mrb[0].mxu0
      %v1923 = vadd.f32 %v1762, %v1922
      %v1924 = vpop.f32.mrb[0].mxu0
      %v1925 = vpop.f32.mrb[0].mxu0
      %v1926 = vadd.f32 %v1765, %v1925
      %v1927 = vpop.f32.mrb[0].mxu0
      %1928 = vmatprep.mubr.bf16.mxu0 0
      %1929 = vmatmul.mubr.bf16.gmra.mrb[0].mxu0 %v1462
      %v1930 = vpop.f32.mrb[0].mxu0
      %v1931 = vadd.f32 %v1770, %v1930
      %v1932 = vpop.f32.mrb[0].mxu0
      %v1933 = vpop.f32.mrb[0].mxu0
      %v1934 = vadd.f32 %v1773, %v1933
      %v1935 = vpop.f32.mrb[0].mxu0
      %1936 = vmatprep.mubr.bf16.mxu0 0
      %1937 = vmatmul.mubr.bf16.gmra.mrb[0].mxu0 %v1465
      %v1938 = vpop.f32.mrb[0].mxu0
      %v1939 = vadd.f32 %v1778, %v1938
      %v1940 = vpop.f32.mrb[0].mxu0
      %v1941 = vpop.f32.mrb[0].mxu0
      %v1942 = vadd.f32 %v1781, %v1941
      %v1943 = vpop.f32.mrb[0].mxu0
      %1944 = vmatprep.mubr.bf16.mxu0 0
      %1945 = vmatmul.mubr.bf16.gmra.mrb[0].mxu0 %v1468
      %v1946 = vpop.f32.mrb[0].mxu0
      %v1947 = vadd.f32 %v1786, %v1946
      %v1948 = vpop.f32.mrb[0].mxu0
      %v1949 = vpop.f32.mrb[0].mxu0
      %v1950 = vadd.f32 %v1789, %v1949
      %v1951 = vpop.f32.mrb[0].mxu0
      %1952 = vmatprep.mubr.bf16.mxu0 0
      %1953 = vmatmul.mubr.bf16.gmra.mrb[0].mxu0 %v1471
      %v1954 = vpop.f32.mrb[0].mxu0
      %v1955 = vadd.f32 %v1794, %v1954
      %v1956 = vpop.f32.mrb[0].mxu0
      %v1957 = vpop.f32.mrb[0].mxu0
      %v1958 = vadd.f32 %v1797, %v1957
      %v1959 = vpop.f32.mrb[0].mxu0
      %1960 = vmatprep.mubr.bf16.mxu0 0
      %1961 = vmatmul.mubr.bf16.gmra.mrb[0].mxu0 %v1474
      %v1962 = vpop.f32.mrb[0].mxu0
      %v1963 = vadd.f32 %v1802, %v1962
      %v1964 = vpop.f32.mrb[0].mxu0
      %v1965 = vpop.f32.mrb[0].mxu0
      %v1966 = vadd.f32 %v1805, %v1965
      %v1967 = vpop.f32.mrb[0].mxu0
      %1968 = vmatprep.mubr.bf16.mxu0 0
      %1969 = vmatmul.mubr.bf16.gmra.mrb[0].mxu0 %v1477
      %v1970 = vpop.f32.mrb[0].mxu0
      %v1971 = vadd.f32 %v1810, %v1970
      %v1972 = vpop.f32.mrb[0].mxu0
      %v1973 = vpop.f32.mrb[0].mxu0
      %v1974 = vadd.f32 %v1813, %v1973
      %v1975 = vpop.f32.mrb[0].mxu0
      %1976 = vmatprep.mubr.bf16.mxu0 0
      %1977 = vmatmul.mubr.bf16.gmra.mrb[0].mxu0 %v1480
      %v1978 = vpop.f32.mrb[0].mxu0
      %v1979 = vadd.f32 %v1818, %v1978
      %v1980 = vpop.f32.mrb[0].mxu0
      %v1981 = vpop.f32.mrb[0].mxu0
      %v1982 = vadd.f32 %v1821, %v1981
      %v1983 = vpop.f32.mrb[0].mxu0
      %1984 = vmatprep.mubr.bf16.mxu0 0
      %1985 = vmatmul.mubr.bf16.gmra.mrb[0].mxu0 %v1483
      %v1986 = vpop.f32.mrb[0].mxu0
      %v1987 = vadd.f32 %v1826, %v1986
      %v1988 = vpop.f32.mrb[0].mxu0
      %v1989 = vpop.f32.mrb[0].mxu0
      %v1990 = vadd.f32 %v1829, %v1989
      %v1991 = vpop.f32.mrb[0].mxu0
      %1992 = vmatprep.mubr.bf16.mxu0 0
      %1993 = vmatmul.mubr.bf16.gmra.mrb[0].mxu0 %v1486
      %v1994 = vpop.f32.mrb[0].mxu0
      %v1995 = vadd.f32 %v1834, %v1994
      %v1996 = vpop.f32.mrb[0].mxu0
      %v1997 = vpop.f32.mrb[0].mxu0
      %v1998 = vadd.f32 %v1837, %v1997
      %v1999 = vpop.f32.mrb[0].mxu0
      %2000 = vdwg.mxu0
      %v2001 = vrcp.pop %v1314
      %v2002 = vrcp.pop %v1318
      %v2003 = vrcp.pop %v1322
      %v2004 = vrcp.pop %v1326
      %v2005 = vrcp.pop %v1330
      %v2006 = vrcp.pop %v1334
      %v2007 = vrcp.pop %v1338
      %v2008 = vrcp.pop %v1342
      %v2009 = vrcp.pop %v1346
      %v2010 = vrcp.pop %v1350
      %v2011 = vrcp.pop %v1354
      %v2012 = vrcp.pop %v1358
      %v2013 = vrcp.pop %v1362
      %v2014 = vrcp.pop %v1366
      %v2015 = vrcp.pop %v1370
      %v2016 = vrcp.pop %v1374
      %v2017 = vrcp.pop %v1378
      %v2018 = vrcp.pop %v1382
      %v2019 = vrcp.pop %v1386
      %v2020 = vrcp.pop %v1390
      %v2021 = vrcp.pop %v1394
      %v2022 = vrcp.pop %v1398
      %v2023 = vrcp.pop %v1402
      %v2024 = vrcp.pop %v1406
      %v2025 = vrcp.pop %v1410
      %v2026 = vrcp.pop %v1414
      %v2027 = vrcp.pop %v1418
      %v2028 = vrcp.pop %v1422
      %v2029 = vrcp.pop %v1426
      %v2030 = vrcp.pop %v1430
      %v2031 = vrcp.pop %v1434
      %v2032 = vrcp.pop %v1438
      %v2033 = vmul.f32 %v1875, %v2001
      %v2034 = vmul.f32 %v1878, %v2002
      %v2035 = vmul.f32 %v1883, %v2003
      %v2036 = vmul.f32 %v1886, %v2004
      %v2037 = vmul.f32 %v1891, %v2005
      %v2038 = vmul.f32 %v1894, %v2006
      %v2039 = vmul.f32 %v1899, %v2007
      %v2040 = vmul.f32 %v1902, %v2008
      %v2041 = vmul.f32 %v1907, %v2009
      %v2042 = vmul.f32 %v1910, %v2010
      %v2043 = vmul.f32 %v1915, %v2011
      %v2044 = vmul.f32 %v1918, %v2012
      %v2045 = vmul.f32 %v1923, %v2013
      %v2046 = vmul.f32 %v1926, %v2014
      %v2047 = vmul.f32 %v1931, %v2015
      %v2048 = vmul.f32 %v1934, %v2016
      %v2049 = vmul.f32 %v1939, %v2017
      %v2050 = vmul.f32 %v1942, %v2018
      %v2051 = vmul.f32 %v1947, %v2019
      %v2052 = vmul.f32 %v1950, %v2020
      %v2053 = vmul.f32 %v1955, %v2021
      %v2054 = vmul.f32 %v1958, %v2022
      %v2055 = vmul.f32 %v1963, %v2023
      %v2056 = vmul.f32 %v1966, %v2024
      %v2057 = vmul.f32 %v1971, %v2025
      %v2058 = vmul.f32 %v1974, %v2026
      %v2059 = vmul.f32 %v1979, %v2027
      %v2060 = vmul.f32 %v1982, %v2028
      %v2061 = vmul.f32 %v1987, %v2029
      %v2062 = vmul.f32 %v1990, %v2030
      %v2063 = vmul.f32 %v1995, %v2031
      %v2064 = vmul.f32 %v1998, %v2032
      %s2065 = scalar_lea.vmem %s228, 128
      %v2066 = vld [vmem:[%s2065] sm:$0xf]
      %v2067 = vld [vmem:[%s2065 + $0x4] sm:$0xf]
      %v2068 = vld [vmem:[%s2065 + $0x8] sm:$0xf]
      %v2069 = vld [vmem:[%s2065 + $0xc] sm:$0xf]
      %v2070 = vld [vmem:[%s2065 + $0x10] sm:$0xf]
      %v2071 = vld [vmem:[%s2065 + $0x14] sm:$0xf]
      %v2072 = vld [vmem:[%s2065 + $0x18] sm:$0xf]
      %v2073 = vld [vmem:[%s2065 + $0x1c] sm:$0xf]
      %v2074 = vld [vmem:[%s2065 + $0x20] sm:$0xf]
      %v2075 = vld [vmem:[%s2065 + $0x24] sm:$0xf]
      %v2076 = vld [vmem:[%s2065 + $0x28] sm:$0xf]
      %v2077 = vld [vmem:[%s2065 + $0x2c] sm:$0xf]
      %v2078 = vld [vmem:[%s2065 + $0x30] sm:$0xf]
      %v2079 = vld [vmem:[%s2065 + $0x34] sm:$0xf]
      %v2080 = vld [vmem:[%s2065 + $0x38] sm:$0xf]
      %v2081 = vld [vmem:[%s2065 + $0x3c] sm:$0xf]
      %v2082 = vld [vmem:[%s2065 + $0x40] sm:$0xf]
      %v2083 = vld [vmem:[%s2065 + $0x44] sm:$0xf]
      %v2084 = vld [vmem:[%s2065 + $0x48] sm:$0xf]
      %v2085 = vld [vmem:[%s2065 + $0x4c] sm:$0xf]
      %v2086 = vld [vmem:[%s2065 + $0x50] sm:$0xf]
      %v2087 = vld [vmem:[%s2065 + $0x54] sm:$0xf]
      %v2088 = vld [vmem:[%s2065 + $0x58] sm:$0xf]
      %v2089 = vld [vmem:[%s2065 + $0x5c] sm:$0xf]
      %v2090 = vld [vmem:[%s2065 + $0x60] sm:$0xf]
      %v2091 = vld [vmem:[%s2065 + $0x64] sm:$0xf]
      %v2092 = vld [vmem:[%s2065 + $0x68] sm:$0xf]
      %v2093 = vld [vmem:[%s2065 + $0x6c] sm:$0xf]
      %v2094 = vld [vmem:[%s2065 + $0x70] sm:$0xf]
      %v2095 = vld [vmem:[%s2065 + $0x74] sm:$0xf]
      %v2096 = vld [vmem:[%s2065 + $0x78] sm:$0xf]
      %v2097 = vld [vmem:[%s2065 + $0x7c] sm:$0xf]
      %s2098 = scalar_lea.vmem %s234, 12
      %v2099 = vld [vmem:[%s2098] sm:$0xff]
      %v2100 = vld [vmem:[%s2098 + $0x8] sm:$0xf]
      %v2133 = vunpack.c.l.b16 %v2066
      %v2134 = vunpack.c.l.b16 %v2067
      %v2135 = vunpack.c.l.b16 %v2068
      %v2136 = vunpack.c.l.b16 %v2069
      %v2137 = vunpack.c.l.b16 %v2070
      %v2138 = vunpack.c.l.b16 %v2071
      %v2139 = vunpack.c.l.b16 %v2072
      %v2140 = vunpack.c.l.b16 %v2073
      %v2141 = vunpack.c.l.b16 %v2074
      %v2142 = vunpack.c.l.b16 %v2075
      %v2143 = vunpack.c.l.b16 %v2076
      %v2144 = vunpack.c.l.b16 %v2077
      %v2145 = vunpack.c.l.b16 %v2078
      %v2146 = vunpack.c.l.b16 %v2079
      %v2147 = vunpack.c.l.b16 %v2080
      %v2148 = vunpack.c.l.b16 %v2081
      %v2149 = vunpack.c.l.b16 %v2082
      %v2150 = vunpack.c.l.b16 %v2083
      %v2151 = vunpack.c.l.b16 %v2084
      %v2152 = vunpack.c.l.b16 %v2085
      %v2153 = vunpack.c.l.b16 %v2086
      %v2154 = vunpack.c.l.b16 %v2087
      %v2155 = vunpack.c.l.b16 %v2088
      %v2156 = vunpack.c.l.b16 %v2089
      %v2157 = vunpack.c.l.b16 %v2090
      %v2158 = vunpack.c.l.b16 %v2091
      %v2159 = vunpack.c.l.b16 %v2092
      %v2160 = vunpack.c.l.b16 %v2093
      %v2161 = vunpack.c.l.b16 %v2094
      %v2162 = vunpack.c.l.b16 %v2095
      %v2163 = vunpack.c.l.b16 %v2096
      %v2164 = vunpack.c.l.b16 %v2097
      %v2165 = vpack.c.b16 %v2134, %v2133
      %v2166 = vpack.c.b16 %v2136, %v2135
      %v2167 = vpack.c.b16 %v2138, %v2137
      %v2168 = vpack.c.b16 %v2140, %v2139
      %v2169 = vpack.c.b16 %v2142, %v2141
      %v2170 = vpack.c.b16 %v2144, %v2143
      %v2171 = vpack.c.b16 %v2146, %v2145
      %v2172 = vpack.c.b16 %v2148, %v2147
      %v2173 = vpack.c.b16 %v2150, %v2149
      %v2174 = vpack.c.b16 %v2152, %v2151
      %v2175 = vpack.c.b16 %v2154, %v2153
      %v2176 = vpack.c.b16 %v2156, %v2155
      %v2177 = vpack.c.b16 %v2158, %v2157
      %v2178 = vpack.c.b16 %v2160, %v2159
      %v2179 = vpack.c.b16 %v2162, %v2161
      %v2180 = vpack.c.b16 %v2164, %v2163
      %v2183 = vunpack.c.l.b16 %v2099
      %v2184 = vunpack.c.h.b16 %v2099
      %v2185 = vunpack.c.l.b16 %v2100
      %v2186 = vpack.c.b16 %v2183, %v2183
      %v2187 = vpack.c.b16 %v2184, %v2184
      %v2188 = vpack.c.b16 %v2185, %v2185
      %v2190 = vsel %vm380, %v2165, 0
      %v2193 = vsel %vm380, %v2166, 0
      %v2196 = vsel %vm380, %v2167, 0
      %v2199 = vsel %vm380, %v2168, 0
      %v2202 = vsel %vm380, %v2169, 0
      %v2205 = vsel %vm380, %v2170, 0
      %v2208 = vsel %vm380, %v2171, 0
      %v2211 = vsel %vm380, %v2172, 0
      %v2214 = vsel %vm380, %v2173, 0
      %v2217 = vsel %vm380, %v2174, 0
      %v2220 = vsel %vm380, %v2175, 0
      %v2223 = vsel %vm380, %v2176, 0
      %v2226 = vsel %vm380, %v2177, 0
      %v2229 = vsel %vm380, %v2178, 0
      %v2232 = vsel %vm380, %v2179, 0
      %v2235 = vsel %vm380, %v2180, 0
      %v2238 = vsel %vm429, %v2186, 0
      %v2241 = vsel %vm429, %v2187, 0
      %v2244 = vsel %vm429, %v2188, 0
      %2246 = vmatprep.subr.bf16.mxu0 %v2241
      %2247 = vmatpush1.bf16.msra.mxu0 %v2238
      %2248 = vmatprep.subr.bf16.mxu0 0
      %2249 = vmatpush1.bf16.msra.mxu0 0
      %2250 = vmatprep.subr.bf16.mxu0 0
      %2251 = vmatpush1.bf16.msra.mxu0 0
      %2252 = vmatprep.subr.bf16.mxu0 0
      %2253 = vmatpush1.bf16.msra.mxu0 0
      %2254 = vmatprep.subr.bf16.mxu0 0
      %2255 = vmatpush1.bf16.msra.mxu0 0
      %2256 = vmatprep.subr.bf16.mxu0 0
      %2257 = vmatpush1.bf16.msra.mxu0 0
      %2258 = vmatprep.subr.bf16.mxu0 0
      %2259 = vmatpush1.bf16.msra.mxu0 0
      %2260 = vmatprep.subr.bf16.mxu0 0
      %2261 = vmatpush1.bf16.msra.mxu0 0
      %2262 = vmatprep.subr.bf16.mxu0 0
      %2263 = vmatpush1.bf16.msra.mxu0 0
      %2264 = vmatprep.subr.bf16.mxu0 0
      %2265 = vmatpush1.bf16.msra.mxu0 0
      %2266 = vmatprep.subr.bf16.mxu0 0
      %2267 = vmatpush1.bf16.msra.mxu0 0
      %2268 = vmatprep.subr.bf16.mxu0 0
      %2269 = vmatpush1.bf16.msra.mxu0 0
      %2270 = vmatprep.subr.bf16.mxu0 0
      %2271 = vmatpush1.bf16.msra.mxu0 0
      %2272 = vmatprep.subr.bf16.mxu0 0
      %2273 = vmatpush1.bf16.msra.mxu0 0
      %2274 = vmatprep.subr.bf16.mxu0 0
      %2275 = vmatpush1.bf16.msra.mxu0 0
      %2276 = vmatprep.subr.bf16.mxu0 0
      %2277 = vmatpush1.bf16.msra.mxu0 0
      %2278 = vmatprep.mubr.bf16.mxu0 0
      %2279 = vmatmul.mubr.bf16.gmra.mrb[0].mxu0 %v2190
      %v2280 = vpop.f32.mrb[0].mxu0
      %v2281 = vadd.f32 0.0, %v2280
      %v2282 = vpop.f32.mrb[0].mxu0
      %v2283 = vadd.f32 0.0, %v2282
      %v2284 = vpop.f32.mrb[0].mxu0
      %v2285 = vadd.f32 0.0, %v2284
      %v2286 = vpop.f32.mrb[0].mxu0
      %v2287 = vadd.f32 0.0, %v2286
      %2288 = vmatprep.mubr.bf16.mxu0 0
      %2289 = vmatmul.mubr.bf16.gmra.mrb[0].mxu0 %v2193
      %v2290 = vpop.f32.mrb[0].mxu0
      %v2291 = vadd.f32 0.0, %v2290
      %v2292 = vpop.f32.mrb[0].mxu0
      %v2293 = vadd.f32 0.0, %v2292
      %v2294 = vpop.f32.mrb[0].mxu0
      %v2295 = vadd.f32 0.0, %v2294
      %v2296 = vpop.f32.mrb[0].mxu0
      %v2297 = vadd.f32 0.0, %v2296
      %2298 = vmatprep.mubr.bf16.mxu0 0
      %2299 = vmatmul.mubr.bf16.gmra.mrb[0].mxu0 %v2196
      %v2300 = vpop.f32.mrb[0].mxu0
      %v2301 = vadd.f32 0.0, %v2300
      %v2302 = vpop.f32.mrb[0].mxu0
      %v2303 = vadd.f32 0.0, %v2302
      %v2304 = vpop.f32.mrb[0].mxu0
      %v2305 = vadd.f32 0.0, %v2304
      %v2306 = vpop.f32.mrb[0].mxu0
      %v2307 = vadd.f32 0.0, %v2306
      %2308 = vmatprep.mubr.bf16.mxu0 0
      %2309 = vmatmul.mubr.bf16.gmra.mrb[0].mxu0 %v2199
      %v2310 = vpop.f32.mrb[0].mxu0
      %v2311 = vadd.f32 0.0, %v2310
      %v2312 = vpop.f32.mrb[0].mxu0
      %v2313 = vadd.f32 0.0, %v2312
      %v2314 = vpop.f32.mrb[0].mxu0
      %v2315 = vadd.f32 0.0, %v2314
      %v2316 = vpop.f32.mrb[0].mxu0
      %v2317 = vadd.f32 0.0, %v2316
      %2318 = vmatprep.mubr.bf16.mxu0 0
      %2319 = vmatmul.mubr.bf16.gmra.mrb[0].mxu0 %v2202
      %v2320 = vpop.f32.mrb[0].mxu0
      %v2321 = vadd.f32 0.0, %v2320
      %v2322 = vpop.f32.mrb[0].mxu0
      %v2323 = vadd.f32 0.0, %v2322
      %v2324 = vpop.f32.mrb[0].mxu0
      %v2325 = vadd.f32 0.0, %v2324
      %v2326 = vpop.f32.mrb[0].mxu0
      %v2327 = vadd.f32 0.0, %v2326
      %2328 = vmatprep.mubr.bf16.mxu0 0
      %2329 = vmatmul.mubr.bf16.gmra.mrb[0].mxu0 %v2205
      %v2330 = vpop.f32.mrb[0].mxu0
      %v2331 = vadd.f32 0.0, %v2330
      %v2332 = vpop.f32.mrb[0].mxu0
      %v2333 = vadd.f32 0.0, %v2332
      %v2334 = vpop.f32.mrb[0].mxu0
      %v2335 = vadd.f32 0.0, %v2334
      %v2336 = vpop.f32.mrb[0].mxu0
      %v2337 = vadd.f32 0.0, %v2336
      %2338 = vmatprep.mubr.bf16.mxu0 0
      %2339 = vmatmul.mubr.bf16.gmra.mrb[0].mxu0 %v2208
      %v2340 = vpop.f32.mrb[0].mxu0
      %v2341 = vadd.f32 0.0, %v2340
      %v2342 = vpop.f32.mrb[0].mxu0
      %v2343 = vadd.f32 0.0, %v2342
      %v2344 = vpop.f32.mrb[0].mxu0
      %v2345 = vadd.f32 0.0, %v2344
      %v2346 = vpop.f32.mrb[0].mxu0
      %v2347 = vadd.f32 0.0, %v2346
      %2348 = vmatprep.mubr.bf16.mxu0 0
      %2349 = vmatmul.mubr.bf16.gmra.mrb[0].mxu0 %v2211
      %v2350 = vpop.f32.mrb[0].mxu0
      %v2351 = vadd.f32 0.0, %v2350
      %v2352 = vpop.f32.mrb[0].mxu0
      %v2353 = vadd.f32 0.0, %v2352
      %v2354 = vpop.f32.mrb[0].mxu0
      %v2355 = vadd.f32 0.0, %v2354
      %v2356 = vpop.f32.mrb[0].mxu0
      %v2357 = vadd.f32 0.0, %v2356
      %2358 = vmatprep.mubr.bf16.mxu0 0
      %2359 = vmatmul.mubr.bf16.gmra.mrb[0].mxu0 %v2214
      %v2360 = vpop.f32.mrb[0].mxu0
      %v2361 = vadd.f32 0.0, %v2360
      %v2362 = vpop.f32.mrb[0].mxu0
      %v2363 = vadd.f32 0.0, %v2362
      %v2364 = vpop.f32.mrb[0].mxu0
      %v2365 = vadd.f32 0.0, %v2364
      %v2366 = vpop.f32.mrb[0].mxu0
      %v2367 = vadd.f32 0.0, %v2366
      %2368 = vmatprep.mubr.bf16.mxu0 0
      %2369 = vmatmul.mubr.bf16.gmra.mrb[0].mxu0 %v2217
      %v2370 = vpop.f32.mrb[0].mxu0
      %v2371 = vadd.f32 0.0, %v2370
      %v2372 = vpop.f32.mrb[0].mxu0
      %v2373 = vadd.f32 0.0, %v2372
      %v2374 = vpop.f32.mrb[0].mxu0
      %v2375 = vadd.f32 0.0, %v2374
      %v2376 = vpop.f32.mrb[0].mxu0
      %v2377 = vadd.f32 0.0, %v2376
      %2378 = vmatprep.mubr.bf16.mxu0 0
      %2379 = vmatmul.mubr.bf16.gmra.mrb[0].mxu0 %v2220
      %v2380 = vpop.f32.mrb[0].mxu0
      %v2381 = vadd.f32 0.0, %v2380
      %v2382 = vpop.f32.mrb[0].mxu0
      %v2383 = vadd.f32 0.0, %v2382
      %v2384 = vpop.f32.mrb[0].mxu0
      %v2385 = vadd.f32 0.0, %v2384
      %v2386 = vpop.f32.mrb[0].mxu0
      %v2387 = vadd.f32 0.0, %v2386
      %2388 = vmatprep.mubr.bf16.mxu0 0
      %2389 = vmatmul.mubr.bf16.gmra.mrb[0].mxu0 %v2223
      %v2390 = vpop.f32.mrb[0].mxu0
      %v2391 = vadd.f32 0.0, %v2390
      %v2392 = vpop.f32.mrb[0].mxu0
      %v2393 = vadd.f32 0.0, %v2392
      %v2394 = vpop.f32.mrb[0].mxu0
      %v2395 = vadd.f32 0.0, %v2394
      %v2396 = vpop.f32.mrb[0].mxu0
      %v2397 = vadd.f32 0.0, %v2396
      %2398 = vmatprep.mubr.bf16.mxu0 0
      %2399 = vmatmul.mubr.bf16.gmra.mrb[0].mxu0 %v2226
      %v2400 = vpop.f32.mrb[0].mxu0
      %v2401 = vadd.f32 0.0, %v2400
      %v2402 = vpop.f32.mrb[0].mxu0
      %v2403 = vadd.f32 0.0, %v2402
      %v2404 = vpop.f32.mrb[0].mxu0
      %v2405 = vadd.f32 0.0, %v2404
      %v2406 = vpop.f32.mrb[0].mxu0
      %v2407 = vadd.f32 0.0, %v2406
      %2408 = vmatprep.mubr.bf16.mxu0 0
      %2409 = vmatmul.mubr.bf16.gmra.mrb[0].mxu0 %v2229
      %v2410 = vpop.f32.mrb[0].mxu0
      %v2411 = vadd.f32 0.0, %v2410
      %v2412 = vpop.f32.mrb[0].mxu0
      %v2413 = vadd.f32 0.0, %v2412
      %v2414 = vpop.f32.mrb[0].mxu0
      %v2415 = vadd.f32 0.0, %v2414
      %v2416 = vpop.f32.mrb[0].mxu0
      %v2417 = vadd.f32 0.0, %v2416
      %2418 = vmatprep.mubr.bf16.mxu0 0
      %2419 = vmatmul.mubr.bf16.gmra.mrb[0].mxu0 %v2232
      %v2420 = vpop.f32.mrb[0].mxu0
      %v2421 = vadd.f32 0.0, %v2420
      %v2422 = vpop.f32.mrb[0].mxu0
      %v2423 = vadd.f32 0.0, %v2422
      %v2424 = vpop.f32.mrb[0].mxu0
      %v2425 = vadd.f32 0.0, %v2424
      %v2426 = vpop.f32.mrb[0].mxu0
      %v2427 = vadd.f32 0.0, %v2426
      %2428 = vmatprep.mubr.bf16.mxu0 0
      %2429 = vmatmul.mubr.bf16.gmra.mrb[0].mxu0 %v2235
      %v2430 = vpop.f32.mrb[0].mxu0
      %v2431 = vadd.f32 0.0, %v2430
      %v2432 = vpop.f32.mrb[0].mxu0
      %v2433 = vadd.f32 0.0, %v2432
      %v2434 = vpop.f32.mrb[0].mxu0
      %v2435 = vadd.f32 0.0, %v2434
      %v2436 = vpop.f32.mrb[0].mxu0
      %v2437 = vadd.f32 0.0, %v2436
      %2438 = vdwg.mxu0
      %2439 = vmatprep.subr.bf16.mxu0 0
      %2440 = vmatpush1.bf16.msra.mxu0 %v2244
      %2441 = vmatprep.subr.bf16.mxu0 0
      %2442 = vmatpush1.bf16.msra.mxu0 0
      %2443 = vmatprep.subr.bf16.mxu0 0
      %2444 = vmatpush1.bf16.msra.mxu0 0
      %2445 = vmatprep.subr.bf16.mxu0 0
      %2446 = vmatpush1.bf16.msra.mxu0 0
      %2447 = vmatprep.subr.bf16.mxu0 0
      %2448 = vmatpush1.bf16.msra.mxu0 0
      %2449 = vmatprep.subr.bf16.mxu0 0
      %2450 = vmatpush1.bf16.msra.mxu0 0
      %2451 = vmatprep.subr.bf16.mxu0 0
      %2452 = vmatpush1.bf16.msra.mxu0 0
      %2453 = vmatprep.subr.bf16.mxu0 0
      %2454 = vmatpush1.bf16.msra.mxu0 0
      %2455 = vmatprep.subr.bf16.mxu0 0
      %2456 = vmatpush1.bf16.msra.mxu0 0
      %2457 = vmatprep.subr.bf16.mxu0 0
      %2458 = vmatpush1.bf16.msra.mxu0 0
      %2459 = vmatprep.subr.bf16.mxu0 0
      %2460 = vmatpush1.bf16.msra.mxu0 0
      %2461 = vmatprep.subr.bf16.mxu0 0
      %2462 = vmatpush1.bf16.msra.mxu0 0
      %2463 = vmatprep.subr.bf16.mxu0 0
      %2464 = vmatpush1.bf16.msra.mxu0 0
      %2465 = vmatprep.subr.bf16.mxu0 0
      %2466 = vmatpush1.bf16.msra.mxu0 0
      %2467 = vmatprep.subr.bf16.mxu0 0
      %2468 = vmatpush1.bf16.msra.mxu0 0
      %2469 = vmatprep.subr.bf16.mxu0 0
      %2470 = vmatpush1.bf16.msra.mxu0 0
      %2471 = vmatprep.mubr.bf16.mxu0 0
      %2472 = vmatmul.mubr.bf16.gmra.mrb[0].mxu0 %v2190
      %v2473 = vpop.f32.mrb[0].mxu0
      %v2474 = vadd.f32 0.0, %v2473
      %v2475 = vpop.f32.mrb[0].mxu0
      %v2476 = vpop.f32.mrb[0].mxu0
      %v2477 = vadd.f32 0.0, %v2476
      %v2478 = vpop.f32.mrb[0].mxu0
      %2479 = vmatprep.mubr.bf16.mxu0 0
      %2480 = vmatmul.mubr.bf16.gmra.mrb[0].mxu0 %v2193
      %v2481 = vpop.f32.mrb[0].mxu0
      %v2482 = vadd.f32 0.0, %v2481
      %v2483 = vpop.f32.mrb[0].mxu0
      %v2484 = vpop.f32.mrb[0].mxu0
      %v2485 = vadd.f32 0.0, %v2484
      %v2486 = vpop.f32.mrb[0].mxu0
      %2487 = vmatprep.mubr.bf16.mxu0 0
      %2488 = vmatmul.mubr.bf16.gmra.mrb[0].mxu0 %v2196
      %v2489 = vpop.f32.mrb[0].mxu0
      %v2490 = vadd.f32 0.0, %v2489
      %v2491 = vpop.f32.mrb[0].mxu0
      %v2492 = vpop.f32.mrb[0].mxu0
      %v2493 = vadd.f32 0.0, %v2492
      %v2494 = vpop.f32.mrb[0].mxu0
      %2495 = vmatprep.mubr.bf16.mxu0 0
      %2496 = vmatmul.mubr.bf16.gmra.mrb[0].mxu0 %v2199
      %v2497 = vpop.f32.mrb[0].mxu0
      %v2498 = vadd.f32 0.0, %v2497
      %v2499 = vpop.f32.mrb[0].mxu0
      %v2500 = vpop.f32.mrb[0].mxu0
      %v2501 = vadd.f32 0.0, %v2500
      %v2502 = vpop.f32.mrb[0].mxu0
      %2503 = vmatprep.mubr.bf16.mxu0 0
      %2504 = vmatmul.mubr.bf16.gmra.mrb[0].mxu0 %v2202
      %v2505 = vpop.f32.mrb[0].mxu0
      %v2506 = vadd.f32 0.0, %v2505
      %v2507 = vpop.f32.mrb[0].mxu0
      %v2508 = vpop.f32.mrb[0].mxu0
      %v2509 = vadd.f32 0.0, %v2508
      %v2510 = vpop.f32.mrb[0].mxu0
      %2511 = vmatprep.mubr.bf16.mxu0 0
      %2512 = vmatmul.mubr.bf16.gmra.mrb[0].mxu0 %v2205
      %v2513 = vpop.f32.mrb[0].mxu0
      %v2514 = vadd.f32 0.0, %v2513
      %v2515 = vpop.f32.mrb[0].mxu0
      %v2516 = vpop.f32.mrb[0].mxu0
      %v2517 = vadd.f32 0.0, %v2516
      %v2518 = vpop.f32.mrb[0].mxu0
      %2519 = vmatprep.mubr.bf16.mxu0 0
      %2520 = vmatmul.mubr.bf16.gmra.mrb[0].mxu0 %v2208
      %v2521 = vpop.f32.mrb[0].mxu0
      %v2522 = vadd.f32 0.0, %v2521
      %v2523 = vpop.f32.mrb[0].mxu0
      %v2524 = vpop.f32.mrb[0].mxu0
      %v2525 = vadd.f32 0.0, %v2524
      %v2526 = vpop.f32.mrb[0].mxu0
      %2527 = vmatprep.mubr.bf16.mxu0 0
      %2528 = vmatmul.mubr.bf16.gmra.mrb[0].mxu0 %v2211
      %v2529 = vpop.f32.mrb[0].mxu0
      %v2530 = vadd.f32 0.0, %v2529
      %v2531 = vpop.f32.mrb[0].mxu0
      %v2532 = vpop.f32.mrb[0].mxu0
      %v2533 = vadd.f32 0.0, %v2532
      %v2534 = vpop.f32.mrb[0].mxu0
      %2535 = vmatprep.mubr.bf16.mxu0 0
      %2536 = vmatmul.mubr.bf16.gmra.mrb[0].mxu0 %v2214
      %v2537 = vpop.f32.mrb[0].mxu0
      %v2538 = vadd.f32 0.0, %v2537
      %v2539 = vpop.f32.mrb[0].mxu0
      %v2540 = vpop.f32.mrb[0].mxu0
      %v2541 = vadd.f32 0.0, %v2540
      %v2542 = vpop.f32.mrb[0].mxu0
      %2543 = vmatprep.mubr.bf16.mxu0 0
      %2544 = vmatmul.mubr.bf16.gmra.mrb[0].mxu0 %v2217
      %v2545 = vpop.f32.mrb[0].mxu0
      %v2546 = vadd.f32 0.0, %v2545
      %v2547 = vpop.f32.mrb[0].mxu0
      %v2548 = vpop.f32.mrb[0].mxu0
      %v2549 = vadd.f32 0.0, %v2548
      %v2550 = vpop.f32.mrb[0].mxu0
      %2551 = vmatprep.mubr.bf16.mxu0 0
      %2552 = vmatmul.mubr.bf16.gmra.mrb[0].mxu0 %v2220
      %v2553 = vpop.f32.mrb[0].mxu0
      %v2554 = vadd.f32 0.0, %v2553
      %v2555 = vpop.f32.mrb[0].mxu0
      %v2556 = vpop.f32.mrb[0].mxu0
      %v2557 = vadd.f32 0.0, %v2556
      %v2558 = vpop.f32.mrb[0].mxu0
      %2559 = vmatprep.mubr.bf16.mxu0 0
      %2560 = vmatmul.mubr.bf16.gmra.mrb[0].mxu0 %v2223
      %v2561 = vpop.f32.mrb[0].mxu0
      %v2562 = vadd.f32 0.0, %v2561
      %v2563 = vpop.f32.mrb[0].mxu0
      %v2564 = vpop.f32.mrb[0].mxu0
      %v2565 = vadd.f32 0.0, %v2564
      %v2566 = vpop.f32.mrb[0].mxu0
      %2567 = vmatprep.mubr.bf16.mxu0 0
      %2568 = vmatmul.mubr.bf16.gmra.mrb[0].mxu0 %v2226
      %v2569 = vpop.f32.mrb[0].mxu0
      %v2570 = vadd.f32 0.0, %v2569
      %v2571 = vpop.f32.mrb[0].mxu0
      %v2572 = vpop.f32.mrb[0].mxu0
      %v2573 = vadd.f32 0.0, %v2572
      %v2574 = vpop.f32.mrb[0].mxu0
      %2575 = vmatprep.mubr.bf16.mxu0 0
      %2576 = vmatmul.mubr.bf16.gmra.mrb[0].mxu0 %v2229
      %v2577 = vpop.f32.mrb[0].mxu0
      %v2578 = vadd.f32 0.0, %v2577
      %v2579 = vpop.f32.mrb[0].mxu0
      %v2580 = vpop.f32.mrb[0].mxu0
      %v2581 = vadd.f32 0.0, %v2580
      %v2582 = vpop.f32.mrb[0].mxu0
      %2583 = vmatprep.mubr.bf16.mxu0 0
      %2584 = vmatmul.mubr.bf16.gmra.mrb[0].mxu0 %v2232
      %v2585 = vpop.f32.mrb[0].mxu0
      %v2586 = vadd.f32 0.0, %v2585
      %v2587 = vpop.f32.mrb[0].mxu0
      %v2588 = vpop.f32.mrb[0].mxu0
      %v2589 = vadd.f32 0.0, %v2588
      %v2590 = vpop.f32.mrb[0].mxu0
      %2591 = vmatprep.mubr.bf16.mxu0 0
      %2592 = vmatmul.mubr.bf16.gmra.mrb[0].mxu0 %v2235
      %v2593 = vpop.f32.mrb[0].mxu0
      %v2594 = vadd.f32 0.0, %v2593
      %v2595 = vpop.f32.mrb[0].mxu0
      %v2596 = vpop.f32.mrb[0].mxu0
      %v2597 = vadd.f32 0.0, %v2596
      %v2598 = vpop.f32.mrb[0].mxu0
      %2599 = vdwg.mxu0
      %v2600 = vsel %vm796, %v2281, -inf
      %v2601 = vsel %vm797, %v2283, -inf
      %v2602 = vsel %vm798, %v2474, -inf
      %v2603 = vsel %vm796, %v2285, -inf
      %v2604 = vsel %vm797, %v2287, -inf
      %v2605 = vsel %vm798, %v2477, -inf
      %v2606 = vsel %vm796, %v2291, -inf
      %v2607 = vsel %vm797, %v2293, -inf
      %v2608 = vsel %vm798, %v2482, -inf
      %v2609 = vsel %vm796, %v2295, -inf
      %v2610 = vsel %vm797, %v2297, -inf
      %v2611 = vsel %vm798, %v2485, -inf
      %v2612 = vsel %vm796, %v2301, -inf
      %v2613 = vsel %vm797, %v2303, -inf
      %v2614 = vsel %vm798, %v2490, -inf
      %v2615 = vsel %vm796, %v2305, -inf
      %v2616 = vsel %vm797, %v2307, -inf
      %v2617 = vsel %vm798, %v2493, -inf
      %v2618 = vsel %vm796, %v2311, -inf
      %v2619 = vsel %vm797, %v2313, -inf
      %v2620 = vsel %vm798, %v2498, -inf
      %v2621 = vsel %vm796, %v2315, -inf
      %v2622 = vsel %vm797, %v2317, -inf
      %v2623 = vsel %vm798, %v2501, -inf
      %v2624 = vsel %vm796, %v2321, -inf
      %v2625 = vsel %vm797, %v2323, -inf
      %v2626 = vsel %vm798, %v2506, -inf
      %v2627 = vsel %vm796, %v2325, -inf
      %v2628 = vsel %vm797, %v2327, -inf
      %v2629 = vsel %vm798, %v2509, -inf
      %v2630 = vsel %vm796, %v2331, -inf
      %v2631 = vsel %vm797, %v2333, -inf
      %v2632 = vsel %vm798, %v2514, -inf
      %v2633 = vsel %vm796, %v2335, -inf
      %v2634 = vsel %vm797, %v2337, -inf
      %v2635 = vsel %vm798, %v2517, -inf
      %v2636 = vsel %vm796, %v2341, -inf
      %v2637 = vsel %vm797, %v2343, -inf
      %v2638 = vsel %vm798, %v2522, -inf
      %v2639 = vsel %vm796, %v2345, -inf
      %v2640 = vsel %vm797, %v2347, -inf
      %v2641 = vsel %vm798, %v2525, -inf
      %v2642 = vsel %vm796, %v2351, -inf
      %v2643 = vsel %vm797, %v2353, -inf
      %v2644 = vsel %vm798, %v2530, -inf
      %v2645 = vsel %vm796, %v2355, -inf
      %v2646 = vsel %vm797, %v2357, -inf
      %v2647 = vsel %vm798, %v2533, -inf
      %v2648 = vsel %vm796, %v2361, -inf
      %v2649 = vsel %vm797, %v2363, -inf
      %v2650 = vsel %vm798, %v2538, -inf
      %v2651 = vsel %vm796, %v2365, -inf
      %v2652 = vsel %vm797, %v2367, -inf
      %v2653 = vsel %vm798, %v2541, -inf
      %v2654 = vsel %vm796, %v2371, -inf
      %v2655 = vsel %vm797, %v2373, -inf
      %v2656 = vsel %vm798, %v2546, -inf
      %v2657 = vsel %vm796, %v2375, -inf
      %v2658 = vsel %vm797, %v2377, -inf
      %v2659 = vsel %vm798, %v2549, -inf
      %v2660 = vsel %vm796, %v2381, -inf
      %v2661 = vsel %vm797, %v2383, -inf
      %v2662 = vsel %vm798, %v2554, -inf
      %v2663 = vsel %vm796, %v2385, -inf
      %v2664 = vsel %vm797, %v2387, -inf
      %v2665 = vsel %vm798, %v2557, -inf
      %v2666 = vsel %vm796, %v2391, -inf
      %v2667 = vsel %vm797, %v2393, -inf
      %v2668 = vsel %vm798, %v2562, -inf
      %v2669 = vsel %vm796, %v2395, -inf
      %v2670 = vsel %vm797, %v2397, -inf
      %v2671 = vsel %vm798, %v2565, -inf
      %v2672 = vsel %vm796, %v2401, -inf
      %v2673 = vsel %vm797, %v2403, -inf
      %v2674 = vsel %vm798, %v2570, -inf
      %v2675 = vsel %vm796, %v2405, -inf
      %v2676 = vsel %vm797, %v2407, -inf
      %v2677 = vsel %vm798, %v2573, -inf
      %v2678 = vsel %vm796, %v2411, -inf
      %v2679 = vsel %vm797, %v2413, -inf
      %v2680 = vsel %vm798, %v2578, -inf
      %v2681 = vsel %vm796, %v2415, -inf
      %v2682 = vsel %vm797, %v2417, -inf
      %v2683 = vsel %vm798, %v2581, -inf
      %v2684 = vsel %vm796, %v2421, -inf
      %v2685 = vsel %vm797, %v2423, -inf
      %v2686 = vsel %vm798, %v2586, -inf
      %v2687 = vsel %vm796, %v2425, -inf
      %v2688 = vsel %vm797, %v2427, -inf
      %v2689 = vsel %vm798, %v2589, -inf
      %v2690 = vsel %vm796, %v2431, -inf
      %v2691 = vsel %vm797, %v2433, -inf
      %v2692 = vsel %vm798, %v2594, -inf
      %v2693 = vsel %vm796, %v2435, -inf
      %v2694 = vsel %vm797, %v2437, -inf
      %v2695 = vsel %vm798, %v2597, -inf
      %v2696 = vmax.f32 %v2600, %v2601
      %v2697 = vmax.f32 %v2696, %v2602
      %2698 = vmax.xlane.f32.xlu0 %v2697
      %v2699 = vpop.xlane.xlu0 %2698
      %v2700 = vmax.f32 %v2603, %v2604
      %v2701 = vmax.f32 %v2700, %v2605
      %2702 = vmax.xlane.f32.xlu0 %v2701
      %v2703 = vpop.xlane.xlu0 %2702
      %v2704 = vmax.f32 %v2606, %v2607
      %v2705 = vmax.f32 %v2704, %v2608
      %2706 = vmax.xlane.f32.xlu0 %v2705
      %v2707 = vpop.xlane.xlu0 %2706
      %v2708 = vmax.f32 %v2609, %v2610
      %v2709 = vmax.f32 %v2708, %v2611
      %2710 = vmax.xlane.f32.xlu0 %v2709
      %v2711 = vpop.xlane.xlu0 %2710
      %v2712 = vmax.f32 %v2612, %v2613
      %v2713 = vmax.f32 %v2712, %v2614
      %2714 = vmax.xlane.f32.xlu0 %v2713
      %v2715 = vpop.xlane.xlu0 %2714
      %v2716 = vmax.f32 %v2615, %v2616
      %v2717 = vmax.f32 %v2716, %v2617
      %2718 = vmax.xlane.f32.xlu0 %v2717
      %v2719 = vpop.xlane.xlu0 %2718
      %v2720 = vmax.f32 %v2618, %v2619
      %v2721 = vmax.f32 %v2720, %v2620
      %2722 = vmax.xlane.f32.xlu0 %v2721
      %v2723 = vpop.xlane.xlu0 %2722
      %v2724 = vmax.f32 %v2621, %v2622
      %v2725 = vmax.f32 %v2724, %v2623
      %2726 = vmax.xlane.f32.xlu0 %v2725
      %v2727 = vpop.xlane.xlu0 %2726
      %v2728 = vmax.f32 %v2624, %v2625
      %v2729 = vmax.f32 %v2728, %v2626
      %2730 = vmax.xlane.f32.xlu0 %v2729
      %v2731 = vpop.xlane.xlu0 %2730
      %v2732 = vmax.f32 %v2627, %v2628
      %v2733 = vmax.f32 %v2732, %v2629
      %2734 = vmax.xlane.f32.xlu0 %v2733
      %v2735 = vpop.xlane.xlu0 %2734
      %v2736 = vmax.f32 %v2630, %v2631
      %v2737 = vmax.f32 %v2736, %v2632
      %2738 = vmax.xlane.f32.xlu0 %v2737
      %v2739 = vpop.xlane.xlu0 %2738
      %v2740 = vmax.f32 %v2633, %v2634
      %v2741 = vmax.f32 %v2740, %v2635
      %2742 = vmax.xlane.f32.xlu0 %v2741
      %v2743 = vpop.xlane.xlu0 %2742
      %v2744 = vmax.f32 %v2636, %v2637
      %v2745 = vmax.f32 %v2744, %v2638
      %2746 = vmax.xlane.f32.xlu0 %v2745
      %v2747 = vpop.xlane.xlu0 %2746
      %v2748 = vmax.f32 %v2639, %v2640
      %v2749 = vmax.f32 %v2748, %v2641
      %2750 = vmax.xlane.f32.xlu0 %v2749
      %v2751 = vpop.xlane.xlu0 %2750
      %v2752 = vmax.f32 %v2642, %v2643
      %v2753 = vmax.f32 %v2752, %v2644
      %2754 = vmax.xlane.f32.xlu0 %v2753
      %v2755 = vpop.xlane.xlu0 %2754
      %v2756 = vmax.f32 %v2645, %v2646
      %v2757 = vmax.f32 %v2756, %v2647
      %2758 = vmax.xlane.f32.xlu0 %v2757
      %v2759 = vpop.xlane.xlu0 %2758
      %v2760 = vmax.f32 %v2648, %v2649
      %v2761 = vmax.f32 %v2760, %v2650
      %2762 = vmax.xlane.f32.xlu0 %v2761
      %v2763 = vpop.xlane.xlu0 %2762
      %v2764 = vmax.f32 %v2651, %v2652
      %v2765 = vmax.f32 %v2764, %v2653
      %2766 = vmax.xlane.f32.xlu0 %v2765
      %v2767 = vpop.xlane.xlu0 %2766
      %v2768 = vmax.f32 %v2654, %v2655
      %v2769 = vmax.f32 %v2768, %v2656
      %2770 = vmax.xlane.f32.xlu0 %v2769
      %v2771 = vpop.xlane.xlu0 %2770
      %v2772 = vmax.f32 %v2657, %v2658
      %v2773 = vmax.f32 %v2772, %v2659
      %2774 = vmax.xlane.f32.xlu0 %v2773
      %v2775 = vpop.xlane.xlu0 %2774
      %v2776 = vmax.f32 %v2660, %v2661
      %v2777 = vmax.f32 %v2776, %v2662
      %2778 = vmax.xlane.f32.xlu0 %v2777
      %v2779 = vpop.xlane.xlu0 %2778
      %v2780 = vmax.f32 %v2663, %v2664
      %v2781 = vmax.f32 %v2780, %v2665
      %2782 = vmax.xlane.f32.xlu0 %v2781
      %v2783 = vpop.xlane.xlu0 %2782
      %v2784 = vmax.f32 %v2666, %v2667
      %v2785 = vmax.f32 %v2784, %v2668
      %2786 = vmax.xlane.f32.xlu0 %v2785
      %v2787 = vpop.xlane.xlu0 %2786
      %v2788 = vmax.f32 %v2669, %v2670
      %v2789 = vmax.f32 %v2788, %v2671
      %2790 = vmax.xlane.f32.xlu0 %v2789
      %v2791 = vpop.xlane.xlu0 %2790
      %v2792 = vmax.f32 %v2672, %v2673
      %v2793 = vmax.f32 %v2792, %v2674
      %2794 = vmax.xlane.f32.xlu0 %v2793
      %v2795 = vpop.xlane.xlu0 %2794
      %v2796 = vmax.f32 %v2675, %v2676
      %v2797 = vmax.f32 %v2796, %v2677
      %2798 = vmax.xlane.f32.xlu0 %v2797
      %v2799 = vpop.xlane.xlu0 %2798
      %v2800 = vmax.f32 %v2678, %v2679
      %v2801 = vmax.f32 %v2800, %v2680
      %2802 = vmax.xlane.f32.xlu0 %v2801
      %v2803 = vpop.xlane.xlu0 %2802
      %v2804 = vmax.f32 %v2681, %v2682
      %v2805 = vmax.f32 %v2804, %v2683
      %2806 = vmax.xlane.f32.xlu0 %v2805
      %v2807 = vpop.xlane.xlu0 %2806
      %v2808 = vmax.f32 %v2684, %v2685
      %v2809 = vmax.f32 %v2808, %v2686
      %2810 = vmax.xlane.f32.xlu0 %v2809
      %v2811 = vpop.xlane.xlu0 %2810
      %v2812 = vmax.f32 %v2687, %v2688
      %v2813 = vmax.f32 %v2812, %v2689
      %2814 = vmax.xlane.f32.xlu0 %v2813
      %v2815 = vpop.xlane.xlu0 %2814
      %v2816 = vmax.f32 %v2690, %v2691
      %v2817 = vmax.f32 %v2816, %v2692
      %2818 = vmax.xlane.f32.xlu0 %v2817
      %v2819 = vpop.xlane.xlu0 %2818
      %v2820 = vmax.f32 %v2693, %v2694
      %v2821 = vmax.f32 %v2820, %v2695
      %2822 = vmax.xlane.f32.xlu0 %v2821
      %v2823 = vpop.xlane.xlu0 %2822
      %v2824 = vsub.f32 %v2600, %v2699
      %v2825 = vsub.f32 %v2601, %v2699
      %v2826 = vsub.f32 %v2602, %v2699
      %v2827 = vsub.f32 %v2603, %v2703
      %v2828 = vsub.f32 %v2604, %v2703
      %v2829 = vsub.f32 %v2605, %v2703
      %v2830 = vsub.f32 %v2606, %v2707
      %v2831 = vsub.f32 %v2607, %v2707
      %v2832 = vsub.f32 %v2608, %v2707
      %v2833 = vsub.f32 %v2609, %v2711
      %v2834 = vsub.f32 %v2610, %v2711
      %v2835 = vsub.f32 %v2611, %v2711
      %v2836 = vsub.f32 %v2612, %v2715
      %v2837 = vsub.f32 %v2613, %v2715
      %v2838 = vsub.f32 %v2614, %v2715
      %v2839 = vsub.f32 %v2615, %v2719
      %v2840 = vsub.f32 %v2616, %v2719
      %v2841 = vsub.f32 %v2617, %v2719
      %v2842 = vsub.f32 %v2618, %v2723
      %v2843 = vsub.f32 %v2619, %v2723
      %v2844 = vsub.f32 %v2620, %v2723
      %v2845 = vsub.f32 %v2621, %v2727
      %v2846 = vsub.f32 %v2622, %v2727
      %v2847 = vsub.f32 %v2623, %v2727
      %v2848 = vsub.f32 %v2624, %v2731
      %v2849 = vsub.f32 %v2625, %v2731
      %v2850 = vsub.f32 %v2626, %v2731
      %v2851 = vsub.f32 %v2627, %v2735
      %v2852 = vsub.f32 %v2628, %v2735
      %v2853 = vsub.f32 %v2629, %v2735
      %v2854 = vsub.f32 %v2630, %v2739
      %v2855 = vsub.f32 %v2631, %v2739
      %v2856 = vsub.f32 %v2632, %v2739
      %v2857 = vsub.f32 %v2633, %v2743
      %v2858 = vsub.f32 %v2634, %v2743
      %v2859 = vsub.f32 %v2635, %v2743
      %v2860 = vsub.f32 %v2636, %v2747
      %v2861 = vsub.f32 %v2637, %v2747
      %v2862 = vsub.f32 %v2638, %v2747
      %v2863 = vsub.f32 %v2639, %v2751
      %v2864 = vsub.f32 %v2640, %v2751
      %v2865 = vsub.f32 %v2641, %v2751
      %v2866 = vsub.f32 %v2642, %v2755
      %v2867 = vsub.f32 %v2643, %v2755
      %v2868 = vsub.f32 %v2644, %v2755
      %v2869 = vsub.f32 %v2645, %v2759
      %v2870 = vsub.f32 %v2646, %v2759
      %v2871 = vsub.f32 %v2647, %v2759
      %v2872 = vsub.f32 %v2648, %v2763
      %v2873 = vsub.f32 %v2649, %v2763
      %v2874 = vsub.f32 %v2650, %v2763
      %v2875 = vsub.f32 %v2651, %v2767
      %v2876 = vsub.f32 %v2652, %v2767
      %v2877 = vsub.f32 %v2653, %v2767
      %v2878 = vsub.f32 %v2654, %v2771
      %v2879 = vsub.f32 %v2655, %v2771
      %v2880 = vsub.f32 %v2656, %v2771
      %v2881 = vsub.f32 %v2657, %v2775
      %v2882 = vsub.f32 %v2658, %v2775
      %v2883 = vsub.f32 %v2659, %v2775
      %v2884 = vsub.f32 %v2660, %v2779
      %v2885 = vsub.f32 %v2661, %v2779
      %v2886 = vsub.f32 %v2662, %v2779
      %v2887 = vsub.f32 %v2663, %v2783
      %v2888 = vsub.f32 %v2664, %v2783
      %v2889 = vsub.f32 %v2665, %v2783
      %v2890 = vsub.f32 %v2666, %v2787
      %v2891 = vsub.f32 %v2667, %v2787
      %v2892 = vsub.f32 %v2668, %v2787
      %v2893 = vsub.f32 %v2669, %v2791
      %v2894 = vsub.f32 %v2670, %v2791
      %v2895 = vsub.f32 %v2671, %v2791
      %v2896 = vsub.f32 %v2672, %v2795
      %v2897 = vsub.f32 %v2673, %v2795
      %v2898 = vsub.f32 %v2674, %v2795
      %v2899 = vsub.f32 %v2675, %v2799
      %v2900 = vsub.f32 %v2676, %v2799
      %v2901 = vsub.f32 %v2677, %v2799
      %v2902 = vsub.f32 %v2678, %v2803
      %v2903 = vsub.f32 %v2679, %v2803
      %v2904 = vsub.f32 %v2680, %v2803
      %v2905 = vsub.f32 %v2681, %v2807
      %v2906 = vsub.f32 %v2682, %v2807
      %v2907 = vsub.f32 %v2683, %v2807
      %v2908 = vsub.f32 %v2684, %v2811
      %v2909 = vsub.f32 %v2685, %v2811
      %v2910 = vsub.f32 %v2686, %v2811
      %v2911 = vsub.f32 %v2687, %v2815
      %v2912 = vsub.f32 %v2688, %v2815
      %v2913 = vsub.f32 %v2689, %v2815
      %v2914 = vsub.f32 %v2690, %v2819
      %v2915 = vsub.f32 %v2691, %v2819
      %v2916 = vsub.f32 %v2692, %v2819
      %v2917 = vsub.f32 %v2693, %v2823
      %v2918 = vsub.f32 %v2694, %v2823
      %v2919 = vsub.f32 %v2695, %v2823
      %v2920 = vmul.f32 %v2824, 1.442695
      %v2921 = vpow.pop %v2920
      %v2922 = vmul.f32 %v2825, 1.442695
      %v2923 = vpow.pop %v2922
      %v2924 = vmul.f32 %v2826, 1.442695
      %v2925 = vpow.pop %v2924
      %v2926 = vmul.f32 %v2827, 1.442695
      %v2927 = vpow.pop %v2926
      %v2928 = vmul.f32 %v2828, 1.442695
      %v2929 = vpow.pop %v2928
      %v2930 = vmul.f32 %v2829, 1.442695
      %v2931 = vpow.pop %v2930
      %v2932 = vmul.f32 %v2830, 1.442695
      %v2933 = vpow.pop %v2932
      %v2934 = vmul.f32 %v2831, 1.442695
      %v2935 = vpow.pop %v2934
      %v2936 = vmul.f32 %v2832, 1.442695
      %v2937 = vpow.pop %v2936
      %v2938 = vmul.f32 %v2833, 1.442695
      %v2939 = vpow.pop %v2938
      %v2940 = vmul.f32 %v2834, 1.442695
      %v2941 = vpow.pop %v2940
      %v2942 = vmul.f32 %v2835, 1.442695
      %v2943 = vpow.pop %v2942
      %v2944 = vmul.f32 %v2836, 1.442695
      %v2945 = vpow.pop %v2944
      %v2946 = vmul.f32 %v2837, 1.442695
      %v2947 = vpow.pop %v2946
      %v2948 = vmul.f32 %v2838, 1.442695
      %v2949 = vpow.pop %v2948
      %v2950 = vmul.f32 %v2839, 1.442695
      %v2951 = vpow.pop %v2950
      %v2952 = vmul.f32 %v2840, 1.442695
      %v2953 = vpow.pop %v2952
      %v2954 = vmul.f32 %v2841, 1.442695
      %v2955 = vpow.pop %v2954
      %v2956 = vmul.f32 %v2842, 1.442695
      %v2957 = vpow.pop %v2956
      %v2958 = vmul.f32 %v2843, 1.442695
      %v2959 = vpow.pop %v2958
      %v2960 = vmul.f32 %v2844, 1.442695
      %v2961 = vpow.pop %v2960
      %v2962 = vmul.f32 %v2845, 1.442695
      %v2963 = vpow.pop %v2962
      %v2964 = vmul.f32 %v2846, 1.442695
      %v2965 = vpow.pop %v2964
      %v2966 = vmul.f32 %v2847, 1.442695
      %v2967 = vpow.pop %v2966
      %v2968 = vmul.f32 %v2848, 1.442695
      %v2969 = vpow.pop %v2968
      %v2970 = vmul.f32 %v2849, 1.442695
      %v2971 = vpow.pop %v2970
      %v2972 = vmul.f32 %v2850, 1.442695
      %v2973 = vpow.pop %v2972
      %v2974 = vmul.f32 %v2851, 1.442695
      %v2975 = vpow.pop %v2974
      %v2976 = vmul.f32 %v2852, 1.442695
      %v2977 = vpow.pop %v2976
      %v2978 = vmul.f32 %v2853, 1.442695
      %v2979 = vpow.pop %v2978
      %v2980 = vmul.f32 %v2854, 1.442695
      %v2981 = vpow.pop %v2980
      %v2982 = vmul.f32 %v2855, 1.442695
      %v2983 = vpow.pop %v2982
      %v2984 = vmul.f32 %v2856, 1.442695
      %v2985 = vpow.pop %v2984
      %v2986 = vmul.f32 %v2857, 1.442695
      %v2987 = vpow.pop %v2986
      %v2988 = vmul.f32 %v2858, 1.442695
      %v2989 = vpow.pop %v2988
      %v2990 = vmul.f32 %v2859, 1.442695
      %v2991 = vpow.pop %v2990
      %v2992 = vmul.f32 %v2860, 1.442695
      %v2993 = vpow.pop %v2992
      %v2994 = vmul.f32 %v2861, 1.442695
      %v2995 = vpow.pop %v2994
      %v2996 = vmul.f32 %v2862, 1.442695
      %v2997 = vpow.pop %v2996
      %v2998 = vmul.f32 %v2863, 1.442695
      %v2999 = vpow.pop %v2998
      %v3000 = vmul.f32 %v2864, 1.442695
      %v3001 = vpow.pop %v3000
      %v3002 = vmul.f32 %v2865, 1.442695
      %v3003 = vpow.pop %v3002
      %v3004 = vmul.f32 %v2866, 1.442695
      %v3005 = vpow.pop %v3004
      %v3006 = vmul.f32 %v2867, 1.442695
      %v3007 = vpow.pop %v3006
      %v3008 = vmul.f32 %v2868, 1.442695
      %v3009 = vpow.pop %v3008
      %v3010 = vmul.f32 %v2869, 1.442695
      %v3011 = vpow.pop %v3010
      %v3012 = vmul.f32 %v2870, 1.442695
      %v3013 = vpow.pop %v3012
      %v3014 = vmul.f32 %v2871, 1.442695
      %v3015 = vpow.pop %v3014
      %v3016 = vmul.f32 %v2872, 1.442695
      %v3017 = vpow.pop %v3016
      %v3018 = vmul.f32 %v2873, 1.442695
      %v3019 = vpow.pop %v3018
      %v3020 = vmul.f32 %v2874, 1.442695
      %v3021 = vpow.pop %v3020
      %v3022 = vmul.f32 %v2875, 1.442695
      %v3023 = vpow.pop %v3022
      %v3024 = vmul.f32 %v2876, 1.442695
      %v3025 = vpow.pop %v3024
      %v3026 = vmul.f32 %v2877, 1.442695
      %v3027 = vpow.pop %v3026
      %v3028 = vmul.f32 %v2878, 1.442695
      %v3029 = vpow.pop %v3028
      %v3030 = vmul.f32 %v2879, 1.442695
      %v3031 = vpow.pop %v3030
      %v3032 = vmul.f32 %v2880, 1.442695
      %v3033 = vpow.pop %v3032
      %v3034 = vmul.f32 %v2881, 1.442695
      %v3035 = vpow.pop %v3034
      %v3036 = vmul.f32 %v2882, 1.442695
      %v3037 = vpow.pop %v3036
      %v3038 = vmul.f32 %v2883, 1.442695
      %v3039 = vpow.pop %v3038
      %v3040 = vmul.f32 %v2884, 1.442695
      %v3041 = vpow.pop %v3040
      %v3042 = vmul.f32 %v2885, 1.442695
      %v3043 = vpow.pop %v3042
      %v3044 = vmul.f32 %v2886, 1.442695
      %v3045 = vpow.pop %v3044
      %v3046 = vmul.f32 %v2887, 1.442695
      %v3047 = vpow.pop %v3046
      %v3048 = vmul.f32 %v2888, 1.442695
      %v3049 = vpow.pop %v3048
      %v3050 = vmul.f32 %v2889, 1.442695
      %v3051 = vpow.pop %v3050
      %v3052 = vmul.f32 %v2890, 1.442695
      %v3053 = vpow.pop %v3052
      %v3054 = vmul.f32 %v2891, 1.442695
      %v3055 = vpow.pop %v3054
      %v3056 = vmul.f32 %v2892, 1.442695
      %v3057 = vpow.pop %v3056
      %v3058 = vmul.f32 %v2893, 1.442695
      %v3059 = vpow.pop %v3058
      %v3060 = vmul.f32 %v2894, 1.442695
      %v3061 = vpow.pop %v3060
      %v3062 = vmul.f32 %v2895, 1.442695
      %v3063 = vpow.pop %v3062
      %v3064 = vmul.f32 %v2896, 1.442695
      %v3065 = vpow.pop %v3064
      %v3066 = vmul.f32 %v2897, 1.442695
      %v3067 = vpow.pop %v3066
      %v3068 = vmul.f32 %v2898, 1.442695
      %v3069 = vpow.pop %v3068
      %v3070 = vmul.f32 %v2899, 1.442695
      %v3071 = vpow.pop %v3070
      %v3072 = vmul.f32 %v2900, 1.442695
      %v3073 = vpow.pop %v3072
      %v3074 = vmul.f32 %v2901, 1.442695
      %v3075 = vpow.pop %v3074
      %v3076 = vmul.f32 %v2902, 1.442695
      %v3077 = vpow.pop %v3076
      %v3078 = vmul.f32 %v2903, 1.442695
      %v3079 = vpow.pop %v3078
      %v3080 = vmul.f32 %v2904, 1.442695
      %v3081 = vpow.pop %v3080
      %v3082 = vmul.f32 %v2905, 1.442695
      %v3083 = vpow.pop %v3082
      %v3084 = vmul.f32 %v2906, 1.442695
      %v3085 = vpow.pop %v3084
      %v3086 = vmul.f32 %v2907, 1.442695
      %v3087 = vpow.pop %v3086
      %v3088 = vmul.f32 %v2908, 1.442695
      %v3089 = vpow.pop %v3088
      %v3090 = vmul.f32 %v2909, 1.442695
      %v3091 = vpow.pop %v3090
      %v3092 = vmul.f32 %v2910, 1.442695
      %v3093 = vpow.pop %v3092
      %v3094 = vmul.f32 %v2911, 1.442695
      %v3095 = vpow.pop %v3094
      %v3096 = vmul.f32 %v2912, 1.442695
      %v3097 = vpow.pop %v3096
      %v3098 = vmul.f32 %v2913, 1.442695
      %v3099 = vpow.pop %v3098
      %v3100 = vmul.f32 %v2914, 1.442695
      %v3101 = vpow.pop %v3100
      %v3102 = vmul.f32 %v2915, 1.442695
      %v3103 = vpow.pop %v3102
      %v3104 = vmul.f32 %v2916, 1.442695
      %v3105 = vpow.pop %v3104
      %v3106 = vmul.f32 %v2917, 1.442695
      %v3107 = vpow.pop %v3106
      %v3108 = vmul.f32 %v2918, 1.442695
      %v3109 = vpow.pop %v3108
      %v3110 = vmul.f32 %v2919, 1.442695
      %v3111 = vpow.pop %v3110
      %v3112 = vadd.f32 %v2921, %v2923
      %v3113 = vadd.f32 %v3112, %v2925
      %3114 = vadd.xlane.f32.xlu0 %v3113
      %v3115 = vpop.xlane.xlu0 %3114
      %v3116 = vadd.f32 %v2927, %v2929
      %v3117 = vadd.f32 %v3116, %v2931
      %3118 = vadd.xlane.f32.xlu0 %v3117
      %v3119 = vpop.xlane.xlu0 %3118
      %v3120 = vadd.f32 %v2933, %v2935
      %v3121 = vadd.f32 %v3120, %v2937
      %3122 = vadd.xlane.f32.xlu0 %v3121
      %v3123 = vpop.xlane.xlu0 %3122
      %v3124 = vadd.f32 %v2939, %v2941
      %v3125 = vadd.f32 %v3124, %v2943
      %3126 = vadd.xlane.f32.xlu0 %v3125
      %v3127 = vpop.xlane.xlu0 %3126
      %v3128 = vadd.f32 %v2945, %v2947
      %v3129 = vadd.f32 %v3128, %v2949
      %3130 = vadd.xlane.f32.xlu0 %v3129
      %v3131 = vpop.xlane.xlu0 %3130
      %v3132 = vadd.f32 %v2951, %v2953
      %v3133 = vadd.f32 %v3132, %v2955
      %3134 = vadd.xlane.f32.xlu0 %v3133
      %v3135 = vpop.xlane.xlu0 %3134
      %v3136 = vadd.f32 %v2957, %v2959
      %v3137 = vadd.f32 %v3136, %v2961
      %3138 = vadd.xlane.f32.xlu0 %v3137
      %v3139 = vpop.xlane.xlu0 %3138
      %v3140 = vadd.f32 %v2963, %v2965
      %v3141 = vadd.f32 %v3140, %v2967
      %3142 = vadd.xlane.f32.xlu0 %v3141
      %v3143 = vpop.xlane.xlu0 %3142
      %v3144 = vadd.f32 %v2969, %v2971
      %v3145 = vadd.f32 %v3144, %v2973
      %3146 = vadd.xlane.f32.xlu0 %v3145
      %v3147 = vpop.xlane.xlu0 %3146
      %v3148 = vadd.f32 %v2975, %v2977
      %v3149 = vadd.f32 %v3148, %v2979
      %3150 = vadd.xlane.f32.xlu0 %v3149
      %v3151 = vpop.xlane.xlu0 %3150
      %v3152 = vadd.f32 %v2981, %v2983
      %v3153 = vadd.f32 %v3152, %v2985
      %3154 = vadd.xlane.f32.xlu0 %v3153
      %v3155 = vpop.xlane.xlu0 %3154
      %v3156 = vadd.f32 %v2987, %v2989
      %v3157 = vadd.f32 %v3156, %v2991
      %3158 = vadd.xlane.f32.xlu0 %v3157
      %v3159 = vpop.xlane.xlu0 %3158
      %v3160 = vadd.f32 %v2993, %v2995
      %v3161 = vadd.f32 %v3160, %v2997
      %3162 = vadd.xlane.f32.xlu0 %v3161
      %v3163 = vpop.xlane.xlu0 %3162
      %v3164 = vadd.f32 %v2999, %v3001
      %v3165 = vadd.f32 %v3164, %v3003
      %3166 = vadd.xlane.f32.xlu0 %v3165
      %v3167 = vpop.xlane.xlu0 %3166
      %v3168 = vadd.f32 %v3005, %v3007
      %v3169 = vadd.f32 %v3168, %v3009
      %3170 = vadd.xlane.f32.xlu0 %v3169
      %v3171 = vpop.xlane.xlu0 %3170
      %v3172 = vadd.f32 %v3011, %v3013
      %v3173 = vadd.f32 %v3172, %v3015
      %3174 = vadd.xlane.f32.xlu0 %v3173
      %v3175 = vpop.xlane.xlu0 %3174
      %v3176 = vadd.f32 %v3017, %v3019
      %v3177 = vadd.f32 %v3176, %v3021
      %3178 = vadd.xlane.f32.xlu0 %v3177
      %v3179 = vpop.xlane.xlu0 %3178
      %v3180 = vadd.f32 %v3023, %v3025
      %v3181 = vadd.f32 %v3180, %v3027
      %3182 = vadd.xlane.f32.xlu0 %v3181
      %v3183 = vpop.xlane.xlu0 %3182
      %v3184 = vadd.f32 %v3029, %v3031
      %v3185 = vadd.f32 %v3184, %v3033
      %3186 = vadd.xlane.f32.xlu0 %v3185
      %v3187 = vpop.xlane.xlu0 %3186
      %v3188 = vadd.f32 %v3035, %v3037
      %v3189 = vadd.f32 %v3188, %v3039
      %3190 = vadd.xlane.f32.xlu0 %v3189
      %v3191 = vpop.xlane.xlu0 %3190
      %v3192 = vadd.f32 %v3041, %v3043
      %v3193 = vadd.f32 %v3192, %v3045
      %3194 = vadd.xlane.f32.xlu0 %v3193
      %v3195 = vpop.xlane.xlu0 %3194
      %v3196 = vadd.f32 %v3047, %v3049
      %v3197 = vadd.f32 %v3196, %v3051
      %3198 = vadd.xlane.f32.xlu0 %v3197
      %v3199 = vpop.xlane.xlu0 %3198
      %v3200 = vadd.f32 %v3053, %v3055
      %v3201 = vadd.f32 %v3200, %v3057
      %3202 = vadd.xlane.f32.xlu0 %v3201
      %v3203 = vpop.xlane.xlu0 %3202
      %v3204 = vadd.f32 %v3059, %v3061
      %v3205 = vadd.f32 %v3204, %v3063
      %3206 = vadd.xlane.f32.xlu0 %v3205
      %v3207 = vpop.xlane.xlu0 %3206
      %v3208 = vadd.f32 %v3065, %v3067
      %v3209 = vadd.f32 %v3208, %v3069
      %3210 = vadd.xlane.f32.xlu0 %v3209
      %v3211 = vpop.xlane.xlu0 %3210
      %v3212 = vadd.f32 %v3071, %v3073
      %v3213 = vadd.f32 %v3212, %v3075
      %3214 = vadd.xlane.f32.xlu0 %v3213
      %v3215 = vpop.xlane.xlu0 %3214
      %v3216 = vadd.f32 %v3077, %v3079
      %v3217 = vadd.f32 %v3216, %v3081
      %3218 = vadd.xlane.f32.xlu0 %v3217
      %v3219 = vpop.xlane.xlu0 %3218
      %v3220 = vadd.f32 %v3083, %v3085
      %v3221 = vadd.f32 %v3220, %v3087
      %3222 = vadd.xlane.f32.xlu0 %v3221
      %v3223 = vpop.xlane.xlu0 %3222
      %v3224 = vadd.f32 %v3089, %v3091
      %v3225 = vadd.f32 %v3224, %v3093
      %3226 = vadd.xlane.f32.xlu0 %v3225
      %v3227 = vpop.xlane.xlu0 %3226
      %v3228 = vadd.f32 %v3095, %v3097
      %v3229 = vadd.f32 %v3228, %v3099
      %3230 = vadd.xlane.f32.xlu0 %v3229
      %v3231 = vpop.xlane.xlu0 %3230
      %v3232 = vadd.f32 %v3101, %v3103
      %v3233 = vadd.f32 %v3232, %v3105
      %3234 = vadd.xlane.f32.xlu0 %v3233
      %v3235 = vpop.xlane.xlu0 %3234
      %v3236 = vadd.f32 %v3107, %v3109
      %v3237 = vadd.f32 %v3236, %v3111
      %3238 = vadd.xlane.f32.xlu0 %v3237
      %v3239 = vpop.xlane.xlu0 %3238
      %v3240 = vpack.c.bf16 %v2927, %v2921
      %v3241 = vpack.c.bf16 %v2929, %v2923
      %v3242 = vpack.c.bf16 %v2931, %v2925
      %v3243 = vpack.c.bf16 %v2939, %v2933
      %v3244 = vpack.c.bf16 %v2941, %v2935
      %v3245 = vpack.c.bf16 %v2943, %v2937
      %v3246 = vpack.c.bf16 %v2951, %v2945
      %v3247 = vpack.c.bf16 %v2953, %v2947
      %v3248 = vpack.c.bf16 %v2955, %v2949
      %v3249 = vpack.c.bf16 %v2963, %v2957
      %v3250 = vpack.c.bf16 %v2965, %v2959
      %v3251 = vpack.c.bf16 %v2967, %v2961
      %v3252 = vpack.c.bf16 %v2975, %v2969
      %v3253 = vpack.c.bf16 %v2977, %v2971
      %v3254 = vpack.c.bf16 %v2979, %v2973
      %v3255 = vpack.c.bf16 %v2987, %v2981
      %v3256 = vpack.c.bf16 %v2989, %v2983
      %v3257 = vpack.c.bf16 %v2991, %v2985
      %v3258 = vpack.c.bf16 %v2999, %v2993
      %v3259 = vpack.c.bf16 %v3001, %v2995
      %v3260 = vpack.c.bf16 %v3003, %v2997
      %v3261 = vpack.c.bf16 %v3011, %v3005
      %v3262 = vpack.c.bf16 %v3013, %v3007
      %v3263 = vpack.c.bf16 %v3015, %v3009
      %v3264 = vpack.c.bf16 %v3023, %v3017
      %v3265 = vpack.c.bf16 %v3025, %v3019
      %v3266 = vpack.c.bf16 %v3027, %v3021
      %v3267 = vpack.c.bf16 %v3035, %v3029
      %v3268 = vpack.c.bf16 %v3037, %v3031
      %v3269 = vpack.c.bf16 %v3039, %v3033
      %v3270 = vpack.c.bf16 %v3047, %v3041
      %v3271 = vpack.c.bf16 %v3049, %v3043
      %v3272 = vpack.c.bf16 %v3051, %v3045
      %v3273 = vpack.c.bf16 %v3059, %v3053
      %v3274 = vpack.c.bf16 %v3061, %v3055
      %v3275 = vpack.c.bf16 %v3063, %v3057
      %v3276 = vpack.c.bf16 %v3071, %v3065
      %v3277 = vpack.c.bf16 %v3073, %v3067
      %v3278 = vpack.c.bf16 %v3075, %v3069
      %v3279 = vpack.c.bf16 %v3083, %v3077
      %v3280 = vpack.c.bf16 %v3085, %v3079
      %v3281 = vpack.c.bf16 %v3087, %v3081
      %v3282 = vpack.c.bf16 %v3095, %v3089
      %v3283 = vpack.c.bf16 %v3097, %v3091
      %v3284 = vpack.c.bf16 %v3099, %v3093
      %v3285 = vpack.c.bf16 %v3107, %v3101
      %v3286 = vpack.c.bf16 %v3109, %v3103
      %v3287 = vpack.c.bf16 %v3111, %v3105
      %s3288 = scalar_lea.vmem %s239, 192
      %v3289 = vld [vmem:[%s3288] sm:$0xf]
      %v3290 = vld [vmem:[%s3288 + $0x4] sm:$0xf]
      %v3291 = vld [vmem:[%s3288 + $0x8] sm:$0xf]
      %v3292 = vld [vmem:[%s3288 + $0xc] sm:$0xf]
      %v3293 = vld [vmem:[%s3288 + $0x10] sm:$0xf]
      %v3294 = vld [vmem:[%s3288 + $0x14] sm:$0xf]
      %v3295 = vld [vmem:[%s3288 + $0x18] sm:$0xf]
      %v3296 = vld [vmem:[%s3288 + $0x1c] sm:$0xf]
      %v3297 = vld [vmem:[%s3288 + $0x20] sm:$0xf]
      %v3298 = vld [vmem:[%s3288 + $0x24] sm:$0xf]
      %v3299 = vld [vmem:[%s3288 + $0x28] sm:$0xf]
      %v3300 = vld [vmem:[%s3288 + $0x2c] sm:$0xf]
      %v3301 = vld [vmem:[%s3288 + $0x30] sm:$0xf]
      %v3302 = vld [vmem:[%s3288 + $0x34] sm:$0xf]
      %v3303 = vld [vmem:[%s3288 + $0x38] sm:$0xf]
      %v3304 = vld [vmem:[%s3288 + $0x3c] sm:$0xf]
      %v3305 = vld [vmem:[%s3288 + $0x40] sm:$0xf]
      %v3306 = vld [vmem:[%s3288 + $0x44] sm:$0xf]
      %v3307 = vld [vmem:[%s3288 + $0x48] sm:$0xf]
      %v3308 = vld [vmem:[%s3288 + $0x4c] sm:$0xf]
      %v3309 = vld [vmem:[%s3288 + $0x50] sm:$0xf]
      %v3310 = vld [vmem:[%s3288 + $0x54] sm:$0xf]
      %v3311 = vld [vmem:[%s3288 + $0x58] sm:$0xf]
      %v3312 = vld [vmem:[%s3288 + $0x5c] sm:$0xf]
      %v3313 = vld [vmem:[%s3288 + $0x60] sm:$0xf]
      %v3314 = vld [vmem:[%s3288 + $0x64] sm:$0xf]
      %v3315 = vld [vmem:[%s3288 + $0x68] sm:$0xf]
      %v3316 = vld [vmem:[%s3288 + $0x6c] sm:$0xf]
      %v3317 = vld [vmem:[%s3288 + $0x70] sm:$0xf]
      %v3318 = vld [vmem:[%s3288 + $0x74] sm:$0xf]
      %v3319 = vld [vmem:[%s3288 + $0x78] sm:$0xf]
      %v3320 = vld [vmem:[%s3288 + $0x7c] sm:$0xf]
      %v3321 = vld [vmem:[%s3288 + $0x80] sm:$0xf]
      %v3322 = vld [vmem:[%s3288 + $0x84] sm:$0xf]
      %v3323 = vld [vmem:[%s3288 + $0x88] sm:$0xf]
      %v3324 = vld [vmem:[%s3288 + $0x8c] sm:$0xf]
      %v3325 = vld [vmem:[%s3288 + $0x90] sm:$0xf]
      %v3326 = vld [vmem:[%s3288 + $0x94] sm:$0xf]
      %v3327 = vld [vmem:[%s3288 + $0x98] sm:$0xf]
      %v3328 = vld [vmem:[%s3288 + $0x9c] sm:$0xf]
      %v3329 = vld [vmem:[%s3288 + $0xa0] sm:$0xf]
      %v3330 = vld [vmem:[%s3288 + $0xa4] sm:$0xf]
      %v3331 = vld [vmem:[%s3288 + $0xa8] sm:$0xf]
      %v3332 = vld [vmem:[%s3288 + $0xac] sm:$0xf]
      %v3333 = vld [vmem:[%s3288 + $0xb0] sm:$0xf]
      %v3334 = vld [vmem:[%s3288 + $0xb4] sm:$0xf]
      %v3335 = vld [vmem:[%s3288 + $0xb8] sm:$0xf]
      %v3336 = vld [vmem:[%s3288 + $0xbc] sm:$0xf]
      %v3385 = vunpack.c.l.b16 %v3289
      %v3386 = vunpack.c.l.b16 %v3290
      %v3387 = vunpack.c.l.b16 %v3291
      %v3388 = vunpack.c.l.b16 %v3292
      %v3389 = vunpack.c.l.b16 %v3293
      %v3390 = vunpack.c.l.b16 %v3294
      %v3391 = vunpack.c.l.b16 %v3295
      %v3392 = vunpack.c.l.b16 %v3296
      %v3393 = vunpack.c.l.b16 %v3297
      %v3394 = vunpack.c.l.b16 %v3298
      %v3395 = vunpack.c.l.b16 %v3299
      %v3396 = vunpack.c.l.b16 %v3300
      %v3397 = vunpack.c.l.b16 %v3301
      %v3398 = vunpack.c.l.b16 %v3302
      %v3399 = vunpack.c.l.b16 %v3303
      %v3400 = vunpack.c.l.b16 %v3304
      %v3401 = vunpack.c.l.b16 %v3305
      %v3402 = vunpack.c.l.b16 %v3306
      %v3403 = vunpack.c.l.b16 %v3307
      %v3404 = vunpack.c.l.b16 %v3308
      %v3405 = vunpack.c.l.b16 %v3309
      %v3406 = vunpack.c.l.b16 %v3310
      %v3407 = vunpack.c.l.b16 %v3311
      %v3408 = vunpack.c.l.b16 %v3312
      %v3409 = vunpack.c.l.b16 %v3313
      %v3410 = vunpack.c.l.b16 %v3314
      %v3411 = vunpack.c.l.b16 %v3315
      %v3412 = vunpack.c.l.b16 %v3316
      %v3413 = vunpack.c.l.b16 %v3317
      %v3414 = vunpack.c.l.b16 %v3318
      %v3415 = vunpack.c.l.b16 %v3319
      %v3416 = vunpack.c.l.b16 %v3320
      %v3417 = vunpack.c.l.b16 %v3321
      %v3418 = vunpack.c.l.b16 %v3322
      %v3419 = vunpack.c.l.b16 %v3323
      %v3420 = vunpack.c.l.b16 %v3324
      %v3421 = vunpack.c.l.b16 %v3325
      %v3422 = vunpack.c.l.b16 %v3326
      %v3423 = vunpack.c.l.b16 %v3327
      %v3424 = vunpack.c.l.b16 %v3328
      %v3425 = vunpack.c.l.b16 %v3329
      %v3426 = vunpack.c.l.b16 %v3330
      %v3427 = vunpack.c.l.b16 %v3331
      %v3428 = vunpack.c.l.b16 %v3332
      %v3429 = vunpack.c.l.b16 %v3333
      %v3430 = vunpack.c.l.b16 %v3334
      %v3431 = vunpack.c.l.b16 %v3335
      %v3432 = vunpack.c.l.b16 %v3336
      %v3433 = vpack.c.b16 %v3386, %v3385
      %v3434 = vpack.c.b16 %v3388, %v3387
      %v3435 = vpack.c.b16 %v3390, %v3389
      %v3436 = vpack.c.b16 %v3392, %v3391
      %v3437 = vpack.c.b16 %v3394, %v3393
      %v3438 = vpack.c.b16 %v3396, %v3395
      %v3439 = vpack.c.b16 %v3398, %v3397
      %v3440 = vpack.c.b16 %v3400, %v3399
      %v3441 = vpack.c.b16 %v3402, %v3401
      %v3442 = vpack.c.b16 %v3404, %v3403
      %v3443 = vpack.c.b16 %v3406, %v3405
      %v3444 = vpack.c.b16 %v3408, %v3407
      %v3445 = vpack.c.b16 %v3410, %v3409
      %v3446 = vpack.c.b16 %v3412, %v3411
      %v3447 = vpack.c.b16 %v3414, %v3413
      %v3448 = vpack.c.b16 %v3416, %v3415
      %v3449 = vpack.c.b16 %v3418, %v3417
      %v3450 = vpack.c.b16 %v3420, %v3419
      %v3451 = vpack.c.b16 %v3422, %v3421
      %v3452 = vpack.c.b16 %v3424, %v3423
      %v3453 = vpack.c.b16 %v3426, %v3425
      %v3454 = vpack.c.b16 %v3428, %v3427
      %v3455 = vpack.c.b16 %v3430, %v3429
      %v3456 = vpack.c.b16 %v3432, %v3431
      %3481 = vmatprep.subr.bf16.mxu0 0
      %3482 = vmatpush1.bf16.msra.mxu0 %v3433
      %3483 = vmatprep.subr.bf16.mxu0 0
      %3484 = vmatpush1.bf16.msra.mxu0 %v3434
      %3485 = vmatprep.subr.bf16.mxu0 0
      %3486 = vmatpush1.bf16.msra.mxu0 %v3435
      %3487 = vmatprep.subr.bf16.mxu0 0
      %3488 = vmatpush1.bf16.msra.mxu0 %v3436
      %3489 = vmatprep.subr.bf16.mxu0 0
      %3490 = vmatpush1.bf16.msra.mxu0 %v3437
      %3491 = vmatprep.subr.bf16.mxu0 0
      %3492 = vmatpush1.bf16.msra.mxu0 %v3438
      %3493 = vmatprep.subr.bf16.mxu0 0
      %3494 = vmatpush1.bf16.msra.mxu0 %v3439
      %3495 = vmatprep.subr.bf16.mxu0 0
      %3496 = vmatpush1.bf16.msra.mxu0 %v3440
      %3497 = vmatprep.subr.bf16.mxu0 0
      %3498 = vmatpush1.bf16.msra.mxu0 %v3441
      %3499 = vmatprep.subr.bf16.mxu0 0
      %3500 = vmatpush1.bf16.msra.mxu0 %v3442
      %3501 = vmatprep.subr.bf16.mxu0 0
      %3502 = vmatpush1.bf16.msra.mxu0 %v3443
      %3503 = vmatprep.subr.bf16.mxu0 0
      %3504 = vmatpush1.bf16.msra.mxu0 %v3444
      %3505 = vmatprep.subr.bf16.mxu0 0
      %3506 = vmatpush1.bf16.msra.mxu0 %v3445
      %3507 = vmatprep.subr.bf16.mxu0 0
      %3508 = vmatpush1.bf16.msra.mxu0 %v3446
      %3509 = vmatprep.subr.bf16.mxu0 0
      %3510 = vmatpush1.bf16.msra.mxu0 %v3447
      %3511 = vmatprep.subr.bf16.mxu0 0
      %3512 = vmatpush1.bf16.msra.mxu0 %v3448
      %3513 = vmatprep.mubr.bf16.mxu0 %v3241
      %3514 = vmatmul.mubr.bf16.gmra.mrb[0].mxu0 %v3240
      %v3515 = vpop.f32.mrb[0].mxu0
      %v3516 = vadd.f32 0.0, %v3515
      %v3517 = vpop.f32.mrb[0].mxu0
      %v3518 = vpop.f32.mrb[0].mxu0
      %v3519 = vadd.f32 0.0, %v3518
      %v3520 = vpop.f32.mrb[0].mxu0
      %3521 = vmatprep.mubr.bf16.mxu0 %v3244
      %3522 = vmatmul.mubr.bf16.gmra.mrb[0].mxu0 %v3243
      %v3523 = vpop.f32.mrb[0].mxu0
      %v3524 = vadd.f32 0.0, %v3523
      %v3525 = vpop.f32.mrb[0].mxu0
      %v3526 = vpop.f32.mrb[0].mxu0
      %v3527 = vadd.f32 0.0, %v3526
      %v3528 = vpop.f32.mrb[0].mxu0
      %3529 = vmatprep.mubr.bf16.mxu0 %v3247
      %3530 = vmatmul.mubr.bf16.gmra.mrb[0].mxu0 %v3246
      %v3531 = vpop.f32.mrb[0].mxu0
      %v3532 = vadd.f32 0.0, %v3531
      %v3533 = vpop.f32.mrb[0].mxu0
      %v3534 = vpop.f32.mrb[0].mxu0
      %v3535 = vadd.f32 0.0, %v3534
      %v3536 = vpop.f32.mrb[0].mxu0
      %3537 = vmatprep.mubr.bf16.mxu0 %v3250
      %3538 = vmatmul.mubr.bf16.gmra.mrb[0].mxu0 %v3249
      %v3539 = vpop.f32.mrb[0].mxu0
      %v3540 = vadd.f32 0.0, %v3539
      %v3541 = vpop.f32.mrb[0].mxu0
      %v3542 = vpop.f32.mrb[0].mxu0
      %v3543 = vadd.f32 0.0, %v3542
      %v3544 = vpop.f32.mrb[0].mxu0
      %3545 = vmatprep.mubr.bf16.mxu0 %v3253
      %3546 = vmatmul.mubr.bf16.gmra.mrb[0].mxu0 %v3252
      %v3547 = vpop.f32.mrb[0].mxu0
      %v3548 = vadd.f32 0.0, %v3547
      %v3549 = vpop.f32.mrb[0].mxu0
      %v3550 = vpop.f32.mrb[0].mxu0
      %v3551 = vadd.f32 0.0, %v3550
      %v3552 = vpop.f32.mrb[0].mxu0
      %3553 = vmatprep.mubr.bf16.mxu0 %v3256
      %3554 = vmatmul.mubr.bf16.gmra.mrb[0].mxu0 %v3255
      %v3555 = vpop.f32.mrb[0].mxu0
      %v3556 = vadd.f32 0.0, %v3555
      %v3557 = vpop.f32.mrb[0].mxu0
      %v3558 = vpop.f32.mrb[0].mxu0
      %v3559 = vadd.f32 0.0, %v3558
      %v3560 = vpop.f32.mrb[0].mxu0
      %3561 = vmatprep.mubr.bf16.mxu0 %v3259
      %3562 = vmatmul.mubr.bf16.gmra.mrb[0].mxu0 %v3258
      %v3563 = vpop.f32.mrb[0].mxu0
      %v3564 = vadd.f32 0.0, %v3563
      %v3565 = vpop.f32.mrb[0].mxu0
      %v3566 = vpop.f32.mrb[0].mxu0
      %v3567 = vadd.f32 0.0, %v3566
      %v3568 = vpop.f32.mrb[0].mxu0
      %3569 = vmatprep.mubr.bf16.mxu0 %v3262
      %3570 = vmatmul.mubr.bf16.gmra.mrb[0].mxu0 %v3261
      %v3571 = vpop.f32.mrb[0].mxu0
      %v3572 = vadd.f32 0.0, %v3571
      %v3573 = vpop.f32.mrb[0].mxu0
      %v3574 = vpop.f32.mrb[0].mxu0
      %v3575 = vadd.f32 0.0, %v3574
      %v3576 = vpop.f32.mrb[0].mxu0
      %3577 = vmatprep.mubr.bf16.mxu0 %v3265
      %3578 = vmatmul.mubr.bf16.gmra.mrb[0].mxu0 %v3264
      %v3579 = vpop.f32.mrb[0].mxu0
      %v3580 = vadd.f32 0.0, %v3579
      %v3581 = vpop.f32.mrb[0].mxu0
      %v3582 = vpop.f32.mrb[0].mxu0
      %v3583 = vadd.f32 0.0, %v3582
      %v3584 = vpop.f32.mrb[0].mxu0
      %3585 = vmatprep.mubr.bf16.mxu0 %v3268
      %3586 = vmatmul.mubr.bf16.gmra.mrb[0].mxu0 %v3267
      %v3587 = vpop.f32.mrb[0].mxu0
      %v3588 = vadd.f32 0.0, %v3587
      %v3589 = vpop.f32.mrb[0].mxu0
      %v3590 = vpop.f32.mrb[0].mxu0
      %v3591 = vadd.f32 0.0, %v3590
      %v3592 = vpop.f32.mrb[0].mxu0
      %3593 = vmatprep.mubr.bf16.mxu0 %v3271
      %3594 = vmatmul.mubr.bf16.gmra.mrb[0].mxu0 %v3270
      %v3595 = vpop.f32.mrb[0].mxu0
      %v3596 = vadd.f32 0.0, %v3595
      %v3597 = vpop.f32.mrb[0].mxu0
      %v3598 = vpop.f32.mrb[0].mxu0
      %v3599 = vadd.f32 0.0, %v3598
      %v3600 = vpop.f32.mrb[0].mxu0
      %3601 = vmatprep.mubr.bf16.mxu0 %v3274
      %3602 = vmatmul.mubr.bf16.gmra.mrb[0].mxu0 %v3273
      %v3603 = vpop.f32.mrb[0].mxu0
      %v3604 = vadd.f32 0.0, %v3603
      %v3605 = vpop.f32.mrb[0].mxu0
      %v3606 = vpop.f32.mrb[0].mxu0
      %v3607 = vadd.f32 0.0, %v3606
      %v3608 = vpop.f32.mrb[0].mxu0
      %3609 = vmatprep.mubr.bf16.mxu0 %v3277
      %3610 = vmatmul.mubr.bf16.gmra.mrb[0].mxu0 %v3276
      %v3611 = vpop.f32.mrb[0].mxu0
      %v3612 = vadd.f32 0.0, %v3611
      %v3613 = vpop.f32.mrb[0].mxu0
      %v3614 = vpop.f32.mrb[0].mxu0
      %v3615 = vadd.f32 0.0, %v3614
      %v3616 = vpop.f32.mrb[0].mxu0
      %3617 = vmatprep.mubr.bf16.mxu0 %v3280
      %3618 = vmatmul.mubr.bf16.gmra.mrb[0].mxu0 %v3279
      %v3619 = vpop.f32.mrb[0].mxu0
      %v3620 = vadd.f32 0.0, %v3619
      %v3621 = vpop.f32.mrb[0].mxu0
      %v3622 = vpop.f32.mrb[0].mxu0
      %v3623 = vadd.f32 0.0, %v3622
      %v3624 = vpop.f32.mrb[0].mxu0
      %3625 = vmatprep.mubr.bf16.mxu0 %v3283
      %3626 = vmatmul.mubr.bf16.gmra.mrb[0].mxu0 %v3282
      %v3627 = vpop.f32.mrb[0].mxu0
      %v3628 = vadd.f32 0.0, %v3627
      %v3629 = vpop.f32.mrb[0].mxu0
      %v3630 = vpop.f32.mrb[0].mxu0
      %v3631 = vadd.f32 0.0, %v3630
      %v3632 = vpop.f32.mrb[0].mxu0
      %3633 = vmatprep.mubr.bf16.mxu0 %v3286
      %3634 = vmatmul.mubr.bf16.gmra.mrb[0].mxu0 %v3285
      %v3635 = vpop.f32.mrb[0].mxu0
      %v3636 = vadd.f32 0.0, %v3635
      %v3637 = vpop.f32.mrb[0].mxu0
      %v3638 = vpop.f32.mrb[0].mxu0
      %v3639 = vadd.f32 0.0, %v3638
      %v3640 = vpop.f32.mrb[0].mxu0
      %3641 = vdwg.mxu0
      %3642 = vmatprep.subr.bf16.mxu0 0
      %3643 = vmatpush1.bf16.msra.mxu0 %v3449
      %3644 = vmatprep.subr.bf16.mxu0 0
      %3645 = vmatpush1.bf16.msra.mxu0 %v3450
      %3646 = vmatprep.subr.bf16.mxu0 0
      %3647 = vmatpush1.bf16.msra.mxu0 %v3451
      %3648 = vmatprep.subr.bf16.mxu0 0
      %3649 = vmatpush1.bf16.msra.mxu0 %v3452
      %3650 = vmatprep.subr.bf16.mxu0 0
      %3651 = vmatpush1.bf16.msra.mxu0 %v3453
      %3652 = vmatprep.subr.bf16.mxu0 0
      %3653 = vmatpush1.bf16.msra.mxu0 %v3454
      %3654 = vmatprep.subr.bf16.mxu0 0
      %3655 = vmatpush1.bf16.msra.mxu0 %v3455
      %3656 = vmatprep.subr.bf16.mxu0 0
      %3657 = vmatpush1.bf16.msra.mxu0 %v3456
      %3658 = vmatprep.subr.bf16.mxu0 0
      %3659 = vmatpush1.bf16.msra.mxu0 0
      %3660 = vmatprep.subr.bf16.mxu0 0
      %3661 = vmatpush1.bf16.msra.mxu0 0
      %3662 = vmatprep.subr.bf16.mxu0 0
      %3663 = vmatpush1.bf16.msra.mxu0 0
      %3664 = vmatprep.subr.bf16.mxu0 0
      %3665 = vmatpush1.bf16.msra.mxu0 0
      %3666 = vmatprep.subr.bf16.mxu0 0
      %3667 = vmatpush1.bf16.msra.mxu0 0
      %3668 = vmatprep.subr.bf16.mxu0 0
      %3669 = vmatpush1.bf16.msra.mxu0 0
      %3670 = vmatprep.subr.bf16.mxu0 0
      %3671 = vmatpush1.bf16.msra.mxu0 0
      %3672 = vmatprep.subr.bf16.mxu0 0
      %3673 = vmatpush1.bf16.msra.mxu0 0
      %3674 = vmatprep.mubr.bf16.mxu0 0
      %3675 = vmatmul.mubr.bf16.gmra.mrb[0].mxu0 %v3242
      %v3676 = vpop.f32.mrb[0].mxu0
      %v3677 = vadd.f32 %v3516, %v3676
      %v3678 = vpop.f32.mrb[0].mxu0
      %v3679 = vpop.f32.mrb[0].mxu0
      %v3680 = vadd.f32 %v3519, %v3679
      %v3681 = vpop.f32.mrb[0].mxu0
      %3682 = vmatprep.mubr.bf16.mxu0 0
      %3683 = vmatmul.mubr.bf16.gmra.mrb[0].mxu0 %v3245
      %v3684 = vpop.f32.mrb[0].mxu0
      %v3685 = vadd.f32 %v3524, %v3684
      %v3686 = vpop.f32.mrb[0].mxu0
      %v3687 = vpop.f32.mrb[0].mxu0
      %v3688 = vadd.f32 %v3527, %v3687
      %v3689 = vpop.f32.mrb[0].mxu0
      %3690 = vmatprep.mubr.bf16.mxu0 0
      %3691 = vmatmul.mubr.bf16.gmra.mrb[0].mxu0 %v3248
      %v3692 = vpop.f32.mrb[0].mxu0
      %v3693 = vadd.f32 %v3532, %v3692
      %v3694 = vpop.f32.mrb[0].mxu0
      %v3695 = vpop.f32.mrb[0].mxu0
      %v3696 = vadd.f32 %v3535, %v3695
      %v3697 = vpop.f32.mrb[0].mxu0
      %3698 = vmatprep.mubr.bf16.mxu0 0
      %3699 = vmatmul.mubr.bf16.gmra.mrb[0].mxu0 %v3251
      %v3700 = vpop.f32.mrb[0].mxu0
      %v3701 = vadd.f32 %v3540, %v3700
      %v3702 = vpop.f32.mrb[0].mxu0
      %v3703 = vpop.f32.mrb[0].mxu0
      %v3704 = vadd.f32 %v3543, %v3703
      %v3705 = vpop.f32.mrb[0].mxu0
      %3706 = vmatprep.mubr.bf16.mxu0 0
      %3707 = vmatmul.mubr.bf16.gmra.mrb[0].mxu0 %v3254
      %v3708 = vpop.f32.mrb[0].mxu0
      %v3709 = vadd.f32 %v3548, %v3708
      %v3710 = vpop.f32.mrb[0].mxu0
      %v3711 = vpop.f32.mrb[0].mxu0
      %v3712 = vadd.f32 %v3551, %v3711
      %v3713 = vpop.f32.mrb[0].mxu0
      %3714 = vmatprep.mubr.bf16.mxu0 0
      %3715 = vmatmul.mubr.bf16.gmra.mrb[0].mxu0 %v3257
      %v3716 = vpop.f32.mrb[0].mxu0
      %v3717 = vadd.f32 %v3556, %v3716
      %v3718 = vpop.f32.mrb[0].mxu0
      %v3719 = vpop.f32.mrb[0].mxu0
      %v3720 = vadd.f32 %v3559, %v3719
      %v3721 = vpop.f32.mrb[0].mxu0
      %3722 = vmatprep.mubr.bf16.mxu0 0
      %3723 = vmatmul.mubr.bf16.gmra.mrb[0].mxu0 %v3260
      %v3724 = vpop.f32.mrb[0].mxu0
      %v3725 = vadd.f32 %v3564, %v3724
      %v3726 = vpop.f32.mrb[0].mxu0
      %v3727 = vpop.f32.mrb[0].mxu0
      %v3728 = vadd.f32 %v3567, %v3727
      %v3729 = vpop.f32.mrb[0].mxu0
      %3730 = vmatprep.mubr.bf16.mxu0 0
      %3731 = vmatmul.mubr.bf16.gmra.mrb[0].mxu0 %v3263
      %v3732 = vpop.f32.mrb[0].mxu0
      %v3733 = vadd.f32 %v3572, %v3732
      %v3734 = vpop.f32.mrb[0].mxu0
      %v3735 = vpop.f32.mrb[0].mxu0
      %v3736 = vadd.f32 %v3575, %v3735
      %v3737 = vpop.f32.mrb[0].mxu0
      %3738 = vmatprep.mubr.bf16.mxu0 0
      %3739 = vmatmul.mubr.bf16.gmra.mrb[0].mxu0 %v3266
      %v3740 = vpop.f32.mrb[0].mxu0
      %v3741 = vadd.f32 %v3580, %v3740
      %v3742 = vpop.f32.mrb[0].mxu0
      %v3743 = vpop.f32.mrb[0].mxu0
      %v3744 = vadd.f32 %v3583, %v3743
      %v3745 = vpop.f32.mrb[0].mxu0
      %3746 = vmatprep.mubr.bf16.mxu0 0
      %3747 = vmatmul.mubr.bf16.gmra.mrb[0].mxu0 %v3269
      %v3748 = vpop.f32.mrb[0].mxu0
      %v3749 = vadd.f32 %v3588, %v3748
      %v3750 = vpop.f32.mrb[0].mxu0
      %v3751 = vpop.f32.mrb[0].mxu0
      %v3752 = vadd.f32 %v3591, %v3751
      %v3753 = vpop.f32.mrb[0].mxu0
      %3754 = vmatprep.mubr.bf16.mxu0 0
      %3755 = vmatmul.mubr.bf16.gmra.mrb[0].mxu0 %v3272
      %v3756 = vpop.f32.mrb[0].mxu0
      %v3757 = vadd.f32 %v3596, %v3756
      %v3758 = vpop.f32.mrb[0].mxu0
      %v3759 = vpop.f32.mrb[0].mxu0
      %v3760 = vadd.f32 %v3599, %v3759
      %v3761 = vpop.f32.mrb[0].mxu0
      %3762 = vmatprep.mubr.bf16.mxu0 0
      %3763 = vmatmul.mubr.bf16.gmra.mrb[0].mxu0 %v3275
      %v3764 = vpop.f32.mrb[0].mxu0
      %v3765 = vadd.f32 %v3604, %v3764
      %v3766 = vpop.f32.mrb[0].mxu0
      %v3767 = vpop.f32.mrb[0].mxu0
      %v3768 = vadd.f32 %v3607, %v3767
      %v3769 = vpop.f32.mrb[0].mxu0
      %3770 = vmatprep.mubr.bf16.mxu0 0
      %3771 = vmatmul.mubr.bf16.gmra.mrb[0].mxu0 %v3278
      %v3772 = vpop.f32.mrb[0].mxu0
      %v3773 = vadd.f32 %v3612, %v3772
      %v3774 = vpop.f32.mrb[0].mxu0
      %v3775 = vpop.f32.mrb[0].mxu0
      %v3776 = vadd.f32 %v3615, %v3775
      %v3777 = vpop.f32.mrb[0].mxu0
      %3778 = vmatprep.mubr.bf16.mxu0 0
      %3779 = vmatmul.mubr.bf16.gmra.mrb[0].mxu0 %v3281
      %v3780 = vpop.f32.mrb[0].mxu0
      %v3781 = vadd.f32 %v3620, %v3780
      %v3782 = vpop.f32.mrb[0].mxu0
      %v3783 = vpop.f32.mrb[0].mxu0
      %v3784 = vadd.f32 %v3623, %v3783
      %v3785 = vpop.f32.mrb[0].mxu0
      %3786 = vmatprep.mubr.bf16.mxu0 0
      %3787 = vmatmul.mubr.bf16.gmra.mrb[0].mxu0 %v3284
      %v3788 = vpop.f32.mrb[0].mxu0
      %v3789 = vadd.f32 %v3628, %v3788
      %v3790 = vpop.f32.mrb[0].mxu0
      %v3791 = vpop.f32.mrb[0].mxu0
      %v3792 = vadd.f32 %v3631, %v3791
      %v3793 = vpop.f32.mrb[0].mxu0
      %3794 = vmatprep.mubr.bf16.mxu0 0
      %3795 = vmatmul.mubr.bf16.gmra.mrb[0].mxu0 %v3287
      %v3796 = vpop.f32.mrb[0].mxu0
      %v3797 = vadd.f32 %v3636, %v3796
      %v3798 = vpop.f32.mrb[0].mxu0
      %v3799 = vpop.f32.mrb[0].mxu0
      %v3800 = vadd.f32 %v3639, %v3799
      %v3801 = vpop.f32.mrb[0].mxu0
      %3802 = vdwg.mxu0
      %v3803 = vrcp.pop %v3115
      %v3804 = vrcp.pop %v3119
      %v3805 = vrcp.pop %v3123
      %v3806 = vrcp.pop %v3127
      %v3807 = vrcp.pop %v3131
      %v3808 = vrcp.pop %v3135
      %v3809 = vrcp.pop %v3139
      %v3810 = vrcp.pop %v3143
      %v3811 = vrcp.pop %v3147
      %v3812 = vrcp.pop %v3151
      %v3813 = vrcp.pop %v3155
      %v3814 = vrcp.pop %v3159
      %v3815 = vrcp.pop %v3163
      %v3816 = vrcp.pop %v3167
      %v3817 = vrcp.pop %v3171
      %v3818 = vrcp.pop %v3175
      %v3819 = vrcp.pop %v3179
      %v3820 = vrcp.pop %v3183
      %v3821 = vrcp.pop %v3187
      %v3822 = vrcp.pop %v3191
      %v3823 = vrcp.pop %v3195
      %v3824 = vrcp.pop %v3199
      %v3825 = vrcp.pop %v3203
      %v3826 = vrcp.pop %v3207
      %v3827 = vrcp.pop %v3211
      %v3828 = vrcp.pop %v3215
      %v3829 = vrcp.pop %v3219
      %v3830 = vrcp.pop %v3223
      %v3831 = vrcp.pop %v3227
      %v3832 = vrcp.pop %v3231
      %v3833 = vrcp.pop %v3235
      %v3834 = vrcp.pop %v3239
      %v3835 = vmul.f32 %v3677, %v3803
      %v3836 = vmul.f32 %v3680, %v3804
      %v3837 = vmul.f32 %v3685, %v3805
      %v3838 = vmul.f32 %v3688, %v3806
      %v3839 = vmul.f32 %v3693, %v3807
      %v3840 = vmul.f32 %v3696, %v3808
      %v3841 = vmul.f32 %v3701, %v3809
      %v3842 = vmul.f32 %v3704, %v3810
      %v3843 = vmul.f32 %v3709, %v3811
      %v3844 = vmul.f32 %v3712, %v3812
      %v3845 = vmul.f32 %v3717, %v3813
      %v3846 = vmul.f32 %v3720, %v3814
      %v3847 = vmul.f32 %v3725, %v3815
      %v3848 = vmul.f32 %v3728, %v3816
      %v3849 = vmul.f32 %v3733, %v3817
      %v3850 = vmul.f32 %v3736, %v3818
      %v3851 = vmul.f32 %v3741, %v3819
      %v3852 = vmul.f32 %v3744, %v3820
      %v3853 = vmul.f32 %v3749, %v3821
      %v3854 = vmul.f32 %v3752, %v3822
      %v3855 = vmul.f32 %v3757, %v3823
      %v3856 = vmul.f32 %v3760, %v3824
      %v3857 = vmul.f32 %v3765, %v3825
      %v3858 = vmul.f32 %v3768, %v3826
      %v3859 = vmul.f32 %v3773, %v3827
      %v3860 = vmul.f32 %v3776, %v3828
      %v3861 = vmul.f32 %v3781, %v3829
      %v3862 = vmul.f32 %v3784, %v3830
      %v3863 = vmul.f32 %v3789, %v3831
      %v3864 = vmul.f32 %v3792, %v3832
      %v3865 = vmul.f32 %v3797, %v3833
      %v3866 = vmul.f32 %v3800, %v3834
      %s3867 = scalar_lea.vmem %s228, 256
      %v3868 = vld [vmem:[%s3867] sm:$0xf]
      %v3869 = vld [vmem:[%s3867 + $0x4] sm:$0xf]
      %v3870 = vld [vmem:[%s3867 + $0x8] sm:$0xf]
      %v3871 = vld [vmem:[%s3867 + $0xc] sm:$0xf]
      %v3872 = vld [vmem:[%s3867 + $0x10] sm:$0xf]
      %v3873 = vld [vmem:[%s3867 + $0x14] sm:$0xf]
      %v3874 = vld [vmem:[%s3867 + $0x18] sm:$0xf]
      %v3875 = vld [vmem:[%s3867 + $0x1c] sm:$0xf]
      %v3876 = vld [vmem:[%s3867 + $0x20] sm:$0xf]
      %v3877 = vld [vmem:[%s3867 + $0x24] sm:$0xf]
      %v3878 = vld [vmem:[%s3867 + $0x28] sm:$0xf]
      %v3879 = vld [vmem:[%s3867 + $0x2c] sm:$0xf]
      %v3880 = vld [vmem:[%s3867 + $0x30] sm:$0xf]
      %v3881 = vld [vmem:[%s3867 + $0x34] sm:$0xf]
      %v3882 = vld [vmem:[%s3867 + $0x38] sm:$0xf]
      %v3883 = vld [vmem:[%s3867 + $0x3c] sm:$0xf]
      %v3884 = vld [vmem:[%s3867 + $0x40] sm:$0xf]
      %v3885 = vld [vmem:[%s3867 + $0x44] sm:$0xf]
      %v3886 = vld [vmem:[%s3867 + $0x48] sm:$0xf]
      %v3887 = vld [vmem:[%s3867 + $0x4c] sm:$0xf]
      %v3888 = vld [vmem:[%s3867 + $0x50] sm:$0xf]
      %v3889 = vld [vmem:[%s3867 + $0x54] sm:$0xf]
      %v3890 = vld [vmem:[%s3867 + $0x58] sm:$0xf]
      %v3891 = vld [vmem:[%s3867 + $0x5c] sm:$0xf]
      %v3892 = vld [vmem:[%s3867 + $0x60] sm:$0xf]
      %v3893 = vld [vmem:[%s3867 + $0x64] sm:$0xf]
      %v3894 = vld [vmem:[%s3867 + $0x68] sm:$0xf]
      %v3895 = vld [vmem:[%s3867 + $0x6c] sm:$0xf]
      %v3896 = vld [vmem:[%s3867 + $0x70] sm:$0xf]
      %v3897 = vld [vmem:[%s3867 + $0x74] sm:$0xf]
      %v3898 = vld [vmem:[%s3867 + $0x78] sm:$0xf]
      %v3899 = vld [vmem:[%s3867 + $0x7c] sm:$0xf]
      %s3900 = scalar_lea.vmem %s234, 24
      %v3901 = vld [vmem:[%s3900] sm:$0xff]
      %v3902 = vld [vmem:[%s3900 + $0x8] sm:$0xf]
      %v3935 = vunpack.c.l.b16 %v3868
      %v3936 = vunpack.c.l.b16 %v3869
      %v3937 = vunpack.c.l.b16 %v3870
      %v3938 = vunpack.c.l.b16 %v3871
      %v3939 = vunpack.c.l.b16 %v3872
      %v3940 = vunpack.c.l.b16 %v3873
      %v3941 = vunpack.c.l.b16 %v3874
      %v3942 = vunpack.c.l.b16 %v3875
      %v3943 = vunpack.c.l.b16 %v3876
      %v3944 = vunpack.c.l.b16 %v3877
      %v3945 = vunpack.c.l.b16 %v3878
      %v3946 = vunpack.c.l.b16 %v3879
      %v3947 = vunpack.c.l.b16 %v3880
      %v3948 = vunpack.c.l.b16 %v3881
      %v3949 = vunpack.c.l.b16 %v3882
      %v3950 = vunpack.c.l.b16 %v3883
      %v3951 = vunpack.c.l.b16 %v3884
      %v3952 = vunpack.c.l.b16 %v3885
      %v3953 = vunpack.c.l.b16 %v3886
      %v3954 = vunpack.c.l.b16 %v3887
      %v3955 = vunpack.c.l.b16 %v3888
      %v3956 = vunpack.c.l.b16 %v3889
      %v3957 = vunpack.c.l.b16 %v3890
      %v3958 = vunpack.c.l.b16 %v3891
      %v3959 = vunpack.c.l.b16 %v3892
      %v3960 = vunpack.c.l.b16 %v3893
      %v3961 = vunpack.c.l.b16 %v3894
      %v3962 = vunpack.c.l.b16 %v3895
      %v3963 = vunpack.c.l.b16 %v3896
      %v3964 = vunpack.c.l.b16 %v3897
      %v3965 = vunpack.c.l.b16 %v3898
      %v3966 = vunpack.c.l.b16 %v3899
      %v3967 = vpack.c.b16 %v3936, %v3935
      %v3968 = vpack.c.b16 %v3938, %v3937
      %v3969 = vpack.c.b16 %v3940, %v3939
      %v3970 = vpack.c.b16 %v3942, %v3941
      %v3971 = vpack.c.b16 %v3944, %v3943
      %v3972 = vpack.c.b16 %v3946, %v3945
      %v3973 = vpack.c.b16 %v3948, %v3947
      %v3974 = vpack.c.b16 %v3950, %v3949
      %v3975 = vpack.c.b16 %v3952, %v3951
      %v3976 = vpack.c.b16 %v3954, %v3953
      %v3977 = vpack.c.b16 %v3956, %v3955
      %v3978 = vpack.c.b16 %v3958, %v3957
      %v3979 = vpack.c.b16 %v3960, %v3959
      %v3980 = vpack.c.b16 %v3962, %v3961
      %v3981 = vpack.c.b16 %v3964, %v3963
      %v3982 = vpack.c.b16 %v3966, %v3965
      %v3985 = vunpack.c.l.b16 %v3901
      %v3986 = vunpack.c.h.b16 %v3901
      %v3987 = vunpack.c.l.b16 %v3902
      %v3988 = vpack.c.b16 %v3985, %v3985
      %v3989 = vpack.c.b16 %v3986, %v3986
      %v3990 = vpack.c.b16 %v3987, %v3987
      %v3992 = vsel %vm380, %v3967, 0
      %v3995 = vsel %vm380, %v3968, 0
      %v3998 = vsel %vm380, %v3969, 0
      %v4001 = vsel %vm380, %v3970, 0
      %v4004 = vsel %vm380, %v3971, 0
      %v4007 = vsel %vm380, %v3972, 0
      %v4010 = vsel %vm380, %v3973, 0
      %v4013 = vsel %vm380, %v3974, 0
      %v4016 = vsel %vm380, %v3975, 0
      %v4019 = vsel %vm380, %v3976, 0
      %v4022 = vsel %vm380, %v3977, 0
      %v4025 = vsel %vm380, %v3978, 0
      %v4028 = vsel %vm380, %v3979, 0
      %v4031 = vsel %vm380, %v3980, 0
      %v4034 = vsel %vm380, %v3981, 0
      %v4037 = vsel %vm380, %v3982, 0
      %v4040 = vsel %vm429, %v3988, 0
      %v4043 = vsel %vm429, %v3989, 0
      %v4046 = vsel %vm429, %v3990, 0
      %4048 = vmatprep.subr.bf16.mxu0 %v4043
      %4049 = vmatpush1.bf16.msra.mxu0 %v4040
      %4050 = vmatprep.subr.bf16.mxu0 0
      %4051 = vmatpush1.bf16.msra.mxu0 0
      %4052 = vmatprep.subr.bf16.mxu0 0
      %4053 = vmatpush1.bf16.msra.mxu0 0
      %4054 = vmatprep.subr.bf16.mxu0 0
      %4055 = vmatpush1.bf16.msra.mxu0 0
      %4056 = vmatprep.subr.bf16.mxu0 0
      %4057 = vmatpush1.bf16.msra.mxu0 0
      %4058 = vmatprep.subr.bf16.mxu0 0
      %4059 = vmatpush1.bf16.msra.mxu0 0
      %4060 = vmatprep.subr.bf16.mxu0 0
      %4061 = vmatpush1.bf16.msra.mxu0 0
      %4062 = vmatprep.subr.bf16.mxu0 0
      %4063 = vmatpush1.bf16.msra.mxu0 0
      %4064 = vmatprep.subr.bf16.mxu0 0
      %4065 = vmatpush1.bf16.msra.mxu0 0
      %4066 = vmatprep.subr.bf16.mxu0 0
      %4067 = vmatpush1.bf16.msra.mxu0 0
      %4068 = vmatprep.subr.bf16.mxu0 0
      %4069 = vmatpush1.bf16.msra.mxu0 0
      %4070 = vmatprep.subr.bf16.mxu0 0
      %4071 = vmatpush1.bf16.msra.mxu0 0
      %4072 = vmatprep.subr.bf16.mxu0 0
      %4073 = vmatpush1.bf16.msra.mxu0 0
      %4074 = vmatprep.subr.bf16.mxu0 0
      %4075 = vmatpush1.bf16.msra.mxu0 0
      %4076 = vmatprep.subr.bf16.mxu0 0
      %4077 = vmatpush1.bf16.msra.mxu0 0
      %4078 = vmatprep.subr.bf16.mxu0 0
      %4079 = vmatpush1.bf16.msra.mxu0 0
      %4080 = vmatprep.mubr.bf16.mxu0 0
      %4081 = vmatmul.mubr.bf16.gmra.mrb[0].mxu0 %v3992
      %v4082 = vpop.f32.mrb[0].mxu0
      %v4083 = vadd.f32 0.0, %v4082
      %v4084 = vpop.f32.mrb[0].mxu0
      %v4085 = vadd.f32 0.0, %v4084
      %v4086 = vpop.f32.mrb[0].mxu0
      %v4087 = vadd.f32 0.0, %v4086
      %v4088 = vpop.f32.mrb[0].mxu0
      %v4089 = vadd.f32 0.0, %v4088
      %4090 = vmatprep.mubr.bf16.mxu0 0
      %4091 = vmatmul.mubr.bf16.gmra.mrb[0].mxu0 %v3995
      %v4092 = vpop.f32.mrb[0].mxu0
      %v4093 = vadd.f32 0.0, %v4092
      %v4094 = vpop.f32.mrb[0].mxu0
      %v4095 = vadd.f32 0.0, %v4094
      %v4096 = vpop.f32.mrb[0].mxu0
      %v4097 = vadd.f32 0.0, %v4096
      %v4098 = vpop.f32.mrb[0].mxu0
      %v4099 = vadd.f32 0.0, %v4098
      %4100 = vmatprep.mubr.bf16.mxu0 0
      %4101 = vmatmul.mubr.bf16.gmra.mrb[0].mxu0 %v3998
      %v4102 = vpop.f32.mrb[0].mxu0
      %v4103 = vadd.f32 0.0, %v4102
      %v4104 = vpop.f32.mrb[0].mxu0
      %v4105 = vadd.f32 0.0, %v4104
      %v4106 = vpop.f32.mrb[0].mxu0
      %v4107 = vadd.f32 0.0, %v4106
      %v4108 = vpop.f32.mrb[0].mxu0
      %v4109 = vadd.f32 0.0, %v4108
      %4110 = vmatprep.mubr.bf16.mxu0 0
      %4111 = vmatmul.mubr.bf16.gmra.mrb[0].mxu0 %v4001
      %v4112 = vpop.f32.mrb[0].mxu0
      %v4113 = vadd.f32 0.0, %v4112
      %v4114 = vpop.f32.mrb[0].mxu0
      %v4115 = vadd.f32 0.0, %v4114
      %v4116 = vpop.f32.mrb[0].mxu0
      %v4117 = vadd.f32 0.0, %v4116
      %v4118 = vpop.f32.mrb[0].mxu0
      %v4119 = vadd.f32 0.0, %v4118
      %4120 = vmatprep.mubr.bf16.mxu0 0
      %4121 = vmatmul.mubr.bf16.gmra.mrb[0].mxu0 %v4004
      %v4122 = vpop.f32.mrb[0].mxu0
      %v4123 = vadd.f32 0.0, %v4122
      %v4124 = vpop.f32.mrb[0].mxu0
      %v4125 = vadd.f32 0.0, %v4124
      %v4126 = vpop.f32.mrb[0].mxu0
      %v4127 = vadd.f32 0.0, %v4126
      %v4128 = vpop.f32.mrb[0].mxu0
      %v4129 = vadd.f32 0.0, %v4128
      %4130 = vmatprep.mubr.bf16.mxu0 0
      %4131 = vmatmul.mubr.bf16.gmra.mrb[0].mxu0 %v4007
      %v4132 = vpop.f32.mrb[0].mxu0
      %v4133 = vadd.f32 0.0, %v4132
      %v4134 = vpop.f32.mrb[0].mxu0
      %v4135 = vadd.f32 0.0, %v4134
      %v4136 = vpop.f32.mrb[0].mxu0
      %v4137 = vadd.f32 0.0, %v4136
      %v4138 = vpop.f32.mrb[0].mxu0
      %v4139 = vadd.f32 0.0, %v4138
      %4140 = vmatprep.mubr.bf16.mxu0 0
      %4141 = vmatmul.mubr.bf16.gmra.mrb[0].mxu0 %v4010
      %v4142 = vpop.f32.mrb[0].mxu0
      %v4143 = vadd.f32 0.0, %v4142
      %v4144 = vpop.f32.mrb[0].mxu0
      %v4145 = vadd.f32 0.0, %v4144
      %v4146 = vpop.f32.mrb[0].mxu0
      %v4147 = vadd.f32 0.0, %v4146
      %v4148 = vpop.f32.mrb[0].mxu0
      %v4149 = vadd.f32 0.0, %v4148
      %4150 = vmatprep.mubr.bf16.mxu0 0
      %4151 = vmatmul.mubr.bf16.gmra.mrb[0].mxu0 %v4013
      %v4152 = vpop.f32.mrb[0].mxu0
      %v4153 = vadd.f32 0.0, %v4152
      %v4154 = vpop.f32.mrb[0].mxu0
      %v4155 = vadd.f32 0.0, %v4154
      %v4156 = vpop.f32.mrb[0].mxu0
      %v4157 = vadd.f32 0.0, %v4156
      %v4158 = vpop.f32.mrb[0].mxu0
      %v4159 = vadd.f32 0.0, %v4158
      %4160 = vmatprep.mubr.bf16.mxu0 0
      %4161 = vmatmul.mubr.bf16.gmra.mrb[0].mxu0 %v4016
      %v4162 = vpop.f32.mrb[0].mxu0
      %v4163 = vadd.f32 0.0, %v4162
      %v4164 = vpop.f32.mrb[0].mxu0
      %v4165 = vadd.f32 0.0, %v4164
      %v4166 = vpop.f32.mrb[0].mxu0
      %v4167 = vadd.f32 0.0, %v4166
      %v4168 = vpop.f32.mrb[0].mxu0
      %v4169 = vadd.f32 0.0, %v4168
      %4170 = vmatprep.mubr.bf16.mxu0 0
      %4171 = vmatmul.mubr.bf16.gmra.mrb[0].mxu0 %v4019
      %v4172 = vpop.f32.mrb[0].mxu0
      %v4173 = vadd.f32 0.0, %v4172
      %v4174 = vpop.f32.mrb[0].mxu0
      %v4175 = vadd.f32 0.0, %v4174
      %v4176 = vpop.f32.mrb[0].mxu0
      %v4177 = vadd.f32 0.0, %v4176
      %v4178 = vpop.f32.mrb[0].mxu0
      %v4179 = vadd.f32 0.0, %v4178
      %4180 = vmatprep.mubr.bf16.mxu0 0
      %4181 = vmatmul.mubr.bf16.gmra.mrb[0].mxu0 %v4022
      %v4182 = vpop.f32.mrb[0].mxu0
      %v4183 = vadd.f32 0.0, %v4182
      %v4184 = vpop.f32.mrb[0].mxu0
      %v4185 = vadd.f32 0.0, %v4184
      %v4186 = vpop.f32.mrb[0].mxu0
      %v4187 = vadd.f32 0.0, %v4186
      %v4188 = vpop.f32.mrb[0].mxu0
      %v4189 = vadd.f32 0.0, %v4188
      %4190 = vmatprep.mubr.bf16.mxu0 0
      %4191 = vmatmul.mubr.bf16.gmra.mrb[0].mxu0 %v4025
      %v4192 = vpop.f32.mrb[0].mxu0
      %v4193 = vadd.f32 0.0, %v4192
      %v4194 = vpop.f32.mrb[0].mxu0
      %v4195 = vadd.f32 0.0, %v4194
      %v4196 = vpop.f32.mrb[0].mxu0
      %v4197 = vadd.f32 0.0, %v4196
      %v4198 = vpop.f32.mrb[0].mxu0
      %v4199 = vadd.f32 0.0, %v4198
      %4200 = vmatprep.mubr.bf16.mxu0 0
      %4201 = vmatmul.mubr.bf16.gmra.mrb[0].mxu0 %v4028
      %v4202 = vpop.f32.mrb[0].mxu0
      %v4203 = vadd.f32 0.0, %v4202
      %v4204 = vpop.f32.mrb[0].mxu0
      %v4205 = vadd.f32 0.0, %v4204
      %v4206 = vpop.f32.mrb[0].mxu0
      %v4207 = vadd.f32 0.0, %v4206
      %v4208 = vpop.f32.mrb[0].mxu0
      %v4209 = vadd.f32 0.0, %v4208
      %4210 = vmatprep.mubr.bf16.mxu0 0
      %4211 = vmatmul.mubr.bf16.gmra.mrb[0].mxu0 %v4031
      %v4212 = vpop.f32.mrb[0].mxu0
      %v4213 = vadd.f32 0.0, %v4212
      %v4214 = vpop.f32.mrb[0].mxu0
      %v4215 = vadd.f32 0.0, %v4214
      %v4216 = vpop.f32.mrb[0].mxu0
      %v4217 = vadd.f32 0.0, %v4216
      %v4218 = vpop.f32.mrb[0].mxu0
      %v4219 = vadd.f32 0.0, %v4218
      %4220 = vmatprep.mubr.bf16.mxu0 0
      %4221 = vmatmul.mubr.bf16.gmra.mrb[0].mxu0 %v4034
      %v4222 = vpop.f32.mrb[0].mxu0
      %v4223 = vadd.f32 0.0, %v4222
      %v4224 = vpop.f32.mrb[0].mxu0
      %v4225 = vadd.f32 0.0, %v4224
      %v4226 = vpop.f32.mrb[0].mxu0
      %v4227 = vadd.f32 0.0, %v4226
      %v4228 = vpop.f32.mrb[0].mxu0
      %v4229 = vadd.f32 0.0, %v4228
      %4230 = vmatprep.mubr.bf16.mxu0 0
      %4231 = vmatmul.mubr.bf16.gmra.mrb[0].mxu0 %v4037
      %v4232 = vpop.f32.mrb[0].mxu0
      %v4233 = vadd.f32 0.0, %v4232
      %v4234 = vpop.f32.mrb[0].mxu0
      %v4235 = vadd.f32 0.0, %v4234
      %v4236 = vpop.f32.mrb[0].mxu0
      %v4237 = vadd.f32 0.0, %v4236
      %v4238 = vpop.f32.mrb[0].mxu0
      %v4239 = vadd.f32 0.0, %v4238
      %4240 = vdwg.mxu0
      %4241 = vmatprep.subr.bf16.mxu0 0
      %4242 = vmatpush1.bf16.msra.mxu0 %v4046
      %4243 = vmatprep.subr.bf16.mxu0 0
      %4244 = vmatpush1.bf16.msra.mxu0 0
      %4245 = vmatprep.subr.bf16.mxu0 0
      %4246 = vmatpush1.bf16.msra.mxu0 0
      %4247 = vmatprep.subr.bf16.mxu0 0
      %4248 = vmatpush1.bf16.msra.mxu0 0
      %4249 = vmatprep.subr.bf16.mxu0 0
      %4250 = vmatpush1.bf16.msra.mxu0 0
      %4251 = vmatprep.subr.bf16.mxu0 0
      %4252 = vmatpush1.bf16.msra.mxu0 0
      %4253 = vmatprep.subr.bf16.mxu0 0
      %4254 = vmatpush1.bf16.msra.mxu0 0
      %4255 = vmatprep.subr.bf16.mxu0 0
      %4256 = vmatpush1.bf16.msra.mxu0 0
      %4257 = vmatprep.subr.bf16.mxu0 0
      %4258 = vmatpush1.bf16.msra.mxu0 0
      %4259 = vmatprep.subr.bf16.mxu0 0
      %4260 = vmatpush1.bf16.msra.mxu0 0
      %4261 = vmatprep.subr.bf16.mxu0 0
      %4262 = vmatpush1.bf16.msra.mxu0 0
      %4263 = vmatprep.subr.bf16.mxu0 0
      %4264 = vmatpush1.bf16.msra.mxu0 0
      %4265 = vmatprep.subr.bf16.mxu0 0
      %4266 = vmatpush1.bf16.msra.mxu0 0
      %4267 = vmatprep.subr.bf16.mxu0 0
      %4268 = vmatpush1.bf16.msra.mxu0 0
      %4269 = vmatprep.subr.bf16.mxu0 0
      %4270 = vmatpush1.bf16.msra.mxu0 0
      %4271 = vmatprep.subr.bf16.mxu0 0
      %4272 = vmatpush1.bf16.msra.mxu0 0
      %4273 = vmatprep.mubr.bf16.mxu0 0
      %4274 = vmatmul.mubr.bf16.gmra.mrb[0].mxu0 %v3992
      %v4275 = vpop.f32.mrb[0].mxu0
      %v4276 = vadd.f32 0.0, %v4275
      %v4277 = vpop.f32.mrb[0].mxu0
      %v4278 = vpop.f32.mrb[0].mxu0
      %v4279 = vadd.f32 0.0, %v4278
      %v4280 = vpop.f32.mrb[0].mxu0
      %4281 = vmatprep.mubr.bf16.mxu0 0
      %4282 = vmatmul.mubr.bf16.gmra.mrb[0].mxu0 %v3995
      %v4283 = vpop.f32.mrb[0].mxu0
      %v4284 = vadd.f32 0.0, %v4283
      %v4285 = vpop.f32.mrb[0].mxu0
      %v4286 = vpop.f32.mrb[0].mxu0
      %v4287 = vadd.f32 0.0, %v4286
      %v4288 = vpop.f32.mrb[0].mxu0
      %4289 = vmatprep.mubr.bf16.mxu0 0
      %4290 = vmatmul.mubr.bf16.gmra.mrb[0].mxu0 %v3998
      %v4291 = vpop.f32.mrb[0].mxu0
      %v4292 = vadd.f32 0.0, %v4291
      %v4293 = vpop.f32.mrb[0].mxu0
      %v4294 = vpop.f32.mrb[0].mxu0
      %v4295 = vadd.f32 0.0, %v4294
      %v4296 = vpop.f32.mrb[0].mxu0
      %4297 = vmatprep.mubr.bf16.mxu0 0
      %4298 = vmatmul.mubr.bf16.gmra.mrb[0].mxu0 %v4001
      %v4299 = vpop.f32.mrb[0].mxu0
      %v4300 = vadd.f32 0.0, %v4299
      %v4301 = vpop.f32.mrb[0].mxu0
      %v4302 = vpop.f32.mrb[0].mxu0
      %v4303 = vadd.f32 0.0, %v4302
      %v4304 = vpop.f32.mrb[0].mxu0
      %4305 = vmatprep.mubr.bf16.mxu0 0
      %4306 = vmatmul.mubr.bf16.gmra.mrb[0].mxu0 %v4004
      %v4307 = vpop.f32.mrb[0].mxu0
      %v4308 = vadd.f32 0.0, %v4307
      %v4309 = vpop.f32.mrb[0].mxu0
      %v4310 = vpop.f32.mrb[0].mxu0
      %v4311 = vadd.f32 0.0, %v4310
      %v4312 = vpop.f32.mrb[0].mxu0
      %4313 = vmatprep.mubr.bf16.mxu0 0
      %4314 = vmatmul.mubr.bf16.gmra.mrb[0].mxu0 %v4007
      %v4315 = vpop.f32.mrb[0].mxu0
      %v4316 = vadd.f32 0.0, %v4315
      %v4317 = vpop.f32.mrb[0].mxu0
      %v4318 = vpop.f32.mrb[0].mxu0
      %v4319 = vadd.f32 0.0, %v4318
      %v4320 = vpop.f32.mrb[0].mxu0
      %4321 = vmatprep.mubr.bf16.mxu0 0
      %4322 = vmatmul.mubr.bf16.gmra.mrb[0].mxu0 %v4010
      %v4323 = vpop.f32.mrb[0].mxu0
      %v4324 = vadd.f32 0.0, %v4323
      %v4325 = vpop.f32.mrb[0].mxu0
      %v4326 = vpop.f32.mrb[0].mxu0
      %v4327 = vadd.f32 0.0, %v4326
      %v4328 = vpop.f32.mrb[0].mxu0
      %4329 = vmatprep.mubr.bf16.mxu0 0
      %4330 = vmatmul.mubr.bf16.gmra.mrb[0].mxu0 %v4013
      %v4331 = vpop.f32.mrb[0].mxu0
      %v4332 = vadd.f32 0.0, %v4331
      %v4333 = vpop.f32.mrb[0].mxu0
      %v4334 = vpop.f32.mrb[0].mxu0
      %v4335 = vadd.f32 0.0, %v4334
      %v4336 = vpop.f32.mrb[0].mxu0
      %4337 = vmatprep.mubr.bf16.mxu0 0
      %4338 = vmatmul.mubr.bf16.gmra.mrb[0].mxu0 %v4016
      %v4339 = vpop.f32.mrb[0].mxu0
      %v4340 = vadd.f32 0.0, %v4339
      %v4341 = vpop.f32.mrb[0].mxu0
      %v4342 = vpop.f32.mrb[0].mxu0
      %v4343 = vadd.f32 0.0, %v4342
      %v4344 = vpop.f32.mrb[0].mxu0
      %4345 = vmatprep.mubr.bf16.mxu0 0
      %4346 = vmatmul.mubr.bf16.gmra.mrb[0].mxu0 %v4019
      %v4347 = vpop.f32.mrb[0].mxu0
      %v4348 = vadd.f32 0.0, %v4347
      %v4349 = vpop.f32.mrb[0].mxu0
      %v4350 = vpop.f32.mrb[0].mxu0
      %v4351 = vadd.f32 0.0, %v4350
      %v4352 = vpop.f32.mrb[0].mxu0
      %4353 = vmatprep.mubr.bf16.mxu0 0
      %4354 = vmatmul.mubr.bf16.gmra.mrb[0].mxu0 %v4022
      %v4355 = vpop.f32.mrb[0].mxu0
      %v4356 = vadd.f32 0.0, %v4355
      %v4357 = vpop.f32.mrb[0].mxu0
      %v4358 = vpop.f32.mrb[0].mxu0
      %v4359 = vadd.f32 0.0, %v4358
      %v4360 = vpop.f32.mrb[0].mxu0
      %4361 = vmatprep.mubr.bf16.mxu0 0
      %4362 = vmatmul.mubr.bf16.gmra.mrb[0].mxu0 %v4025
      %v4363 = vpop.f32.mrb[0].mxu0
      %v4364 = vadd.f32 0.0, %v4363
      %v4365 = vpop.f32.mrb[0].mxu0
      %v4366 = vpop.f32.mrb[0].mxu0
      %v4367 = vadd.f32 0.0, %v4366
      %v4368 = vpop.f32.mrb[0].mxu0
      %4369 = vmatprep.mubr.bf16.mxu0 0
      %4370 = vmatmul.mubr.bf16.gmra.mrb[0].mxu0 %v4028
      %v4371 = vpop.f32.mrb[0].mxu0
      %v4372 = vadd.f32 0.0, %v4371
      %v4373 = vpop.f32.mrb[0].mxu0
      %v4374 = vpop.f32.mrb[0].mxu0
      %v4375 = vadd.f32 0.0, %v4374
      %v4376 = vpop.f32.mrb[0].mxu0
      %4377 = vmatprep.mubr.bf16.mxu0 0
      %4378 = vmatmul.mubr.bf16.gmra.mrb[0].mxu0 %v4031
      %v4379 = vpop.f32.mrb[0].mxu0
      %v4380 = vadd.f32 0.0, %v4379
      %v4381 = vpop.f32.mrb[0].mxu0
      %v4382 = vpop.f32.mrb[0].mxu0
      %v4383 = vadd.f32 0.0, %v4382
      %v4384 = vpop.f32.mrb[0].mxu0
      %4385 = vmatprep.mubr.bf16.mxu0 0
      %4386 = vmatmul.mubr.bf16.gmra.mrb[0].mxu0 %v4034
      %v4387 = vpop.f32.mrb[0].mxu0
      %v4388 = vadd.f32 0.0, %v4387
      %v4389 = vpop.f32.mrb[0].mxu0
      %v4390 = vpop.f32.mrb[0].mxu0
      %v4391 = vadd.f32 0.0, %v4390
      %v4392 = vpop.f32.mrb[0].mxu0
      %4393 = vmatprep.mubr.bf16.mxu0 0
      %4394 = vmatmul.mubr.bf16.gmra.mrb[0].mxu0 %v4037
      %v4395 = vpop.f32.mrb[0].mxu0
      %v4396 = vadd.f32 0.0, %v4395
      %v4397 = vpop.f32.mrb[0].mxu0
      %v4398 = vpop.f32.mrb[0].mxu0
      %v4399 = vadd.f32 0.0, %v4398
      %v4400 = vpop.f32.mrb[0].mxu0
      %4401 = vdwg.mxu0
      %v4402 = vsel %vm796, %v4083, -inf
      %v4403 = vsel %vm797, %v4085, -inf
      %v4404 = vsel %vm798, %v4276, -inf
      %v4405 = vsel %vm796, %v4087, -inf
      %v4406 = vsel %vm797, %v4089, -inf
      %v4407 = vsel %vm798, %v4279, -inf
      %v4408 = vsel %vm796, %v4093, -inf
      %v4409 = vsel %vm797, %v4095, -inf
      %v4410 = vsel %vm798, %v4284, -inf
      %v4411 = vsel %vm796, %v4097, -inf
      %v4412 = vsel %vm797, %v4099, -inf
      %v4413 = vsel %vm798, %v4287, -inf
      %v4414 = vsel %vm796, %v4103, -inf
      %v4415 = vsel %vm797, %v4105, -inf
      %v4416 = vsel %vm798, %v4292, -inf
      %v4417 = vsel %vm796, %v4107, -inf
      %v4418 = vsel %vm797, %v4109, -inf
      %v4419 = vsel %vm798, %v4295, -inf
      %v4420 = vsel %vm796, %v4113, -inf
      %v4421 = vsel %vm797, %v4115, -inf
      %v4422 = vsel %vm798, %v4300, -inf
      %v4423 = vsel %vm796, %v4117, -inf
      %v4424 = vsel %vm797, %v4119, -inf
      %v4425 = vsel %vm798, %v4303, -inf
      %v4426 = vsel %vm796, %v4123, -inf
      %v4427 = vsel %vm797, %v4125, -inf
      %v4428 = vsel %vm798, %v4308, -inf
      %v4429 = vsel %vm796, %v4127, -inf
      %v4430 = vsel %vm797, %v4129, -inf
      %v4431 = vsel %vm798, %v4311, -inf
      %v4432 = vsel %vm796, %v4133, -inf
      %v4433 = vsel %vm797, %v4135, -inf
      %v4434 = vsel %vm798, %v4316, -inf
      %v4435 = vsel %vm796, %v4137, -inf
      %v4436 = vsel %vm797, %v4139, -inf
      %v4437 = vsel %vm798, %v4319, -inf
      %v4438 = vsel %vm796, %v4143, -inf
      %v4439 = vsel %vm797, %v4145, -inf
      %v4440 = vsel %vm798, %v4324, -inf
      %v4441 = vsel %vm796, %v4147, -inf
      %v4442 = vsel %vm797, %v4149, -inf
      %v4443 = vsel %vm798, %v4327, -inf
      %v4444 = vsel %vm796, %v4153, -inf
      %v4445 = vsel %vm797, %v4155, -inf
      %v4446 = vsel %vm798, %v4332, -inf
      %v4447 = vsel %vm796, %v4157, -inf
      %v4448 = vsel %vm797, %v4159, -inf
      %v4449 = vsel %vm798, %v4335, -inf
      %v4450 = vsel %vm796, %v4163, -inf
      %v4451 = vsel %vm797, %v4165, -inf
      %v4452 = vsel %vm798, %v4340, -inf
      %v4453 = vsel %vm796, %v4167, -inf
      %v4454 = vsel %vm797, %v4169, -inf
      %v4455 = vsel %vm798, %v4343, -inf
      %v4456 = vsel %vm796, %v4173, -inf
      %v4457 = vsel %vm797, %v4175, -inf
      %v4458 = vsel %vm798, %v4348, -inf
      %v4459 = vsel %vm796, %v4177, -inf
      %v4460 = vsel %vm797, %v4179, -inf
      %v4461 = vsel %vm798, %v4351, -inf
      %v4462 = vsel %vm796, %v4183, -inf
      %v4463 = vsel %vm797, %v4185, -inf
      %v4464 = vsel %vm798, %v4356, -inf
      %v4465 = vsel %vm796, %v4187, -inf
      %v4466 = vsel %vm797, %v4189, -inf
      %v4467 = vsel %vm798, %v4359, -inf
      %v4468 = vsel %vm796, %v4193, -inf
      %v4469 = vsel %vm797, %v4195, -inf
      %v4470 = vsel %vm798, %v4364, -inf
      %v4471 = vsel %vm796, %v4197, -inf
      %v4472 = vsel %vm797, %v4199, -inf
      %v4473 = vsel %vm798, %v4367, -inf
      %v4474 = vsel %vm796, %v4203, -inf
      %v4475 = vsel %vm797, %v4205, -inf
      %v4476 = vsel %vm798, %v4372, -inf
      %v4477 = vsel %vm796, %v4207, -inf
      %v4478 = vsel %vm797, %v4209, -inf
      %v4479 = vsel %vm798, %v4375, -inf
      %v4480 = vsel %vm796, %v4213, -inf
      %v4481 = vsel %vm797, %v4215, -inf
      %v4482 = vsel %vm798, %v4380, -inf
      %v4483 = vsel %vm796, %v4217, -inf
      %v4484 = vsel %vm797, %v4219, -inf
      %v4485 = vsel %vm798, %v4383, -inf
      %v4486 = vsel %vm796, %v4223, -inf
      %v4487 = vsel %vm797, %v4225, -inf
      %v4488 = vsel %vm798, %v4388, -inf
      %v4489 = vsel %vm796, %v4227, -inf
      %v4490 = vsel %vm797, %v4229, -inf
      %v4491 = vsel %vm798, %v4391, -inf
      %v4492 = vsel %vm796, %v4233, -inf
      %v4493 = vsel %vm797, %v4235, -inf
      %v4494 = vsel %vm798, %v4396, -inf
      %v4495 = vsel %vm796, %v4237, -inf
      %v4496 = vsel %vm797, %v4239, -inf
      %v4497 = vsel %vm798, %v4399, -inf
      %v4498 = vmax.f32 %v4402, %v4403
      %v4499 = vmax.f32 %v4498, %v4404
      %4500 = vmax.xlane.f32.xlu0 %v4499
      %v4501 = vpop.xlane.xlu0 %4500
      %v4502 = vmax.f32 %v4405, %v4406
      %v4503 = vmax.f32 %v4502, %v4407
      %4504 = vmax.xlane.f32.xlu0 %v4503
      %v4505 = vpop.xlane.xlu0 %4504
      %v4506 = vmax.f32 %v4408, %v4409
      %v4507 = vmax.f32 %v4506, %v4410
      %4508 = vmax.xlane.f32.xlu0 %v4507
      %v4509 = vpop.xlane.xlu0 %4508
      %v4510 = vmax.f32 %v4411, %v4412
      %v4511 = vmax.f32 %v4510, %v4413
      %4512 = vmax.xlane.f32.xlu0 %v4511
      %v4513 = vpop.xlane.xlu0 %4512
      %v4514 = vmax.f32 %v4414, %v4415
      %v4515 = vmax.f32 %v4514, %v4416
      %4516 = vmax.xlane.f32.xlu0 %v4515
      %v4517 = vpop.xlane.xlu0 %4516
      %v4518 = vmax.f32 %v4417, %v4418
      %v4519 = vmax.f32 %v4518, %v4419
      %4520 = vmax.xlane.f32.xlu0 %v4519
      %v4521 = vpop.xlane.xlu0 %4520
      %v4522 = vmax.f32 %v4420, %v4421
      %v4523 = vmax.f32 %v4522, %v4422
      %4524 = vmax.xlane.f32.xlu0 %v4523
      %v4525 = vpop.xlane.xlu0 %4524
      %v4526 = vmax.f32 %v4423, %v4424
      %v4527 = vmax.f32 %v4526, %v4425
      %4528 = vmax.xlane.f32.xlu0 %v4527
      %v4529 = vpop.xlane.xlu0 %4528
      %v4530 = vmax.f32 %v4426, %v4427
      %v4531 = vmax.f32 %v4530, %v4428
      %4532 = vmax.xlane.f32.xlu0 %v4531
      %v4533 = vpop.xlane.xlu0 %4532
      %v4534 = vmax.f32 %v4429, %v4430
      %v4535 = vmax.f32 %v4534, %v4431
      %4536 = vmax.xlane.f32.xlu0 %v4535
      %v4537 = vpop.xlane.xlu0 %4536
      %v4538 = vmax.f32 %v4432, %v4433
      %v4539 = vmax.f32 %v4538, %v4434
      %4540 = vmax.xlane.f32.xlu0 %v4539
      %v4541 = vpop.xlane.xlu0 %4540
      %v4542 = vmax.f32 %v4435, %v4436
      %v4543 = vmax.f32 %v4542, %v4437
      %4544 = vmax.xlane.f32.xlu0 %v4543
      %v4545 = vpop.xlane.xlu0 %4544
      %v4546 = vmax.f32 %v4438, %v4439
      %v4547 = vmax.f32 %v4546, %v4440
      %4548 = vmax.xlane.f32.xlu0 %v4547
      %v4549 = vpop.xlane.xlu0 %4548
      %v4550 = vmax.f32 %v4441, %v4442
      %v4551 = vmax.f32 %v4550, %v4443
      %4552 = vmax.xlane.f32.xlu0 %v4551
      %v4553 = vpop.xlane.xlu0 %4552
      %v4554 = vmax.f32 %v4444, %v4445
      %v4555 = vmax.f32 %v4554, %v4446
      %4556 = vmax.xlane.f32.xlu0 %v4555
      %v4557 = vpop.xlane.xlu0 %4556
      %v4558 = vmax.f32 %v4447, %v4448
      %v4559 = vmax.f32 %v4558, %v4449
      %4560 = vmax.xlane.f32.xlu0 %v4559
      %v4561 = vpop.xlane.xlu0 %4560
      %v4562 = vmax.f32 %v4450, %v4451
      %v4563 = vmax.f32 %v4562, %v4452
      %4564 = vmax.xlane.f32.xlu0 %v4563
      %v4565 = vpop.xlane.xlu0 %4564
      %v4566 = vmax.f32 %v4453, %v4454
      %v4567 = vmax.f32 %v4566, %v4455
      %4568 = vmax.xlane.f32.xlu0 %v4567
      %v4569 = vpop.xlane.xlu0 %4568
      %v4570 = vmax.f32 %v4456, %v4457
      %v4571 = vmax.f32 %v4570, %v4458
      %4572 = vmax.xlane.f32.xlu0 %v4571
      %v4573 = vpop.xlane.xlu0 %4572
      %v4574 = vmax.f32 %v4459, %v4460
      %v4575 = vmax.f32 %v4574, %v4461
      %4576 = vmax.xlane.f32.xlu0 %v4575
      %v4577 = vpop.xlane.xlu0 %4576
      %v4578 = vmax.f32 %v4462, %v4463
      %v4579 = vmax.f32 %v4578, %v4464
      %4580 = vmax.xlane.f32.xlu0 %v4579
      %v4581 = vpop.xlane.xlu0 %4580
      %v4582 = vmax.f32 %v4465, %v4466
      %v4583 = vmax.f32 %v4582, %v4467
      %4584 = vmax.xlane.f32.xlu0 %v4583
      %v4585 = vpop.xlane.xlu0 %4584
      %v4586 = vmax.f32 %v4468, %v4469
      %v4587 = vmax.f32 %v4586, %v4470
      %4588 = vmax.xlane.f32.xlu0 %v4587
      %v4589 = vpop.xlane.xlu0 %4588
      %v4590 = vmax.f32 %v4471, %v4472
      %v4591 = vmax.f32 %v4590, %v4473
      %4592 = vmax.xlane.f32.xlu0 %v4591
      %v4593 = vpop.xlane.xlu0 %4592
      %v4594 = vmax.f32 %v4474, %v4475
      %v4595 = vmax.f32 %v4594, %v4476
      %4596 = vmax.xlane.f32.xlu0 %v4595
      %v4597 = vpop.xlane.xlu0 %4596
      %v4598 = vmax.f32 %v4477, %v4478
      %v4599 = vmax.f32 %v4598, %v4479
      %4600 = vmax.xlane.f32.xlu0 %v4599
      %v4601 = vpop.xlane.xlu0 %4600
      %v4602 = vmax.f32 %v4480, %v4481
      %v4603 = vmax.f32 %v4602, %v4482
      %4604 = vmax.xlane.f32.xlu0 %v4603
      %v4605 = vpop.xlane.xlu0 %4604
      %v4606 = vmax.f32 %v4483, %v4484
      %v4607 = vmax.f32 %v4606, %v4485
      %4608 = vmax.xlane.f32.xlu0 %v4607
      %v4609 = vpop.xlane.xlu0 %4608
      %v4610 = vmax.f32 %v4486, %v4487
      %v4611 = vmax.f32 %v4610, %v4488
      %4612 = vmax.xlane.f32.xlu0 %v4611
      %v4613 = vpop.xlane.xlu0 %4612
      %v4614 = vmax.f32 %v4489, %v4490
      %v4615 = vmax.f32 %v4614, %v4491
      %4616 = vmax.xlane.f32.xlu0 %v4615
      %v4617 = vpop.xlane.xlu0 %4616
      %v4618 = vmax.f32 %v4492, %v4493
      %v4619 = vmax.f32 %v4618, %v4494
      %4620 = vmax.xlane.f32.xlu0 %v4619
      %v4621 = vpop.xlane.xlu0 %4620
      %v4622 = vmax.f32 %v4495, %v4496
      %v4623 = vmax.f32 %v4622, %v4497
      %4624 = vmax.xlane.f32.xlu0 %v4623
      %v4625 = vpop.xlane.xlu0 %4624
      %v4626 = vsub.f32 %v4402, %v4501
      %v4627 = vsub.f32 %v4403, %v4501
      %v4628 = vsub.f32 %v4404, %v4501
      %v4629 = vsub.f32 %v4405, %v4505
      %v4630 = vsub.f32 %v4406, %v4505
      %v4631 = vsub.f32 %v4407, %v4505
      %v4632 = vsub.f32 %v4408, %v4509
      %v4633 = vsub.f32 %v4409, %v4509
      %v4634 = vsub.f32 %v4410, %v4509
      %v4635 = vsub.f32 %v4411, %v4513
      %v4636 = vsub.f32 %v4412, %v4513
      %v4637 = vsub.f32 %v4413, %v4513
      %v4638 = vsub.f32 %v4414, %v4517
      %v4639 = vsub.f32 %v4415, %v4517
      %v4640 = vsub.f32 %v4416, %v4517
      %v4641 = vsub.f32 %v4417, %v4521
      %v4642 = vsub.f32 %v4418, %v4521
      %v4643 = vsub.f32 %v4419, %v4521
      %v4644 = vsub.f32 %v4420, %v4525
      %v4645 = vsub.f32 %v4421, %v4525
      %v4646 = vsub.f32 %v4422, %v4525
      %v4647 = vsub.f32 %v4423, %v4529
      %v4648 = vsub.f32 %v4424, %v4529
      %v4649 = vsub.f32 %v4425, %v4529
      %v4650 = vsub.f32 %v4426, %v4533
      %v4651 = vsub.f32 %v4427, %v4533
      %v4652 = vsub.f32 %v4428, %v4533
      %v4653 = vsub.f32 %v4429, %v4537
      %v4654 = vsub.f32 %v4430, %v4537
      %v4655 = vsub.f32 %v4431, %v4537
      %v4656 = vsub.f32 %v4432, %v4541
      %v4657 = vsub.f32 %v4433, %v4541
      %v4658 = vsub.f32 %v4434, %v4541
      %v4659 = vsub.f32 %v4435, %v4545
      %v4660 = vsub.f32 %v4436, %v4545
      %v4661 = vsub.f32 %v4437, %v4545
      %v4662 = vsub.f32 %v4438, %v4549
      %v4663 = vsub.f32 %v4439, %v4549
      %v4664 = vsub.f32 %v4440, %v4549
      %v4665 = vsub.f32 %v4441, %v4553
      %v4666 = vsub.f32 %v4442, %v4553
      %v4667 = vsub.f32 %v4443, %v4553
      %v4668 = vsub.f32 %v4444, %v4557
      %v4669 = vsub.f32 %v4445, %v4557
      %v4670 = vsub.f32 %v4446, %v4557
      %v4671 = vsub.f32 %v4447, %v4561
      %v4672 = vsub.f32 %v4448, %v4561
      %v4673 = vsub.f32 %v4449, %v4561
      %v4674 = vsub.f32 %v4450, %v4565
      %v4675 = vsub.f32 %v4451, %v4565
      %v4676 = vsub.f32 %v4452, %v4565
      %v4677 = vsub.f32 %v4453, %v4569
      %v4678 = vsub.f32 %v4454, %v4569
      %v4679 = vsub.f32 %v4455, %v4569
      %v4680 = vsub.f32 %v4456, %v4573
      %v4681 = vsub.f32 %v4457, %v4573
      %v4682 = vsub.f32 %v4458, %v4573
      %v4683 = vsub.f32 %v4459, %v4577
      %v4684 = vsub.f32 %v4460, %v4577
      %v4685 = vsub.f32 %v4461, %v4577
      %v4686 = vsub.f32 %v4462, %v4581
      %v4687 = vsub.f32 %v4463, %v4581
      %v4688 = vsub.f32 %v4464, %v4581
      %v4689 = vsub.f32 %v4465, %v4585
      %v4690 = vsub.f32 %v4466, %v4585
      %v4691 = vsub.f32 %v4467, %v4585
      %v4692 = vsub.f32 %v4468, %v4589
      %v4693 = vsub.f32 %v4469, %v4589
      %v4694 = vsub.f32 %v4470, %v4589
      %v4695 = vsub.f32 %v4471, %v4593
      %v4696 = vsub.f32 %v4472, %v4593
      %v4697 = vsub.f32 %v4473, %v4593
      %v4698 = vsub.f32 %v4474, %v4597
      %v4699 = vsub.f32 %v4475, %v4597
      %v4700 = vsub.f32 %v4476, %v4597
      %v4701 = vsub.f32 %v4477, %v4601
      %v4702 = vsub.f32 %v4478, %v4601
      %v4703 = vsub.f32 %v4479, %v4601
      %v4704 = vsub.f32 %v4480, %v4605
      %v4705 = vsub.f32 %v4481, %v4605
      %v4706 = vsub.f32 %v4482, %v4605
      %v4707 = vsub.f32 %v4483, %v4609
      %v4708 = vsub.f32 %v4484, %v4609
      %v4709 = vsub.f32 %v4485, %v4609
      %v4710 = vsub.f32 %v4486, %v4613
      %v4711 = vsub.f32 %v4487, %v4613
      %v4712 = vsub.f32 %v4488, %v4613
      %v4713 = vsub.f32 %v4489, %v4617
      %v4714 = vsub.f32 %v4490, %v4617
      %v4715 = vsub.f32 %v4491, %v4617
      %v4716 = vsub.f32 %v4492, %v4621
      %v4717 = vsub.f32 %v4493, %v4621
      %v4718 = vsub.f32 %v4494, %v4621
      %v4719 = vsub.f32 %v4495, %v4625
      %v4720 = vsub.f32 %v4496, %v4625
      %v4721 = vsub.f32 %v4497, %v4625
      %v4722 = vmul.f32 %v4626, 1.442695
      %v4723 = vpow.pop %v4722
      %v4724 = vmul.f32 %v4627, 1.442695
      %v4725 = vpow.pop %v4724
      %v4726 = vmul.f32 %v4628, 1.442695
      %v4727 = vpow.pop %v4726
      %v4728 = vmul.f32 %v4629, 1.442695
      %v4729 = vpow.pop %v4728
      %v4730 = vmul.f32 %v4630, 1.442695
      %v4731 = vpow.pop %v4730
      %v4732 = vmul.f32 %v4631, 1.442695
      %v4733 = vpow.pop %v4732
      %v4734 = vmul.f32 %v4632, 1.442695
      %v4735 = vpow.pop %v4734
      %v4736 = vmul.f32 %v4633, 1.442695
      %v4737 = vpow.pop %v4736
      %v4738 = vmul.f32 %v4634, 1.442695
      %v4739 = vpow.pop %v4738
      %v4740 = vmul.f32 %v4635, 1.442695
      %v4741 = vpow.pop %v4740
      %v4742 = vmul.f32 %v4636, 1.442695
      %v4743 = vpow.pop %v4742
      %v4744 = vmul.f32 %v4637, 1.442695
      %v4745 = vpow.pop %v4744
      %v4746 = vmul.f32 %v4638, 1.442695
      %v4747 = vpow.pop %v4746
      %v4748 = vmul.f32 %v4639, 1.442695
      %v4749 = vpow.pop %v4748
      %v4750 = vmul.f32 %v4640, 1.442695
      %v4751 = vpow.pop %v4750
      %v4752 = vmul.f32 %v4641, 1.442695
      %v4753 = vpow.pop %v4752
      %v4754 = vmul.f32 %v4642, 1.442695
      %v4755 = vpow.pop %v4754
      %v4756 = vmul.f32 %v4643, 1.442695
      %v4757 = vpow.pop %v4756
      %v4758 = vmul.f32 %v4644, 1.442695
      %v4759 = vpow.pop %v4758
      %v4760 = vmul.f32 %v4645, 1.442695
      %v4761 = vpow.pop %v4760
      %v4762 = vmul.f32 %v4646, 1.442695
      %v4763 = vpow.pop %v4762
      %v4764 = vmul.f32 %v4647, 1.442695
      %v4765 = vpow.pop %v4764
      %v4766 = vmul.f32 %v4648, 1.442695
      %v4767 = vpow.pop %v4766
      %v4768 = vmul.f32 %v4649, 1.442695
      %v4769 = vpow.pop %v4768
      %v4770 = vmul.f32 %v4650, 1.442695
      %v4771 = vpow.pop %v4770
      %v4772 = vmul.f32 %v4651, 1.442695
      %v4773 = vpow.pop %v4772
      %v4774 = vmul.f32 %v4652, 1.442695
      %v4775 = vpow.pop %v4774
      %v4776 = vmul.f32 %v4653, 1.442695
      %v4777 = vpow.pop %v4776
      %v4778 = vmul.f32 %v4654, 1.442695
      %v4779 = vpow.pop %v4778
      %v4780 = vmul.f32 %v4655, 1.442695
      %v4781 = vpow.pop %v4780
      %v4782 = vmul.f32 %v4656, 1.442695
      %v4783 = vpow.pop %v4782
      %v4784 = vmul.f32 %v4657, 1.442695
      %v4785 = vpow.pop %v4784
      %v4786 = vmul.f32 %v4658, 1.442695
      %v4787 = vpow.pop %v4786
      %v4788 = vmul.f32 %v4659, 1.442695
      %v4789 = vpow.pop %v4788
      %v4790 = vmul.f32 %v4660, 1.442695
      %v4791 = vpow.pop %v4790
      %v4792 = vmul.f32 %v4661, 1.442695
      %v4793 = vpow.pop %v4792
      %v4794 = vmul.f32 %v4662, 1.442695
      %v4795 = vpow.pop %v4794
      %v4796 = vmul.f32 %v4663, 1.442695
      %v4797 = vpow.pop %v4796
      %v4798 = vmul.f32 %v4664, 1.442695
      %v4799 = vpow.pop %v4798
      %v4800 = vmul.f32 %v4665, 1.442695
      %v4801 = vpow.pop %v4800
      %v4802 = vmul.f32 %v4666, 1.442695
      %v4803 = vpow.pop %v4802
      %v4804 = vmul.f32 %v4667, 1.442695
      %v4805 = vpow.pop %v4804
      %v4806 = vmul.f32 %v4668, 1.442695
      %v4807 = vpow.pop %v4806
      %v4808 = vmul.f32 %v4669, 1.442695
      %v4809 = vpow.pop %v4808
      %v4810 = vmul.f32 %v4670, 1.442695
      %v4811 = vpow.pop %v4810
      %v4812 = vmul.f32 %v4671, 1.442695
      %v4813 = vpow.pop %v4812
      %v4814 = vmul.f32 %v4672, 1.442695
      %v4815 = vpow.pop %v4814
      %v4816 = vmul.f32 %v4673, 1.442695
      %v4817 = vpow.pop %v4816
      %v4818 = vmul.f32 %v4674, 1.442695
      %v4819 = vpow.pop %v4818
      %v4820 = vmul.f32 %v4675, 1.442695
      %v4821 = vpow.pop %v4820
      %v4822 = vmul.f32 %v4676, 1.442695
      %v4823 = vpow.pop %v4822
      %v4824 = vmul.f32 %v4677, 1.442695
      %v4825 = vpow.pop %v4824
      %v4826 = vmul.f32 %v4678, 1.442695
      %v4827 = vpow.pop %v4826
      %v4828 = vmul.f32 %v4679, 1.442695
      %v4829 = vpow.pop %v4828
      %v4830 = vmul.f32 %v4680, 1.442695
      %v4831 = vpow.pop %v4830
      %v4832 = vmul.f32 %v4681, 1.442695
      %v4833 = vpow.pop %v4832
      %v4834 = vmul.f32 %v4682, 1.442695
      %v4835 = vpow.pop %v4834
      %v4836 = vmul.f32 %v4683, 1.442695
      %v4837 = vpow.pop %v4836
      %v4838 = vmul.f32 %v4684, 1.442695
      %v4839 = vpow.pop %v4838
      %v4840 = vmul.f32 %v4685, 1.442695
      %v4841 = vpow.pop %v4840
      %v4842 = vmul.f32 %v4686, 1.442695
      %v4843 = vpow.pop %v4842
      %v4844 = vmul.f32 %v4687, 1.442695
      %v4845 = vpow.pop %v4844
      %v4846 = vmul.f32 %v4688, 1.442695
      %v4847 = vpow.pop %v4846
      %v4848 = vmul.f32 %v4689, 1.442695
      %v4849 = vpow.pop %v4848
      %v4850 = vmul.f32 %v4690, 1.442695
      %v4851 = vpow.pop %v4850
      %v4852 = vmul.f32 %v4691, 1.442695
      %v4853 = vpow.pop %v4852
      %v4854 = vmul.f32 %v4692, 1.442695
      %v4855 = vpow.pop %v4854
      %v4856 = vmul.f32 %v4693, 1.442695
      %v4857 = vpow.pop %v4856
      %v4858 = vmul.f32 %v4694, 1.442695
      %v4859 = vpow.pop %v4858
      %v4860 = vmul.f32 %v4695, 1.442695
      %v4861 = vpow.pop %v4860
      %v4862 = vmul.f32 %v4696, 1.442695
      %v4863 = vpow.pop %v4862
      %v4864 = vmul.f32 %v4697, 1.442695
      %v4865 = vpow.pop %v4864
      %v4866 = vmul.f32 %v4698, 1.442695
      %v4867 = vpow.pop %v4866
      %v4868 = vmul.f32 %v4699, 1.442695
      %v4869 = vpow.pop %v4868
      %v4870 = vmul.f32 %v4700, 1.442695
      %v4871 = vpow.pop %v4870
      %v4872 = vmul.f32 %v4701, 1.442695
      %v4873 = vpow.pop %v4872
      %v4874 = vmul.f32 %v4702, 1.442695
      %v4875 = vpow.pop %v4874
      %v4876 = vmul.f32 %v4703, 1.442695
      %v4877 = vpow.pop %v4876
      %v4878 = vmul.f32 %v4704, 1.442695
      %v4879 = vpow.pop %v4878
      %v4880 = vmul.f32 %v4705, 1.442695
      %v4881 = vpow.pop %v4880
      %v4882 = vmul.f32 %v4706, 1.442695
      %v4883 = vpow.pop %v4882
      %v4884 = vmul.f32 %v4707, 1.442695
      %v4885 = vpow.pop %v4884
      %v4886 = vmul.f32 %v4708, 1.442695
      %v4887 = vpow.pop %v4886
      %v4888 = vmul.f32 %v4709, 1.442695
      %v4889 = vpow.pop %v4888
      %v4890 = vmul.f32 %v4710, 1.442695
      %v4891 = vpow.pop %v4890
      %v4892 = vmul.f32 %v4711, 1.442695
      %v4893 = vpow.pop %v4892
      %v4894 = vmul.f32 %v4712, 1.442695
      %v4895 = vpow.pop %v4894
      %v4896 = vmul.f32 %v4713, 1.442695
      %v4897 = vpow.pop %v4896
      %v4898 = vmul.f32 %v4714, 1.442695
      %v4899 = vpow.pop %v4898
      %v4900 = vmul.f32 %v4715, 1.442695
      %v4901 = vpow.pop %v4900
      %v4902 = vmul.f32 %v4716, 1.442695
      %v4903 = vpow.pop %v4902
      %v4904 = vmul.f32 %v4717, 1.442695
      %v4905 = vpow.pop %v4904
      %v4906 = vmul.f32 %v4718, 1.442695
      %v4907 = vpow.pop %v4906
      %v4908 = vmul.f32 %v4719, 1.442695
      %v4909 = vpow.pop %v4908
      %v4910 = vmul.f32 %v4720, 1.442695
      %v4911 = vpow.pop %v4910
      %v4912 = vmul.f32 %v4721, 1.442695
      %v4913 = vpow.pop %v4912
      %v4914 = vadd.f32 %v4723, %v4725
      %v4915 = vadd.f32 %v4914, %v4727
      %4916 = vadd.xlane.f32.xlu0 %v4915
      %v4917 = vpop.xlane.xlu0 %4916
      %v4918 = vadd.f32 %v4729, %v4731
      %v4919 = vadd.f32 %v4918, %v4733
      %4920 = vadd.xlane.f32.xlu0 %v4919
      %v4921 = vpop.xlane.xlu0 %4920
      %v4922 = vadd.f32 %v4735, %v4737
      %v4923 = vadd.f32 %v4922, %v4739
      %4924 = vadd.xlane.f32.xlu0 %v4923
      %v4925 = vpop.xlane.xlu0 %4924
      %v4926 = vadd.f32 %v4741, %v4743
      %v4927 = vadd.f32 %v4926, %v4745
      %4928 = vadd.xlane.f32.xlu0 %v4927
      %v4929 = vpop.xlane.xlu0 %4928
      %v4930 = vadd.f32 %v4747, %v4749
      %v4931 = vadd.f32 %v4930, %v4751
      %4932 = vadd.xlane.f32.xlu0 %v4931
      %v4933 = vpop.xlane.xlu0 %4932
      %v4934 = vadd.f32 %v4753, %v4755
      %v4935 = vadd.f32 %v4934, %v4757
      %4936 = vadd.xlane.f32.xlu0 %v4935
      %v4937 = vpop.xlane.xlu0 %4936
      %v4938 = vadd.f32 %v4759, %v4761
      %v4939 = vadd.f32 %v4938, %v4763
      %4940 = vadd.xlane.f32.xlu0 %v4939
      %v4941 = vpop.xlane.xlu0 %4940
      %v4942 = vadd.f32 %v4765, %v4767
      %v4943 = vadd.f32 %v4942, %v4769
      %4944 = vadd.xlane.f32.xlu0 %v4943
      %v4945 = vpop.xlane.xlu0 %4944
      %v4946 = vadd.f32 %v4771, %v4773
      %v4947 = vadd.f32 %v4946, %v4775
      %4948 = vadd.xlane.f32.xlu0 %v4947
      %v4949 = vpop.xlane.xlu0 %4948
      %v4950 = vadd.f32 %v4777, %v4779
      %v4951 = vadd.f32 %v4950, %v4781
      %4952 = vadd.xlane.f32.xlu0 %v4951
      %v4953 = vpop.xlane.xlu0 %4952
      %v4954 = vadd.f32 %v4783, %v4785
      %v4955 = vadd.f32 %v4954, %v4787
      %4956 = vadd.xlane.f32.xlu0 %v4955
      %v4957 = vpop.xlane.xlu0 %4956
      %v4958 = vadd.f32 %v4789, %v4791
      %v4959 = vadd.f32 %v4958, %v4793
      %4960 = vadd.xlane.f32.xlu0 %v4959
      %v4961 = vpop.xlane.xlu0 %4960
      %v4962 = vadd.f32 %v4795, %v4797
      %v4963 = vadd.f32 %v4962, %v4799
      %4964 = vadd.xlane.f32.xlu0 %v4963
      %v4965 = vpop.xlane.xlu0 %4964
      %v4966 = vadd.f32 %v4801, %v4803
      %v4967 = vadd.f32 %v4966, %v4805
      %4968 = vadd.xlane.f32.xlu0 %v4967
      %v4969 = vpop.xlane.xlu0 %4968
      %v4970 = vadd.f32 %v4807, %v4809
      %v4971 = vadd.f32 %v4970, %v4811
      %4972 = vadd.xlane.f32.xlu0 %v4971
      %v4973 = vpop.xlane.xlu0 %4972
      %v4974 = vadd.f32 %v4813, %v4815
      %v4975 = vadd.f32 %v4974, %v4817
      %4976 = vadd.xlane.f32.xlu0 %v4975
      %v4977 = vpop.xlane.xlu0 %4976
      %v4978 = vadd.f32 %v4819, %v4821
      %v4979 = vadd.f32 %v4978, %v4823
      %4980 = vadd.xlane.f32.xlu0 %v4979
      %v4981 = vpop.xlane.xlu0 %4980
      %v4982 = vadd.f32 %v4825, %v4827
      %v4983 = vadd.f32 %v4982, %v4829
      %4984 = vadd.xlane.f32.xlu0 %v4983
      %v4985 = vpop.xlane.xlu0 %4984
      %v4986 = vadd.f32 %v4831, %v4833
      %v4987 = vadd.f32 %v4986, %v4835
      %4988 = vadd.xlane.f32.xlu0 %v4987
      %v4989 = vpop.xlane.xlu0 %4988
      %v4990 = vadd.f32 %v4837, %v4839
      %v4991 = vadd.f32 %v4990, %v4841
      %4992 = vadd.xlane.f32.xlu0 %v4991
      %v4993 = vpop.xlane.xlu0 %4992
      %v4994 = vadd.f32 %v4843, %v4845
      %v4995 = vadd.f32 %v4994, %v4847
      %4996 = vadd.xlane.f32.xlu0 %v4995
      %v4997 = vpop.xlane.xlu0 %4996
      %v4998 = vadd.f32 %v4849, %v4851
      %v4999 = vadd.f32 %v4998, %v4853
      %5000 = vadd.xlane.f32.xlu0 %v4999
      %v5001 = vpop.xlane.xlu0 %5000
      %v5002 = vadd.f32 %v4855, %v4857
      %v5003 = vadd.f32 %v5002, %v4859
      %5004 = vadd.xlane.f32.xlu0 %v5003
      %v5005 = vpop.xlane.xlu0 %5004
      %v5006 = vadd.f32 %v4861, %v4863
      %v5007 = vadd.f32 %v5006, %v4865
      %5008 = vadd.xlane.f32.xlu0 %v5007
      %v5009 = vpop.xlane.xlu0 %5008
      %v5010 = vadd.f32 %v4867, %v4869
      %v5011 = vadd.f32 %v5010, %v4871
      %5012 = vadd.xlane.f32.xlu0 %v5011
      %v5013 = vpop.xlane.xlu0 %5012
      %v5014 = vadd.f32 %v4873, %v4875
      %v5015 = vadd.f32 %v5014, %v4877
      %5016 = vadd.xlane.f32.xlu0 %v5015
      %v5017 = vpop.xlane.xlu0 %5016
      %v5018 = vadd.f32 %v4879, %v4881
      %v5019 = vadd.f32 %v5018, %v4883
      %5020 = vadd.xlane.f32.xlu0 %v5019
      %v5021 = vpop.xlane.xlu0 %5020
      %v5022 = vadd.f32 %v4885, %v4887
      %v5023 = vadd.f32 %v5022, %v4889
      %5024 = vadd.xlane.f32.xlu0 %v5023
      %v5025 = vpop.xlane.xlu0 %5024
      %v5026 = vadd.f32 %v4891, %v4893
      %v5027 = vadd.f32 %v5026, %v4895
      %5028 = vadd.xlane.f32.xlu0 %v5027
      %v5029 = vpop.xlane.xlu0 %5028
      %v5030 = vadd.f32 %v4897, %v4899
      %v5031 = vadd.f32 %v5030, %v4901
      %5032 = vadd.xlane.f32.xlu0 %v5031
      %v5033 = vpop.xlane.xlu0 %5032
      %v5034 = vadd.f32 %v4903, %v4905
      %v5035 = vadd.f32 %v5034, %v4907
      %5036 = vadd.xlane.f32.xlu0 %v5035
      %v5037 = vpop.xlane.xlu0 %5036
      %v5038 = vadd.f32 %v4909, %v4911
      %v5039 = vadd.f32 %v5038, %v4913
      %5040 = vadd.xlane.f32.xlu0 %v5039
      %v5041 = vpop.xlane.xlu0 %5040
      %v5042 = vpack.c.bf16 %v4729, %v4723
      %v5043 = vpack.c.bf16 %v4731, %v4725
      %v5044 = vpack.c.bf16 %v4733, %v4727
      %v5045 = vpack.c.bf16 %v4741, %v4735
      %v5046 = vpack.c.bf16 %v4743, %v4737
      %v5047 = vpack.c.bf16 %v4745, %v4739
      %v5048 = vpack.c.bf16 %v4753, %v4747
      %v5049 = vpack.c.bf16 %v4755, %v4749
      %v5050 = vpack.c.bf16 %v4757, %v4751
      %v5051 = vpack.c.bf16 %v4765, %v4759
      %v5052 = vpack.c.bf16 %v4767, %v4761
      %v5053 = vpack.c.bf16 %v4769, %v4763
      %v5054 = vpack.c.bf16 %v4777, %v4771
      %v5055 = vpack.c.bf16 %v4779, %v4773
      %v5056 = vpack.c.bf16 %v4781, %v4775
      %v5057 = vpack.c.bf16 %v4789, %v4783
      %v5058 = vpack.c.bf16 %v4791, %v4785
      %v5059 = vpack.c.bf16 %v4793, %v4787
      %v5060 = vpack.c.bf16 %v4801, %v4795
      %v5061 = vpack.c.bf16 %v4803, %v4797
      %v5062 = vpack.c.bf16 %v4805, %v4799
      %v5063 = vpack.c.bf16 %v4813, %v4807
      %v5064 = vpack.c.bf16 %v4815, %v4809
      %v5065 = vpack.c.bf16 %v4817, %v4811
      %v5066 = vpack.c.bf16 %v4825, %v4819
      %v5067 = vpack.c.bf16 %v4827, %v4821
      %v5068 = vpack.c.bf16 %v4829, %v4823
      %v5069 = vpack.c.bf16 %v4837, %v4831
      %v5070 = vpack.c.bf16 %v4839, %v4833
      %v5071 = vpack.c.bf16 %v4841, %v4835
      %v5072 = vpack.c.bf16 %v4849, %v4843
      %v5073 = vpack.c.bf16 %v4851, %v4845
      %v5074 = vpack.c.bf16 %v4853, %v4847
      %v5075 = vpack.c.bf16 %v4861, %v4855
      %v5076 = vpack.c.bf16 %v4863, %v4857
      %v5077 = vpack.c.bf16 %v4865, %v4859
      %v5078 = vpack.c.bf16 %v4873, %v4867
      %v5079 = vpack.c.bf16 %v4875, %v4869
      %v5080 = vpack.c.bf16 %v4877, %v4871
      %v5081 = vpack.c.bf16 %v4885, %v4879
      %v5082 = vpack.c.bf16 %v4887, %v4881
      %v5083 = vpack.c.bf16 %v4889, %v4883
      %v5084 = vpack.c.bf16 %v4897, %v4891
      %v5085 = vpack.c.bf16 %v4899, %v4893
      %v5086 = vpack.c.bf16 %v4901, %v4895
      %v5087 = vpack.c.bf16 %v4909, %v4903
      %v5088 = vpack.c.bf16 %v4911, %v4905
      %v5089 = vpack.c.bf16 %v4913, %v4907
      %s5090 = scalar_lea.vmem %s239, 384
      %v5091 = vld [vmem:[%s5090] sm:$0xf]
      %v5092 = vld [vmem:[%s5090 + $0x4] sm:$0xf]
      %v5093 = vld [vmem:[%s5090 + $0x8] sm:$0xf]
      %v5094 = vld [vmem:[%s5090 + $0xc] sm:$0xf]
      %v5095 = vld [vmem:[%s5090 + $0x10] sm:$0xf]
      %v5096 = vld [vmem:[%s5090 + $0x14] sm:$0xf]
      %v5097 = vld [vmem:[%s5090 + $0x18] sm:$0xf]
      %v5098 = vld [vmem:[%s5090 + $0x1c] sm:$0xf]
      %v5099 = vld [vmem:[%s5090 + $0x20] sm:$0xf]
      %v5100 = vld [vmem:[%s5090 + $0x24] sm:$0xf]
      %v5101 = vld [vmem:[%s5090 + $0x28] sm:$0xf]
      %v5102 = vld [vmem:[%s5090 + $0x2c] sm:$0xf]
      %v5103 = vld [vmem:[%s5090 + $0x30] sm:$0xf]
      %v5104 = vld [vmem:[%s5090 + $0x34] sm:$0xf]
      %v5105 = vld [vmem:[%s5090 + $0x38] sm:$0xf]
      %v5106 = vld [vmem:[%s5090 + $0x3c] sm:$0xf]
      %v5107 = vld [vmem:[%s5090 + $0x40] sm:$0xf]
      %v5108 = vld [vmem:[%s5090 + $0x44] sm:$0xf]
      %v5109 = vld [vmem:[%s5090 + $0x48] sm:$0xf]
      %v5110 = vld [vmem:[%s5090 + $0x4c] sm:$0xf]
      %v5111 = vld [vmem:[%s5090 + $0x50] sm:$0xf]
      %v5112 = vld [vmem:[%s5090 + $0x54] sm:$0xf]
      %v5113 = vld [vmem:[%s5090 + $0x58] sm:$0xf]
      %v5114 = vld [vmem:[%s5090 + $0x5c] sm:$0xf]
      %v5115 = vld [vmem:[%s5090 + $0x60] sm:$0xf]
      %v5116 = vld [vmem:[%s5090 + $0x64] sm:$0xf]
      %v5117 = vld [vmem:[%s5090 + $0x68] sm:$0xf]
      %v5118 = vld [vmem:[%s5090 + $0x6c] sm:$0xf]
      %v5119 = vld [vmem:[%s5090 + $0x70] sm:$0xf]
      %v5120 = vld [vmem:[%s5090 + $0x74] sm:$0xf]
      %v5121 = vld [vmem:[%s5090 + $0x78] sm:$0xf]
      %v5122 = vld [vmem:[%s5090 + $0x7c] sm:$0xf]
      %v5123 = vld [vmem:[%s5090 + $0x80] sm:$0xf]
      %v5124 = vld [vmem:[%s5090 + $0x84] sm:$0xf]
      %v5125 = vld [vmem:[%s5090 + $0x88] sm:$0xf]
      %v5126 = vld [vmem:[%s5090 + $0x8c] sm:$0xf]
      %v5127 = vld [vmem:[%s5090 + $0x90] sm:$0xf]
      %v5128 = vld [vmem:[%s5090 + $0x94] sm:$0xf]
      %v5129 = vld [vmem:[%s5090 + $0x98] sm:$0xf]
      %v5130 = vld [vmem:[%s5090 + $0x9c] sm:$0xf]
      %v5131 = vld [vmem:[%s5090 + $0xa0] sm:$0xf]
      %v5132 = vld [vmem:[%s5090 + $0xa4] sm:$0xf]
      %v5133 = vld [vmem:[%s5090 + $0xa8] sm:$0xf]
      %v5134 = vld [vmem:[%s5090 + $0xac] sm:$0xf]
      %v5135 = vld [vmem:[%s5090 + $0xb0] sm:$0xf]
      %v5136 = vld [vmem:[%s5090 + $0xb4] sm:$0xf]
      %v5137 = vld [vmem:[%s5090 + $0xb8] sm:$0xf]
      %v5138 = vld [vmem:[%s5090 + $0xbc] sm:$0xf]
      %v5187 = vunpack.c.l.b16 %v5091
      %v5188 = vunpack.c.l.b16 %v5092
      %v5189 = vunpack.c.l.b16 %v5093
      %v5190 = vunpack.c.l.b16 %v5094
      %v5191 = vunpack.c.l.b16 %v5095
      %v5192 = vunpack.c.l.b16 %v5096
      %v5193 = vunpack.c.l.b16 %v5097
      %v5194 = vunpack.c.l.b16 %v5098
      %v5195 = vunpack.c.l.b16 %v5099
      %v5196 = vunpack.c.l.b16 %v5100
      %v5197 = vunpack.c.l.b16 %v5101
      %v5198 = vunpack.c.l.b16 %v5102
      %v5199 = vunpack.c.l.b16 %v5103
      %v5200 = vunpack.c.l.b16 %v5104
      %v5201 = vunpack.c.l.b16 %v5105
      %v5202 = vunpack.c.l.b16 %v5106
      %v5203 = vunpack.c.l.b16 %v5107
      %v5204 = vunpack.c.l.b16 %v5108
      %v5205 = vunpack.c.l.b16 %v5109
      %v5206 = vunpack.c.l.b16 %v5110
      %v5207 = vunpack.c.l.b16 %v5111
      %v5208 = vunpack.c.l.b16 %v5112
      %v5209 = vunpack.c.l.b16 %v5113
      %v5210 = vunpack.c.l.b16 %v5114
      %v5211 = vunpack.c.l.b16 %v5115
      %v5212 = vunpack.c.l.b16 %v5116
      %v5213 = vunpack.c.l.b16 %v5117
      %v5214 = vunpack.c.l.b16 %v5118
      %v5215 = vunpack.c.l.b16 %v5119
      %v5216 = vunpack.c.l.b16 %v5120
      %v5217 = vunpack.c.l.b16 %v5121
      %v5218 = vunpack.c.l.b16 %v5122
      %v5219 = vunpack.c.l.b16 %v5123
      %v5220 = vunpack.c.l.b16 %v5124
      %v5221 = vunpack.c.l.b16 %v5125
      %v5222 = vunpack.c.l.b16 %v5126
      %v5223 = vunpack.c.l.b16 %v5127
      %v5224 = vunpack.c.l.b16 %v5128
      %v5225 = vunpack.c.l.b16 %v5129
      %v5226 = vunpack.c.l.b16 %v5130
      %v5227 = vunpack.c.l.b16 %v5131
      %v5228 = vunpack.c.l.b16 %v5132
      %v5229 = vunpack.c.l.b16 %v5133
      %v5230 = vunpack.c.l.b16 %v5134
      %v5231 = vunpack.c.l.b16 %v5135
      %v5232 = vunpack.c.l.b16 %v5136
      %v5233 = vunpack.c.l.b16 %v5137
      %v5234 = vunpack.c.l.b16 %v5138
      %v5235 = vpack.c.b16 %v5188, %v5187
      %v5236 = vpack.c.b16 %v5190, %v5189
      %v5237 = vpack.c.b16 %v5192, %v5191
      %v5238 = vpack.c.b16 %v5194, %v5193
      %v5239 = vpack.c.b16 %v5196, %v5195
      %v5240 = vpack.c.b16 %v5198, %v5197
      %v5241 = vpack.c.b16 %v5200, %v5199
      %v5242 = vpack.c.b16 %v5202, %v5201
      %v5243 = vpack.c.b16 %v5204, %v5203
      %v5244 = vpack.c.b16 %v5206, %v5205
      %v5245 = vpack.c.b16 %v5208, %v5207
      %v5246 = vpack.c.b16 %v5210, %v5209
      %v5247 = vpack.c.b16 %v5212, %v5211
      %v5248 = vpack.c.b16 %v5214, %v5213
      %v5249 = vpack.c.b16 %v5216, %v5215
      %v5250 = vpack.c.b16 %v5218, %v5217
      %v5251 = vpack.c.b16 %v5220, %v5219
      %v5252 = vpack.c.b16 %v5222, %v5221
      %v5253 = vpack.c.b16 %v5224, %v5223
      %v5254 = vpack.c.b16 %v5226, %v5225
      %v5255 = vpack.c.b16 %v5228, %v5227
      %v5256 = vpack.c.b16 %v5230, %v5229
      %v5257 = vpack.c.b16 %v5232, %v5231
      %v5258 = vpack.c.b16 %v5234, %v5233
      %5283 = vmatprep.subr.bf16.mxu0 0
      %5284 = vmatpush1.bf16.msra.mxu0 %v5235
      %5285 = vmatprep.subr.bf16.mxu0 0
      %5286 = vmatpush1.bf16.msra.mxu0 %v5236
      %5287 = vmatprep.subr.bf16.mxu0 0
      %5288 = vmatpush1.bf16.msra.mxu0 %v5237
      %5289 = vmatprep.subr.bf16.mxu0 0
      %5290 = vmatpush1.bf16.msra.mxu0 %v5238
      %5291 = vmatprep.subr.bf16.mxu0 0
      %5292 = vmatpush1.bf16.msra.mxu0 %v5239
      %5293 = vmatprep.subr.bf16.mxu0 0
      %5294 = vmatpush1.bf16.msra.mxu0 %v5240
      %5295 = vmatprep.subr.bf16.mxu0 0
      %5296 = vmatpush1.bf16.msra.mxu0 %v5241
      %5297 = vmatprep.subr.bf16.mxu0 0
      %5298 = vmatpush1.bf16.msra.mxu0 %v5242
      %5299 = vmatprep.subr.bf16.mxu0 0
      %5300 = vmatpush1.bf16.msra.mxu0 %v5243
      %5301 = vmatprep.subr.bf16.mxu0 0
      %5302 = vmatpush1.bf16.msra.mxu0 %v5244
      %5303 = vmatprep.subr.bf16.mxu0 0
      %5304 = vmatpush1.bf16.msra.mxu0 %v5245
      %5305 = vmatprep.subr.bf16.mxu0 0
      %5306 = vmatpush1.bf16.msra.mxu0 %v5246
      %5307 = vmatprep.subr.bf16.mxu0 0
      %5308 = vmatpush1.bf16.msra.mxu0 %v5247
      %5309 = vmatprep.subr.bf16.mxu0 0
      %5310 = vmatpush1.bf16.msra.mxu0 %v5248
      %5311 = vmatprep.subr.bf16.mxu0 0
      %5312 = vmatpush1.bf16.msra.mxu0 %v5249
      %5313 = vmatprep.subr.bf16.mxu0 0
      %5314 = vmatpush1.bf16.msra.mxu0 %v5250
      %5315 = vmatprep.mubr.bf16.mxu0 %v5043
      %5316 = vmatmul.mubr.bf16.gmra.mrb[0].mxu0 %v5042
      %v5317 = vpop.f32.mrb[0].mxu0
      %v5318 = vadd.f32 0.0, %v5317
      %v5319 = vpop.f32.mrb[0].mxu0
      %v5320 = vpop.f32.mrb[0].mxu0
      %v5321 = vadd.f32 0.0, %v5320
      %v5322 = vpop.f32.mrb[0].mxu0
      %5323 = vmatprep.mubr.bf16.mxu0 %v5046
      %5324 = vmatmul.mubr.bf16.gmra.mrb[0].mxu0 %v5045
      %v5325 = vpop.f32.mrb[0].mxu0
      %v5326 = vadd.f32 0.0, %v5325
      %v5327 = vpop.f32.mrb[0].mxu0
      %v5328 = vpop.f32.mrb[0].mxu0
      %v5329 = vadd.f32 0.0, %v5328
      %v5330 = vpop.f32.mrb[0].mxu0
      %5331 = vmatprep.mubr.bf16.mxu0 %v5049
      %5332 = vmatmul.mubr.bf16.gmra.mrb[0].mxu0 %v5048
      %v5333 = vpop.f32.mrb[0].mxu0
      %v5334 = vadd.f32 0.0, %v5333
      %v5335 = vpop.f32.mrb[0].mxu0
      %v5336 = vpop.f32.mrb[0].mxu0
      %v5337 = vadd.f32 0.0, %v5336
      %v5338 = vpop.f32.mrb[0].mxu0
      %5339 = vmatprep.mubr.bf16.mxu0 %v5052
      %5340 = vmatmul.mubr.bf16.gmra.mrb[0].mxu0 %v5051
      %v5341 = vpop.f32.mrb[0].mxu0
      %v5342 = vadd.f32 0.0, %v5341
      %v5343 = vpop.f32.mrb[0].mxu0
      %v5344 = vpop.f32.mrb[0].mxu0
      %v5345 = vadd.f32 0.0, %v5344
      %v5346 = vpop.f32.mrb[0].mxu0
      %5347 = vmatprep.mubr.bf16.mxu0 %v5055
      %5348 = vmatmul.mubr.bf16.gmra.mrb[0].mxu0 %v5054
      %v5349 = vpop.f32.mrb[0].mxu0
      %v5350 = vadd.f32 0.0, %v5349
      %v5351 = vpop.f32.mrb[0].mxu0
      %v5352 = vpop.f32.mrb[0].mxu0
      %v5353 = vadd.f32 0.0, %v5352
      %v5354 = vpop.f32.mrb[0].mxu0
      %5355 = vmatprep.mubr.bf16.mxu0 %v5058
      %5356 = vmatmul.mubr.bf16.gmra.mrb[0].mxu0 %v5057
      %v5357 = vpop.f32.mrb[0].mxu0
      %v5358 = vadd.f32 0.0, %v5357
      %v5359 = vpop.f32.mrb[0].mxu0
      %v5360 = vpop.f32.mrb[0].mxu0
      %v5361 = vadd.f32 0.0, %v5360
      %v5362 = vpop.f32.mrb[0].mxu0
      %5363 = vmatprep.mubr.bf16.mxu0 %v5061
      %5364 = vmatmul.mubr.bf16.gmra.mrb[0].mxu0 %v5060
      %v5365 = vpop.f32.mrb[0].mxu0
      %v5366 = vadd.f32 0.0, %v5365
      %v5367 = vpop.f32.mrb[0].mxu0
      %v5368 = vpop.f32.mrb[0].mxu0
      %v5369 = vadd.f32 0.0, %v5368
      %v5370 = vpop.f32.mrb[0].mxu0
      %5371 = vmatprep.mubr.bf16.mxu0 %v5064
      %5372 = vmatmul.mubr.bf16.gmra.mrb[0].mxu0 %v5063
      %v5373 = vpop.f32.mrb[0].mxu0
      %v5374 = vadd.f32 0.0, %v5373
      %v5375 = vpop.f32.mrb[0].mxu0
      %v5376 = vpop.f32.mrb[0].mxu0
      %v5377 = vadd.f32 0.0, %v5376
      %v5378 = vpop.f32.mrb[0].mxu0
      %5379 = vmatprep.mubr.bf16.mxu0 %v5067
      %5380 = vmatmul.mubr.bf16.gmra.mrb[0].mxu0 %v5066
      %v5381 = vpop.f32.mrb[0].mxu0
      %v5382 = vadd.f32 0.0, %v5381
      %v5383 = vpop.f32.mrb[0].mxu0
      %v5384 = vpop.f32.mrb[0].mxu0
      %v5385 = vadd.f32 0.0, %v5384
      %v5386 = vpop.f32.mrb[0].mxu0
      %5387 = vmatprep.mubr.bf16.mxu0 %v5070
      %5388 = vmatmul.mubr.bf16.gmra.mrb[0].mxu0 %v5069
      %v5389 = vpop.f32.mrb[0].mxu0
      %v5390 = vadd.f32 0.0, %v5389
      %v5391 = vpop.f32.mrb[0].mxu0
      %v5392 = vpop.f32.mrb[0].mxu0
      %v5393 = vadd.f32 0.0, %v5392
      %v5394 = vpop.f32.mrb[0].mxu0
      %5395 = vmatprep.mubr.bf16.mxu0 %v5073
      %5396 = vmatmul.mubr.bf16.gmra.mrb[0].mxu0 %v5072
      %v5397 = vpop.f32.mrb[0].mxu0
      %v5398 = vadd.f32 0.0, %v5397
      %v5399 = vpop.f32.mrb[0].mxu0
      %v5400 = vpop.f32.mrb[0].mxu0
      %v5401 = vadd.f32 0.0, %v5400
      %v5402 = vpop.f32.mrb[0].mxu0
      %5403 = vmatprep.mubr.bf16.mxu0 %v5076
      %5404 = vmatmul.mubr.bf16.gmra.mrb[0].mxu0 %v5075
      %v5405 = vpop.f32.mrb[0].mxu0
      %v5406 = vadd.f32 0.0, %v5405
      %v5407 = vpop.f32.mrb[0].mxu0
      %v5408 = vpop.f32.mrb[0].mxu0
      %v5409 = vadd.f32 0.0, %v5408
      %v5410 = vpop.f32.mrb[0].mxu0
      %5411 = vmatprep.mubr.bf16.mxu0 %v5079
      %5412 = vmatmul.mubr.bf16.gmra.mrb[0].mxu0 %v5078
      %v5413 = vpop.f32.mrb[0].mxu0
      %v5414 = vadd.f32 0.0, %v5413
      %v5415 = vpop.f32.mrb[0].mxu0
      %v5416 = vpop.f32.mrb[0].mxu0
      %v5417 = vadd.f32 0.0, %v5416
      %v5418 = vpop.f32.mrb[0].mxu0
      %5419 = vmatprep.mubr.bf16.mxu0 %v5082
      %5420 = vmatmul.mubr.bf16.gmra.mrb[0].mxu0 %v5081
      %v5421 = vpop.f32.mrb[0].mxu0
      %v5422 = vadd.f32 0.0, %v5421
      %v5423 = vpop.f32.mrb[0].mxu0
      %v5424 = vpop.f32.mrb[0].mxu0
      %v5425 = vadd.f32 0.0, %v5424
      %v5426 = vpop.f32.mrb[0].mxu0
      %5427 = vmatprep.mubr.bf16.mxu0 %v5085
      %5428 = vmatmul.mubr.bf16.gmra.mrb[0].mxu0 %v5084
      %v5429 = vpop.f32.mrb[0].mxu0
      %v5430 = vadd.f32 0.0, %v5429
      %v5431 = vpop.f32.mrb[0].mxu0
      %v5432 = vpop.f32.mrb[0].mxu0
      %v5433 = vadd.f32 0.0, %v5432
      %v5434 = vpop.f32.mrb[0].mxu0
      %5435 = vmatprep.mubr.bf16.mxu0 %v5088
      %5436 = vmatmul.mubr.bf16.gmra.mrb[0].mxu0 %v5087
      %v5437 = vpop.f32.mrb[0].mxu0
      %v5438 = vadd.f32 0.0, %v5437
      %v5439 = vpop.f32.mrb[0].mxu0
      %v5440 = vpop.f32.mrb[0].mxu0
      %v5441 = vadd.f32 0.0, %v5440
      %v5442 = vpop.f32.mrb[0].mxu0
      %5443 = vdwg.mxu0
      %5444 = vmatprep.subr.bf16.mxu0 0
      %5445 = vmatpush1.bf16.msra.mxu0 %v5251
      %5446 = vmatprep.subr.bf16.mxu0 0
      %5447 = vmatpush1.bf16.msra.mxu0 %v5252
      %5448 = vmatprep.subr.bf16.mxu0 0
      %5449 = vmatpush1.bf16.msra.mxu0 %v5253
      %5450 = vmatprep.subr.bf16.mxu0 0
      %5451 = vmatpush1.bf16.msra.mxu0 %v5254
      %5452 = vmatprep.subr.bf16.mxu0 0
      %5453 = vmatpush1.bf16.msra.mxu0 %v5255
      %5454 = vmatprep.subr.bf16.mxu0 0
      %5455 = vmatpush1.bf16.msra.mxu0 %v5256
      %5456 = vmatprep.subr.bf16.mxu0 0
      %5457 = vmatpush1.bf16.msra.mxu0 %v5257
      %5458 = vmatprep.subr.bf16.mxu0 0
      %5459 = vmatpush1.bf16.msra.mxu0 %v5258
      %5460 = vmatprep.subr.bf16.mxu0 0
      %5461 = vmatpush1.bf16.msra.mxu0 0
      %5462 = vmatprep.subr.bf16.mxu0 0
      %5463 = vmatpush1.bf16.msra.mxu0 0
      %5464 = vmatprep.subr.bf16.mxu0 0
      %5465 = vmatpush1.bf16.msra.mxu0 0
      %5466 = vmatprep.subr.bf16.mxu0 0
      %5467 = vmatpush1.bf16.msra.mxu0 0
      %5468 = vmatprep.subr.bf16.mxu0 0
      %5469 = vmatpush1.bf16.msra.mxu0 0
      %5470 = vmatprep.subr.bf16.mxu0 0
      %5471 = vmatpush1.bf16.msra.mxu0 0
      %5472 = vmatprep.subr.bf16.mxu0 0
      %5473 = vmatpush1.bf16.msra.mxu0 0
      %5474 = vmatprep.subr.bf16.mxu0 0
      %5475 = vmatpush1.bf16.msra.mxu0 0
      %5476 = vmatprep.mubr.bf16.mxu0 0
      %5477 = vmatmul.mubr.bf16.gmra.mrb[0].mxu0 %v5044
      %v5478 = vpop.f32.mrb[0].mxu0
      %v5479 = vadd.f32 %v5318, %v5478
      %v5480 = vpop.f32.mrb[0].mxu0
      %v5481 = vpop.f32.mrb[0].mxu0
      %v5482 = vadd.f32 %v5321, %v5481
      %v5483 = vpop.f32.mrb[0].mxu0
      %5484 = vmatprep.mubr.bf16.mxu0 0
      %5485 = vmatmul.mubr.bf16.gmra.mrb[0].mxu0 %v5047
      %v5486 = vpop.f32.mrb[0].mxu0
      %v5487 = vadd.f32 %v5326, %v5486
      %v5488 = vpop.f32.mrb[0].mxu0
      %v5489 = vpop.f32.mrb[0].mxu0
      %v5490 = vadd.f32 %v5329, %v5489
      %v5491 = vpop.f32.mrb[0].mxu0
      %5492 = vmatprep.mubr.bf16.mxu0 0
      %5493 = vmatmul.mubr.bf16.gmra.mrb[0].mxu0 %v5050
      %v5494 = vpop.f32.mrb[0].mxu0
      %v5495 = vadd.f32 %v5334, %v5494
      %v5496 = vpop.f32.mrb[0].mxu0
      %v5497 = vpop.f32.mrb[0].mxu0
      %v5498 = vadd.f32 %v5337, %v5497
      %v5499 = vpop.f32.mrb[0].mxu0
      %5500 = vmatprep.mubr.bf16.mxu0 0
      %5501 = vmatmul.mubr.bf16.gmra.mrb[0].mxu0 %v5053
      %v5502 = vpop.f32.mrb[0].mxu0
      %v5503 = vadd.f32 %v5342, %v5502
      %v5504 = vpop.f32.mrb[0].mxu0
      %v5505 = vpop.f32.mrb[0].mxu0
      %v5506 = vadd.f32 %v5345, %v5505
      %v5507 = vpop.f32.mrb[0].mxu0
      %5508 = vmatprep.mubr.bf16.mxu0 0
      %5509 = vmatmul.mubr.bf16.gmra.mrb[0].mxu0 %v5056
      %v5510 = vpop.f32.mrb[0].mxu0
      %v5511 = vadd.f32 %v5350, %v5510
      %v5512 = vpop.f32.mrb[0].mxu0
      %v5513 = vpop.f32.mrb[0].mxu0
      %v5514 = vadd.f32 %v5353, %v5513
      %v5515 = vpop.f32.mrb[0].mxu0
      %5516 = vmatprep.mubr.bf16.mxu0 0
      %5517 = vmatmul.mubr.bf16.gmra.mrb[0].mxu0 %v5059
      %v5518 = vpop.f32.mrb[0].mxu0
      %v5519 = vadd.f32 %v5358, %v5518
      %v5520 = vpop.f32.mrb[0].mxu0
      %v5521 = vpop.f32.mrb[0].mxu0
      %v5522 = vadd.f32 %v5361, %v5521
      %v5523 = vpop.f32.mrb[0].mxu0
      %5524 = vmatprep.mubr.bf16.mxu0 0
      %5525 = vmatmul.mubr.bf16.gmra.mrb[0].mxu0 %v5062
      %v5526 = vpop.f32.mrb[0].mxu0
      %v5527 = vadd.f32 %v5366, %v5526
      %v5528 = vpop.f32.mrb[0].mxu0
      %v5529 = vpop.f32.mrb[0].mxu0
      %v5530 = vadd.f32 %v5369, %v5529
      %v5531 = vpop.f32.mrb[0].mxu0
      %5532 = vmatprep.mubr.bf16.mxu0 0
      %5533 = vmatmul.mubr.bf16.gmra.mrb[0].mxu0 %v5065
      %v5534 = vpop.f32.mrb[0].mxu0
      %v5535 = vadd.f32 %v5374, %v5534
      %v5536 = vpop.f32.mrb[0].mxu0
      %v5537 = vpop.f32.mrb[0].mxu0
      %v5538 = vadd.f32 %v5377, %v5537
      %v5539 = vpop.f32.mrb[0].mxu0
      %5540 = vmatprep.mubr.bf16.mxu0 0
      %5541 = vmatmul.mubr.bf16.gmra.mrb[0].mxu0 %v5068
      %v5542 = vpop.f32.mrb[0].mxu0
      %v5543 = vadd.f32 %v5382, %v5542
      %v5544 = vpop.f32.mrb[0].mxu0
      %v5545 = vpop.f32.mrb[0].mxu0
      %v5546 = vadd.f32 %v5385, %v5545
      %v5547 = vpop.f32.mrb[0].mxu0
      %5548 = vmatprep.mubr.bf16.mxu0 0
      %5549 = vmatmul.mubr.bf16.gmra.mrb[0].mxu0 %v5071
      %v5550 = vpop.f32.mrb[0].mxu0
      %v5551 = vadd.f32 %v5390, %v5550
      %v5552 = vpop.f32.mrb[0].mxu0
      %v5553 = vpop.f32.mrb[0].mxu0
      %v5554 = vadd.f32 %v5393, %v5553
      %v5555 = vpop.f32.mrb[0].mxu0
      %5556 = vmatprep.mubr.bf16.mxu0 0
      %5557 = vmatmul.mubr.bf16.gmra.mrb[0].mxu0 %v5074
      %v5558 = vpop.f32.mrb[0].mxu0
      %v5559 = vadd.f32 %v5398, %v5558
      %v5560 = vpop.f32.mrb[0].mxu0
      %v5561 = vpop.f32.mrb[0].mxu0
      %v5562 = vadd.f32 %v5401, %v5561
      %v5563 = vpop.f32.mrb[0].mxu0
      %5564 = vmatprep.mubr.bf16.mxu0 0
      %5565 = vmatmul.mubr.bf16.gmra.mrb[0].mxu0 %v5077
      %v5566 = vpop.f32.mrb[0].mxu0
      %v5567 = vadd.f32 %v5406, %v5566
      %v5568 = vpop.f32.mrb[0].mxu0
      %v5569 = vpop.f32.mrb[0].mxu0
      %v5570 = vadd.f32 %v5409, %v5569
      %v5571 = vpop.f32.mrb[0].mxu0
      %5572 = vmatprep.mubr.bf16.mxu0 0
      %5573 = vmatmul.mubr.bf16.gmra.mrb[0].mxu0 %v5080
      %v5574 = vpop.f32.mrb[0].mxu0
      %v5575 = vadd.f32 %v5414, %v5574
      %v5576 = vpop.f32.mrb[0].mxu0
      %v5577 = vpop.f32.mrb[0].mxu0
      %v5578 = vadd.f32 %v5417, %v5577
      %v5579 = vpop.f32.mrb[0].mxu0
      %5580 = vmatprep.mubr.bf16.mxu0 0
      %5581 = vmatmul.mubr.bf16.gmra.mrb[0].mxu0 %v5083
      %v5582 = vpop.f32.mrb[0].mxu0
      %v5583 = vadd.f32 %v5422, %v5582
      %v5584 = vpop.f32.mrb[0].mxu0
      %v5585 = vpop.f32.mrb[0].mxu0
      %v5586 = vadd.f32 %v5425, %v5585
      %v5587 = vpop.f32.mrb[0].mxu0
      %5588 = vmatprep.mubr.bf16.mxu0 0
      %5589 = vmatmul.mubr.bf16.gmra.mrb[0].mxu0 %v5086
      %v5590 = vpop.f32.mrb[0].mxu0
      %v5591 = vadd.f32 %v5430, %v5590
      %v5592 = vpop.f32.mrb[0].mxu0
      %v5593 = vpop.f32.mrb[0].mxu0
      %v5594 = vadd.f32 %v5433, %v5593
      %v5595 = vpop.f32.mrb[0].mxu0
      %5596 = vmatprep.mubr.bf16.mxu0 0
      %5597 = vmatmul.mubr.bf16.gmra.mrb[0].mxu0 %v5089
      %v5598 = vpop.f32.mrb[0].mxu0
      %v5599 = vadd.f32 %v5438, %v5598
      %v5600 = vpop.f32.mrb[0].mxu0
      %v5601 = vpop.f32.mrb[0].mxu0
      %v5602 = vadd.f32 %v5441, %v5601
      %v5603 = vpop.f32.mrb[0].mxu0
      %5604 = vdwg.mxu0
      %v5605 = vrcp.pop %v4917
      %v5606 = vrcp.pop %v4921
      %v5607 = vrcp.pop %v4925
      %v5608 = vrcp.pop %v4929
      %v5609 = vrcp.pop %v4933
      %v5610 = vrcp.pop %v4937
      %v5611 = vrcp.pop %v4941
      %v5612 = vrcp.pop %v4945
      %v5613 = vrcp.pop %v4949
      %v5614 = vrcp.pop %v4953
      %v5615 = vrcp.pop %v4957
      %v5616 = vrcp.pop %v4961
      %v5617 = vrcp.pop %v4965
      %v5618 = vrcp.pop %v4969
      %v5619 = vrcp.pop %v4973
      %v5620 = vrcp.pop %v4977
      %v5621 = vrcp.pop %v4981
      %v5622 = vrcp.pop %v4985
      %v5623 = vrcp.pop %v4989
      %v5624 = vrcp.pop %v4993
      %v5625 = vrcp.pop %v4997
      %v5626 = vrcp.pop %v5001
      %v5627 = vrcp.pop %v5005
      %v5628 = vrcp.pop %v5009
      %v5629 = vrcp.pop %v5013
      %v5630 = vrcp.pop %v5017
      %v5631 = vrcp.pop %v5021
      %v5632 = vrcp.pop %v5025
      %v5633 = vrcp.pop %v5029
      %v5634 = vrcp.pop %v5033
      %v5635 = vrcp.pop %v5037
      %v5636 = vrcp.pop %v5041
      %v5637 = vmul.f32 %v5479, %v5605
      %v5638 = vmul.f32 %v5482, %v5606
      %v5639 = vmul.f32 %v5487, %v5607
      %v5640 = vmul.f32 %v5490, %v5608
      %v5641 = vmul.f32 %v5495, %v5609
      %v5642 = vmul.f32 %v5498, %v5610
      %v5643 = vmul.f32 %v5503, %v5611
      %v5644 = vmul.f32 %v5506, %v5612
      %v5645 = vmul.f32 %v5511, %v5613
      %v5646 = vmul.f32 %v5514, %v5614
      %v5647 = vmul.f32 %v5519, %v5615
      %v5648 = vmul.f32 %v5522, %v5616
      %v5649 = vmul.f32 %v5527, %v5617
      %v5650 = vmul.f32 %v5530, %v5618
      %v5651 = vmul.f32 %v5535, %v5619
      %v5652 = vmul.f32 %v5538, %v5620
      %v5653 = vmul.f32 %v5543, %v5621
      %v5654 = vmul.f32 %v5546, %v5622
      %v5655 = vmul.f32 %v5551, %v5623
      %v5656 = vmul.f32 %v5554, %v5624
      %v5657 = vmul.f32 %v5559, %v5625
      %v5658 = vmul.f32 %v5562, %v5626
      %v5659 = vmul.f32 %v5567, %v5627
      %v5660 = vmul.f32 %v5570, %v5628
      %v5661 = vmul.f32 %v5575, %v5629
      %v5662 = vmul.f32 %v5578, %v5630
      %v5663 = vmul.f32 %v5583, %v5631
      %v5664 = vmul.f32 %v5586, %v5632
      %v5665 = vmul.f32 %v5591, %v5633
      %v5666 = vmul.f32 %v5594, %v5634
      %v5667 = vmul.f32 %v5599, %v5635
      %v5668 = vmul.f32 %v5602, %v5636
      %s5669 = scalar_lea.vmem %s228, 384
      %v5670 = vld [vmem:[%s5669] sm:$0xf]
      %v5671 = vld [vmem:[%s5669 + $0x4] sm:$0xf]
      %v5672 = vld [vmem:[%s5669 + $0x8] sm:$0xf]
      %v5673 = vld [vmem:[%s5669 + $0xc] sm:$0xf]
      %v5674 = vld [vmem:[%s5669 + $0x10] sm:$0xf]
      %v5675 = vld [vmem:[%s5669 + $0x14] sm:$0xf]
      %v5676 = vld [vmem:[%s5669 + $0x18] sm:$0xf]
      %v5677 = vld [vmem:[%s5669 + $0x1c] sm:$0xf]
      %v5678 = vld [vmem:[%s5669 + $0x20] sm:$0xf]
      %v5679 = vld [vmem:[%s5669 + $0x24] sm:$0xf]
      %v5680 = vld [vmem:[%s5669 + $0x28] sm:$0xf]
      %v5681 = vld [vmem:[%s5669 + $0x2c] sm:$0xf]
      %v5682 = vld [vmem:[%s5669 + $0x30] sm:$0xf]
      %v5683 = vld [vmem:[%s5669 + $0x34] sm:$0xf]
      %v5684 = vld [vmem:[%s5669 + $0x38] sm:$0xf]
      %v5685 = vld [vmem:[%s5669 + $0x3c] sm:$0xf]
      %v5686 = vld [vmem:[%s5669 + $0x40] sm:$0xf]
      %v5687 = vld [vmem:[%s5669 + $0x44] sm:$0xf]
      %v5688 = vld [vmem:[%s5669 + $0x48] sm:$0xf]
      %v5689 = vld [vmem:[%s5669 + $0x4c] sm:$0xf]
      %v5690 = vld [vmem:[%s5669 + $0x50] sm:$0xf]
      %v5691 = vld [vmem:[%s5669 + $0x54] sm:$0xf]
      %v5692 = vld [vmem:[%s5669 + $0x58] sm:$0xf]
      %v5693 = vld [vmem:[%s5669 + $0x5c] sm:$0xf]
      %v5694 = vld [vmem:[%s5669 + $0x60] sm:$0xf]
      %v5695 = vld [vmem:[%s5669 + $0x64] sm:$0xf]
      %v5696 = vld [vmem:[%s5669 + $0x68] sm:$0xf]
      %v5697 = vld [vmem:[%s5669 + $0x6c] sm:$0xf]
      %v5698 = vld [vmem:[%s5669 + $0x70] sm:$0xf]
      %v5699 = vld [vmem:[%s5669 + $0x74] sm:$0xf]
      %v5700 = vld [vmem:[%s5669 + $0x78] sm:$0xf]
      %v5701 = vld [vmem:[%s5669 + $0x7c] sm:$0xf]
      %s5702 = scalar_lea.vmem %s234, 36
      %v5703 = vld [vmem:[%s5702] sm:$0xff]
      %v5704 = vld [vmem:[%s5702 + $0x8] sm:$0xf]
      %v5737 = vunpack.c.l.b16 %v5670
      %v5738 = vunpack.c.l.b16 %v5671
      %v5739 = vunpack.c.l.b16 %v5672
      %v5740 = vunpack.c.l.b16 %v5673
      %v5741 = vunpack.c.l.b16 %v5674
      %v5742 = vunpack.c.l.b16 %v5675
      %v5743 = vunpack.c.l.b16 %v5676
      %v5744 = vunpack.c.l.b16 %v5677
      %v5745 = vunpack.c.l.b16 %v5678
      %v5746 = vunpack.c.l.b16 %v5679
      %v5747 = vunpack.c.l.b16 %v5680
      %v5748 = vunpack.c.l.b16 %v5681
      %v5749 = vunpack.c.l.b16 %v5682
      %v5750 = vunpack.c.l.b16 %v5683
      %v5751 = vunpack.c.l.b16 %v5684
      %v5752 = vunpack.c.l.b16 %v5685
      %v5753 = vunpack.c.l.b16 %v5686
      %v5754 = vunpack.c.l.b16 %v5687
      %v5755 = vunpack.c.l.b16 %v5688
      %v5756 = vunpack.c.l.b16 %v5689
      %v5757 = vunpack.c.l.b16 %v5690
      %v5758 = vunpack.c.l.b16 %v5691
      %v5759 = vunpack.c.l.b16 %v5692
      %v5760 = vunpack.c.l.b16 %v5693
      %v5761 = vunpack.c.l.b16 %v5694
      %v5762 = vunpack.c.l.b16 %v5695
      %v5763 = vunpack.c.l.b16 %v5696
      %v5764 = vunpack.c.l.b16 %v5697
      %v5765 = vunpack.c.l.b16 %v5698
      %v5766 = vunpack.c.l.b16 %v5699
      %v5767 = vunpack.c.l.b16 %v5700
      %v5768 = vunpack.c.l.b16 %v5701
      %v5769 = vpack.c.b16 %v5738, %v5737
      %v5770 = vpack.c.b16 %v5740, %v5739
      %v5771 = vpack.c.b16 %v5742, %v5741
      %v5772 = vpack.c.b16 %v5744, %v5743
      %v5773 = vpack.c.b16 %v5746, %v5745
      %v5774 = vpack.c.b16 %v5748, %v5747
      %v5775 = vpack.c.b16 %v5750, %v5749
      %v5776 = vpack.c.b16 %v5752, %v5751
      %v5777 = vpack.c.b16 %v5754, %v5753
      %v5778 = vpack.c.b16 %v5756, %v5755
      %v5779 = vpack.c.b16 %v5758, %v5757
      %v5780 = vpack.c.b16 %v5760, %v5759
      %v5781 = vpack.c.b16 %v5762, %v5761
      %v5782 = vpack.c.b16 %v5764, %v5763
      %v5783 = vpack.c.b16 %v5766, %v5765
      %v5784 = vpack.c.b16 %v5768, %v5767
      %v5787 = vunpack.c.l.b16 %v5703
      %v5788 = vunpack.c.h.b16 %v5703
      %v5789 = vunpack.c.l.b16 %v5704
      %v5790 = vpack.c.b16 %v5787, %v5787
      %v5791 = vpack.c.b16 %v5788, %v5788
      %v5792 = vpack.c.b16 %v5789, %v5789
      %v5794 = vsel %vm380, %v5769, 0
      %v5797 = vsel %vm380, %v5770, 0
      %v5800 = vsel %vm380, %v5771, 0
      %v5803 = vsel %vm380, %v5772, 0
      %v5806 = vsel %vm380, %v5773, 0
      %v5809 = vsel %vm380, %v5774, 0
      %v5812 = vsel %vm380, %v5775, 0
      %v5815 = vsel %vm380, %v5776, 0
      %v5818 = vsel %vm380, %v5777, 0
      %v5821 = vsel %vm380, %v5778, 0
      %v5824 = vsel %vm380, %v5779, 0
      %v5827 = vsel %vm380, %v5780, 0
      %v5830 = vsel %vm380, %v5781, 0
      %v5833 = vsel %vm380, %v5782, 0
      %v5836 = vsel %vm380, %v5783, 0
      %v5839 = vsel %vm380, %v5784, 0
      %v5842 = vsel %vm429, %v5790, 0
      %v5845 = vsel %vm429, %v5791, 0
      %v5848 = vsel %vm429, %v5792, 0
      %5850 = vmatprep.subr.bf16.mxu0 %v5845
      %5851 = vmatpush1.bf16.msra.mxu0 %v5842
      %5852 = vmatprep.subr.bf16.mxu0 0
      %5853 = vmatpush1.bf16.msra.mxu0 0
      %5854 = vmatprep.subr.bf16.mxu0 0
      %5855 = vmatpush1.bf16.msra.mxu0 0
      %5856 = vmatprep.subr.bf16.mxu0 0
      %5857 = vmatpush1.bf16.msra.mxu0 0
      %5858 = vmatprep.subr.bf16.mxu0 0
      %5859 = vmatpush1.bf16.msra.mxu0 0
      %5860 = vmatprep.subr.bf16.mxu0 0
      %5861 = vmatpush1.bf16.msra.mxu0 0
      %5862 = vmatprep.subr.bf16.mxu0 0
      %5863 = vmatpush1.bf16.msra.mxu0 0
      %5864 = vmatprep.subr.bf16.mxu0 0
      %5865 = vmatpush1.bf16.msra.mxu0 0
      %5866 = vmatprep.subr.bf16.mxu0 0
      %5867 = vmatpush1.bf16.msra.mxu0 0
      %5868 = vmatprep.subr.bf16.mxu0 0
      %5869 = vmatpush1.bf16.msra.mxu0 0
      %5870 = vmatprep.subr.bf16.mxu0 0
      %5871 = vmatpush1.bf16.msra.mxu0 0
      %5872 = vmatprep.subr.bf16.mxu0 0
      %5873 = vmatpush1.bf16.msra.mxu0 0
      %5874 = vmatprep.subr.bf16.mxu0 0
      %5875 = vmatpush1.bf16.msra.mxu0 0
      %5876 = vmatprep.subr.bf16.mxu0 0
      %5877 = vmatpush1.bf16.msra.mxu0 0
      %5878 = vmatprep.subr.bf16.mxu0 0
      %5879 = vmatpush1.bf16.msra.mxu0 0
      %5880 = vmatprep.subr.bf16.mxu0 0
      %5881 = vmatpush1.bf16.msra.mxu0 0
      %5882 = vmatprep.mubr.bf16.mxu0 0
      %5883 = vmatmul.mubr.bf16.gmra.mrb[0].mxu0 %v5794
      %v5884 = vpop.f32.mrb[0].mxu0
      %v5885 = vadd.f32 0.0, %v5884
      %v5886 = vpop.f32.mrb[0].mxu0
      %v5887 = vadd.f32 0.0, %v5886
      %v5888 = vpop.f32.mrb[0].mxu0
      %v5889 = vadd.f32 0.0, %v5888
      %v5890 = vpop.f32.mrb[0].mxu0
      %v5891 = vadd.f32 0.0, %v5890
      %5892 = vmatprep.mubr.bf16.mxu0 0
      %5893 = vmatmul.mubr.bf16.gmra.mrb[0].mxu0 %v5797
      %v5894 = vpop.f32.mrb[0].mxu0
      %v5895 = vadd.f32 0.0, %v5894
      %v5896 = vpop.f32.mrb[0].mxu0
      %v5897 = vadd.f32 0.0, %v5896
      %v5898 = vpop.f32.mrb[0].mxu0
      %v5899 = vadd.f32 0.0, %v5898
      %v5900 = vpop.f32.mrb[0].mxu0
      %v5901 = vadd.f32 0.0, %v5900
      %5902 = vmatprep.mubr.bf16.mxu0 0
      %5903 = vmatmul.mubr.bf16.gmra.mrb[0].mxu0 %v5800
      %v5904 = vpop.f32.mrb[0].mxu0
      %v5905 = vadd.f32 0.0, %v5904
      %v5906 = vpop.f32.mrb[0].mxu0
      %v5907 = vadd.f32 0.0, %v5906
      %v5908 = vpop.f32.mrb[0].mxu0
      %v5909 = vadd.f32 0.0, %v5908
      %v5910 = vpop.f32.mrb[0].mxu0
      %v5911 = vadd.f32 0.0, %v5910
      %5912 = vmatprep.mubr.bf16.mxu0 0
      %5913 = vmatmul.mubr.bf16.gmra.mrb[0].mxu0 %v5803
      %v5914 = vpop.f32.mrb[0].mxu0
      %v5915 = vadd.f32 0.0, %v5914
      %v5916 = vpop.f32.mrb[0].mxu0
      %v5917 = vadd.f32 0.0, %v5916
      %v5918 = vpop.f32.mrb[0].mxu0
      %v5919 = vadd.f32 0.0, %v5918
      %v5920 = vpop.f32.mrb[0].mxu0
      %v5921 = vadd.f32 0.0, %v5920
      %5922 = vmatprep.mubr.bf16.mxu0 0
      %5923 = vmatmul.mubr.bf16.gmra.mrb[0].mxu0 %v5806
      %v5924 = vpop.f32.mrb[0].mxu0
      %v5925 = vadd.f32 0.0, %v5924
      %v5926 = vpop.f32.mrb[0].mxu0
      %v5927 = vadd.f32 0.0, %v5926
      %v5928 = vpop.f32.mrb[0].mxu0
      %v5929 = vadd.f32 0.0, %v5928
      %v5930 = vpop.f32.mrb[0].mxu0
      %v5931 = vadd.f32 0.0, %v5930
      %5932 = vmatprep.mubr.bf16.mxu0 0
      %5933 = vmatmul.mubr.bf16.gmra.mrb[0].mxu0 %v5809
      %v5934 = vpop.f32.mrb[0].mxu0
      %v5935 = vadd.f32 0.0, %v5934
      %v5936 = vpop.f32.mrb[0].mxu0
      %v5937 = vadd.f32 0.0, %v5936
      %v5938 = vpop.f32.mrb[0].mxu0
      %v5939 = vadd.f32 0.0, %v5938
      %v5940 = vpop.f32.mrb[0].mxu0
      %v5941 = vadd.f32 0.0, %v5940
      %5942 = vmatprep.mubr.bf16.mxu0 0
      %5943 = vmatmul.mubr.bf16.gmra.mrb[0].mxu0 %v5812
      %v5944 = vpop.f32.mrb[0].mxu0
      %v5945 = vadd.f32 0.0, %v5944
      %v5946 = vpop.f32.mrb[0].mxu0
      %v5947 = vadd.f32 0.0, %v5946
      %v5948 = vpop.f32.mrb[0].mxu0
      %v5949 = vadd.f32 0.0, %v5948
      %v5950 = vpop.f32.mrb[0].mxu0
      %v5951 = vadd.f32 0.0, %v5950
      %5952 = vmatprep.mubr.bf16.mxu0 0
      %5953 = vmatmul.mubr.bf16.gmra.mrb[0].mxu0 %v5815
      %v5954 = vpop.f32.mrb[0].mxu0
      %v5955 = vadd.f32 0.0, %v5954
      %v5956 = vpop.f32.mrb[0].mxu0
      %v5957 = vadd.f32 0.0, %v5956
      %v5958 = vpop.f32.mrb[0].mxu0
      %v5959 = vadd.f32 0.0, %v5958
      %v5960 = vpop.f32.mrb[0].mxu0
      %v5961 = vadd.f32 0.0, %v5960
      %5962 = vmatprep.mubr.bf16.mxu0 0
      %5963 = vmatmul.mubr.bf16.gmra.mrb[0].mxu0 %v5818
      %v5964 = vpop.f32.mrb[0].mxu0
      %v5965 = vadd.f32 0.0, %v5964
      %v5966 = vpop.f32.mrb[0].mxu0
      %v5967 = vadd.f32 0.0, %v5966
      %v5968 = vpop.f32.mrb[0].mxu0
      %v5969 = vadd.f32 0.0, %v5968
      %v5970 = vpop.f32.mrb[0].mxu0
      %v5971 = vadd.f32 0.0, %v5970
      %5972 = vmatprep.mubr.bf16.mxu0 0
      %5973 = vmatmul.mubr.bf16.gmra.mrb[0].mxu0 %v5821
      %v5974 = vpop.f32.mrb[0].mxu0
      %v5975 = vadd.f32 0.0, %v5974
      %v5976 = vpop.f32.mrb[0].mxu0
      %v5977 = vadd.f32 0.0, %v5976
      %v5978 = vpop.f32.mrb[0].mxu0
      %v5979 = vadd.f32 0.0, %v5978
      %v5980 = vpop.f32.mrb[0].mxu0
      %v5981 = vadd.f32 0.0, %v5980
      %5982 = vmatprep.mubr.bf16.mxu0 0
      %5983 = vmatmul.mubr.bf16.gmra.mrb[0].mxu0 %v5824
      %v5984 = vpop.f32.mrb[0].mxu0
      %v5985 = vadd.f32 0.0, %v5984
      %v5986 = vpop.f32.mrb[0].mxu0
      %v5987 = vadd.f32 0.0, %v5986
      %v5988 = vpop.f32.mrb[0].mxu0
      %v5989 = vadd.f32 0.0, %v5988
      %v5990 = vpop.f32.mrb[0].mxu0
      %v5991 = vadd.f32 0.0, %v5990
      %5992 = vmatprep.mubr.bf16.mxu0 0
      %5993 = vmatmul.mubr.bf16.gmra.mrb[0].mxu0 %v5827
      %v5994 = vpop.f32.mrb[0].mxu0
      %v5995 = vadd.f32 0.0, %v5994
      %v5996 = vpop.f32.mrb[0].mxu0
      %v5997 = vadd.f32 0.0, %v5996
      %v5998 = vpop.f32.mrb[0].mxu0
      %v5999 = vadd.f32 0.0, %v5998
      %v6000 = vpop.f32.mrb[0].mxu0
      %v6001 = vadd.f32 0.0, %v6000
      %6002 = vmatprep.mubr.bf16.mxu0 0
      %6003 = vmatmul.mubr.bf16.gmra.mrb[0].mxu0 %v5830
      %v6004 = vpop.f32.mrb[0].mxu0
      %v6005 = vadd.f32 0.0, %v6004
      %v6006 = vpop.f32.mrb[0].mxu0
      %v6007 = vadd.f32 0.0, %v6006
      %v6008 = vpop.f32.mrb[0].mxu0
      %v6009 = vadd.f32 0.0, %v6008
      %v6010 = vpop.f32.mrb[0].mxu0
      %v6011 = vadd.f32 0.0, %v6010
      %6012 = vmatprep.mubr.bf16.mxu0 0
      %6013 = vmatmul.mubr.bf16.gmra.mrb[0].mxu0 %v5833
      %v6014 = vpop.f32.mrb[0].mxu0
      %v6015 = vadd.f32 0.0, %v6014
      %v6016 = vpop.f32.mrb[0].mxu0
      %v6017 = vadd.f32 0.0, %v6016
      %v6018 = vpop.f32.mrb[0].mxu0
      %v6019 = vadd.f32 0.0, %v6018
      %v6020 = vpop.f32.mrb[0].mxu0
      %v6021 = vadd.f32 0.0, %v6020
      %6022 = vmatprep.mubr.bf16.mxu0 0
      %6023 = vmatmul.mubr.bf16.gmra.mrb[0].mxu0 %v5836
      %v6024 = vpop.f32.mrb[0].mxu0
      %v6025 = vadd.f32 0.0, %v6024
      %v6026 = vpop.f32.mrb[0].mxu0
      %v6027 = vadd.f32 0.0, %v6026
      %v6028 = vpop.f32.mrb[0].mxu0
      %v6029 = vadd.f32 0.0, %v6028
      %v6030 = vpop.f32.mrb[0].mxu0
      %v6031 = vadd.f32 0.0, %v6030
      %6032 = vmatprep.mubr.bf16.mxu0 0
      %6033 = vmatmul.mubr.bf16.gmra.mrb[0].mxu0 %v5839
      %v6034 = vpop.f32.mrb[0].mxu0
      %v6035 = vadd.f32 0.0, %v6034
      %v6036 = vpop.f32.mrb[0].mxu0
      %v6037 = vadd.f32 0.0, %v6036
      %v6038 = vpop.f32.mrb[0].mxu0
      %v6039 = vadd.f32 0.0, %v6038
      %v6040 = vpop.f32.mrb[0].mxu0
      %v6041 = vadd.f32 0.0, %v6040
      %6042 = vdwg.mxu0
      %6043 = vmatprep.subr.bf16.mxu0 0
      %6044 = vmatpush1.bf16.msra.mxu0 %v5848
      %6045 = vmatprep.subr.bf16.mxu0 0
      %6046 = vmatpush1.bf16.msra.mxu0 0
      %6047 = vmatprep.subr.bf16.mxu0 0
      %6048 = vmatpush1.bf16.msra.mxu0 0
      %6049 = vmatprep.subr.bf16.mxu0 0
      %6050 = vmatpush1.bf16.msra.mxu0 0
      %6051 = vmatprep.subr.bf16.mxu0 0
      %6052 = vmatpush1.bf16.msra.mxu0 0
      %6053 = vmatprep.subr.bf16.mxu0 0
      %6054 = vmatpush1.bf16.msra.mxu0 0
      %6055 = vmatprep.subr.bf16.mxu0 0
      %6056 = vmatpush1.bf16.msra.mxu0 0
      %6057 = vmatprep.subr.bf16.mxu0 0
      %6058 = vmatpush1.bf16.msra.mxu0 0
      %6059 = vmatprep.subr.bf16.mxu0 0
      %6060 = vmatpush1.bf16.msra.mxu0 0
      %6061 = vmatprep.subr.bf16.mxu0 0
      %6062 = vmatpush1.bf16.msra.mxu0 0
      %6063 = vmatprep.subr.bf16.mxu0 0
      %6064 = vmatpush1.bf16.msra.mxu0 0
      %6065 = vmatprep.subr.bf16.mxu0 0
      %6066 = vmatpush1.bf16.msra.mxu0 0
      %6067 = vmatprep.subr.bf16.mxu0 0
      %6068 = vmatpush1.bf16.msra.mxu0 0
      %6069 = vmatprep.subr.bf16.mxu0 0
      %6070 = vmatpush1.bf16.msra.mxu0 0
      %6071 = vmatprep.subr.bf16.mxu0 0
      %6072 = vmatpush1.bf16.msra.mxu0 0
      %6073 = vmatprep.subr.bf16.mxu0 0
      %6074 = vmatpush1.bf16.msra.mxu0 0
      %6075 = vmatprep.mubr.bf16.mxu0 0
      %6076 = vmatmul.mubr.bf16.gmra.mrb[0].mxu0 %v5794
      %v6077 = vpop.f32.mrb[0].mxu0
      %v6078 = vadd.f32 0.0, %v6077
      %v6079 = vpop.f32.mrb[0].mxu0
      %v6080 = vpop.f32.mrb[0].mxu0
      %v6081 = vadd.f32 0.0, %v6080
      %v6082 = vpop.f32.mrb[0].mxu0
      %6083 = vmatprep.mubr.bf16.mxu0 0
      %6084 = vmatmul.mubr.bf16.gmra.mrb[0].mxu0 %v5797
      %v6085 = vpop.f32.mrb[0].mxu0
      %v6086 = vadd.f32 0.0, %v6085
      %v6087 = vpop.f32.mrb[0].mxu0
      %v6088 = vpop.f32.mrb[0].mxu0
      %v6089 = vadd.f32 0.0, %v6088
      %v6090 = vpop.f32.mrb[0].mxu0
      %6091 = vmatprep.mubr.bf16.mxu0 0
      %6092 = vmatmul.mubr.bf16.gmra.mrb[0].mxu0 %v5800
      %v6093 = vpop.f32.mrb[0].mxu0
      %v6094 = vadd.f32 0.0, %v6093
      %v6095 = vpop.f32.mrb[0].mxu0
      %v6096 = vpop.f32.mrb[0].mxu0
      %v6097 = vadd.f32 0.0, %v6096
      %v6098 = vpop.f32.mrb[0].mxu0
      %6099 = vmatprep.mubr.bf16.mxu0 0
      %6100 = vmatmul.mubr.bf16.gmra.mrb[0].mxu0 %v5803
      %v6101 = vpop.f32.mrb[0].mxu0
      %v6102 = vadd.f32 0.0, %v6101
      %v6103 = vpop.f32.mrb[0].mxu0
      %v6104 = vpop.f32.mrb[0].mxu0
      %v6105 = vadd.f32 0.0, %v6104
      %v6106 = vpop.f32.mrb[0].mxu0
      %6107 = vmatprep.mubr.bf16.mxu0 0
      %6108 = vmatmul.mubr.bf16.gmra.mrb[0].mxu0 %v5806
      %v6109 = vpop.f32.mrb[0].mxu0
      %v6110 = vadd.f32 0.0, %v6109
      %v6111 = vpop.f32.mrb[0].mxu0
      %v6112 = vpop.f32.mrb[0].mxu0
      %v6113 = vadd.f32 0.0, %v6112
      %v6114 = vpop.f32.mrb[0].mxu0
      %6115 = vmatprep.mubr.bf16.mxu0 0
      %6116 = vmatmul.mubr.bf16.gmra.mrb[0].mxu0 %v5809
      %v6117 = vpop.f32.mrb[0].mxu0
      %v6118 = vadd.f32 0.0, %v6117
      %v6119 = vpop.f32.mrb[0].mxu0
      %v6120 = vpop.f32.mrb[0].mxu0
      %v6121 = vadd.f32 0.0, %v6120
      %v6122 = vpop.f32.mrb[0].mxu0
      %6123 = vmatprep.mubr.bf16.mxu0 0
      %6124 = vmatmul.mubr.bf16.gmra.mrb[0].mxu0 %v5812
      %v6125 = vpop.f32.mrb[0].mxu0
      %v6126 = vadd.f32 0.0, %v6125
      %v6127 = vpop.f32.mrb[0].mxu0
      %v6128 = vpop.f32.mrb[0].mxu0
      %v6129 = vadd.f32 0.0, %v6128
      %v6130 = vpop.f32.mrb[0].mxu0
      %6131 = vmatprep.mubr.bf16.mxu0 0
      %6132 = vmatmul.mubr.bf16.gmra.mrb[0].mxu0 %v5815
      %v6133 = vpop.f32.mrb[0].mxu0
      %v6134 = vadd.f32 0.0, %v6133
      %v6135 = vpop.f32.mrb[0].mxu0
      %v6136 = vpop.f32.mrb[0].mxu0
      %v6137 = vadd.f32 0.0, %v6136
      %v6138 = vpop.f32.mrb[0].mxu0
      %6139 = vmatprep.mubr.bf16.mxu0 0
      %6140 = vmatmul.mubr.bf16.gmra.mrb[0].mxu0 %v5818
      %v6141 = vpop.f32.mrb[0].mxu0
      %v6142 = vadd.f32 0.0, %v6141
      %v6143 = vpop.f32.mrb[0].mxu0
      %v6144 = vpop.f32.mrb[0].mxu0
      %v6145 = vadd.f32 0.0, %v6144
      %v6146 = vpop.f32.mrb[0].mxu0
      %6147 = vmatprep.mubr.bf16.mxu0 0
      %6148 = vmatmul.mubr.bf16.gmra.mrb[0].mxu0 %v5821
      %v6149 = vpop.f32.mrb[0].mxu0
      %v6150 = vadd.f32 0.0, %v6149
      %v6151 = vpop.f32.mrb[0].mxu0
      %v6152 = vpop.f32.mrb[0].mxu0
      %v6153 = vadd.f32 0.0, %v6152
      %v6154 = vpop.f32.mrb[0].mxu0
      %6155 = vmatprep.mubr.bf16.mxu0 0
      %6156 = vmatmul.mubr.bf16.gmra.mrb[0].mxu0 %v5824
      %v6157 = vpop.f32.mrb[0].mxu0
      %v6158 = vadd.f32 0.0, %v6157
      %v6159 = vpop.f32.mrb[0].mxu0
      %v6160 = vpop.f32.mrb[0].mxu0
      %v6161 = vadd.f32 0.0, %v6160
      %v6162 = vpop.f32.mrb[0].mxu0
      %6163 = vmatprep.mubr.bf16.mxu0 0
      %6164 = vmatmul.mubr.bf16.gmra.mrb[0].mxu0 %v5827
      %v6165 = vpop.f32.mrb[0].mxu0
      %v6166 = vadd.f32 0.0, %v6165
      %v6167 = vpop.f32.mrb[0].mxu0
      %v6168 = vpop.f32.mrb[0].mxu0
      %v6169 = vadd.f32 0.0, %v6168
      %v6170 = vpop.f32.mrb[0].mxu0
      %6171 = vmatprep.mubr.bf16.mxu0 0
      %6172 = vmatmul.mubr.bf16.gmra.mrb[0].mxu0 %v5830
      %v6173 = vpop.f32.mrb[0].mxu0
      %v6174 = vadd.f32 0.0, %v6173
      %v6175 = vpop.f32.mrb[0].mxu0
      %v6176 = vpop.f32.mrb[0].mxu0
      %v6177 = vadd.f32 0.0, %v6176
      %v6178 = vpop.f32.mrb[0].mxu0
      %6179 = vmatprep.mubr.bf16.mxu0 0
      %6180 = vmatmul.mubr.bf16.gmra.mrb[0].mxu0 %v5833
      %v6181 = vpop.f32.mrb[0].mxu0
      %v6182 = vadd.f32 0.0, %v6181
      %v6183 = vpop.f32.mrb[0].mxu0
      %v6184 = vpop.f32.mrb[0].mxu0
      %v6185 = vadd.f32 0.0, %v6184
      %v6186 = vpop.f32.mrb[0].mxu0
      %6187 = vmatprep.mubr.bf16.mxu0 0
      %6188 = vmatmul.mubr.bf16.gmra.mrb[0].mxu0 %v5836
      %v6189 = vpop.f32.mrb[0].mxu0
      %v6190 = vadd.f32 0.0, %v6189
      %v6191 = vpop.f32.mrb[0].mxu0
      %v6192 = vpop.f32.mrb[0].mxu0
      %v6193 = vadd.f32 0.0, %v6192
      %v6194 = vpop.f32.mrb[0].mxu0
      %6195 = vmatprep.mubr.bf16.mxu0 0
      %6196 = vmatmul.mubr.bf16.gmra.mrb[0].mxu0 %v5839
      %v6197 = vpop.f32.mrb[0].mxu0
      %v6198 = vadd.f32 0.0, %v6197
      %v6199 = vpop.f32.mrb[0].mxu0
      %v6200 = vpop.f32.mrb[0].mxu0
      %v6201 = vadd.f32 0.0, %v6200
      %v6202 = vpop.f32.mrb[0].mxu0
      %6203 = vdwg.mxu0
      %v6204 = vsel %vm796, %v5885, -inf
      %v6205 = vsel %vm797, %v5887, -inf
      %v6206 = vsel %vm798, %v6078, -inf
      %v6207 = vsel %vm796, %v5889, -inf
      %v6208 = vsel %vm797, %v5891, -inf
      %v6209 = vsel %vm798, %v6081, -inf
      %v6210 = vsel %vm796, %v5895, -inf
      %v6211 = vsel %vm797, %v5897, -inf
      %v6212 = vsel %vm798, %v6086, -inf
      %v6213 = vsel %vm796, %v5899, -inf
      %v6214 = vsel %vm797, %v5901, -inf
      %v6215 = vsel %vm798, %v6089, -inf
      %v6216 = vsel %vm796, %v5905, -inf
      %v6217 = vsel %vm797, %v5907, -inf
      %v6218 = vsel %vm798, %v6094, -inf
      %v6219 = vsel %vm796, %v5909, -inf
      %v6220 = vsel %vm797, %v5911, -inf
      %v6221 = vsel %vm798, %v6097, -inf
      %v6222 = vsel %vm796, %v5915, -inf
      %v6223 = vsel %vm797, %v5917, -inf
      %v6224 = vsel %vm798, %v6102, -inf
      %v6225 = vsel %vm796, %v5919, -inf
      %v6226 = vsel %vm797, %v5921, -inf
      %v6227 = vsel %vm798, %v6105, -inf
      %v6228 = vsel %vm796, %v5925, -inf
      %v6229 = vsel %vm797, %v5927, -inf
      %v6230 = vsel %vm798, %v6110, -inf
      %v6231 = vsel %vm796, %v5929, -inf
      %v6232 = vsel %vm797, %v5931, -inf
      %v6233 = vsel %vm798, %v6113, -inf
      %v6234 = vsel %vm796, %v5935, -inf
      %v6235 = vsel %vm797, %v5937, -inf
      %v6236 = vsel %vm798, %v6118, -inf
      %v6237 = vsel %vm796, %v5939, -inf
      %v6238 = vsel %vm797, %v5941, -inf
      %v6239 = vsel %vm798, %v6121, -inf
      %v6240 = vsel %vm796, %v5945, -inf
      %v6241 = vsel %vm797, %v5947, -inf
      %v6242 = vsel %vm798, %v6126, -inf
      %v6243 = vsel %vm796, %v5949, -inf
      %v6244 = vsel %vm797, %v5951, -inf
      %v6245 = vsel %vm798, %v6129, -inf
      %v6246 = vsel %vm796, %v5955, -inf
      %v6247 = vsel %vm797, %v5957, -inf
      %v6248 = vsel %vm798, %v6134, -inf
      %v6249 = vsel %vm796, %v5959, -inf
      %v6250 = vsel %vm797, %v5961, -inf
      %v6251 = vsel %vm798, %v6137, -inf
      %v6252 = vsel %vm796, %v5965, -inf
      %v6253 = vsel %vm797, %v5967, -inf
      %v6254 = vsel %vm798, %v6142, -inf
      %v6255 = vsel %vm796, %v5969, -inf
      %v6256 = vsel %vm797, %v5971, -inf
      %v6257 = vsel %vm798, %v6145, -inf
      %v6258 = vsel %vm796, %v5975, -inf
      %v6259 = vsel %vm797, %v5977, -inf
      %v6260 = vsel %vm798, %v6150, -inf
      %v6261 = vsel %vm796, %v5979, -inf
      %v6262 = vsel %vm797, %v5981, -inf
      %v6263 = vsel %vm798, %v6153, -inf
      %v6264 = vsel %vm796, %v5985, -inf
      %v6265 = vsel %vm797, %v5987, -inf
      %v6266 = vsel %vm798, %v6158, -inf
      %v6267 = vsel %vm796, %v5989, -inf
      %v6268 = vsel %vm797, %v5991, -inf
      %v6269 = vsel %vm798, %v6161, -inf
      %v6270 = vsel %vm796, %v5995, -inf
      %v6271 = vsel %vm797, %v5997, -inf
      %v6272 = vsel %vm798, %v6166, -inf
      %v6273 = vsel %vm796, %v5999, -inf
      %v6274 = vsel %vm797, %v6001, -inf
      %v6275 = vsel %vm798, %v6169, -inf
      %v6276 = vsel %vm796, %v6005, -inf
      %v6277 = vsel %vm797, %v6007, -inf
      %v6278 = vsel %vm798, %v6174, -inf
      %v6279 = vsel %vm796, %v6009, -inf
      %v6280 = vsel %vm797, %v6011, -inf
      %v6281 = vsel %vm798, %v6177, -inf
      %v6282 = vsel %vm796, %v6015, -inf
      %v6283 = vsel %vm797, %v6017, -inf
      %v6284 = vsel %vm798, %v6182, -inf
      %v6285 = vsel %vm796, %v6019, -inf
      %v6286 = vsel %vm797, %v6021, -inf
      %v6287 = vsel %vm798, %v6185, -inf
      %v6288 = vsel %vm796, %v6025, -inf
      %v6289 = vsel %vm797, %v6027, -inf
      %v6290 = vsel %vm798, %v6190, -inf
      %v6291 = vsel %vm796, %v6029, -inf
      %v6292 = vsel %vm797, %v6031, -inf
      %v6293 = vsel %vm798, %v6193, -inf
      %v6294 = vsel %vm796, %v6035, -inf
      %v6295 = vsel %vm797, %v6037, -inf
      %v6296 = vsel %vm798, %v6198, -inf
      %v6297 = vsel %vm796, %v6039, -inf
      %v6298 = vsel %vm797, %v6041, -inf
      %v6299 = vsel %vm798, %v6201, -inf
      %v6300 = vmax.f32 %v6204, %v6205
      %v6301 = vmax.f32 %v6300, %v6206
      %6302 = vmax.xlane.f32.xlu0 %v6301
      %v6303 = vpop.xlane.xlu0 %6302
      %v6304 = vmax.f32 %v6207, %v6208
      %v6305 = vmax.f32 %v6304, %v6209
      %6306 = vmax.xlane.f32.xlu0 %v6305
      %v6307 = vpop.xlane.xlu0 %6306
      %v6308 = vmax.f32 %v6210, %v6211
      %v6309 = vmax.f32 %v6308, %v6212
      %6310 = vmax.xlane.f32.xlu0 %v6309
      %v6311 = vpop.xlane.xlu0 %6310
      %v6312 = vmax.f32 %v6213, %v6214
      %v6313 = vmax.f32 %v6312, %v6215
      %6314 = vmax.xlane.f32.xlu0 %v6313
      %v6315 = vpop.xlane.xlu0 %6314
      %v6316 = vmax.f32 %v6216, %v6217
      %v6317 = vmax.f32 %v6316, %v6218
      %6318 = vmax.xlane.f32.xlu0 %v6317
      %v6319 = vpop.xlane.xlu0 %6318
      %v6320 = vmax.f32 %v6219, %v6220
      %v6321 = vmax.f32 %v6320, %v6221
      %6322 = vmax.xlane.f32.xlu0 %v6321
      %v6323 = vpop.xlane.xlu0 %6322
      %v6324 = vmax.f32 %v6222, %v6223
      %v6325 = vmax.f32 %v6324, %v6224
      %6326 = vmax.xlane.f32.xlu0 %v6325
      %v6327 = vpop.xlane.xlu0 %6326
      %v6328 = vmax.f32 %v6225, %v6226
      %v6329 = vmax.f32 %v6328, %v6227
      %6330 = vmax.xlane.f32.xlu0 %v6329
      %v6331 = vpop.xlane.xlu0 %6330
      %v6332 = vmax.f32 %v6228, %v6229
      %v6333 = vmax.f32 %v6332, %v6230
      %6334 = vmax.xlane.f32.xlu0 %v6333
      %v6335 = vpop.xlane.xlu0 %6334
      %v6336 = vmax.f32 %v6231, %v6232
      %v6337 = vmax.f32 %v6336, %v6233
      %6338 = vmax.xlane.f32.xlu0 %v6337
      %v6339 = vpop.xlane.xlu0 %6338
      %v6340 = vmax.f32 %v6234, %v6235
      %v6341 = vmax.f32 %v6340, %v6236
      %6342 = vmax.xlane.f32.xlu0 %v6341
      %v6343 = vpop.xlane.xlu0 %6342
      %v6344 = vmax.f32 %v6237, %v6238
      %v6345 = vmax.f32 %v6344, %v6239
      %6346 = vmax.xlane.f32.xlu0 %v6345
      %v6347 = vpop.xlane.xlu0 %6346
      %v6348 = vmax.f32 %v6240, %v6241
      %v6349 = vmax.f32 %v6348, %v6242
      %6350 = vmax.xlane.f32.xlu0 %v6349
      %v6351 = vpop.xlane.xlu0 %6350
      %v6352 = vmax.f32 %v6243, %v6244
      %v6353 = vmax.f32 %v6352, %v6245
      %6354 = vmax.xlane.f32.xlu0 %v6353
      %v6355 = vpop.xlane.xlu0 %6354
      %v6356 = vmax.f32 %v6246, %v6247
      %v6357 = vmax.f32 %v6356, %v6248
      %6358 = vmax.xlane.f32.xlu0 %v6357
      %v6359 = vpop.xlane.xlu0 %6358
      %v6360 = vmax.f32 %v6249, %v6250
      %v6361 = vmax.f32 %v6360, %v6251
      %6362 = vmax.xlane.f32.xlu0 %v6361
      %v6363 = vpop.xlane.xlu0 %6362
      %v6364 = vmax.f32 %v6252, %v6253
      %v6365 = vmax.f32 %v6364, %v6254
      %6366 = vmax.xlane.f32.xlu0 %v6365
      %v6367 = vpop.xlane.xlu0 %6366
      %v6368 = vmax.f32 %v6255, %v6256
      %v6369 = vmax.f32 %v6368, %v6257
      %6370 = vmax.xlane.f32.xlu0 %v6369
      %v6371 = vpop.xlane.xlu0 %6370
      %v6372 = vmax.f32 %v6258, %v6259
      %v6373 = vmax.f32 %v6372, %v6260
      %6374 = vmax.xlane.f32.xlu0 %v6373
      %v6375 = vpop.xlane.xlu0 %6374
      %v6376 = vmax.f32 %v6261, %v6262
      %v6377 = vmax.f32 %v6376, %v6263
      %6378 = vmax.xlane.f32.xlu0 %v6377
      %v6379 = vpop.xlane.xlu0 %6378
      %v6380 = vmax.f32 %v6264, %v6265
      %v6381 = vmax.f32 %v6380, %v6266
      %6382 = vmax.xlane.f32.xlu0 %v6381
      %v6383 = vpop.xlane.xlu0 %6382
      %v6384 = vmax.f32 %v6267, %v6268
      %v6385 = vmax.f32 %v6384, %v6269
      %6386 = vmax.xlane.f32.xlu0 %v6385
      %v6387 = vpop.xlane.xlu0 %6386
      %v6388 = vmax.f32 %v6270, %v6271
      %v6389 = vmax.f32 %v6388, %v6272
      %6390 = vmax.xlane.f32.xlu0 %v6389
      %v6391 = vpop.xlane.xlu0 %6390
      %v6392 = vmax.f32 %v6273, %v6274
      %v6393 = vmax.f32 %v6392, %v6275
      %6394 = vmax.xlane.f32.xlu0 %v6393
      %v6395 = vpop.xlane.xlu0 %6394
      %v6396 = vmax.f32 %v6276, %v6277
      %v6397 = vmax.f32 %v6396, %v6278
      %6398 = vmax.xlane.f32.xlu0 %v6397
      %v6399 = vpop.xlane.xlu0 %6398
      %v6400 = vmax.f32 %v6279, %v6280
      %v6401 = vmax.f32 %v6400, %v6281
      %6402 = vmax.xlane.f32.xlu0 %v6401
      %v6403 = vpop.xlane.xlu0 %6402
      %v6404 = vmax.f32 %v6282, %v6283
      %v6405 = vmax.f32 %v6404, %v6284
      %6406 = vmax.xlane.f32.xlu0 %v6405
      %v6407 = vpop.xlane.xlu0 %6406
      %v6408 = vmax.f32 %v6285, %v6286
      %v6409 = vmax.f32 %v6408, %v6287
      %6410 = vmax.xlane.f32.xlu0 %v6409
      %v6411 = vpop.xlane.xlu0 %6410
      %v6412 = vmax.f32 %v6288, %v6289
      %v6413 = vmax.f32 %v6412, %v6290
      %6414 = vmax.xlane.f32.xlu0 %v6413
      %v6415 = vpop.xlane.xlu0 %6414
      %v6416 = vmax.f32 %v6291, %v6292
      %v6417 = vmax.f32 %v6416, %v6293
      %6418 = vmax.xlane.f32.xlu0 %v6417
      %v6419 = vpop.xlane.xlu0 %6418
      %v6420 = vmax.f32 %v6294, %v6295
      %v6421 = vmax.f32 %v6420, %v6296
      %6422 = vmax.xlane.f32.xlu0 %v6421
      %v6423 = vpop.xlane.xlu0 %6422
      %v6424 = vmax.f32 %v6297, %v6298
      %v6425 = vmax.f32 %v6424, %v6299
      %6426 = vmax.xlane.f32.xlu0 %v6425
      %v6427 = vpop.xlane.xlu0 %6426
      %v6428 = vsub.f32 %v6204, %v6303
      %v6429 = vsub.f32 %v6205, %v6303
      %v6430 = vsub.f32 %v6206, %v6303
      %v6431 = vsub.f32 %v6207, %v6307
      %v6432 = vsub.f32 %v6208, %v6307
      %v6433 = vsub.f32 %v6209, %v6307
      %v6434 = vsub.f32 %v6210, %v6311
      %v6435 = vsub.f32 %v6211, %v6311
      %v6436 = vsub.f32 %v6212, %v6311
      %v6437 = vsub.f32 %v6213, %v6315
      %v6438 = vsub.f32 %v6214, %v6315
      %v6439 = vsub.f32 %v6215, %v6315
      %v6440 = vsub.f32 %v6216, %v6319
      %v6441 = vsub.f32 %v6217, %v6319
      %v6442 = vsub.f32 %v6218, %v6319
      %v6443 = vsub.f32 %v6219, %v6323
      %v6444 = vsub.f32 %v6220, %v6323
      %v6445 = vsub.f32 %v6221, %v6323
      %v6446 = vsub.f32 %v6222, %v6327
      %v6447 = vsub.f32 %v6223, %v6327
      %v6448 = vsub.f32 %v6224, %v6327
      %v6449 = vsub.f32 %v6225, %v6331
      %v6450 = vsub.f32 %v6226, %v6331
      %v6451 = vsub.f32 %v6227, %v6331
      %v6452 = vsub.f32 %v6228, %v6335
      %v6453 = vsub.f32 %v6229, %v6335
      %v6454 = vsub.f32 %v6230, %v6335
      %v6455 = vsub.f32 %v6231, %v6339
      %v6456 = vsub.f32 %v6232, %v6339
      %v6457 = vsub.f32 %v6233, %v6339
      %v6458 = vsub.f32 %v6234, %v6343
      %v6459 = vsub.f32 %v6235, %v6343
      %v6460 = vsub.f32 %v6236, %v6343
      %v6461 = vsub.f32 %v6237, %v6347
      %v6462 = vsub.f32 %v6238, %v6347
      %v6463 = vsub.f32 %v6239, %v6347
      %v6464 = vsub.f32 %v6240, %v6351
      %v6465 = vsub.f32 %v6241, %v6351
      %v6466 = vsub.f32 %v6242, %v6351
      %v6467 = vsub.f32 %v6243, %v6355
      %v6468 = vsub.f32 %v6244, %v6355
      %v6469 = vsub.f32 %v6245, %v6355
      %v6470 = vsub.f32 %v6246, %v6359
      %v6471 = vsub.f32 %v6247, %v6359
      %v6472 = vsub.f32 %v6248, %v6359
      %v6473 = vsub.f32 %v6249, %v6363
      %v6474 = vsub.f32 %v6250, %v6363
      %v6475 = vsub.f32 %v6251, %v6363
      %v6476 = vsub.f32 %v6252, %v6367
      %v6477 = vsub.f32 %v6253, %v6367
      %v6478 = vsub.f32 %v6254, %v6367
      %v6479 = vsub.f32 %v6255, %v6371
      %v6480 = vsub.f32 %v6256, %v6371
      %v6481 = vsub.f32 %v6257, %v6371
      %v6482 = vsub.f32 %v6258, %v6375
      %v6483 = vsub.f32 %v6259, %v6375
      %v6484 = vsub.f32 %v6260, %v6375
      %v6485 = vsub.f32 %v6261, %v6379
      %v6486 = vsub.f32 %v6262, %v6379
      %v6487 = vsub.f32 %v6263, %v6379
      %v6488 = vsub.f32 %v6264, %v6383
      %v6489 = vsub.f32 %v6265, %v6383
      %v6490 = vsub.f32 %v6266, %v6383
      %v6491 = vsub.f32 %v6267, %v6387
      %v6492 = vsub.f32 %v6268, %v6387
      %v6493 = vsub.f32 %v6269, %v6387
      %v6494 = vsub.f32 %v6270, %v6391
      %v6495 = vsub.f32 %v6271, %v6391
      %v6496 = vsub.f32 %v6272, %v6391
      %v6497 = vsub.f32 %v6273, %v6395
      %v6498 = vsub.f32 %v6274, %v6395
      %v6499 = vsub.f32 %v6275, %v6395
      %v6500 = vsub.f32 %v6276, %v6399
      %v6501 = vsub.f32 %v6277, %v6399
      %v6502 = vsub.f32 %v6278, %v6399
      %v6503 = vsub.f32 %v6279, %v6403
      %v6504 = vsub.f32 %v6280, %v6403
      %v6505 = vsub.f32 %v6281, %v6403
      %v6506 = vsub.f32 %v6282, %v6407
      %v6507 = vsub.f32 %v6283, %v6407
      %v6508 = vsub.f32 %v6284, %v6407
      %v6509 = vsub.f32 %v6285, %v6411
      %v6510 = vsub.f32 %v6286, %v6411
      %v6511 = vsub.f32 %v6287, %v6411
      %v6512 = vsub.f32 %v6288, %v6415
      %v6513 = vsub.f32 %v6289, %v6415
      %v6514 = vsub.f32 %v6290, %v6415
      %v6515 = vsub.f32 %v6291, %v6419
      %v6516 = vsub.f32 %v6292, %v6419
      %v6517 = vsub.f32 %v6293, %v6419
      %v6518 = vsub.f32 %v6294, %v6423
      %v6519 = vsub.f32 %v6295, %v6423
      %v6520 = vsub.f32 %v6296, %v6423
      %v6521 = vsub.f32 %v6297, %v6427
      %v6522 = vsub.f32 %v6298, %v6427
      %v6523 = vsub.f32 %v6299, %v6427
      %v6524 = vmul.f32 %v6428, 1.442695
      %v6525 = vpow.pop %v6524
      %v6526 = vmul.f32 %v6429, 1.442695
      %v6527 = vpow.pop %v6526
      %v6528 = vmul.f32 %v6430, 1.442695
      %v6529 = vpow.pop %v6528
      %v6530 = vmul.f32 %v6431, 1.442695
      %v6531 = vpow.pop %v6530
      %v6532 = vmul.f32 %v6432, 1.442695
      %v6533 = vpow.pop %v6532
      %v6534 = vmul.f32 %v6433, 1.442695
      %v6535 = vpow.pop %v6534
      %v6536 = vmul.f32 %v6434, 1.442695
      %v6537 = vpow.pop %v6536
      %v6538 = vmul.f32 %v6435, 1.442695
      %v6539 = vpow.pop %v6538
      %v6540 = vmul.f32 %v6436, 1.442695
      %v6541 = vpow.pop %v6540
      %v6542 = vmul.f32 %v6437, 1.442695
      %v6543 = vpow.pop %v6542
      %v6544 = vmul.f32 %v6438, 1.442695
      %v6545 = vpow.pop %v6544
      %v6546 = vmul.f32 %v6439, 1.442695
      %v6547 = vpow.pop %v6546
      %v6548 = vmul.f32 %v6440, 1.442695
      %v6549 = vpow.pop %v6548
      %v6550 = vmul.f32 %v6441, 1.442695
      %v6551 = vpow.pop %v6550
      %v6552 = vmul.f32 %v6442, 1.442695
      %v6553 = vpow.pop %v6552
      %v6554 = vmul.f32 %v6443, 1.442695
      %v6555 = vpow.pop %v6554
      %v6556 = vmul.f32 %v6444, 1.442695
      %v6557 = vpow.pop %v6556
      %v6558 = vmul.f32 %v6445, 1.442695
      %v6559 = vpow.pop %v6558
      %v6560 = vmul.f32 %v6446, 1.442695
      %v6561 = vpow.pop %v6560
      %v6562 = vmul.f32 %v6447, 1.442695
      %v6563 = vpow.pop %v6562
      %v6564 = vmul.f32 %v6448, 1.442695
      %v6565 = vpow.pop %v6564
      %v6566 = vmul.f32 %v6449, 1.442695
      %v6567 = vpow.pop %v6566
      %v6568 = vmul.f32 %v6450, 1.442695
      %v6569 = vpow.pop %v6568
      %v6570 = vmul.f32 %v6451, 1.442695
      %v6571 = vpow.pop %v6570
      %v6572 = vmul.f32 %v6452, 1.442695
      %v6573 = vpow.pop %v6572
      %v6574 = vmul.f32 %v6453, 1.442695
      %v6575 = vpow.pop %v6574
      %v6576 = vmul.f32 %v6454, 1.442695
      %v6577 = vpow.pop %v6576
      %v6578 = vmul.f32 %v6455, 1.442695
      %v6579 = vpow.pop %v6578
      %v6580 = vmul.f32 %v6456, 1.442695
      %v6581 = vpow.pop %v6580
      %v6582 = vmul.f32 %v6457, 1.442695
      %v6583 = vpow.pop %v6582
      %v6584 = vmul.f32 %v6458, 1.442695
      %v6585 = vpow.pop %v6584
      %v6586 = vmul.f32 %v6459, 1.442695
      %v6587 = vpow.pop %v6586
      %v6588 = vmul.f32 %v6460, 1.442695
      %v6589 = vpow.pop %v6588
      %v6590 = vmul.f32 %v6461, 1.442695
      %v6591 = vpow.pop %v6590
      %v6592 = vmul.f32 %v6462, 1.442695
      %v6593 = vpow.pop %v6592
      %v6594 = vmul.f32 %v6463, 1.442695
      %v6595 = vpow.pop %v6594
      %v6596 = vmul.f32 %v6464, 1.442695
      %v6597 = vpow.pop %v6596
      %v6598 = vmul.f32 %v6465, 1.442695
      %v6599 = vpow.pop %v6598
      %v6600 = vmul.f32 %v6466, 1.442695
      %v6601 = vpow.pop %v6600
      %v6602 = vmul.f32 %v6467, 1.442695
      %v6603 = vpow.pop %v6602
      %v6604 = vmul.f32 %v6468, 1.442695
      %v6605 = vpow.pop %v6604
      %v6606 = vmul.f32 %v6469, 1.442695
      %v6607 = vpow.pop %v6606
      %v6608 = vmul.f32 %v6470, 1.442695
      %v6609 = vpow.pop %v6608
      %v6610 = vmul.f32 %v6471, 1.442695
      %v6611 = vpow.pop %v6610
      %v6612 = vmul.f32 %v6472, 1.442695
      %v6613 = vpow.pop %v6612
      %v6614 = vmul.f32 %v6473, 1.442695
      %v6615 = vpow.pop %v6614
      %v6616 = vmul.f32 %v6474, 1.442695
      %v6617 = vpow.pop %v6616
      %v6618 = vmul.f32 %v6475, 1.442695
      %v6619 = vpow.pop %v6618
      %v6620 = vmul.f32 %v6476, 1.442695
      %v6621 = vpow.pop %v6620
      %v6622 = vmul.f32 %v6477, 1.442695
      %v6623 = vpow.pop %v6622
      %v6624 = vmul.f32 %v6478, 1.442695
      %v6625 = vpow.pop %v6624
      %v6626 = vmul.f32 %v6479, 1.442695
      %v6627 = vpow.pop %v6626
      %v6628 = vmul.f32 %v6480, 1.442695
      %v6629 = vpow.pop %v6628
      %v6630 = vmul.f32 %v6481, 1.442695
      %v6631 = vpow.pop %v6630
      %v6632 = vmul.f32 %v6482, 1.442695
      %v6633 = vpow.pop %v6632
      %v6634 = vmul.f32 %v6483, 1.442695
      %v6635 = vpow.pop %v6634
      %v6636 = vmul.f32 %v6484, 1.442695
      %v6637 = vpow.pop %v6636
      %v6638 = vmul.f32 %v6485, 1.442695
      %v6639 = vpow.pop %v6638
      %v6640 = vmul.f32 %v6486, 1.442695
      %v6641 = vpow.pop %v6640
      %v6642 = vmul.f32 %v6487, 1.442695
      %v6643 = vpow.pop %v6642
      %v6644 = vmul.f32 %v6488, 1.442695
      %v6645 = vpow.pop %v6644
      %v6646 = vmul.f32 %v6489, 1.442695
      %v6647 = vpow.pop %v6646
      %v6648 = vmul.f32 %v6490, 1.442695
      %v6649 = vpow.pop %v6648
      %v6650 = vmul.f32 %v6491, 1.442695
      %v6651 = vpow.pop %v6650
      %v6652 = vmul.f32 %v6492, 1.442695
      %v6653 = vpow.pop %v6652
      %v6654 = vmul.f32 %v6493, 1.442695
      %v6655 = vpow.pop %v6654
      %v6656 = vmul.f32 %v6494, 1.442695
      %v6657 = vpow.pop %v6656
      %v6658 = vmul.f32 %v6495, 1.442695
      %v6659 = vpow.pop %v6658
      %v6660 = vmul.f32 %v6496, 1.442695
      %v6661 = vpow.pop %v6660
      %v6662 = vmul.f32 %v6497, 1.442695
      %v6663 = vpow.pop %v6662
      %v6664 = vmul.f32 %v6498, 1.442695
      %v6665 = vpow.pop %v6664
      %v6666 = vmul.f32 %v6499, 1.442695
      %v6667 = vpow.pop %v6666
      %v6668 = vmul.f32 %v6500, 1.442695
      %v6669 = vpow.pop %v6668
      %v6670 = vmul.f32 %v6501, 1.442695
      %v6671 = vpow.pop %v6670
      %v6672 = vmul.f32 %v6502, 1.442695
      %v6673 = vpow.pop %v6672
      %v6674 = vmul.f32 %v6503, 1.442695
      %v6675 = vpow.pop %v6674
      %v6676 = vmul.f32 %v6504, 1.442695
      %v6677 = vpow.pop %v6676
      %v6678 = vmul.f32 %v6505, 1.442695
      %v6679 = vpow.pop %v6678
      %v6680 = vmul.f32 %v6506, 1.442695
      %v6681 = vpow.pop %v6680
      %v6682 = vmul.f32 %v6507, 1.442695
      %v6683 = vpow.pop %v6682
      %v6684 = vmul.f32 %v6508, 1.442695
      %v6685 = vpow.pop %v6684
      %v6686 = vmul.f32 %v6509, 1.442695
      %v6687 = vpow.pop %v6686
      %v6688 = vmul.f32 %v6510, 1.442695
      %v6689 = vpow.pop %v6688
      %v6690 = vmul.f32 %v6511, 1.442695
      %v6691 = vpow.pop %v6690
      %v6692 = vmul.f32 %v6512, 1.442695
      %v6693 = vpow.pop %v6692
      %v6694 = vmul.f32 %v6513, 1.442695
      %v6695 = vpow.pop %v6694
      %v6696 = vmul.f32 %v6514, 1.442695
      %v6697 = vpow.pop %v6696
      %v6698 = vmul.f32 %v6515, 1.442695
      %v6699 = vpow.pop %v6698
      %v6700 = vmul.f32 %v6516, 1.442695
      %v6701 = vpow.pop %v6700
      %v6702 = vmul.f32 %v6517, 1.442695
      %v6703 = vpow.pop %v6702
      %v6704 = vmul.f32 %v6518, 1.442695
      %v6705 = vpow.pop %v6704
      %v6706 = vmul.f32 %v6519, 1.442695
      %v6707 = vpow.pop %v6706
      %v6708 = vmul.f32 %v6520, 1.442695
      %v6709 = vpow.pop %v6708
      %v6710 = vmul.f32 %v6521, 1.442695
      %v6711 = vpow.pop %v6710
      %v6712 = vmul.f32 %v6522, 1.442695
      %v6713 = vpow.pop %v6712
      %v6714 = vmul.f32 %v6523, 1.442695
      %v6715 = vpow.pop %v6714
      %v6716 = vadd.f32 %v6525, %v6527
      %v6717 = vadd.f32 %v6716, %v6529
      %6718 = vadd.xlane.f32.xlu0 %v6717
      %v6719 = vpop.xlane.xlu0 %6718
      %v6720 = vadd.f32 %v6531, %v6533
      %v6721 = vadd.f32 %v6720, %v6535
      %6722 = vadd.xlane.f32.xlu0 %v6721
      %v6723 = vpop.xlane.xlu0 %6722
      %v6724 = vadd.f32 %v6537, %v6539
      %v6725 = vadd.f32 %v6724, %v6541
      %6726 = vadd.xlane.f32.xlu0 %v6725
      %v6727 = vpop.xlane.xlu0 %6726
      %v6728 = vadd.f32 %v6543, %v6545
      %v6729 = vadd.f32 %v6728, %v6547
      %6730 = vadd.xlane.f32.xlu0 %v6729
      %v6731 = vpop.xlane.xlu0 %6730
      %v6732 = vadd.f32 %v6549, %v6551
      %v6733 = vadd.f32 %v6732, %v6553
      %6734 = vadd.xlane.f32.xlu0 %v6733
      %v6735 = vpop.xlane.xlu0 %6734
      %v6736 = vadd.f32 %v6555, %v6557
      %v6737 = vadd.f32 %v6736, %v6559
      %6738 = vadd.xlane.f32.xlu0 %v6737
      %v6739 = vpop.xlane.xlu0 %6738
      %v6740 = vadd.f32 %v6561, %v6563
      %v6741 = vadd.f32 %v6740, %v6565
      %6742 = vadd.xlane.f32.xlu0 %v6741
      %v6743 = vpop.xlane.xlu0 %6742
      %v6744 = vadd.f32 %v6567, %v6569
      %v6745 = vadd.f32 %v6744, %v6571
      %6746 = vadd.xlane.f32.xlu0 %v6745
      %v6747 = vpop.xlane.xlu0 %6746
      %v6748 = vadd.f32 %v6573, %v6575
      %v6749 = vadd.f32 %v6748, %v6577
      %6750 = vadd.xlane.f32.xlu0 %v6749
      %v6751 = vpop.xlane.xlu0 %6750
      %v6752 = vadd.f32 %v6579, %v6581
      %v6753 = vadd.f32 %v6752, %v6583
      %6754 = vadd.xlane.f32.xlu0 %v6753
      %v6755 = vpop.xlane.xlu0 %6754
      %v6756 = vadd.f32 %v6585, %v6587
      %v6757 = vadd.f32 %v6756, %v6589
      %6758 = vadd.xlane.f32.xlu0 %v6757
      %v6759 = vpop.xlane.xlu0 %6758
      %v6760 = vadd.f32 %v6591, %v6593
      %v6761 = vadd.f32 %v6760, %v6595
      %6762 = vadd.xlane.f32.xlu0 %v6761
      %v6763 = vpop.xlane.xlu0 %6762
      %v6764 = vadd.f32 %v6597, %v6599
      %v6765 = vadd.f32 %v6764, %v6601
      %6766 = vadd.xlane.f32.xlu0 %v6765
      %v6767 = vpop.xlane.xlu0 %6766
      %v6768 = vadd.f32 %v6603, %v6605
      %v6769 = vadd.f32 %v6768, %v6607
      %6770 = vadd.xlane.f32.xlu0 %v6769
      %v6771 = vpop.xlane.xlu0 %6770
      %v6772 = vadd.f32 %v6609, %v6611
      %v6773 = vadd.f32 %v6772, %v6613
      %6774 = vadd.xlane.f32.xlu0 %v6773
      %v6775 = vpop.xlane.xlu0 %6774
      %v6776 = vadd.f32 %v6615, %v6617
      %v6777 = vadd.f32 %v6776, %v6619
      %6778 = vadd.xlane.f32.xlu0 %v6777
      %v6779 = vpop.xlane.xlu0 %6778
      %v6780 = vadd.f32 %v6621, %v6623
      %v6781 = vadd.f32 %v6780, %v6625
      %6782 = vadd.xlane.f32.xlu0 %v6781
      %v6783 = vpop.xlane.xlu0 %6782
      %v6784 = vadd.f32 %v6627, %v6629
      %v6785 = vadd.f32 %v6784, %v6631
      %6786 = vadd.xlane.f32.xlu0 %v6785
      %v6787 = vpop.xlane.xlu0 %6786
      %v6788 = vadd.f32 %v6633, %v6635
      %v6789 = vadd.f32 %v6788, %v6637
      %6790 = vadd.xlane.f32.xlu0 %v6789
      %v6791 = vpop.xlane.xlu0 %6790
      %v6792 = vadd.f32 %v6639, %v6641
      %v6793 = vadd.f32 %v6792, %v6643
      %6794 = vadd.xlane.f32.xlu0 %v6793
      %v6795 = vpop.xlane.xlu0 %6794
      %v6796 = vadd.f32 %v6645, %v6647
      %v6797 = vadd.f32 %v6796, %v6649
      %6798 = vadd.xlane.f32.xlu0 %v6797
      %v6799 = vpop.xlane.xlu0 %6798
      %v6800 = vadd.f32 %v6651, %v6653
      %v6801 = vadd.f32 %v6800, %v6655
      %6802 = vadd.xlane.f32.xlu0 %v6801
      %v6803 = vpop.xlane.xlu0 %6802
      %v6804 = vadd.f32 %v6657, %v6659
      %v6805 = vadd.f32 %v6804, %v6661
      %6806 = vadd.xlane.f32.xlu0 %v6805
      %v6807 = vpop.xlane.xlu0 %6806
      %v6808 = vadd.f32 %v6663, %v6665
      %v6809 = vadd.f32 %v6808, %v6667
      %6810 = vadd.xlane.f32.xlu0 %v6809
      %v6811 = vpop.xlane.xlu0 %6810
      %v6812 = vadd.f32 %v6669, %v6671
      %v6813 = vadd.f32 %v6812, %v6673
      %6814 = vadd.xlane.f32.xlu0 %v6813
      %v6815 = vpop.xlane.xlu0 %6814
      %v6816 = vadd.f32 %v6675, %v6677
      %v6817 = vadd.f32 %v6816, %v6679
      %6818 = vadd.xlane.f32.xlu0 %v6817
      %v6819 = vpop.xlane.xlu0 %6818
      %v6820 = vadd.f32 %v6681, %v6683
      %v6821 = vadd.f32 %v6820, %v6685
      %6822 = vadd.xlane.f32.xlu0 %v6821
      %v6823 = vpop.xlane.xlu0 %6822
      %v6824 = vadd.f32 %v6687, %v6689
      %v6825 = vadd.f32 %v6824, %v6691
      %6826 = vadd.xlane.f32.xlu0 %v6825
      %v6827 = vpop.xlane.xlu0 %6826
      %v6828 = vadd.f32 %v6693, %v6695
      %v6829 = vadd.f32 %v6828, %v6697
      %6830 = vadd.xlane.f32.xlu0 %v6829
      %v6831 = vpop.xlane.xlu0 %6830
      %v6832 = vadd.f32 %v6699, %v6701
      %v6833 = vadd.f32 %v6832, %v6703
      %6834 = vadd.xlane.f32.xlu0 %v6833
      %v6835 = vpop.xlane.xlu0 %6834
      %v6836 = vadd.f32 %v6705, %v6707
      %v6837 = vadd.f32 %v6836, %v6709
      %6838 = vadd.xlane.f32.xlu0 %v6837
      %v6839 = vpop.xlane.xlu0 %6838
      %v6840 = vadd.f32 %v6711, %v6713
      %v6841 = vadd.f32 %v6840, %v6715
      %6842 = vadd.xlane.f32.xlu0 %v6841
      %v6843 = vpop.xlane.xlu0 %6842
      %v6844 = vpack.c.bf16 %v6531, %v6525
      %v6845 = vpack.c.bf16 %v6533, %v6527
      %v6846 = vpack.c.bf16 %v6535, %v6529
      %v6847 = vpack.c.bf16 %v6543, %v6537
      %v6848 = vpack.c.bf16 %v6545, %v6539
      %v6849 = vpack.c.bf16 %v6547, %v6541
      %v6850 = vpack.c.bf16 %v6555, %v6549
      %v6851 = vpack.c.bf16 %v6557, %v6551
      %v6852 = vpack.c.bf16 %v6559, %v6553
      %v6853 = vpack.c.bf16 %v6567, %v6561
      %v6854 = vpack.c.bf16 %v6569, %v6563
      %v6855 = vpack.c.bf16 %v6571, %v6565
      %v6856 = vpack.c.bf16 %v6579, %v6573
      %v6857 = vpack.c.bf16 %v6581, %v6575
      %v6858 = vpack.c.bf16 %v6583, %v6577
      %v6859 = vpack.c.bf16 %v6591, %v6585
      %v6860 = vpack.c.bf16 %v6593, %v6587
      %v6861 = vpack.c.bf16 %v6595, %v6589
      %v6862 = vpack.c.bf16 %v6603, %v6597
      %v6863 = vpack.c.bf16 %v6605, %v6599
      %v6864 = vpack.c.bf16 %v6607, %v6601
      %v6865 = vpack.c.bf16 %v6615, %v6609
      %v6866 = vpack.c.bf16 %v6617, %v6611
      %v6867 = vpack.c.bf16 %v6619, %v6613
      %v6868 = vpack.c.bf16 %v6627, %v6621
      %v6869 = vpack.c.bf16 %v6629, %v6623
      %v6870 = vpack.c.bf16 %v6631, %v6625
      %v6871 = vpack.c.bf16 %v6639, %v6633
      %v6872 = vpack.c.bf16 %v6641, %v6635
      %v6873 = vpack.c.bf16 %v6643, %v6637
      %v6874 = vpack.c.bf16 %v6651, %v6645
      %v6875 = vpack.c.bf16 %v6653, %v6647
      %v6876 = vpack.c.bf16 %v6655, %v6649
      %v6877 = vpack.c.bf16 %v6663, %v6657
      %v6878 = vpack.c.bf16 %v6665, %v6659
      %v6879 = vpack.c.bf16 %v6667, %v6661
      %v6880 = vpack.c.bf16 %v6675, %v6669
      %v6881 = vpack.c.bf16 %v6677, %v6671
      %v6882 = vpack.c.bf16 %v6679, %v6673
      %v6883 = vpack.c.bf16 %v6687, %v6681
      %v6884 = vpack.c.bf16 %v6689, %v6683
      %v6885 = vpack.c.bf16 %v6691, %v6685
      %v6886 = vpack.c.bf16 %v6699, %v6693
      %v6887 = vpack.c.bf16 %v6701, %v6695
      %v6888 = vpack.c.bf16 %v6703, %v6697
      %v6889 = vpack.c.bf16 %v6711, %v6705
      %v6890 = vpack.c.bf16 %v6713, %v6707
      %v6891 = vpack.c.bf16 %v6715, %v6709
      %s6892 = scalar_lea.vmem %s239, 576
      %v6893 = vld [vmem:[%s6892] sm:$0xf]
      %v6894 = vld [vmem:[%s6892 + $0x4] sm:$0xf]
      %v6895 = vld [vmem:[%s6892 + $0x8] sm:$0xf]
      %v6896 = vld [vmem:[%s6892 + $0xc] sm:$0xf]
      %v6897 = vld [vmem:[%s6892 + $0x10] sm:$0xf]
      %v6898 = vld [vmem:[%s6892 + $0x14] sm:$0xf]
      %v6899 = vld [vmem:[%s6892 + $0x18] sm:$0xf]
      %v6900 = vld [vmem:[%s6892 + $0x1c] sm:$0xf]
      %v6901 = vld [vmem:[%s6892 + $0x20] sm:$0xf]
      %v6902 = vld [vmem:[%s6892 + $0x24] sm:$0xf]
      %v6903 = vld [vmem:[%s6892 + $0x28] sm:$0xf]
      %v6904 = vld [vmem:[%s6892 + $0x2c] sm:$0xf]
      %v6905 = vld [vmem:[%s6892 + $0x30] sm:$0xf]
      %v6906 = vld [vmem:[%s6892 + $0x34] sm:$0xf]
      %v6907 = vld [vmem:[%s6892 + $0x38] sm:$0xf]
      %v6908 = vld [vmem:[%s6892 + $0x3c] sm:$0xf]
      %v6909 = vld [vmem:[%s6892 + $0x40] sm:$0xf]
      %v6910 = vld [vmem:[%s6892 + $0x44] sm:$0xf]
      %v6911 = vld [vmem:[%s6892 + $0x48] sm:$0xf]
      %v6912 = vld [vmem:[%s6892 + $0x4c] sm:$0xf]
      %v6913 = vld [vmem:[%s6892 + $0x50] sm:$0xf]
      %v6914 = vld [vmem:[%s6892 + $0x54] sm:$0xf]
      %v6915 = vld [vmem:[%s6892 + $0x58] sm:$0xf]
      %v6916 = vld [vmem:[%s6892 + $0x5c] sm:$0xf]
      %v6917 = vld [vmem:[%s6892 + $0x60] sm:$0xf]
      %v6918 = vld [vmem:[%s6892 + $0x64] sm:$0xf]
      %v6919 = vld [vmem:[%s6892 + $0x68] sm:$0xf]
      %v6920 = vld [vmem:[%s6892 + $0x6c] sm:$0xf]
      %v6921 = vld [vmem:[%s6892 + $0x70] sm:$0xf]
      %v6922 = vld [vmem:[%s6892 + $0x74] sm:$0xf]
      %v6923 = vld [vmem:[%s6892 + $0x78] sm:$0xf]
      %v6924 = vld [vmem:[%s6892 + $0x7c] sm:$0xf]
      %v6925 = vld [vmem:[%s6892 + $0x80] sm:$0xf]
      %v6926 = vld [vmem:[%s6892 + $0x84] sm:$0xf]
      %v6927 = vld [vmem:[%s6892 + $0x88] sm:$0xf]
      %v6928 = vld [vmem:[%s6892 + $0x8c] sm:$0xf]
      %v6929 = vld [vmem:[%s6892 + $0x90] sm:$0xf]
      %v6930 = vld [vmem:[%s6892 + $0x94] sm:$0xf]
      %v6931 = vld [vmem:[%s6892 + $0x98] sm:$0xf]
      %v6932 = vld [vmem:[%s6892 + $0x9c] sm:$0xf]
      %v6933 = vld [vmem:[%s6892 + $0xa0] sm:$0xf]
      %v6934 = vld [vmem:[%s6892 + $0xa4] sm:$0xf]
      %v6935 = vld [vmem:[%s6892 + $0xa8] sm:$0xf]
      %v6936 = vld [vmem:[%s6892 + $0xac] sm:$0xf]
      %v6937 = vld [vmem:[%s6892 + $0xb0] sm:$0xf]
      %v6938 = vld [vmem:[%s6892 + $0xb4] sm:$0xf]
      %v6939 = vld [vmem:[%s6892 + $0xb8] sm:$0xf]
      %v6940 = vld [vmem:[%s6892 + $0xbc] sm:$0xf]
      %v6989 = vunpack.c.l.b16 %v6893
      %v6990 = vunpack.c.l.b16 %v6894
      %v6991 = vunpack.c.l.b16 %v6895
      %v6992 = vunpack.c.l.b16 %v6896
      %v6993 = vunpack.c.l.b16 %v6897
      %v6994 = vunpack.c.l.b16 %v6898
      %v6995 = vunpack.c.l.b16 %v6899
      %v6996 = vunpack.c.l.b16 %v6900
      %v6997 = vunpack.c.l.b16 %v6901
      %v6998 = vunpack.c.l.b16 %v6902
      %v6999 = vunpack.c.l.b16 %v6903
      %v7000 = vunpack.c.l.b16 %v6904
      %v7001 = vunpack.c.l.b16 %v6905
      %v7002 = vunpack.c.l.b16 %v6906
      %v7003 = vunpack.c.l.b16 %v6907
      %v7004 = vunpack.c.l.b16 %v6908
      %v7005 = vunpack.c.l.b16 %v6909
      %v7006 = vunpack.c.l.b16 %v6910
      %v7007 = vunpack.c.l.b16 %v6911
      %v7008 = vunpack.c.l.b16 %v6912
      %v7009 = vunpack.c.l.b16 %v6913
      %v7010 = vunpack.c.l.b16 %v6914
      %v7011 = vunpack.c.l.b16 %v6915
      %v7012 = vunpack.c.l.b16 %v6916
      %v7013 = vunpack.c.l.b16 %v6917
      %v7014 = vunpack.c.l.b16 %v6918
      %v7015 = vunpack.c.l.b16 %v6919
      %v7016 = vunpack.c.l.b16 %v6920
      %v7017 = vunpack.c.l.b16 %v6921
      %v7018 = vunpack.c.l.b16 %v6922
      %v7019 = vunpack.c.l.b16 %v6923
      %v7020 = vunpack.c.l.b16 %v6924
      %v7021 = vunpack.c.l.b16 %v6925
      %v7022 = vunpack.c.l.b16 %v6926
      %v7023 = vunpack.c.l.b16 %v6927
      %v7024 = vunpack.c.l.b16 %v6928
      %v7025 = vunpack.c.l.b16 %v6929
      %v7026 = vunpack.c.l.b16 %v6930
      %v7027 = vunpack.c.l.b16 %v6931
      %v7028 = vunpack.c.l.b16 %v6932
      %v7029 = vunpack.c.l.b16 %v6933
      %v7030 = vunpack.c.l.b16 %v6934
      %v7031 = vunpack.c.l.b16 %v6935
      %v7032 = vunpack.c.l.b16 %v6936
      %v7033 = vunpack.c.l.b16 %v6937
      %v7034 = vunpack.c.l.b16 %v6938
      %v7035 = vunpack.c.l.b16 %v6939
      %v7036 = vunpack.c.l.b16 %v6940
      %v7037 = vpack.c.b16 %v6990, %v6989
      %v7038 = vpack.c.b16 %v6992, %v6991
      %v7039 = vpack.c.b16 %v6994, %v6993
      %v7040 = vpack.c.b16 %v6996, %v6995
      %v7041 = vpack.c.b16 %v6998, %v6997
      %v7042 = vpack.c.b16 %v7000, %v6999
      %v7043 = vpack.c.b16 %v7002, %v7001
      %v7044 = vpack.c.b16 %v7004, %v7003
      %v7045 = vpack.c.b16 %v7006, %v7005
      %v7046 = vpack.c.b16 %v7008, %v7007
      %v7047 = vpack.c.b16 %v7010, %v7009
      %v7048 = vpack.c.b16 %v7012, %v7011
      %v7049 = vpack.c.b16 %v7014, %v7013
      %v7050 = vpack.c.b16 %v7016, %v7015
      %v7051 = vpack.c.b16 %v7018, %v7017
      %v7052 = vpack.c.b16 %v7020, %v7019
      %v7053 = vpack.c.b16 %v7022, %v7021
      %v7054 = vpack.c.b16 %v7024, %v7023
      %v7055 = vpack.c.b16 %v7026, %v7025
      %v7056 = vpack.c.b16 %v7028, %v7027
      %v7057 = vpack.c.b16 %v7030, %v7029
      %v7058 = vpack.c.b16 %v7032, %v7031
      %v7059 = vpack.c.b16 %v7034, %v7033
      %v7060 = vpack.c.b16 %v7036, %v7035
      %7085 = vmatprep.subr.bf16.mxu0 0
      %7086 = vmatpush1.bf16.msra.mxu0 %v7037
      %7087 = vmatprep.subr.bf16.mxu0 0
      %7088 = vmatpush1.bf16.msra.mxu0 %v7038
      %7089 = vmatprep.subr.bf16.mxu0 0
      %7090 = vmatpush1.bf16.msra.mxu0 %v7039
      %7091 = vmatprep.subr.bf16.mxu0 0
      %7092 = vmatpush1.bf16.msra.mxu0 %v7040
      %7093 = vmatprep.subr.bf16.mxu0 0
      %7094 = vmatpush1.bf16.msra.mxu0 %v7041
      %7095 = vmatprep.subr.bf16.mxu0 0
      %7096 = vmatpush1.bf16.msra.mxu0 %v7042
      %7097 = vmatprep.subr.bf16.mxu0 0
      %7098 = vmatpush1.bf16.msra.mxu0 %v7043
      %7099 = vmatprep.subr.bf16.mxu0 0
      %7100 = vmatpush1.bf16.msra.mxu0 %v7044
      %7101 = vmatprep.subr.bf16.mxu0 0
      %7102 = vmatpush1.bf16.msra.mxu0 %v7045
      %7103 = vmatprep.subr.bf16.mxu0 0
      %7104 = vmatpush1.bf16.msra.mxu0 %v7046
      %7105 = vmatprep.subr.bf16.mxu0 0
      %7106 = vmatpush1.bf16.msra.mxu0 %v7047
      %7107 = vmatprep.subr.bf16.mxu0 0
      %7108 = vmatpush1.bf16.msra.mxu0 %v7048
      %7109 = vmatprep.subr.bf16.mxu0 0
      %7110 = vmatpush1.bf16.msra.mxu0 %v7049
      %7111 = vmatprep.subr.bf16.mxu0 0
      %7112 = vmatpush1.bf16.msra.mxu0 %v7050
      %7113 = vmatprep.subr.bf16.mxu0 0
      %7114 = vmatpush1.bf16.msra.mxu0 %v7051
      %7115 = vmatprep.subr.bf16.mxu0 0
      %7116 = vmatpush1.bf16.msra.mxu0 %v7052
      %7117 = vmatprep.mubr.bf16.mxu0 %v6845
      %7118 = vmatmul.mubr.bf16.gmra.mrb[0].mxu0 %v6844
      %v7119 = vpop.f32.mrb[0].mxu0
      %v7120 = vadd.f32 0.0, %v7119
      %v7121 = vpop.f32.mrb[0].mxu0
      %v7122 = vpop.f32.mrb[0].mxu0
      %v7123 = vadd.f32 0.0, %v7122
      %v7124 = vpop.f32.mrb[0].mxu0
      %7125 = vmatprep.mubr.bf16.mxu0 %v6848
      %7126 = vmatmul.mubr.bf16.gmra.mrb[0].mxu0 %v6847
      %v7127 = vpop.f32.mrb[0].mxu0
      %v7128 = vadd.f32 0.0, %v7127
      %v7129 = vpop.f32.mrb[0].mxu0
      %v7130 = vpop.f32.mrb[0].mxu0
      %v7131 = vadd.f32 0.0, %v7130
      %v7132 = vpop.f32.mrb[0].mxu0
      %7133 = vmatprep.mubr.bf16.mxu0 %v6851
      %7134 = vmatmul.mubr.bf16.gmra.mrb[0].mxu0 %v6850
      %v7135 = vpop.f32.mrb[0].mxu0
      %v7136 = vadd.f32 0.0, %v7135
      %v7137 = vpop.f32.mrb[0].mxu0
      %v7138 = vpop.f32.mrb[0].mxu0
      %v7139 = vadd.f32 0.0, %v7138
      %v7140 = vpop.f32.mrb[0].mxu0
      %7141 = vmatprep.mubr.bf16.mxu0 %v6854
      %7142 = vmatmul.mubr.bf16.gmra.mrb[0].mxu0 %v6853
      %v7143 = vpop.f32.mrb[0].mxu0
      %v7144 = vadd.f32 0.0, %v7143
      %v7145 = vpop.f32.mrb[0].mxu0
      %v7146 = vpop.f32.mrb[0].mxu0
      %v7147 = vadd.f32 0.0, %v7146
      %v7148 = vpop.f32.mrb[0].mxu0
      %7149 = vmatprep.mubr.bf16.mxu0 %v6857
      %7150 = vmatmul.mubr.bf16.gmra.mrb[0].mxu0 %v6856
      %v7151 = vpop.f32.mrb[0].mxu0
      %v7152 = vadd.f32 0.0, %v7151
      %v7153 = vpop.f32.mrb[0].mxu0
      %v7154 = vpop.f32.mrb[0].mxu0
      %v7155 = vadd.f32 0.0, %v7154
      %v7156 = vpop.f32.mrb[0].mxu0
      %7157 = vmatprep.mubr.bf16.mxu0 %v6860
      %7158 = vmatmul.mubr.bf16.gmra.mrb[0].mxu0 %v6859
      %v7159 = vpop.f32.mrb[0].mxu0
      %v7160 = vadd.f32 0.0, %v7159
      %v7161 = vpop.f32.mrb[0].mxu0
      %v7162 = vpop.f32.mrb[0].mxu0
      %v7163 = vadd.f32 0.0, %v7162
      %v7164 = vpop.f32.mrb[0].mxu0
      %7165 = vmatprep.mubr.bf16.mxu0 %v6863
      %7166 = vmatmul.mubr.bf16.gmra.mrb[0].mxu0 %v6862
      %v7167 = vpop.f32.mrb[0].mxu0
      %v7168 = vadd.f32 0.0, %v7167
      %v7169 = vpop.f32.mrb[0].mxu0
      %v7170 = vpop.f32.mrb[0].mxu0
      %v7171 = vadd.f32 0.0, %v7170
      %v7172 = vpop.f32.mrb[0].mxu0
      %7173 = vmatprep.mubr.bf16.mxu0 %v6866
      %7174 = vmatmul.mubr.bf16.gmra.mrb[0].mxu0 %v6865
      %v7175 = vpop.f32.mrb[0].mxu0
      %v7176 = vadd.f32 0.0, %v7175
      %v7177 = vpop.f32.mrb[0].mxu0
      %v7178 = vpop.f32.mrb[0].mxu0
      %v7179 = vadd.f32 0.0, %v7178
      %v7180 = vpop.f32.mrb[0].mxu0
      %7181 = vmatprep.mubr.bf16.mxu0 %v6869
      %7182 = vmatmul.mubr.bf16.gmra.mrb[0].mxu0 %v6868
      %v7183 = vpop.f32.mrb[0].mxu0
      %v7184 = vadd.f32 0.0, %v7183
      %v7185 = vpop.f32.mrb[0].mxu0
      %v7186 = vpop.f32.mrb[0].mxu0
      %v7187 = vadd.f32 0.0, %v7186
      %v7188 = vpop.f32.mrb[0].mxu0
      %7189 = vmatprep.mubr.bf16.mxu0 %v6872
      %7190 = vmatmul.mubr.bf16.gmra.mrb[0].mxu0 %v6871
      %v7191 = vpop.f32.mrb[0].mxu0
      %v7192 = vadd.f32 0.0, %v7191
      %v7193 = vpop.f32.mrb[0].mxu0
      %v7194 = vpop.f32.mrb[0].mxu0
      %v7195 = vadd.f32 0.0, %v7194
      %v7196 = vpop.f32.mrb[0].mxu0
      %7197 = vmatprep.mubr.bf16.mxu0 %v6875
      %7198 = vmatmul.mubr.bf16.gmra.mrb[0].mxu0 %v6874
      %v7199 = vpop.f32.mrb[0].mxu0
      %v7200 = vadd.f32 0.0, %v7199
      %v7201 = vpop.f32.mrb[0].mxu0
      %v7202 = vpop.f32.mrb[0].mxu0
      %v7203 = vadd.f32 0.0, %v7202
      %v7204 = vpop.f32.mrb[0].mxu0
      %7205 = vmatprep.mubr.bf16.mxu0 %v6878
      %7206 = vmatmul.mubr.bf16.gmra.mrb[0].mxu0 %v6877
      %v7207 = vpop.f32.mrb[0].mxu0
      %v7208 = vadd.f32 0.0, %v7207
      %v7209 = vpop.f32.mrb[0].mxu0
      %v7210 = vpop.f32.mrb[0].mxu0
      %v7211 = vadd.f32 0.0, %v7210
      %v7212 = vpop.f32.mrb[0].mxu0
      %7213 = vmatprep.mubr.bf16.mxu0 %v6881
      %7214 = vmatmul.mubr.bf16.gmra.mrb[0].mxu0 %v6880
      %v7215 = vpop.f32.mrb[0].mxu0
      %v7216 = vadd.f32 0.0, %v7215
      %v7217 = vpop.f32.mrb[0].mxu0
      %v7218 = vpop.f32.mrb[0].mxu0
      %v7219 = vadd.f32 0.0, %v7218
      %v7220 = vpop.f32.mrb[0].mxu0
      %7221 = vmatprep.mubr.bf16.mxu0 %v6884
      %7222 = vmatmul.mubr.bf16.gmra.mrb[0].mxu0 %v6883
      %v7223 = vpop.f32.mrb[0].mxu0
      %v7224 = vadd.f32 0.0, %v7223
      %v7225 = vpop.f32.mrb[0].mxu0
      %v7226 = vpop.f32.mrb[0].mxu0
      %v7227 = vadd.f32 0.0, %v7226
      %v7228 = vpop.f32.mrb[0].mxu0
      %7229 = vmatprep.mubr.bf16.mxu0 %v6887
      %7230 = vmatmul.mubr.bf16.gmra.mrb[0].mxu0 %v6886
      %v7231 = vpop.f32.mrb[0].mxu0
      %v7232 = vadd.f32 0.0, %v7231
      %v7233 = vpop.f32.mrb[0].mxu0
      %v7234 = vpop.f32.mrb[0].mxu0
      %v7235 = vadd.f32 0.0, %v7234
      %v7236 = vpop.f32.mrb[0].mxu0
      %7237 = vmatprep.mubr.bf16.mxu0 %v6890
      %7238 = vmatmul.mubr.bf16.gmra.mrb[0].mxu0 %v6889
      %v7239 = vpop.f32.mrb[0].mxu0
      %v7240 = vadd.f32 0.0, %v7239
      %v7241 = vpop.f32.mrb[0].mxu0
      %v7242 = vpop.f32.mrb[0].mxu0
      %v7243 = vadd.f32 0.0, %v7242
      %v7244 = vpop.f32.mrb[0].mxu0
      %7245 = vdwg.mxu0
      %7246 = vmatprep.subr.bf16.mxu0 0
      %7247 = vmatpush1.bf16.msra.mxu0 %v7053
      %7248 = vmatprep.subr.bf16.mxu0 0
      %7249 = vmatpush1.bf16.msra.mxu0 %v7054
      %7250 = vmatprep.subr.bf16.mxu0 0
      %7251 = vmatpush1.bf16.msra.mxu0 %v7055
      %7252 = vmatprep.subr.bf16.mxu0 0
      %7253 = vmatpush1.bf16.msra.mxu0 %v7056
      %7254 = vmatprep.subr.bf16.mxu0 0
      %7255 = vmatpush1.bf16.msra.mxu0 %v7057
      %7256 = vmatprep.subr.bf16.mxu0 0
      %7257 = vmatpush1.bf16.msra.mxu0 %v7058
      %7258 = vmatprep.subr.bf16.mxu0 0
      %7259 = vmatpush1.bf16.msra.mxu0 %v7059
      %7260 = vmatprep.subr.bf16.mxu0 0
      %7261 = vmatpush1.bf16.msra.mxu0 %v7060
      %7262 = vmatprep.subr.bf16.mxu0 0
      %7263 = vmatpush1.bf16.msra.mxu0 0
      %7264 = vmatprep.subr.bf16.mxu0 0
      %7265 = vmatpush1.bf16.msra.mxu0 0
      %7266 = vmatprep.subr.bf16.mxu0 0
      %7267 = vmatpush1.bf16.msra.mxu0 0
      %7268 = vmatprep.subr.bf16.mxu0 0
      %7269 = vmatpush1.bf16.msra.mxu0 0
      %7270 = vmatprep.subr.bf16.mxu0 0
      %7271 = vmatpush1.bf16.msra.mxu0 0
      %7272 = vmatprep.subr.bf16.mxu0 0
      %7273 = vmatpush1.bf16.msra.mxu0 0
      %7274 = vmatprep.subr.bf16.mxu0 0
      %7275 = vmatpush1.bf16.msra.mxu0 0
      %7276 = vmatprep.subr.bf16.mxu0 0
      %7277 = vmatpush1.bf16.msra.mxu0 0
      %7278 = vmatprep.mubr.bf16.mxu0 0
      %7279 = vmatmul.mubr.bf16.gmra.mrb[0].mxu0 %v6846
      %v7280 = vpop.f32.mrb[0].mxu0
      %v7281 = vadd.f32 %v7120, %v7280
      %v7282 = vpop.f32.mrb[0].mxu0
      %v7283 = vpop.f32.mrb[0].mxu0
      %v7284 = vadd.f32 %v7123, %v7283
      %v7285 = vpop.f32.mrb[0].mxu0
      %7286 = vmatprep.mubr.bf16.mxu0 0
      %7287 = vmatmul.mubr.bf16.gmra.mrb[0].mxu0 %v6849
      %v7288 = vpop.f32.mrb[0].mxu0
      %v7289 = vadd.f32 %v7128, %v7288
      %v7290 = vpop.f32.mrb[0].mxu0
      %v7291 = vpop.f32.mrb[0].mxu0
      %v7292 = vadd.f32 %v7131, %v7291
      %v7293 = vpop.f32.mrb[0].mxu0
      %7294 = vmatprep.mubr.bf16.mxu0 0
      %7295 = vmatmul.mubr.bf16.gmra.mrb[0].mxu0 %v6852
      %v7296 = vpop.f32.mrb[0].mxu0
      %v7297 = vadd.f32 %v7136, %v7296
      %v7298 = vpop.f32.mrb[0].mxu0
      %v7299 = vpop.f32.mrb[0].mxu0
      %v7300 = vadd.f32 %v7139, %v7299
      %v7301 = vpop.f32.mrb[0].mxu0
      %7302 = vmatprep.mubr.bf16.mxu0 0
      %7303 = vmatmul.mubr.bf16.gmra.mrb[0].mxu0 %v6855
      %v7304 = vpop.f32.mrb[0].mxu0
      %v7305 = vadd.f32 %v7144, %v7304
      %v7306 = vpop.f32.mrb[0].mxu0
      %v7307 = vpop.f32.mrb[0].mxu0
      %v7308 = vadd.f32 %v7147, %v7307
      %v7309 = vpop.f32.mrb[0].mxu0
      %7310 = vmatprep.mubr.bf16.mxu0 0
      %7311 = vmatmul.mubr.bf16.gmra.mrb[0].mxu0 %v6858
      %v7312 = vpop.f32.mrb[0].mxu0
      %v7313 = vadd.f32 %v7152, %v7312
      %v7314 = vpop.f32.mrb[0].mxu0
      %v7315 = vpop.f32.mrb[0].mxu0
      %v7316 = vadd.f32 %v7155, %v7315
      %v7317 = vpop.f32.mrb[0].mxu0
      %7318 = vmatprep.mubr.bf16.mxu0 0
      %7319 = vmatmul.mubr.bf16.gmra.mrb[0].mxu0 %v6861
      %v7320 = vpop.f32.mrb[0].mxu0
      %v7321 = vadd.f32 %v7160, %v7320
      %v7322 = vpop.f32.mrb[0].mxu0
      %v7323 = vpop.f32.mrb[0].mxu0
      %v7324 = vadd.f32 %v7163, %v7323
      %v7325 = vpop.f32.mrb[0].mxu0
      %7326 = vmatprep.mubr.bf16.mxu0 0
      %7327 = vmatmul.mubr.bf16.gmra.mrb[0].mxu0 %v6864
      %v7328 = vpop.f32.mrb[0].mxu0
      %v7329 = vadd.f32 %v7168, %v7328
      %v7330 = vpop.f32.mrb[0].mxu0
      %v7331 = vpop.f32.mrb[0].mxu0
      %v7332 = vadd.f32 %v7171, %v7331
      %v7333 = vpop.f32.mrb[0].mxu0
      %7334 = vmatprep.mubr.bf16.mxu0 0
      %7335 = vmatmul.mubr.bf16.gmra.mrb[0].mxu0 %v6867
      %v7336 = vpop.f32.mrb[0].mxu0
      %v7337 = vadd.f32 %v7176, %v7336
      %v7338 = vpop.f32.mrb[0].mxu0
      %v7339 = vpop.f32.mrb[0].mxu0
      %v7340 = vadd.f32 %v7179, %v7339
      %v7341 = vpop.f32.mrb[0].mxu0
      %7342 = vmatprep.mubr.bf16.mxu0 0
      %7343 = vmatmul.mubr.bf16.gmra.mrb[0].mxu0 %v6870
      %v7344 = vpop.f32.mrb[0].mxu0
      %v7345 = vadd.f32 %v7184, %v7344
      %v7346 = vpop.f32.mrb[0].mxu0
      %v7347 = vpop.f32.mrb[0].mxu0
      %v7348 = vadd.f32 %v7187, %v7347
      %v7349 = vpop.f32.mrb[0].mxu0
      %7350 = vmatprep.mubr.bf16.mxu0 0
      %7351 = vmatmul.mubr.bf16.gmra.mrb[0].mxu0 %v6873
      %v7352 = vpop.f32.mrb[0].mxu0
      %v7353 = vadd.f32 %v7192, %v7352
      %v7354 = vpop.f32.mrb[0].mxu0
      %v7355 = vpop.f32.mrb[0].mxu0
      %v7356 = vadd.f32 %v7195, %v7355
      %v7357 = vpop.f32.mrb[0].mxu0
      %7358 = vmatprep.mubr.bf16.mxu0 0
      %7359 = vmatmul.mubr.bf16.gmra.mrb[0].mxu0 %v6876
      %v7360 = vpop.f32.mrb[0].mxu0
      %v7361 = vadd.f32 %v7200, %v7360
      %v7362 = vpop.f32.mrb[0].mxu0
      %v7363 = vpop.f32.mrb[0].mxu0
      %v7364 = vadd.f32 %v7203, %v7363
      %v7365 = vpop.f32.mrb[0].mxu0
      %7366 = vmatprep.mubr.bf16.mxu0 0
      %7367 = vmatmul.mubr.bf16.gmra.mrb[0].mxu0 %v6879
      %v7368 = vpop.f32.mrb[0].mxu0
      %v7369 = vadd.f32 %v7208, %v7368
      %v7370 = vpop.f32.mrb[0].mxu0
      %v7371 = vpop.f32.mrb[0].mxu0
      %v7372 = vadd.f32 %v7211, %v7371
      %v7373 = vpop.f32.mrb[0].mxu0
      %7374 = vmatprep.mubr.bf16.mxu0 0
      %7375 = vmatmul.mubr.bf16.gmra.mrb[0].mxu0 %v6882
      %v7376 = vpop.f32.mrb[0].mxu0
      %v7377 = vadd.f32 %v7216, %v7376
      %v7378 = vpop.f32.mrb[0].mxu0
      %v7379 = vpop.f32.mrb[0].mxu0
      %v7380 = vadd.f32 %v7219, %v7379
      %v7381 = vpop.f32.mrb[0].mxu0
      %7382 = vmatprep.mubr.bf16.mxu0 0
      %7383 = vmatmul.mubr.bf16.gmra.mrb[0].mxu0 %v6885
      %v7384 = vpop.f32.mrb[0].mxu0
      %v7385 = vadd.f32 %v7224, %v7384
      %v7386 = vpop.f32.mrb[0].mxu0
      %v7387 = vpop.f32.mrb[0].mxu0
      %v7388 = vadd.f32 %v7227, %v7387
      %v7389 = vpop.f32.mrb[0].mxu0
      %7390 = vmatprep.mubr.bf16.mxu0 0
      %7391 = vmatmul.mubr.bf16.gmra.mrb[0].mxu0 %v6888
      %v7392 = vpop.f32.mrb[0].mxu0
      %v7393 = vadd.f32 %v7232, %v7392
      %v7394 = vpop.f32.mrb[0].mxu0
      %v7395 = vpop.f32.mrb[0].mxu0
      %v7396 = vadd.f32 %v7235, %v7395
      %v7397 = vpop.f32.mrb[0].mxu0
      %7398 = vmatprep.mubr.bf16.mxu0 0
      %7399 = vmatmul.mubr.bf16.gmra.mrb[0].mxu0 %v6891
      %v7400 = vpop.f32.mrb[0].mxu0
      %v7401 = vadd.f32 %v7240, %v7400
      %v7402 = vpop.f32.mrb[0].mxu0
      %v7403 = vpop.f32.mrb[0].mxu0
      %v7404 = vadd.f32 %v7243, %v7403
      %v7405 = vpop.f32.mrb[0].mxu0
      %7406 = vdwg.mxu0
      %v7407 = vrcp.pop %v6719
      %v7408 = vrcp.pop %v6723
      %v7409 = vrcp.pop %v6727
      %v7410 = vrcp.pop %v6731
      %v7411 = vrcp.pop %v6735
      %v7412 = vrcp.pop %v6739
      %v7413 = vrcp.pop %v6743
      %v7414 = vrcp.pop %v6747
      %v7415 = vrcp.pop %v6751
      %v7416 = vrcp.pop %v6755
      %v7417 = vrcp.pop %v6759
      %v7418 = vrcp.pop %v6763
      %v7419 = vrcp.pop %v6767
      %v7420 = vrcp.pop %v6771
      %v7421 = vrcp.pop %v6775
      %v7422 = vrcp.pop %v6779
      %v7423 = vrcp.pop %v6783
      %v7424 = vrcp.pop %v6787
      %v7425 = vrcp.pop %v6791
      %v7426 = vrcp.pop %v6795
      %v7427 = vrcp.pop %v6799
      %v7428 = vrcp.pop %v6803
      %v7429 = vrcp.pop %v6807
      %v7430 = vrcp.pop %v6811
      %v7431 = vrcp.pop %v6815
      %v7432 = vrcp.pop %v6819
      %v7433 = vrcp.pop %v6823
      %v7434 = vrcp.pop %v6827
      %v7435 = vrcp.pop %v6831
      %v7436 = vrcp.pop %v6835
      %v7437 = vrcp.pop %v6839
      %v7438 = vrcp.pop %v6843
      %v7439 = vmul.f32 %v7281, %v7407
      %v7440 = vmul.f32 %v7284, %v7408
      %v7441 = vmul.f32 %v7289, %v7409
      %v7442 = vmul.f32 %v7292, %v7410
      %v7443 = vmul.f32 %v7297, %v7411
      %v7444 = vmul.f32 %v7300, %v7412
      %v7445 = vmul.f32 %v7305, %v7413
      %v7446 = vmul.f32 %v7308, %v7414
      %v7447 = vmul.f32 %v7313, %v7415
      %v7448 = vmul.f32 %v7316, %v7416
      %v7449 = vmul.f32 %v7321, %v7417
      %v7450 = vmul.f32 %v7324, %v7418
      %v7451 = vmul.f32 %v7329, %v7419
      %v7452 = vmul.f32 %v7332, %v7420
      %v7453 = vmul.f32 %v7337, %v7421
      %v7454 = vmul.f32 %v7340, %v7422
      %v7455 = vmul.f32 %v7345, %v7423
      %v7456 = vmul.f32 %v7348, %v7424
      %v7457 = vmul.f32 %v7353, %v7425
      %v7458 = vmul.f32 %v7356, %v7426
      %v7459 = vmul.f32 %v7361, %v7427
      %v7460 = vmul.f32 %v7364, %v7428
      %v7461 = vmul.f32 %v7369, %v7429
      %v7462 = vmul.f32 %v7372, %v7430
      %v7463 = vmul.f32 %v7377, %v7431
      %v7464 = vmul.f32 %v7380, %v7432
      %v7465 = vmul.f32 %v7385, %v7433
      %v7466 = vmul.f32 %v7388, %v7434
      %v7467 = vmul.f32 %v7393, %v7435
      %v7468 = vmul.f32 %v7396, %v7436
      %v7469 = vmul.f32 %v7401, %v7437
      %v7470 = vmul.f32 %v7404, %v7438
      %7503 = vrot.lane.b32.xlu0 %v3835, 8
      %v7504 = vpop.permute.xlu0 %7503
      %7505 = vrot.lane.b32.xlu0 %v3836, 8
      %v7506 = vpop.permute.xlu0 %7505
      %7507 = vrot.lane.b32.xlu0 %v3837, 8
      %v7508 = vpop.permute.xlu0 %7507
      %7509 = vrot.lane.b32.xlu0 %v3838, 8
      %v7510 = vpop.permute.xlu0 %7509
      %7511 = vrot.lane.b32.xlu0 %v3839, 8
      %v7512 = vpop.permute.xlu0 %7511
      %7513 = vrot.lane.b32.xlu0 %v3840, 8
      %v7514 = vpop.permute.xlu0 %7513
      %7515 = vrot.lane.b32.xlu0 %v3841, 8
      %v7516 = vpop.permute.xlu0 %7515
      %7517 = vrot.lane.b32.xlu0 %v3842, 8
      %v7518 = vpop.permute.xlu0 %7517
      %7519 = vrot.lane.b32.xlu0 %v3843, 8
      %v7520 = vpop.permute.xlu0 %7519
      %7521 = vrot.lane.b32.xlu0 %v3844, 8
      %v7522 = vpop.permute.xlu0 %7521
      %7523 = vrot.lane.b32.xlu0 %v3845, 8
      %v7524 = vpop.permute.xlu0 %7523
      %7525 = vrot.lane.b32.xlu0 %v3846, 8
      %v7526 = vpop.permute.xlu0 %7525
      %7527 = vrot.lane.b32.xlu0 %v3847, 8
      %v7528 = vpop.permute.xlu0 %7527
      %7529 = vrot.lane.b32.xlu0 %v3848, 8
      %v7530 = vpop.permute.xlu0 %7529
      %7531 = vrot.lane.b32.xlu0 %v3849, 8
      %v7532 = vpop.permute.xlu0 %7531
      %7533 = vrot.lane.b32.xlu0 %v3850, 8
      %v7534 = vpop.permute.xlu0 %7533
      %7535 = vrot.lane.b32.xlu0 %v3851, 8
      %v7536 = vpop.permute.xlu0 %7535
      %7537 = vrot.lane.b32.xlu0 %v3852, 8
      %v7538 = vpop.permute.xlu0 %7537
      %7539 = vrot.lane.b32.xlu0 %v3853, 8
      %v7540 = vpop.permute.xlu0 %7539
      %7541 = vrot.lane.b32.xlu0 %v3854, 8
      %v7542 = vpop.permute.xlu0 %7541
      %7543 = vrot.lane.b32.xlu0 %v3855, 8
      %v7544 = vpop.permute.xlu0 %7543
      %7545 = vrot.lane.b32.xlu0 %v3856, 8
      %v7546 = vpop.permute.xlu0 %7545
      %7547 = vrot.lane.b32.xlu0 %v3857, 8
      %v7548 = vpop.permute.xlu0 %7547
      %7549 = vrot.lane.b32.xlu0 %v3858, 8
      %v7550 = vpop.permute.xlu0 %7549
      %7551 = vrot.lane.b32.xlu0 %v3859, 8
      %v7552 = vpop.permute.xlu0 %7551
      %7553 = vrot.lane.b32.xlu0 %v3860, 8
      %v7554 = vpop.permute.xlu0 %7553
      %7555 = vrot.lane.b32.xlu0 %v3861, 8
      %v7556 = vpop.permute.xlu0 %7555
      %7557 = vrot.lane.b32.xlu0 %v3862, 8
      %v7558 = vpop.permute.xlu0 %7557
      %7559 = vrot.lane.b32.xlu0 %v3863, 8
      %v7560 = vpop.permute.xlu0 %7559
      %7561 = vrot.lane.b32.xlu0 %v3864, 8
      %v7562 = vpop.permute.xlu0 %7561
      %7563 = vrot.lane.b32.xlu0 %v3865, 8
      %v7564 = vpop.permute.xlu0 %7563
      %7565 = vrot.lane.b32.xlu0 %v3866, 8
      %v7566 = vpop.permute.xlu0 %7565
      %7631 = vrot.lane.b32.xlu0 %v5637, 16
      %v7632 = vpop.permute.xlu0 %7631
      %7633 = vrot.lane.b32.xlu0 %v5638, 16
      %v7634 = vpop.permute.xlu0 %7633
      %7635 = vrot.lane.b32.xlu0 %v5639, 16
      %v7636 = vpop.permute.xlu0 %7635
      %7637 = vrot.lane.b32.xlu0 %v5640, 16
      %v7638 = vpop.permute.xlu0 %7637
      %7639 = vrot.lane.b32.xlu0 %v5641, 16
      %v7640 = vpop.permute.xlu0 %7639
      %7641 = vrot.lane.b32.xlu0 %v5642, 16
      %v7642 = vpop.permute.xlu0 %7641
      %7643 = vrot.lane.b32.xlu0 %v5643, 16
      %v7644 = vpop.permute.xlu0 %7643
      %7645 = vrot.lane.b32.xlu0 %v5644, 16
      %v7646 = vpop.permute.xlu0 %7645
      %7647 = vrot.lane.b32.xlu0 %v5645, 16
      %v7648 = vpop.permute.xlu0 %7647
      %7649 = vrot.lane.b32.xlu0 %v5646, 16
      %v7650 = vpop.permute.xlu0 %7649
      %7651 = vrot.lane.b32.xlu0 %v5647, 16
      %v7652 = vpop.permute.xlu0 %7651
      %7653 = vrot.lane.b32.xlu0 %v5648, 16
      %v7654 = vpop.permute.xlu0 %7653
      %7655 = vrot.lane.b32.xlu0 %v5649, 16
      %v7656 = vpop.permute.xlu0 %7655
      %7657 = vrot.lane.b32.xlu0 %v5650, 16
      %v7658 = vpop.permute.xlu0 %7657
      %7659 = vrot.lane.b32.xlu0 %v5651, 16
      %v7660 = vpop.permute.xlu0 %7659
      %7661 = vrot.lane.b32.xlu0 %v5652, 16
      %v7662 = vpop.permute.xlu0 %7661
      %7663 = vrot.lane.b32.xlu0 %v5653, 16
      %v7664 = vpop.permute.xlu0 %7663
      %7665 = vrot.lane.b32.xlu0 %v5654, 16
      %v7666 = vpop.permute.xlu0 %7665
      %7667 = vrot.lane.b32.xlu0 %v5655, 16
      %v7668 = vpop.permute.xlu0 %7667
      %7669 = vrot.lane.b32.xlu0 %v5656, 16
      %v7670 = vpop.permute.xlu0 %7669
      %7671 = vrot.lane.b32.xlu0 %v5657, 16
      %v7672 = vpop.permute.xlu0 %7671
      %7673 = vrot.lane.b32.xlu0 %v5658, 16
      %v7674 = vpop.permute.xlu0 %7673
      %7675 = vrot.lane.b32.xlu0 %v5659, 16
      %v7676 = vpop.permute.xlu0 %7675
      %7677 = vrot.lane.b32.xlu0 %v5660, 16
      %v7678 = vpop.permute.xlu0 %7677
      %7679 = vrot.lane.b32.xlu0 %v5661, 16
      %v7680 = vpop.permute.xlu0 %7679
      %7681 = vrot.lane.b32.xlu0 %v5662, 16
      %v7682 = vpop.permute.xlu0 %7681
      %7683 = vrot.lane.b32.xlu0 %v5663, 16
      %v7684 = vpop.permute.xlu0 %7683
      %7685 = vrot.lane.b32.xlu0 %v5664, 16
      %v7686 = vpop.permute.xlu0 %7685
      %7687 = vrot.lane.b32.xlu0 %v5665, 16
      %v7688 = vpop.permute.xlu0 %7687
      %7689 = vrot.lane.b32.xlu0 %v5666, 16
      %v7690 = vpop.permute.xlu0 %7689
      %7691 = vrot.lane.b32.xlu0 %v5667, 16
      %v7692 = vpop.permute.xlu0 %7691
      %7693 = vrot.lane.b32.xlu0 %v5668, 16
      %v7694 = vpop.permute.xlu0 %7693
      %7759 = vrot.lane.b32.xlu0 %v7439, 24
      %v7760 = vpop.permute.xlu0 %7759
      %7761 = vrot.lane.b32.xlu0 %v7440, 24
      %v7762 = vpop.permute.xlu0 %7761
      %7763 = vrot.lane.b32.xlu0 %v7441, 24
      %v7764 = vpop.permute.xlu0 %7763
      %7765 = vrot.lane.b32.xlu0 %v7442, 24
      %v7766 = vpop.permute.xlu0 %7765
      %7767 = vrot.lane.b32.xlu0 %v7443, 24
      %v7768 = vpop.permute.xlu0 %7767
      %7769 = vrot.lane.b32.xlu0 %v7444, 24
      %v7770 = vpop.permute.xlu0 %7769
      %7771 = vrot.lane.b32.xlu0 %v7445, 24
      %v7772 = vpop.permute.xlu0 %7771
      %7773 = vrot.lane.b32.xlu0 %v7446, 24
      %v7774 = vpop.permute.xlu0 %7773
      %7775 = vrot.lane.b32.xlu0 %v7447, 24
      %v7776 = vpop.permute.xlu0 %7775
      %7777 = vrot.lane.b32.xlu0 %v7448, 24
      %v7778 = vpop.permute.xlu0 %7777
      %7779 = vrot.lane.b32.xlu0 %v7449, 24
      %v7780 = vpop.permute.xlu0 %7779
      %7781 = vrot.lane.b32.xlu0 %v7450, 24
      %v7782 = vpop.permute.xlu0 %7781
      %7783 = vrot.lane.b32.xlu0 %v7451, 24
      %v7784 = vpop.permute.xlu0 %7783
      %7785 = vrot.lane.b32.xlu0 %v7452, 24
      %v7786 = vpop.permute.xlu0 %7785
      %7787 = vrot.lane.b32.xlu0 %v7453, 24
      %v7788 = vpop.permute.xlu0 %7787
      %7789 = vrot.lane.b32.xlu0 %v7454, 24
      %v7790 = vpop.permute.xlu0 %7789
      %7791 = vrot.lane.b32.xlu0 %v7455, 24
      %v7792 = vpop.permute.xlu0 %7791
      %7793 = vrot.lane.b32.xlu0 %v7456, 24
      %v7794 = vpop.permute.xlu0 %7793
      %7795 = vrot.lane.b32.xlu0 %v7457, 24
      %v7796 = vpop.permute.xlu0 %7795
      %7797 = vrot.lane.b32.xlu0 %v7458, 24
      %v7798 = vpop.permute.xlu0 %7797
      %7799 = vrot.lane.b32.xlu0 %v7459, 24
      %v7800 = vpop.permute.xlu0 %7799
      %7801 = vrot.lane.b32.xlu0 %v7460, 24
      %v7802 = vpop.permute.xlu0 %7801
      %7803 = vrot.lane.b32.xlu0 %v7461, 24
      %v7804 = vpop.permute.xlu0 %7803
      %7805 = vrot.lane.b32.xlu0 %v7462, 24
      %v7806 = vpop.permute.xlu0 %7805
      %7807 = vrot.lane.b32.xlu0 %v7463, 24
      %v7808 = vpop.permute.xlu0 %7807
      %7809 = vrot.lane.b32.xlu0 %v7464, 24
      %v7810 = vpop.permute.xlu0 %7809
      %7811 = vrot.lane.b32.xlu0 %v7465, 24
      %v7812 = vpop.permute.xlu0 %7811
      %7813 = vrot.lane.b32.xlu0 %v7466, 24
      %v7814 = vpop.permute.xlu0 %7813
      %7815 = vrot.lane.b32.xlu0 %v7467, 24
      %v7816 = vpop.permute.xlu0 %7815
      %7817 = vrot.lane.b32.xlu0 %v7468, 24
      %v7818 = vpop.permute.xlu0 %7817
      %7819 = vrot.lane.b32.xlu0 %v7469, 24
      %v7820 = vpop.permute.xlu0 %7819
      %7821 = vrot.lane.b32.xlu0 %v7470, 24
      %v7822 = vpop.permute.xlu0 %7821
      %v7855 = vsel %vm380, %v2033, %v7504
      %v7856 = vsel %vm380, %v2034, %v7506
      %v7857 = vsel %vm380, %v2035, %v7508
      %v7858 = vsel %vm380, %v2036, %v7510
      %v7859 = vsel %vm380, %v2037, %v7512
      %v7860 = vsel %vm380, %v2038, %v7514
      %v7861 = vsel %vm380, %v2039, %v7516
      %v7862 = vsel %vm380, %v2040, %v7518
      %v7863 = vsel %vm380, %v2041, %v7520
      %v7864 = vsel %vm380, %v2042, %v7522
      %v7865 = vsel %vm380, %v2043, %v7524
      %v7866 = vsel %vm380, %v2044, %v7526
      %v7867 = vsel %vm380, %v2045, %v7528
      %v7868 = vsel %vm380, %v2046, %v7530
      %v7869 = vsel %vm380, %v2047, %v7532
      %v7870 = vsel %vm380, %v2048, %v7534
      %v7871 = vsel %vm380, %v2049, %v7536
      %v7872 = vsel %vm380, %v2050, %v7538
      %v7873 = vsel %vm380, %v2051, %v7540
      %v7874 = vsel %vm380, %v2052, %v7542
      %v7875 = vsel %vm380, %v2053, %v7544
      %v7876 = vsel %vm380, %v2054, %v7546
      %v7877 = vsel %vm380, %v2055, %v7548
      %v7878 = vsel %vm380, %v2056, %v7550
      %v7879 = vsel %vm380, %v2057, %v7552
      %v7880 = vsel %vm380, %v2058, %v7554
      %v7881 = vsel %vm380, %v2059, %v7556
      %v7882 = vsel %vm380, %v2060, %v7558
      %v7883 = vsel %vm380, %v2061, %v7560
      %v7884 = vsel %vm380, %v2062, %v7562
      %v7885 = vsel %vm380, %v2063, %v7564
      %v7886 = vsel %vm380, %v2064, %v7566
      %vm7887 = vcmask 130048
      %v7888 = vsel %vm7887, %v7855, %v7632
      %v7889 = vsel %vm7887, %v7856, %v7634
      %v7890 = vsel %vm7887, %v7857, %v7636
      %v7891 = vsel %vm7887, %v7858, %v7638
      %v7892 = vsel %vm7887, %v7859, %v7640
      %v7893 = vsel %vm7887, %v7860, %v7642
      %v7894 = vsel %vm7887, %v7861, %v7644
      %v7895 = vsel %vm7887, %v7862, %v7646
      %v7896 = vsel %vm7887, %v7863, %v7648
      %v7897 = vsel %vm7887, %v7864, %v7650
      %v7898 = vsel %vm7887, %v7865, %v7652
      %v7899 = vsel %vm7887, %v7866, %v7654
      %v7900 = vsel %vm7887, %v7867, %v7656
      %v7901 = vsel %vm7887, %v7868, %v7658
      %v7902 = vsel %vm7887, %v7869, %v7660
      %v7903 = vsel %vm7887, %v7870, %v7662
      %v7904 = vsel %vm7887, %v7871, %v7664
      %v7905 = vsel %vm7887, %v7872, %v7666
      %v7906 = vsel %vm7887, %v7873, %v7668
      %v7907 = vsel %vm7887, %v7874, %v7670
      %v7908 = vsel %vm7887, %v7875, %v7672
      %v7909 = vsel %vm7887, %v7876, %v7674
      %v7910 = vsel %vm7887, %v7877, %v7676
      %v7911 = vsel %vm7887, %v7878, %v7678
      %v7912 = vsel %vm7887, %v7879, %v7680
      %v7913 = vsel %vm7887, %v7880, %v7682
      %v7914 = vsel %vm7887, %v7881, %v7684
      %v7915 = vsel %vm7887, %v7882, %v7686
      %v7916 = vsel %vm7887, %v7883, %v7688
      %v7917 = vsel %vm7887, %v7884, %v7690
      %v7918 = vsel %vm7887, %v7885, %v7692
      %v7919 = vsel %vm7887, %v7886, %v7694
      %vm7920 = vcmask 195584
      %v7921 = vsel %vm7920, %v7888, %v7760
      %v7922 = vsel %vm7920, %v7889, %v7762
      %v7923 = vsel %vm7920, %v7890, %v7764
      %v7924 = vsel %vm7920, %v7891, %v7766
      %v7925 = vsel %vm7920, %v7892, %v7768
      %v7926 = vsel %vm7920, %v7893, %v7770
      %v7927 = vsel %vm7920, %v7894, %v7772
      %v7928 = vsel %vm7920, %v7895, %v7774
      %v7929 = vsel %vm7920, %v7896, %v7776
      %v7930 = vsel %vm7920, %v7897, %v7778
      %v7931 = vsel %vm7920, %v7898, %v7780
      %v7932 = vsel %vm7920, %v7899, %v7782
      %v7933 = vsel %vm7920, %v7900, %v7784
      %v7934 = vsel %vm7920, %v7901, %v7786
      %v7935 = vsel %vm7920, %v7902, %v7788
      %v7936 = vsel %vm7920, %v7903, %v7790
      %v7937 = vsel %vm7920, %v7904, %v7792
      %v7938 = vsel %vm7920, %v7905, %v7794
      %v7939 = vsel %vm7920, %v7906, %v7796
      %v7940 = vsel %vm7920, %v7907, %v7798
      %v7941 = vsel %vm7920, %v7908, %v7800
      %v7942 = vsel %vm7920, %v7909, %v7802
      %v7943 = vsel %vm7920, %v7910, %v7804
      %v7944 = vsel %vm7920, %v7911, %v7806
      %v7945 = vsel %vm7920, %v7912, %v7808
      %v7946 = vsel %vm7920, %v7913, %v7810
      %v7947 = vsel %vm7920, %v7914, %v7812
      %v7948 = vsel %vm7920, %v7915, %v7814
      %v7949 = vsel %vm7920, %v7916, %v7816
      %v7950 = vsel %vm7920, %v7917, %v7818
      %v7951 = vsel %vm7920, %v7918, %v7820
      %v7952 = vsel %vm7920, %v7919, %v7822
      %vm7953 = vcmask 261120
      %7954 = vst.msk [vmem:[%s248] sm:$0xff] %vm7953, %v7921
      %7955 = vst.msk [vmem:[%s248 + $0x8] sm:$0xff] %vm7953, %v7922
      %7956 = vst.msk [vmem:[%s248 + $0x10] sm:$0xff] %vm7953, %v7923
      %7957 = vst.msk [vmem:[%s248 + $0x18] sm:$0xff] %vm7953, %v7924
      %7958 = vst.msk [vmem:[%s248 + $0x20] sm:$0xff] %vm7953, %v7925
      %7959 = vst.msk [vmem:[%s248 + $0x28] sm:$0xff] %vm7953, %v7926
      %7960 = vst.msk [vmem:[%s248 + $0x30] sm:$0xff] %vm7953, %v7927
      %7961 = vst.msk [vmem:[%s248 + $0x38] sm:$0xff] %vm7953, %v7928
      %7962 = vst.msk [vmem:[%s248 + $0x40] sm:$0xff] %vm7953, %v7929
      %7963 = vst.msk [vmem:[%s248 + $0x48] sm:$0xff] %vm7953, %v7930
      %7964 = vst.msk [vmem:[%s248 + $0x50] sm:$0xff] %vm7953, %v7931
      %7965 = vst.msk [vmem:[%s248 + $0x58] sm:$0xff] %vm7953, %v7932
      %7966 = vst.msk [vmem:[%s248 + $0x60] sm:$0xff] %vm7953, %v7933
      %7967 = vst.msk [vmem:[%s248 + $0x68] sm:$0xff] %vm7953, %v7934
      %7968 = vst.msk [vmem:[%s248 + $0x70] sm:$0xff] %vm7953, %v7935
      %7969 = vst.msk [vmem:[%s248 + $0x78] sm:$0xff] %vm7953, %v7936
      %7970 = vst.msk [vmem:[%s248 + $0x80] sm:$0xff] %vm7953, %v7937
      %7971 = vst.msk [vmem:[%s248 + $0x88] sm:$0xff] %vm7953, %v7938
      %7972 = vst.msk [vmem:[%s248 + $0x90] sm:$0xff] %vm7953, %v7939
      %7973 = vst.msk [vmem:[%s248 + $0x98] sm:$0xff] %vm7953, %v7940
      %7974 = vst.msk [vmem:[%s248 + $0xa0] sm:$0xff] %vm7953, %v7941
      %7975 = vst.msk [vmem:[%s248 + $0xa8] sm:$0xff] %vm7953, %v7942
      %7976 = vst.msk [vmem:[%s248 + $0xb0] sm:$0xff] %vm7953, %v7943
      %7977 = vst.msk [vmem:[%s248 + $0xb8] sm:$0xff] %vm7953, %v7944
      %7978 = vst.msk [vmem:[%s248 + $0xc0] sm:$0xff] %vm7953, %v7945
      %7979 = vst.msk [vmem:[%s248 + $0xc8] sm:$0xff] %vm7953, %v7946
      %7980 = vst.msk [vmem:[%s248 + $0xd0] sm:$0xff] %vm7953, %v7947
      %7981 = vst.msk [vmem:[%s248 + $0xd8] sm:$0xff] %vm7953, %v7948
      %7982 = vst.msk [vmem:[%s248 + $0xe0] sm:$0xff] %vm7953, %v7949
      %7983 = vst.msk [vmem:[%s248 + $0xe8] sm:$0xff] %vm7953, %v7950
      %7984 = vst.msk [vmem:[%s248 + $0xf0] sm:$0xff] %vm7953, %v7951
      %7985 = vst.msk [vmem:[%s248 + $0xf8] sm:$0xff] %vm7953, %v7952
      %s7986 = smul.u32 32, %s19
      %p7987 = scmp.lt.s32.totalorder %s18, 1
      %s7988 = scalar_select %p7987, %s18, 1
      %p7989 = scmp.lt.s32.totalorder %s7986, 31
      %s7990 = scalar_select %p7989, %s7986, 31
      %s7991 = smul.addr %s7988, 32
      %s7992 = sadd.s32 %s7990, %s7991
      %s7993 = smul.addr %s7992, 8
      %s7994 = scalar_lea.vmem %s3, %s7993
      // Predicated region
      $region33: #{tpu_custom_call.1} parent=31 // pred_check
        %p7995 = pneg %p126
      $region34: #{tpu_custom_call.1} parent=31 // pred_check_branch
        %7997 = sbr.rel (%p7995) target = $region36
      $region35: #{tpu_custom_call.1} parent=31 // pred_region
        %s7998 = smul.u32 32, %s19
      $region36: #{tpu_custom_call.1} parent=31 // pred_fallthru
        _
    $region32: #{tpu_custom_call.1} parent=5 // pred_fallthru
      _
    %p7999 = scmp.le.s32.totalorder 2, %s9
    // Predicated region
    $region37: #{tpu_custom_call.1} parent=5 // pred_check
      %p8000 = pneg %p7999
    $region38: #{tpu_custom_call.1} parent=5 // pred_check_branch
      %8002 = sbr.rel (%p8000) target = $region40
    $region39: #{tpu_custom_call.1} parent=5 // pred_region
      %s8003 = ssub.s32 %s9, 2
      // Predicated region
      $region41: #{tpu_custom_call.1} parent=39 // pred_check
        %p8004 = pneg %p132
      $region42: #{tpu_custom_call.1} parent=39 // pred_check_branch
        %8006 = sbr.rel (%p8004) target = $region44
      $region43: #{tpu_custom_call.1} parent=39 // pred_region
        %s8007 = smul.u32 32, %s21
        %p8008 = scmp.lt.s32.totalorder %s20, 1
        %s8009 = scalar_select %p8008, %s20, 1
        %p8010 = scmp.lt.s32.totalorder %s8007, 31
        %s8011 = scalar_select %p8010, %s8007, 31
        %s8012 = smul.addr %s8009, 32
        %s8013 = sadd.s32 %s8011, %s8012
        %s8014 = smul.addr %s8013, 8
        %s8015 = scalar_lea.vmem %s3, %s8014
      $region44: #{tpu_custom_call.1} parent=39 // pred_fallthru
        _
    $region40: #{tpu_custom_call.1} parent=5 // pred_fallthru
      _
  $region6: #{tpu_custom_call.1} parent=0 // loop_footer
    %s13 = sadd.s32 1, %s9
  $region7: #{tpu_custom_call.1} parent=0 // loop_footer_branch
    %8 = sbr.rel target = $region3
  $region8: #{tpu_custom_call.1} parent=0 // loop_exit
    _

</llo_original>
